<compile_context>
chip_gen: v7x
topology: tpu7x:2x2x1
jax: 0.10.0
libtpu: 0.0.40
codegen_flags: <defaults>
</compile_context>

<pallas_src>
import functools

import jax
import jax.numpy as jnp
import numpy as np
from jax import lax
from jax.experimental import pallas as pl
from jax.experimental.pallas import tpu as pltpu

BN_EPS = 1e-5
LANES = 128

# Generation-aware VMEM budget: ~3/4 of physical (48 MiB on v7x, 96 MiB on v5e/v6e),
# never below 32 MiB.
try:
    _VMEM_CAP = int(pltpu.get_tpu_info().vmem_capacity_bytes)
except Exception:  # pragma: no cover - fall back to the v7x-safe value.
    _VMEM_CAP = 64 * 1024 * 1024
VMEM_LIMIT = min(96 * 1024 * 1024, max(32 * 1024 * 1024, (_VMEM_CAP * 3) // 4))


def _round_up(x, m):
    return (x + m - 1) // m * m


# ---------------------------------------------------------------------------
# Pass 1: Conv3d as shifted-slice matmuls (MXU, bf16 operands, f32 accumulate)
#         fused with masked per-channel sum / sum-of-squares for train-mode BN.
# ---------------------------------------------------------------------------
def _conv_stats_kernel(w_ref, x_ref, mask_ref, conv_ref, sum_ref, ssq_ref, *,
                       offsets):
    cout, p_pad = conv_ref.shape[1], conv_ref.shape[2]
    acc = jnp.zeros((cout, p_pad), jnp.float32)
    # kd*kh*kw small matmuls; each RHS is a constant-lane-shifted view of the
    # VMEM-resident padded-input slab (the in-kernel replacement for im2col).
    for i, off in enumerate(offsets):
        xs = x_ref[0, :, off:off + p_pad]                  # (Cin, P_pad) bf16
        acc = acc + jnp.dot(w_ref[i], xs, preferred_element_type=jnp.float32)
    acc = acc * mask_ref[...]                              # zero invalid positions
    conv_ref[0] = acc.astype(conv_ref.dtype)               # bf16 intermediate

    # Per-sample per-channel statistics from the f32 accumulator: one store per
    # sample, no cross-step read-modify-write.
    s = jnp.sum(acc, axis=1, keepdims=True)
    q = jnp.sum(acc * acc, axis=1, keepdims=True)
    sum_ref[0] = jnp.broadcast_to(s, sum_ref.shape[1:])
    ssq_ref[0] = jnp.broadcast_to(q, ssq_ref.shape[1:])


# ---------------------------------------------------------------------------
# Pass 2: fused BN affine (single FMA per element) + ReLU.
# ---------------------------------------------------------------------------
def _bn_relu_kernel(scale_ref, shift_ref, conv_ref, out_ref):
    y = conv_ref[0].astype(jnp.float32) * scale_ref[...] + shift_ref[...]
    out_ref[0] = jnp.maximum(y, 0.0)


@functools.partial(jax.jit, static_argnums=(5,))
def relation_conv_block(x, conv_w, conv_b, bn_gamma, bn_beta, padding=0):
    """x: (N, Cin, D, H, W) NCDHW.  Returns (N, Cout, Do, Ho, Wo) float32."""
    del conv_b  # A per-channel conv bias cancels exactly under train-mode BN.
    Cout, Cin, kd, kh, kw = conv_w.shape
    N, _, D, H, W = x.shape
    p = padding
    Dp, Hp, Wp = D + 2 * p, H + 2 * p, W + 2 * p
    Do, Ho, Wo = Dp - kd + 1, Hp - kh + 1, Wp - kw + 1
    P = Dp * Hp * Wp                       # padded-flat spatial extent
    S = Do * Ho * Wo                       # number of valid output positions
    max_off = (kd - 1) * Hp * Wp + (kh - 1) * Wp + (kw - 1)
    P_pad = _round_up(P, LANES)            # lane-aligned conv-block length
    P_ext = _round_up(P_pad + max_off, LANES)   # input length so every shifted
                                                # slice [off, off+P_pad) is in-bounds

    # Padded input, flattened over (Dp,Hp,Wp), zero-extended to P_ext, bf16.
    # (This is the only input-side copy: 1x the input, not 27x.)
    x_pad = jnp.pad(x.astype(jnp.bfloat16),
                    ((0, 0), (0, 0), (p, p), (p, p), (p, p)))
    x_ext = jnp.pad(x_pad.reshape(N, Cin, P), ((0, 0), (0, 0), (0, P_ext - P)))

    # Weights grouped per kernel offset: (kd*kh*kw, Cout, Cin), bf16.
    w_stack = jnp.transpose(conv_w, (2, 3, 4, 0, 1)).reshape(
        kd * kh * kw, Cout, Cin).astype(jnp.bfloat16)
    offsets = tuple(a * Hp * Wp + b * Wp + c
                    for a in range(kd) for b in range(kh) for c in range(kw))

    # Validity mask over the padded-flat index (1 where d<Do, h<Ho, w<Wo; else 0).
    # Padded rows/columns must stay exactly zero so BN stats use the true N*S count.
    mask3 = jnp.zeros((Dp, Hp, Wp), jnp.float32).at[:Do, :Ho, :Wo].set(1.0)
    mask = jnp.zeros((1, P_pad), jnp.float32).at[:, :P].set(mask3.reshape(1, P))

    # ---------------- Pass 1: conv + BN statistics ----------------
    conv_out, sums, ssqs = pl.pallas_call(
        functools.partial(_conv_stats_kernel, offsets=offsets),
        grid=(N,),
        in_specs=[
            pl.BlockSpec((kd * kh * kw, Cout, Cin), lambda n: (0, 0, 0)),  # weights
            pl.BlockSpec((1, Cin, P_ext), lambda n: (n, 0, 0)),            # input
            pl.BlockSpec((1, P_pad), lambda n: (0, 0)),                    # mask
        ],
        out_specs=[
            pl.BlockSpec((1, Cout, P_pad), lambda n: (n, 0, 0)),   # conv (bf16)
            pl.BlockSpec((1, Cout, LANES), lambda n: (n, 0, 0)),   # sum
            pl.BlockSpec((1, Cout, LANES), lambda n: (n, 0, 0)),   # sumsq
        ],
        out_shape=(
            jax.ShapeDtypeStruct((N, Cout, P_pad), jnp.bfloat16),
            jax.ShapeDtypeStruct((N, Cout, LANES), jnp.float32),
            jax.ShapeDtypeStruct((N, Cout, LANES), jnp.float32),
        ),
        compiler_params=pltpu.CompilerParams(
            dimension_semantics=("parallel",),
            vmem_limit_bytes=VMEM_LIMIT),
    )(w_stack, x_ext, mask)

    # Tiny per-channel math in the wrapper: fold train-mode BN into one FMA.
    inv_count = 1.0 / float(N * S)
    ch_sum = jnp.sum(sums[:, :, 0], axis=0)                   # (Cout,)
    ch_ssq = jnp.sum(ssqs[:, :, 0], axis=0)                   # (Cout,)
    mean = ch_sum * inv_count
    var = jnp.maximum(ch_ssq * inv_count - mean * mean, 0.0)  # biased variance
    inv_std = lax.rsqrt(var + BN_EPS)
    scale = (bn_gamma * inv_std).astype(jnp.float32).reshape(Cout, 1)
    shift = (bn_beta - mean * bn_gamma * inv_std).astype(jnp.float32).reshape(Cout, 1)

    # ---------------- Pass 2: scale/shift + ReLU ----------------
    out = pl.pallas_call(
        _bn_relu_kernel,
        grid=(N,),
        in_specs=[
            pl.BlockSpec((Cout, 1), lambda n: (0, 0)),
            pl.BlockSpec((Cout, 1), lambda n: (0, 0)),
            pl.BlockSpec((1, Cout, P_pad), lambda n: (n, 0, 0)),
        ],
        out_specs=pl.BlockSpec((1, Cout, P_pad), lambda n: (n, 0, 0)),
        out_shape=jax.ShapeDtypeStruct((N, Cout, P_pad), jnp.float32),
        compiler_params=pltpu.CompilerParams(
            dimension_semantics=("parallel",),
            vmem_limit_bytes=VMEM_LIMIT),
    )(scale, shift, conv_out)

    # Valid outputs are the [:Do, :Ho, :Wo] corner of the padded-flat layout.
    out = out[:, :, :P].reshape(N, Cout, Dp, Hp, Wp)[:, :, :Do, :Ho, :Wo]
    return out


def _reference(x, conv_w, conv_b, bn_gamma, bn_beta, padding):
    p = padding
    conv = lax.conv_general_dilated(
        x, conv_w, window_strides=(1, 1, 1),
        padding=[(p, p), (p, p), (p, p)],
        dimension_numbers=("NCDHW", "OIDHW", "NCDHW"),
        precision=lax.Precision.HIGHEST)
    conv = conv + conv_b.reshape(1, -1, 1, 1, 1)
    mean = jnp.mean(conv, axis=(0, 2, 3, 4), keepdims=True)
    var = jnp.mean((conv - mean) ** 2, axis=(0, 2, 3, 4), keepdims=True)
    y = (conv - mean) * lax.rsqrt(var + BN_EPS)
    y = y * bn_gamma.reshape(1, -1, 1, 1, 1) + bn_beta.reshape(1, -1, 1, 1, 1)
    return jnp.maximum(y, 0.0)


if __name__ == "__main__":
    # Module config: RelationConvBlock(indim=4, outdim=8, kersize=3, padding=1)
    indim, outdim, kersize, padding = 4, 8, 3, 1
    N, D, H, W = 2, 8, 8, 8

    key = jax.random.PRNGKey(0)
    kx, kweights = jax.random.split(key)
    x = jax.random.normal(kx, (N, indim, D, H, W), dtype=jnp.float32)

    # Deterministic parameter init (mimics backbone.init_layer: conv ~ scaled
    # normal, conv bias = 0; BN weight = 1, BN bias = 0).
    fan_in = indim * kersize ** 3
    conv_w = jax.random.normal(
        kweights, (outdim, indim, kersize, kersize, kersize),
        dtype=jnp.float32) * np.sqrt(2.0 / fan_in)
    conv_b = jnp.zeros((outdim,), dtype=jnp.float32)
    bn_gamma = jnp.ones((outdim,), dtype=jnp.float32)
    bn_beta = jnp.zeros((outdim,), dtype=jnp.float32)

    out = relation_conv_block(x, conv_w, conv_b, bn_gamma, bn_beta, padding)
    out = jax.block_until_ready(out)

    ref = jax.block_until_ready(
        _reference(x, conv_w, conv_b, bn_gamma, bn_beta, padding))
    # bf16 MXU operands + bf16 conv intermediate (stats kept in f32) vs a full-f32
    # reference -> a few-percent deviation; tolerance set accordingly.
    np.testing.assert_allclose(np.asarray(out), np.asarray(ref),
                               rtol=3e-2, atol=3e-2)
    print("KERNEL_OK")
</pallas_src>

<mosaic_0001>
module attributes {stable_mosaic.version = 11 : i64} {
  func.func @_conv_stats_kernel(%arg0: i32, %arg1: memref<27x8x4xbf16, #tpu.memory_space<vmem>>, %arg2: memref<1x4x1280xbf16, #tpu.memory_space<vmem>>, %arg3: memref<1x1024xf32, #tpu.memory_space<vmem>>, %arg4: memref<1x8x1024xbf16, #tpu.memory_space<vmem>>, %arg5: memref<1x8x128xf32, #tpu.memory_space<vmem>>, %arg6: memref<1x8x128xf32, #tpu.memory_space<vmem>>) attributes {dimension_semantics = [#tpu.dimension_semantics<parallel>], iteration_bounds = array<i64: 2>, scalar_prefetch = 0 : i64, scratch_operands = 0 : i64, tpu.core_type = #tpu.core_type<tc>, window_params = [{pipeline_mode = #tpu.pipeline_mode<synchronous>, transform_indices = @transform_0, window_bounds = array<i64: 27, 8, 4>}, {transform_indices = @transform_1, window_bounds = array<i64: 1, 4, 1280>}, {pipeline_mode = #tpu.pipeline_mode<synchronous>, transform_indices = @transform_2, window_bounds = array<i64: 1, 1024>}, {transform_indices = @transform_3, window_bounds = array<i64: 1, 8, 1024>}, {transform_indices = @transform_4, window_bounds = array<i64: 1, 8, 128>}, {transform_indices = @transform_5, window_bounds = array<i64: 1, 8, 128>}]} {
    %cst = arith.constant 0.000000e+00 : f32
    %0 = vector.broadcast %cst : f32 to vector<8x1024xf32>
    %c0 = arith.constant 0 : index
    %c0_0 = arith.constant 0 : index
    %c0_1 = arith.constant 0 : index
    %1 = vector.load %arg2[%c0, %c0_0, %c0_1] : memref<1x4x1280xbf16, #tpu.memory_space<vmem>>, vector<1x4x1024xbf16>
    %2 = vector.shape_cast %1 : vector<1x4x1024xbf16> to vector<4x1024xbf16>
    %c0_2 = arith.constant 0 : index
    %c0_3 = arith.constant 0 : index
    %c0_4 = arith.constant 0 : index
    %3 = vector.load %arg1[%c0_2, %c0_3, %c0_4] : memref<27x8x4xbf16, #tpu.memory_space<vmem>>, vector<1x8x4xbf16>
    %4 = vector.shape_cast %3 : vector<1x8x4xbf16> to vector<8x4xbf16>
    %cst_5 = arith.constant dense<0.000000e+00> : vector<8x1024xf32>
    %5 = tpu.matmul %4, %2, %cst_5 {dimension_numbers = #tpu.dot_dimension_numbers<[1], [0], [0], [1], [0, 0, 1, 1], [], []>} : vector<8x4xbf16>, vector<4x1024xbf16>, vector<8x1024xf32> -> vector<8x1024xf32>
    %6 = arith.addf %0, %5 : vector<8x1024xf32>
    %c0_6 = arith.constant 0 : index
    %c0_7 = arith.constant 0 : index
    %c1 = arith.constant 1 : index
    %7 = vector.load %arg2[%c0_6, %c0_7, %c1] : memref<1x4x1280xbf16, #tpu.memory_space<vmem>>, vector<1x4x1024xbf16>
    %8 = vector.shape_cast %7 : vector<1x4x1024xbf16> to vector<4x1024xbf16>
    %c1_8 = arith.constant 1 : index
    %c0_9 = arith.constant 0 : index
    %c0_10 = arith.constant 0 : index
    %9 = vector.load %arg1[%c1_8, %c0_9, %c0_10] : memref<27x8x4xbf16, #tpu.memory_space<vmem>>, vector<1x8x4xbf16>
    %10 = vector.shape_cast %9 : vector<1x8x4xbf16> to vector<8x4xbf16>
    %cst_11 = arith.constant dense<0.000000e+00> : vector<8x1024xf32>
    %11 = tpu.matmul %10, %8, %cst_11 {dimension_numbers = #tpu.dot_dimension_numbers<[1], [0], [0], [1], [0, 0, 1, 1], [], []>} : vector<8x4xbf16>, vector<4x1024xbf16>, vector<8x1024xf32> -> vector<8x1024xf32>
    %12 = arith.addf %6, %11 : vector<8x1024xf32>
    %c0_12 = arith.constant 0 : index
    %c0_13 = arith.constant 0 : index
    %c2 = arith.constant 2 : index
    %13 = vector.load %arg2[%c0_12, %c0_13, %c2] : memref<1x4x1280xbf16, #tpu.memory_space<vmem>>, vector<1x4x1024xbf16>
    %14 = vector.shape_cast %13 : vector<1x4x1024xbf16> to vector<4x1024xbf16>
    %c2_14 = arith.constant 2 : index
    %c0_15 = arith.constant 0 : index
    %c0_16 = arith.constant 0 : index
    %15 = vector.load %arg1[%c2_14, %c0_15, %c0_16] : memref<27x8x4xbf16, #tpu.memory_space<vmem>>, vector<1x8x4xbf16>
    %16 = vector.shape_cast %15 : vector<1x8x4xbf16> to vector<8x4xbf16>
    %cst_17 = arith.constant dense<0.000000e+00> : vector<8x1024xf32>
    %17 = tpu.matmul %16, %14, %cst_17 {dimension_numbers = #tpu.dot_dimension_numbers<[1], [0], [0], [1], [0, 0, 1, 1], [], []>} : vector<8x4xbf16>, vector<4x1024xbf16>, vector<8x1024xf32> -> vector<8x1024xf32>
    %18 = arith.addf %12, %17 : vector<8x1024xf32>
    %c0_18 = arith.constant 0 : index
    %c0_19 = arith.constant 0 : index
    %c10 = arith.constant 10 : index
    %19 = vector.load %arg2[%c0_18, %c0_19, %c10] : memref<1x4x1280xbf16, #tpu.memory_space<vmem>>, vector<1x4x1024xbf16>
    %20 = vector.shape_cast %19 : vector<1x4x1024xbf16> to vector<4x1024xbf16>
    %c3 = arith.constant 3 : index
    %c0_20 = arith.constant 0 : index
    %c0_21 = arith.constant 0 : index
    %21 = vector.load %arg1[%c3, %c0_20, %c0_21] : memref<27x8x4xbf16, #tpu.memory_space<vmem>>, vector<1x8x4xbf16>
    %22 = vector.shape_cast %21 : vector<1x8x4xbf16> to vector<8x4xbf16>
    %cst_22 = arith.constant dense<0.000000e+00> : vector<8x1024xf32>
    %23 = tpu.matmul %22, %20, %cst_22 {dimension_numbers = #tpu.dot_dimension_numbers<[1], [0], [0], [1], [0, 0, 1, 1], [], []>} : vector<8x4xbf16>, vector<4x1024xbf16>, vector<8x1024xf32> -> vector<8x1024xf32>
    %24 = arith.addf %18, %23 : vector<8x1024xf32>
    %c0_23 = arith.constant 0 : index
    %c0_24 = arith.constant 0 : index
    %c11 = arith.constant 11 : index
    %25 = vector.load %arg2[%c0_23, %c0_24, %c11] : memref<1x4x1280xbf16, #tpu.memory_space<vmem>>, vector<1x4x1024xbf16>
    %26 = vector.shape_cast %25 : vector<1x4x1024xbf16> to vector<4x1024xbf16>
    %c4 = arith.constant 4 : index
    %c0_25 = arith.constant 0 : index
    %c0_26 = arith.constant 0 : index
    %27 = vector.load %arg1[%c4, %c0_25, %c0_26] : memref<27x8x4xbf16, #tpu.memory_space<vmem>>, vector<1x8x4xbf16>
    %28 = vector.shape_cast %27 : vector<1x8x4xbf16> to vector<8x4xbf16>
    %cst_27 = arith.constant dense<0.000000e+00> : vector<8x1024xf32>
    %29 = tpu.matmul %28, %26, %cst_27 {dimension_numbers = #tpu.dot_dimension_numbers<[1], [0], [0], [1], [0, 0, 1, 1], [], []>} : vector<8x4xbf16>, vector<4x1024xbf16>, vector<8x1024xf32> -> vector<8x1024xf32>
    %30 = arith.addf %24, %29 : vector<8x1024xf32>
    %c0_28 = arith.constant 0 : index
    %c0_29 = arith.constant 0 : index
    %c12 = arith.constant 12 : index
    %31 = vector.load %arg2[%c0_28, %c0_29, %c12] : memref<1x4x1280xbf16, #tpu.memory_space<vmem>>, vector<1x4x1024xbf16>
    %32 = vector.shape_cast %31 : vector<1x4x1024xbf16> to vector<4x1024xbf16>
    %c5 = arith.constant 5 : index
    %c0_30 = arith.constant 0 : index
    %c0_31 = arith.constant 0 : index
    %33 = vector.load %arg1[%c5, %c0_30, %c0_31] : memref<27x8x4xbf16, #tpu.memory_space<vmem>>, vector<1x8x4xbf16>
    %34 = vector.shape_cast %33 : vector<1x8x4xbf16> to vector<8x4xbf16>
    %cst_32 = arith.constant dense<0.000000e+00> : vector<8x1024xf32>
    %35 = tpu.matmul %34, %32, %cst_32 {dimension_numbers = #tpu.dot_dimension_numbers<[1], [0], [0], [1], [0, 0, 1, 1], [], []>} : vector<8x4xbf16>, vector<4x1024xbf16>, vector<8x1024xf32> -> vector<8x1024xf32>
    %36 = arith.addf %30, %35 : vector<8x1024xf32>
    %c0_33 = arith.constant 0 : index
    %c0_34 = arith.constant 0 : index
    %c20 = arith.constant 20 : index
    %37 = vector.load %arg2[%c0_33, %c0_34, %c20] : memref<1x4x1280xbf16, #tpu.memory_space<vmem>>, vector<1x4x1024xbf16>
    %38 = vector.shape_cast %37 : vector<1x4x1024xbf16> to vector<4x1024xbf16>
    %c6 = arith.constant 6 : index
    %c0_35 = arith.constant 0 : index
    %c0_36 = arith.constant 0 : index
    %39 = vector.load %arg1[%c6, %c0_35, %c0_36] : memref<27x8x4xbf16, #tpu.memory_space<vmem>>, vector<1x8x4xbf16>
    %40 = vector.shape_cast %39 : vector<1x8x4xbf16> to vector<8x4xbf16>
    %cst_37 = arith.constant dense<0.000000e+00> : vector<8x1024xf32>
    %41 = tpu.matmul %40, %38, %cst_37 {dimension_numbers = #tpu.dot_dimension_numbers<[1], [0], [0], [1], [0, 0, 1, 1], [], []>} : vector<8x4xbf16>, vector<4x1024xbf16>, vector<8x1024xf32> -> vector<8x1024xf32>
    %42 = arith.addf %36, %41 : vector<8x1024xf32>
    %c0_38 = arith.constant 0 : index
    %c0_39 = arith.constant 0 : index
    %c21 = arith.constant 21 : index
    %43 = vector.load %arg2[%c0_38, %c0_39, %c21] : memref<1x4x1280xbf16, #tpu.memory_space<vmem>>, vector<1x4x1024xbf16>
    %44 = vector.shape_cast %43 : vector<1x4x1024xbf16> to vector<4x1024xbf16>
    %c7 = arith.constant 7 : index
    %c0_40 = arith.constant 0 : index
    %c0_41 = arith.constant 0 : index
    %45 = vector.load %arg1[%c7, %c0_40, %c0_41] : memref<27x8x4xbf16, #tpu.memory_space<vmem>>, vector<1x8x4xbf16>
    %46 = vector.shape_cast %45 : vector<1x8x4xbf16> to vector<8x4xbf16>
    %cst_42 = arith.constant dense<0.000000e+00> : vector<8x1024xf32>
    %47 = tpu.matmul %46, %44, %cst_42 {dimension_numbers = #tpu.dot_dimension_numbers<[1], [0], [0], [1], [0, 0, 1, 1], [], []>} : vector<8x4xbf16>, vector<4x1024xbf16>, vector<8x1024xf32> -> vector<8x1024xf32>
    %48 = arith.addf %42, %47 : vector<8x1024xf32>
    %c0_43 = arith.constant 0 : index
    %c0_44 = arith.constant 0 : index
    %c22 = arith.constant 22 : index
    %49 = vector.load %arg2[%c0_43, %c0_44, %c22] : memref<1x4x1280xbf16, #tpu.memory_space<vmem>>, vector<1x4x1024xbf16>
    %50 = vector.shape_cast %49 : vector<1x4x1024xbf16> to vector<4x1024xbf16>
    %c8 = arith.constant 8 : index
    %c0_45 = arith.constant 0 : index
    %c0_46 = arith.constant 0 : index
    %51 = vector.load %arg1[%c8, %c0_45, %c0_46] : memref<27x8x4xbf16, #tpu.memory_space<vmem>>, vector<1x8x4xbf16>
    %52 = vector.shape_cast %51 : vector<1x8x4xbf16> to vector<8x4xbf16>
    %cst_47 = arith.constant dense<0.000000e+00> : vector<8x1024xf32>
    %53 = tpu.matmul %52, %50, %cst_47 {dimension_numbers = #tpu.dot_dimension_numbers<[1], [0], [0], [1], [0, 0, 1, 1], [], []>} : vector<8x4xbf16>, vector<4x1024xbf16>, vector<8x1024xf32> -> vector<8x1024xf32>
    %54 = arith.addf %48, %53 : vector<8x1024xf32>
    %c0_48 = arith.constant 0 : index
    %c0_49 = arith.constant 0 : index
    %c100 = arith.constant 100 : index
    %55 = vector.load %arg2[%c0_48, %c0_49, %c100] : memref<1x4x1280xbf16, #tpu.memory_space<vmem>>, vector<1x4x1024xbf16>
    %56 = vector.shape_cast %55 : vector<1x4x1024xbf16> to vector<4x1024xbf16>
    %c9 = arith.constant 9 : index
    %c0_50 = arith.constant 0 : index
    %c0_51 = arith.constant 0 : index
    %57 = vector.load %arg1[%c9, %c0_50, %c0_51] : memref<27x8x4xbf16, #tpu.memory_space<vmem>>, vector<1x8x4xbf16>
    %58 = vector.shape_cast %57 : vector<1x8x4xbf16> to vector<8x4xbf16>
    %cst_52 = arith.constant dense<0.000000e+00> : vector<8x1024xf32>
    %59 = tpu.matmul %58, %56, %cst_52 {dimension_numbers = #tpu.dot_dimension_numbers<[1], [0], [0], [1], [0, 0, 1, 1], [], []>} : vector<8x4xbf16>, vector<4x1024xbf16>, vector<8x1024xf32> -> vector<8x1024xf32>
    %60 = arith.addf %54, %59 : vector<8x1024xf32>
    %c0_53 = arith.constant 0 : index
    %c0_54 = arith.constant 0 : index
    %c101 = arith.constant 101 : index
    %61 = vector.load %arg2[%c0_53, %c0_54, %c101] : memref<1x4x1280xbf16, #tpu.memory_space<vmem>>, vector<1x4x1024xbf16>
    %62 = vector.shape_cast %61 : vector<1x4x1024xbf16> to vector<4x1024xbf16>
    %c10_55 = arith.constant 10 : index
    %c0_56 = arith.constant 0 : index
    %c0_57 = arith.constant 0 : index
    %63 = vector.load %arg1[%c10_55, %c0_56, %c0_57] : memref<27x8x4xbf16, #tpu.memory_space<vmem>>, vector<1x8x4xbf16>
    %64 = vector.shape_cast %63 : vector<1x8x4xbf16> to vector<8x4xbf16>
    %cst_58 = arith.constant dense<0.000000e+00> : vector<8x1024xf32>
    %65 = tpu.matmul %64, %62, %cst_58 {dimension_numbers = #tpu.dot_dimension_numbers<[1], [0], [0], [1], [0, 0, 1, 1], [], []>} : vector<8x4xbf16>, vector<4x1024xbf16>, vector<8x1024xf32> -> vector<8x1024xf32>
    %66 = arith.addf %60, %65 : vector<8x1024xf32>
    %c0_59 = arith.constant 0 : index
    %c0_60 = arith.constant 0 : index
    %c102 = arith.constant 102 : index
    %67 = vector.load %arg2[%c0_59, %c0_60, %c102] : memref<1x4x1280xbf16, #tpu.memory_space<vmem>>, vector<1x4x1024xbf16>
    %68 = vector.shape_cast %67 : vector<1x4x1024xbf16> to vector<4x1024xbf16>
    %c11_61 = arith.constant 11 : index
    %c0_62 = arith.constant 0 : index
    %c0_63 = arith.constant 0 : index
    %69 = vector.load %arg1[%c11_61, %c0_62, %c0_63] : memref<27x8x4xbf16, #tpu.memory_space<vmem>>, vector<1x8x4xbf16>
    %70 = vector.shape_cast %69 : vector<1x8x4xbf16> to vector<8x4xbf16>
    %cst_64 = arith.constant dense<0.000000e+00> : vector<8x1024xf32>
    %71 = tpu.matmul %70, %68, %cst_64 {dimension_numbers = #tpu.dot_dimension_numbers<[1], [0], [0], [1], [0, 0, 1, 1], [], []>} : vector<8x4xbf16>, vector<4x1024xbf16>, vector<8x1024xf32> -> vector<8x1024xf32>
    %72 = arith.addf %66, %71 : vector<8x1024xf32>
    %c0_65 = arith.constant 0 : index
    %c0_66 = arith.constant 0 : index
    %c110 = arith.constant 110 : index
    %73 = vector.load %arg2[%c0_65, %c0_66, %c110] : memref<1x4x1280xbf16, #tpu.memory_space<vmem>>, vector<1x4x1024xbf16>
    %74 = vector.shape_cast %73 : vector<1x4x1024xbf16> to vector<4x1024xbf16>
    %c12_67 = arith.constant 12 : index
    %c0_68 = arith.constant 0 : index
    %c0_69 = arith.constant 0 : index
    %75 = vector.load %arg1[%c12_67, %c0_68, %c0_69] : memref<27x8x4xbf16, #tpu.memory_space<vmem>>, vector<1x8x4xbf16>
    %76 = vector.shape_cast %75 : vector<1x8x4xbf16> to vector<8x4xbf16>
    %cst_70 = arith.constant dense<0.000000e+00> : vector<8x1024xf32>
    %77 = tpu.matmul %76, %74, %cst_70 {dimension_numbers = #tpu.dot_dimension_numbers<[1], [0], [0], [1], [0, 0, 1, 1], [], []>} : vector<8x4xbf16>, vector<4x1024xbf16>, vector<8x1024xf32> -> vector<8x1024xf32>
    %78 = arith.addf %72, %77 : vector<8x1024xf32>
    %c0_71 = arith.constant 0 : index
    %c0_72 = arith.constant 0 : index
    %c111 = arith.constant 111 : index
    %79 = vector.load %arg2[%c0_71, %c0_72, %c111] : memref<1x4x1280xbf16, #tpu.memory_space<vmem>>, vector<1x4x1024xbf16>
    %80 = vector.shape_cast %79 : vector<1x4x1024xbf16> to vector<4x1024xbf16>
    %c13 = arith.constant 13 : index
    %c0_73 = arith.constant 0 : index
    %c0_74 = arith.constant 0 : index
    %81 = vector.load %arg1[%c13, %c0_73, %c0_74] : memref<27x8x4xbf16, #tpu.memory_space<vmem>>, vector<1x8x4xbf16>
    %82 = vector.shape_cast %81 : vector<1x8x4xbf16> to vector<8x4xbf16>
    %cst_75 = arith.constant dense<0.000000e+00> : vector<8x1024xf32>
    %83 = tpu.matmul %82, %80, %cst_75 {dimension_numbers = #tpu.dot_dimension_numbers<[1], [0], [0], [1], [0, 0, 1, 1], [], []>} : vector<8x4xbf16>, vector<4x1024xbf16>, vector<8x1024xf32> -> vector<8x1024xf32>
    %84 = arith.addf %78, %83 : vector<8x1024xf32>
    %c0_76 = arith.constant 0 : index
    %c0_77 = arith.constant 0 : index
    %c112 = arith.constant 112 : index
    %85 = vector.load %arg2[%c0_76, %c0_77, %c112] : memref<1x4x1280xbf16, #tpu.memory_space<vmem>>, vector<1x4x1024xbf16>
    %86 = vector.shape_cast %85 : vector<1x4x1024xbf16> to vector<4x1024xbf16>
    %c14 = arith.constant 14 : index
    %c0_78 = arith.constant 0 : index
    %c0_79 = arith.constant 0 : index
    %87 = vector.load %arg1[%c14, %c0_78, %c0_79] : memref<27x8x4xbf16, #tpu.memory_space<vmem>>, vector<1x8x4xbf16>
    %88 = vector.shape_cast %87 : vector<1x8x4xbf16> to vector<8x4xbf16>
    %cst_80 = arith.constant dense<0.000000e+00> : vector<8x1024xf32>
    %89 = tpu.matmul %88, %86, %cst_80 {dimension_numbers = #tpu.dot_dimension_numbers<[1], [0], [0], [1], [0, 0, 1, 1], [], []>} : vector<8x4xbf16>, vector<4x1024xbf16>, vector<8x1024xf32> -> vector<8x1024xf32>
    %90 = arith.addf %84, %89 : vector<8x1024xf32>
    %c0_81 = arith.constant 0 : index
    %c0_82 = arith.constant 0 : index
    %c120 = arith.constant 120 : index
    %91 = vector.load %arg2[%c0_81, %c0_82, %c120] : memref<1x4x1280xbf16, #tpu.memory_space<vmem>>, vector<1x4x1024xbf16>
    %92 = vector.shape_cast %91 : vector<1x4x1024xbf16> to vector<4x1024xbf16>
    %c15 = arith.constant 15 : index
    %c0_83 = arith.constant 0 : index
    %c0_84 = arith.constant 0 : index
    %93 = vector.load %arg1[%c15, %c0_83, %c0_84] : memref<27x8x4xbf16, #tpu.memory_space<vmem>>, vector<1x8x4xbf16>
    %94 = vector.shape_cast %93 : vector<1x8x4xbf16> to vector<8x4xbf16>
    %cst_85 = arith.constant dense<0.000000e+00> : vector<8x1024xf32>
    %95 = tpu.matmul %94, %92, %cst_85 {dimension_numbers = #tpu.dot_dimension_numbers<[1], [0], [0], [1], [0, 0, 1, 1], [], []>} : vector<8x4xbf16>, vector<4x1024xbf16>, vector<8x1024xf32> -> vector<8x1024xf32>
    %96 = arith.addf %90, %95 : vector<8x1024xf32>
    %c0_86 = arith.constant 0 : index
    %c0_87 = arith.constant 0 : index
    %c121 = arith.constant 121 : index
    %97 = vector.load %arg2[%c0_86, %c0_87, %c121] : memref<1x4x1280xbf16, #tpu.memory_space<vmem>>, vector<1x4x1024xbf16>
    %98 = vector.shape_cast %97 : vector<1x4x1024xbf16> to vector<4x1024xbf16>
    %c16 = arith.constant 16 : index
    %c0_88 = arith.constant 0 : index
    %c0_89 = arith.constant 0 : index
    %99 = vector.load %arg1[%c16, %c0_88, %c0_89] : memref<27x8x4xbf16, #tpu.memory_space<vmem>>, vector<1x8x4xbf16>
    %100 = vector.shape_cast %99 : vector<1x8x4xbf16> to vector<8x4xbf16>
    %cst_90 = arith.constant dense<0.000000e+00> : vector<8x1024xf32>
    %101 = tpu.matmul %100, %98, %cst_90 {dimension_numbers = #tpu.dot_dimension_numbers<[1], [0], [0], [1], [0, 0, 1, 1], [], []>} : vector<8x4xbf16>, vector<4x1024xbf16>, vector<8x1024xf32> -> vector<8x1024xf32>
    %102 = arith.addf %96, %101 : vector<8x1024xf32>
    %c0_91 = arith.constant 0 : index
    %c0_92 = arith.constant 0 : index
    %c122 = arith.constant 122 : index
    %103 = vector.load %arg2[%c0_91, %c0_92, %c122] : memref<1x4x1280xbf16, #tpu.memory_space<vmem>>, vector<1x4x1024xbf16>
    %104 = vector.shape_cast %103 : vector<1x4x1024xbf16> to vector<4x1024xbf16>
    %c17 = arith.constant 17 : index
    %c0_93 = arith.constant 0 : index
    %c0_94 = arith.constant 0 : index
    %105 = vector.load %arg1[%c17, %c0_93, %c0_94] : memref<27x8x4xbf16, #tpu.memory_space<vmem>>, vector<1x8x4xbf16>
    %106 = vector.shape_cast %105 : vector<1x8x4xbf16> to vector<8x4xbf16>
    %cst_95 = arith.constant dense<0.000000e+00> : vector<8x1024xf32>
    %107 = tpu.matmul %106, %104, %cst_95 {dimension_numbers = #tpu.dot_dimension_numbers<[1], [0], [0], [1], [0, 0, 1, 1], [], []>} : vector<8x4xbf16>, vector<4x1024xbf16>, vector<8x1024xf32> -> vector<8x1024xf32>
    %108 = arith.addf %102, %107 : vector<8x1024xf32>
    %c0_96 = arith.constant 0 : index
    %c0_97 = arith.constant 0 : index
    %c200 = arith.constant 200 : index
    %109 = vector.load %arg2[%c0_96, %c0_97, %c200] : memref<1x4x1280xbf16, #tpu.memory_space<vmem>>, vector<1x4x1024xbf16>
    %110 = vector.shape_cast %109 : vector<1x4x1024xbf16> to vector<4x1024xbf16>
    %c18 = arith.constant 18 : index
    %c0_98 = arith.constant 0 : index
    %c0_99 = arith.constant 0 : index
    %111 = vector.load %arg1[%c18, %c0_98, %c0_99] : memref<27x8x4xbf16, #tpu.memory_space<vmem>>, vector<1x8x4xbf16>
    %112 = vector.shape_cast %111 : vector<1x8x4xbf16> to vector<8x4xbf16>
    %cst_100 = arith.constant dense<0.000000e+00> : vector<8x1024xf32>
    %113 = tpu.matmul %112, %110, %cst_100 {dimension_numbers = #tpu.dot_dimension_numbers<[1], [0], [0], [1], [0, 0, 1, 1], [], []>} : vector<8x4xbf16>, vector<4x1024xbf16>, vector<8x1024xf32> -> vector<8x1024xf32>
    %114 = arith.addf %108, %113 : vector<8x1024xf32>
    %c0_101 = arith.constant 0 : index
    %c0_102 = arith.constant 0 : index
    %c201 = arith.constant 201 : index
    %115 = vector.load %arg2[%c0_101, %c0_102, %c201] : memref<1x4x1280xbf16, #tpu.memory_space<vmem>>, vector<1x4x1024xbf16>
    %116 = vector.shape_cast %115 : vector<1x4x1024xbf16> to vector<4x1024xbf16>
    %c19 = arith.constant 19 : index
    %c0_103 = arith.constant 0 : index
    %c0_104 = arith.constant 0 : index
    %117 = vector.load %arg1[%c19, %c0_103, %c0_104] : memref<27x8x4xbf16, #tpu.memory_space<vmem>>, vector<1x8x4xbf16>
    %118 = vector.shape_cast %117 : vector<1x8x4xbf16> to vector<8x4xbf16>
    %cst_105 = arith.constant dense<0.000000e+00> : vector<8x1024xf32>
    %119 = tpu.matmul %118, %116, %cst_105 {dimension_numbers = #tpu.dot_dimension_numbers<[1], [0], [0], [1], [0, 0, 1, 1], [], []>} : vector<8x4xbf16>, vector<4x1024xbf16>, vector<8x1024xf32> -> vector<8x1024xf32>
    %120 = arith.addf %114, %119 : vector<8x1024xf32>
    %c0_106 = arith.constant 0 : index
    %c0_107 = arith.constant 0 : index
    %c202 = arith.constant 202 : index
    %121 = vector.load %arg2[%c0_106, %c0_107, %c202] : memref<1x4x1280xbf16, #tpu.memory_space<vmem>>, vector<1x4x1024xbf16>
    %122 = vector.shape_cast %121 : vector<1x4x1024xbf16> to vector<4x1024xbf16>
    %c20_108 = arith.constant 20 : index
    %c0_109 = arith.constant 0 : index
    %c0_110 = arith.constant 0 : index
    %123 = vector.load %arg1[%c20_108, %c0_109, %c0_110] : memref<27x8x4xbf16, #tpu.memory_space<vmem>>, vector<1x8x4xbf16>
    %124 = vector.shape_cast %123 : vector<1x8x4xbf16> to vector<8x4xbf16>
    %cst_111 = arith.constant dense<0.000000e+00> : vector<8x1024xf32>
    %125 = tpu.matmul %124, %122, %cst_111 {dimension_numbers = #tpu.dot_dimension_numbers<[1], [0], [0], [1], [0, 0, 1, 1], [], []>} : vector<8x4xbf16>, vector<4x1024xbf16>, vector<8x1024xf32> -> vector<8x1024xf32>
    %126 = arith.addf %120, %125 : vector<8x1024xf32>
    %c0_112 = arith.constant 0 : index
    %c0_113 = arith.constant 0 : index
    %c210 = arith.constant 210 : index
    %127 = vector.load %arg2[%c0_112, %c0_113, %c210] : memref<1x4x1280xbf16, #tpu.memory_space<vmem>>, vector<1x4x1024xbf16>
    %128 = vector.shape_cast %127 : vector<1x4x1024xbf16> to vector<4x1024xbf16>
    %c21_114 = arith.constant 21 : index
    %c0_115 = arith.constant 0 : index
    %c0_116 = arith.constant 0 : index
    %129 = vector.load %arg1[%c21_114, %c0_115, %c0_116] : memref<27x8x4xbf16, #tpu.memory_space<vmem>>, vector<1x8x4xbf16>
    %130 = vector.shape_cast %129 : vector<1x8x4xbf16> to vector<8x4xbf16>
    %cst_117 = arith.constant dense<0.000000e+00> : vector<8x1024xf32>
    %131 = tpu.matmul %130, %128, %cst_117 {dimension_numbers = #tpu.dot_dimension_numbers<[1], [0], [0], [1], [0, 0, 1, 1], [], []>} : vector<8x4xbf16>, vector<4x1024xbf16>, vector<8x1024xf32> -> vector<8x1024xf32>
    %132 = arith.addf %126, %131 : vector<8x1024xf32>
    %c0_118 = arith.constant 0 : index
    %c0_119 = arith.constant 0 : index
    %c211 = arith.constant 211 : index
    %133 = vector.load %arg2[%c0_118, %c0_119, %c211] : memref<1x4x1280xbf16, #tpu.memory_space<vmem>>, vector<1x4x1024xbf16>
    %134 = vector.shape_cast %133 : vector<1x4x1024xbf16> to vector<4x1024xbf16>
    %c22_120 = arith.constant 22 : index
    %c0_121 = arith.constant 0 : index
    %c0_122 = arith.constant 0 : index
    %135 = vector.load %arg1[%c22_120, %c0_121, %c0_122] : memref<27x8x4xbf16, #tpu.memory_space<vmem>>, vector<1x8x4xbf16>
    %136 = vector.shape_cast %135 : vector<1x8x4xbf16> to vector<8x4xbf16>
    %cst_123 = arith.constant dense<0.000000e+00> : vector<8x1024xf32>
    %137 = tpu.matmul %136, %134, %cst_123 {dimension_numbers = #tpu.dot_dimension_numbers<[1], [0], [0], [1], [0, 0, 1, 1], [], []>} : vector<8x4xbf16>, vector<4x1024xbf16>, vector<8x1024xf32> -> vector<8x1024xf32>
    %138 = arith.addf %132, %137 : vector<8x1024xf32>
    %c0_124 = arith.constant 0 : index
    %c0_125 = arith.constant 0 : index
    %c212 = arith.constant 212 : index
    %139 = vector.load %arg2[%c0_124, %c0_125, %c212] : memref<1x4x1280xbf16, #tpu.memory_space<vmem>>, vector<1x4x1024xbf16>
    %140 = vector.shape_cast %139 : vector<1x4x1024xbf16> to vector<4x1024xbf16>
    %c23 = arith.constant 23 : index
    %c0_126 = arith.constant 0 : index
    %c0_127 = arith.constant 0 : index
    %141 = vector.load %arg1[%c23, %c0_126, %c0_127] : memref<27x8x4xbf16, #tpu.memory_space<vmem>>, vector<1x8x4xbf16>
    %142 = vector.shape_cast %141 : vector<1x8x4xbf16> to vector<8x4xbf16>
    %cst_128 = arith.constant dense<0.000000e+00> : vector<8x1024xf32>
    %143 = tpu.matmul %142, %140, %cst_128 {dimension_numbers = #tpu.dot_dimension_numbers<[1], [0], [0], [1], [0, 0, 1, 1], [], []>} : vector<8x4xbf16>, vector<4x1024xbf16>, vector<8x1024xf32> -> vector<8x1024xf32>
    %144 = arith.addf %138, %143 : vector<8x1024xf32>
    %c0_129 = arith.constant 0 : index
    %c0_130 = arith.constant 0 : index
    %c220 = arith.constant 220 : index
    %145 = vector.load %arg2[%c0_129, %c0_130, %c220] : memref<1x4x1280xbf16, #tpu.memory_space<vmem>>, vector<1x4x1024xbf16>
    %146 = vector.shape_cast %145 : vector<1x4x1024xbf16> to vector<4x1024xbf16>
    %c24 = arith.constant 24 : index
    %c0_131 = arith.constant 0 : index
    %c0_132 = arith.constant 0 : index
    %147 = vector.load %arg1[%c24, %c0_131, %c0_132] : memref<27x8x4xbf16, #tpu.memory_space<vmem>>, vector<1x8x4xbf16>
    %148 = vector.shape_cast %147 : vector<1x8x4xbf16> to vector<8x4xbf16>
    %cst_133 = arith.constant dense<0.000000e+00> : vector<8x1024xf32>
    %149 = tpu.matmul %148, %146, %cst_133 {dimension_numbers = #tpu.dot_dimension_numbers<[1], [0], [0], [1], [0, 0, 1, 1], [], []>} : vector<8x4xbf16>, vector<4x1024xbf16>, vector<8x1024xf32> -> vector<8x1024xf32>
    %150 = arith.addf %144, %149 : vector<8x1024xf32>
    %c0_134 = arith.constant 0 : index
    %c0_135 = arith.constant 0 : index
    %c221 = arith.constant 221 : index
    %151 = vector.load %arg2[%c0_134, %c0_135, %c221] : memref<1x4x1280xbf16, #tpu.memory_space<vmem>>, vector<1x4x1024xbf16>
    %152 = vector.shape_cast %151 : vector<1x4x1024xbf16> to vector<4x1024xbf16>
    %c25 = arith.constant 25 : index
    %c0_136 = arith.constant 0 : index
    %c0_137 = arith.constant 0 : index
    %153 = vector.load %arg1[%c25, %c0_136, %c0_137] : memref<27x8x4xbf16, #tpu.memory_space<vmem>>, vector<1x8x4xbf16>
    %154 = vector.shape_cast %153 : vector<1x8x4xbf16> to vector<8x4xbf16>
    %cst_138 = arith.constant dense<0.000000e+00> : vector<8x1024xf32>
    %155 = tpu.matmul %154, %152, %cst_138 {dimension_numbers = #tpu.dot_dimension_numbers<[1], [0], [0], [1], [0, 0, 1, 1], [], []>} : vector<8x4xbf16>, vector<4x1024xbf16>, vector<8x1024xf32> -> vector<8x1024xf32>
    %156 = arith.addf %150, %155 : vector<8x1024xf32>
    %c0_139 = arith.constant 0 : index
    %c0_140 = arith.constant 0 : index
    %c222 = arith.constant 222 : index
    %157 = vector.load %arg2[%c0_139, %c0_140, %c222] : memref<1x4x1280xbf16, #tpu.memory_space<vmem>>, vector<1x4x1024xbf16>
    %158 = vector.shape_cast %157 : vector<1x4x1024xbf16> to vector<4x1024xbf16>
    %c26 = arith.constant 26 : index
    %c0_141 = arith.constant 0 : index
    %c0_142 = arith.constant 0 : index
    %159 = vector.load %arg1[%c26, %c0_141, %c0_142] : memref<27x8x4xbf16, #tpu.memory_space<vmem>>, vector<1x8x4xbf16>
    %160 = vector.shape_cast %159 : vector<1x8x4xbf16> to vector<8x4xbf16>
    %cst_143 = arith.constant dense<0.000000e+00> : vector<8x1024xf32>
    %161 = tpu.matmul %160, %158, %cst_143 {dimension_numbers = #tpu.dot_dimension_numbers<[1], [0], [0], [1], [0, 0, 1, 1], [], []>} : vector<8x4xbf16>, vector<4x1024xbf16>, vector<8x1024xf32> -> vector<8x1024xf32>
    %162 = arith.addf %156, %161 : vector<8x1024xf32>
    %c0_144 = arith.constant 0 : index
    %c0_145 = arith.constant 0 : index
    %163 = vector.load %arg3[%c0_144, %c0_145] : memref<1x1024xf32, #tpu.memory_space<vmem>>, vector<1x1024xf32>
    %164 = vector.broadcast %163 : vector<1x1024xf32> to vector<8x1024xf32>
    %165 = arith.mulf %162, %164 : vector<8x1024xf32>
    %166 = arith.truncf %165 : vector<8x1024xf32> to vector<8x1024xbf16>
    %c0_146 = arith.constant 0 : index
    %c0_147 = arith.constant 0 : index
    %c0_148 = arith.constant 0 : index
    %167 = vector.load %arg4[%c0_146, %c0_147, %c0_148] : memref<1x8x1024xbf16, #tpu.memory_space<vmem>>, vector<1x8x1024xbf16>
    %168 = vector.shape_cast %167 : vector<1x8x1024xbf16> to vector<8x1024xbf16>
    %169 = vector.shape_cast %166 : vector<8x1024xbf16> to vector<1x8x1024xbf16>
    tpu.vector_store %arg4[%c0_146, %c0_147, %c0_148], %169 {strides = array<i32>} : memref<1x8x1024xbf16, #tpu.memory_space<vmem>>, vector<1x8x1024xbf16>,
    %cst_149 = arith.constant dense<0.000000e+00> : vector<8xf32>
    %170 = vector.multi_reduction <add>, %165, %cst_149 [1] : vector<8x1024xf32> to vector<8xf32>
    %171 = vector.shape_cast %170 : vector<8xf32> to vector<8x1xf32>
    %172 = arith.mulf %165, %165 : vector<8x1024xf32>
    %cst_150 = arith.constant dense<0.000000e+00> : vector<8xf32>
    %173 = vector.multi_reduction <add>, %172, %cst_150 [1] : vector<8x1024xf32> to vector<8xf32>
    %174 = vector.shape_cast %173 : vector<8xf32> to vector<8x1xf32>
    %175 = vector.shape_cast %171 : vector<8x1xf32> to vector<8x1xf32>
    %176 = vector.broadcast %175 : vector<8x1xf32> to vector<8x128xf32>
    %c0_151 = arith.constant 0 : index
    %c0_152 = arith.constant 0 : index
    %c0_153 = arith.constant 0 : index
    %177 = vector.load %arg5[%c0_151, %c0_152, %c0_153] : memref<1x8x128xf32, #tpu.memory_space<vmem>>, vector<1x8x128xf32>
    %178 = vector.shape_cast %177 : vector<1x8x128xf32> to vector<8x128xf32>
    %179 = vector.shape_cast %176 : vector<8x128xf32> to vector<1x8x128xf32>
    tpu.vector_store %arg5[%c0_151, %c0_152, %c0_153], %179 {strides = array<i32>} : memref<1x8x128xf32, #tpu.memory_space<vmem>>, vector<1x8x128xf32>,
    %180 = vector.shape_cast %174 : vector<8x1xf32> to vector<8x1xf32>
    %181 = vector.broadcast %180 : vector<8x1xf32> to vector<8x128xf32>
    %c0_154 = arith.constant 0 : index
    %c0_155 = arith.constant 0 : index
    %c0_156 = arith.constant 0 : index
    %182 = vector.load %arg6[%c0_154, %c0_155, %c0_156] : memref<1x8x128xf32, #tpu.memory_space<vmem>>, vector<1x8x128xf32>
    %183 = vector.shape_cast %182 : vector<1x8x128xf32> to vector<8x128xf32>
    %184 = vector.shape_cast %181 : vector<8x128xf32> to vector<1x8x128xf32>
    tpu.vector_store %arg6[%c0_154, %c0_155, %c0_156], %184 {strides = array<i32>} : memref<1x8x128xf32, #tpu.memory_space<vmem>>, vector<1x8x128xf32>,
    return
  }
  func.func @transform_0(%arg0: i32) -> (i32, i32, i32) {
    %c0_i32 = arith.constant 0 : i32
    %c0_i32_0 = arith.constant 0 : i32
    %c0_i32_1 = arith.constant 0 : i32
    %c0_i32_2 = arith.constant 0 : i32
    return %c0_i32, %c0_i32_0, %c0_i32_1 : i32, i32, i32
  }
  func.func @transform_1(%arg0: i32) -> (i32, i32, i32) {
    %c0_i32 = arith.constant 0 : i32
    %c0_i32_0 = arith.constant 0 : i32
    %c0_i32_1 = arith.constant 0 : i32
    return %arg0, %c0_i32, %c0_i32_0 : i32, i32, i32
  }
  func.func @transform_2(%arg0: i32) -> (i32, i32) {
    %c0_i32 = arith.constant 0 : i32
    %c0_i32_0 = arith.constant 0 : i32
    %c0_i32_1 = arith.constant 0 : i32
    return %c0_i32, %c0_i32_0 : i32, i32
  }
  func.func @transform_3(%arg0: i32) -> (i32, i32, i32) {
    %c0_i32 = arith.constant 0 : i32
    %c0_i32_0 = arith.constant 0 : i32
    %c0_i32_1 = arith.constant 0 : i32
    return %arg0, %c0_i32, %c0_i32_0 : i32, i32, i32
  }
  func.func @transform_4(%arg0: i32) -> (i32, i32, i32) {
    %c0_i32 = arith.constant 0 : i32
    %c0_i32_0 = arith.constant 0 : i32
    %c0_i32_1 = arith.constant 0 : i32
    return %arg0, %c0_i32, %c0_i32_0 : i32, i32, i32
  }
  func.func @transform_5(%arg0: i32) -> (i32, i32, i32) {
    %c0_i32 = arith.constant 0 : i32
    %c0_i32_0 = arith.constant 0 : i32
    %c0_i32_1 = arith.constant 0 : i32
    return %arg0, %c0_i32, %c0_i32_0 : i32, i32, i32
  }
}

module attributes {stable_mosaic.version = 11 : i64} {
  func.func @_bn_relu_kernel(%arg0: i32, %arg1: memref<8x1xf32, #tpu.memory_space<vmem>>, %arg2: memref<8x1xf32, #tpu.memory_space<vmem>>, %arg3: memref<1x8x1024xbf16, #tpu.memory_space<vmem>>, %arg4: memref<1x8x1024xf32, #tpu.memory_space<vmem>>) attributes {dimension_semantics = [#tpu.dimension_semantics<parallel>], iteration_bounds = array<i64: 2>, scalar_prefetch = 0 : i64, scratch_operands = 0 : i64, tpu.core_type = #tpu.core_type<tc>, window_params = [{pipeline_mode = #tpu.pipeline_mode<synchronous>, transform_indices = @transform_0, window_bounds = array<i64: 8, 1>}, {pipeline_mode = #tpu.pipeline_mode<synchronous>, transform_indices = @transform_1, window_bounds = array<i64: 8, 1>}, {transform_indices = @transform_2, window_bounds = array<i64: 1, 8, 1024>}, {transform_indices = @transform_3, window_bounds = array<i64: 1, 8, 1024>}]} {
    %c0 = arith.constant 0 : index
    %c0_0 = arith.constant 0 : index
    %c0_1 = arith.constant 0 : index
    %0 = vector.load %arg3[%c0, %c0_0, %c0_1] : memref<1x8x1024xbf16, #tpu.memory_space<vmem>>, vector<1x8x1024xbf16>
    %1 = vector.shape_cast %0 : vector<1x8x1024xbf16> to vector<8x1024xbf16>
    %2 = arith.extf %1 : vector<8x1024xbf16> to vector<8x1024xf32>
    %c0_2 = arith.constant 0 : index
    %c0_3 = arith.constant 0 : index
    %3 = vector.load %arg1[%c0_2, %c0_3] : memref<8x1xf32, #tpu.memory_space<vmem>>, vector<8x1xf32>
    %4 = vector.broadcast %3 : vector<8x1xf32> to vector<8x1024xf32>
    %5 = arith.mulf %2, %4 : vector<8x1024xf32>
    %c0_4 = arith.constant 0 : index
    %c0_5 = arith.constant 0 : index
    %6 = vector.load %arg2[%c0_4, %c0_5] : memref<8x1xf32, #tpu.memory_space<vmem>>, vector<8x1xf32>
    %7 = vector.broadcast %6 : vector<8x1xf32> to vector<8x1024xf32>
    %8 = arith.addf %5, %7 : vector<8x1024xf32>
    %cst = arith.constant 0.000000e+00 : f32
    %9 = vector.broadcast %cst : f32 to vector<8x1024xf32>
    %10 = arith.maximumf %8, %9 : vector<8x1024xf32>
    %c0_6 = arith.constant 0 : index
    %c0_7 = arith.constant 0 : index
    %c0_8 = arith.constant 0 : index
    %11 = vector.load %arg4[%c0_6, %c0_7, %c0_8] : memref<1x8x1024xf32, #tpu.memory_space<vmem>>, vector<1x8x1024xf32>
    %12 = vector.shape_cast %11 : vector<1x8x1024xf32> to vector<8x1024xf32>
    %13 = vector.shape_cast %10 : vector<8x1024xf32> to vector<1x8x1024xf32>
    tpu.vector_store %arg4[%c0_6, %c0_7, %c0_8], %13 {strides = array<i32>} : memref<1x8x1024xf32, #tpu.memory_space<vmem>>, vector<1x8x1024xf32>,
    return
  }
  func.func @transform_0(%arg0: i32) -> (i32, i32) {
    %c0_i32 = arith.constant 0 : i32
    %c0_i32_0 = arith.constant 0 : i32
    %c0_i32_1 = arith.constant 0 : i32
    return %c0_i32, %c0_i32_0 : i32, i32
  }
  func.func @transform_1(%arg0: i32) -> (i32, i32) {
    %c0_i32 = arith.constant 0 : i32
    %c0_i32_0 = arith.constant 0 : i32
    %c0_i32_1 = arith.constant 0 : i32
    return %c0_i32, %c0_i32_0 : i32, i32
  }
  func.func @transform_2(%arg0: i32) -> (i32, i32, i32) {
    %c0_i32 = arith.constant 0 : i32
    %c0_i32_0 = arith.constant 0 : i32
    %c0_i32_1 = arith.constant 0 : i32
    return %arg0, %c0_i32, %c0_i32_0 : i32, i32, i32
  }
  func.func @transform_3(%arg0: i32) -> (i32, i32, i32) {
    %c0_i32 = arith.constant 0 : i32
    %c0_i32_0 = arith.constant 0 : i32
    %c0_i32_1 = arith.constant 0 : i32
    return %arg0, %c0_i32, %c0_i32_0 : i32, i32, i32
  }
}

</mosaic_0001>

<llo_original>
// kernel: relation_conv_block.3
$region0: #{relation_conv_block.3}
  #allocation0 [shape = 'u32[]', space=smem, size = 0x4, offset = 0x4, fixed_abs, tag = 'smem constant byte address 0x4 - core index']
  #allocation1 [shape = 'u32[144,128]{1,0:T(1,128)}', space=vmem, size = 0x12000, scoped, tag = 'internal scratch']
  %s0 = inlined_call_operand.vmem [shape: f32[8,1], index: 0, kind: input, shape index: {}]
  %s1 = inlined_call_operand.vmem [shape: f32[8,1], index: 1, kind: input, shape index: {}]
  %s2 = inlined_call_operand.vmem [shape: bf16[2,8,1024], index: 2, kind: input, shape index: {}]
  %s3 = inlined_call_operand.vmem [shape: f32[2,8,1024], index: 3, kind: output, shape index: {}]
  %s4 = sld [smem:[#allocation0]]
  $region45: #{relation_conv_block.3} parent=0
    _
  %s6 = ssub.s32 1, %s4
  %s7 = scalar_select 0, %s6, %s4
  loop: start=0, step=1, limit=4
  $region2: #{relation_conv_block.3} parent=0 // loop_pre_header
    _
  $region3: #{relation_conv_block.3} parent=0 // loop_header
    %s9 = sphi 0, %s13
    %p10 = scmp.ge.s32.totalorder %s9, 4
    %s17 = sphi 0, %s17
    %s19 = sphi 0, %s17
    %s20 = sphi 0, %s19
    %s34 = sphi 0, %s20
    %s38 = sphi 0, %s38
    %s40 = sphi 0, %s38
    %s41 = sphi 0, %s40
    %s55 = sphi 0, %s41
    %s61 = sphi 0, %s63
    %s64 = sphi 0, %s61
    %s65 = sphi 0, %s64
    %s81 = sphi 0, %s65
    %s87 = sphi 0, %s89
    %s90 = sphi 0, %s87
    %s91 = sphi 0, %s90
    %s107 = sphi 0, %s91
  $region4: #{relation_conv_block.3} parent=0 // loop_header_branch
    %12 = sbr.rel (%p10) target = $region8
  $region5: #{relation_conv_block.3} parent=0 // loop_body
    %s14 = ssub.s32 %s9, 1
    %s15 = ssub.s32 %s9, 2
    %s16 = sadd.s32 %s9, 1
    %s18 = sadd.s32 %s17, 1
    %p21 = scmp.eq.s32.totalorder %s9, 1
    %p22 = scmp.ne.s32.totalorder %s17, %s19
    %p23 = scmp.eq.s32.totalorder %s9, 0
    %p24 = por %p22, %p23
    %p25 = scmp.ne.s32.totalorder %s17, %s19
    %p26 = scmp.eq.s32.totalorder %s14, 1
    %p27 = por %p25, %p26
    %p28 = scmp.ne.s32.totalorder %s19, %s20
    %p29 = scmp.eq.s32.totalorder %s14, 0
    %p30 = por %p28, %p29
    %p31 = scmp.ne.s32.totalorder %s19, %s20
    %p32 = scmp.eq.s32.totalorder %s15, 1
    %p33 = por %p31, %p32
    %p35 = scmp.ne.s32.totalorder %s20, %s34
    %p36 = scmp.eq.s32.totalorder %s15, 0
    %p37 = por %p35, %p36
    %s39 = sadd.s32 %s38, 1
    %p42 = scmp.eq.s32.totalorder %s9, 1
    %p43 = scmp.ne.s32.totalorder %s38, %s40
    %p44 = scmp.eq.s32.totalorder %s9, 0
    %p45 = por %p43, %p44
    %p46 = scmp.ne.s32.totalorder %s38, %s40
    %p47 = scmp.eq.s32.totalorder %s14, 1
    %p48 = por %p46, %p47
    %p49 = scmp.ne.s32.totalorder %s40, %s41
    %p50 = scmp.eq.s32.totalorder %s14, 0
    %p51 = por %p49, %p50
    %p52 = scmp.ne.s32.totalorder %s40, %s41
    %p53 = scmp.eq.s32.totalorder %s15, 1
    %p54 = por %p52, %p53
    %p56 = scmp.ne.s32.totalorder %s41, %s55
    %p57 = scmp.eq.s32.totalorder %s15, 0
    %p58 = por %p56, %p57
    %s59 = ssub.s32 %s9, %s16
    %p60 = scmp.eq.s32.totalorder %s59, 0
    %s62 = sadd.s32 %s61, 1
    %s63 = scalar_select %p60, %s61, %s62
    %p66 = pneg %p60
    %p67 = scmp.eq.s32.totalorder %s9, 1
    %p68 = por %p66, %p67
    %p69 = scmp.ne.s32.totalorder %s61, %s64
    %p70 = scmp.eq.s32.totalorder %s9, 0
    %p71 = por %p69, %p70
    %p72 = scmp.ne.s32.totalorder %s61, %s64
    %p73 = scmp.eq.s32.totalorder %s14, 1
    %p74 = por %p72, %p73
    %p75 = scmp.ne.s32.totalorder %s64, %s65
    %p76 = scmp.eq.s32.totalorder %s14, 0
    %p77 = por %p75, %p76
    %p78 = scmp.ne.s32.totalorder %s64, %s65
    %p79 = scmp.eq.s32.totalorder %s15, 1
    %p80 = por %p78, %p79
    %p82 = scmp.ne.s32.totalorder %s65, %s81
    %p83 = scmp.eq.s32.totalorder %s15, 0
    %p84 = por %p82, %p83
    %s85 = ssub.s32 %s9, %s16
    %p86 = scmp.eq.s32.totalorder %s85, 0
    %s88 = sadd.s32 %s87, 1
    %s89 = scalar_select %p86, %s87, %s88
    %p92 = pneg %p86
    %p93 = scmp.eq.s32.totalorder %s9, 1
    %p94 = por %p92, %p93
    %p95 = scmp.ne.s32.totalorder %s87, %s90
    %p96 = scmp.eq.s32.totalorder %s9, 0
    %p97 = por %p95, %p96
    %p98 = scmp.ne.s32.totalorder %s87, %s90
    %p99 = scmp.eq.s32.totalorder %s14, 1
    %p100 = por %p98, %p99
    %p101 = scmp.ne.s32.totalorder %s90, %s91
    %p102 = scmp.eq.s32.totalorder %s14, 0
    %p103 = por %p101, %p102
    %p104 = scmp.ne.s32.totalorder %s90, %s91
    %p105 = scmp.eq.s32.totalorder %s15, 1
    %p106 = por %p104, %p105
    %p108 = scmp.ne.s32.totalorder %s91, %s107
    %p109 = scmp.eq.s32.totalorder %s15, 0
    %p110 = por %p108, %p109
    %p111 = scmp.le.s32.totalorder 1, %s9
    %p112 = scmp.lt.s32.totalorder %s9, 3
    %p113 = pnand %p111, %p112
    %p114 = pneg %p113
    // Predicated region
    $region9: #{relation_conv_block.3} parent=5 // pred_check
      _
    $region10: #{relation_conv_block.3} parent=5 // pred_check_branch
      %116 = sbr.rel (%p113) target = $region12
    $region11: #{relation_conv_block.3} parent=5 // pred_region
      %s117 = ssub.s32 %s9, 1
      // Predicated region
      $region13: #{relation_conv_block.3} parent=11 // pred_check
        %p118 = pneg %p30
      $region14: #{relation_conv_block.3} parent=11 // pred_check_branch
        %120 = sbr.rel (%p118) target = $region16
      $region15: #{relation_conv_block.3} parent=11 // pred_region
        _
      $region16: #{relation_conv_block.3} parent=11 // pred_fallthru
        _
      // Predicated region
      $region17: #{relation_conv_block.3} parent=11 // pred_check
        %p121 = pneg %p51
      $region18: #{relation_conv_block.3} parent=11 // pred_check_branch
        %123 = sbr.rel (%p121) target = $region20
      $region19: #{relation_conv_block.3} parent=11 // pred_region
        _
      $region20: #{relation_conv_block.3} parent=11 // pred_fallthru
        _
    $region12: #{relation_conv_block.3} parent=5 // pred_fallthru
      _
    %p124 = scmp.lt.s32.totalorder %s9, 2
    // Predicated region
    $region21: #{relation_conv_block.3} parent=5 // pred_check
      %p125 = pneg %p124
    $region22: #{relation_conv_block.3} parent=5 // pred_check_branch
      %127 = sbr.rel (%p125) target = $region24
    $region23: #{relation_conv_block.3} parent=5 // pred_region
      // Predicated region
      $region25: #{relation_conv_block.3} parent=23 // pred_check
        %p128 = pneg %p71
      $region26: #{relation_conv_block.3} parent=23 // pred_check_branch
        %130 = sbr.rel (%p128) target = $region28
      $region27: #{relation_conv_block.3} parent=23 // pred_region
        %p131 = scmp.lt.s32.totalorder %s9, 1
        %s132 = scalar_select %p131, %s9, 1
        %s133 = smul.addr %s132, 8
        %s134 = smul.addr %s133, 4
        %s135 = scalar_lea.vmem %s2, %s134
      $region28: #{relation_conv_block.3} parent=23 // pred_fallthru
        _
    $region24: #{relation_conv_block.3} parent=5 // pred_fallthru
      _
    %p136 = scmp.le.s32.totalorder 1, %s9
    %p137 = scmp.lt.s32.totalorder %s9, 3
    %p138 = pnand %p136, %p137
    %p139 = pneg %p138
    // Predicated region
    $region29: #{relation_conv_block.3} parent=5 // pred_check
      _
    $region30: #{relation_conv_block.3} parent=5 // pred_check_branch
      %141 = sbr.rel (%p138) target = $region32
    $region31: #{relation_conv_block.3} parent=5 // pred_region
      %s142 = ssub.s32 %s9, 1
      %p143 = pneg %p30
      %p144 = pneg %p27
      %p145 = pneg %p51
      %p146 = pneg %p48
      %p147 = scmp.lt.s32.totalorder %s14, 1
      %s148 = scalar_select %p147, %s14, 1
      %s149 = smul.addr %s148, 8
      %s150 = smul.addr %s149, 4
      %s151 = scalar_lea.vmem %s2, %s150
      %p152 = pneg %p77
      %p153 = pneg %p74
      %p154 = pneg %p103
      %p155 = pneg %p100
      %p156 = scmp.lt.s32.totalorder %s14, 1
      %s157 = scalar_select %p156, %s14, 1
      %s158 = smul.addr %s157, 8
      %s159 = smul.addr %s158, 8
      %s160 = scalar_lea.vmem %s3, %s159
      %p161 = scmp.lt.s32.totalorder %s14, 1
      %s162 = scalar_select %p161, %s14, 1
      %s163 = smul.addr %s162, 8
      %s164 = smul.addr %s163, 4
      %s165 = scalar_lea.vmem %s2, %s164
      %p166 = scmp.lt.s32.totalorder %s14, 1
      %s167 = scalar_select %p166, %s14, 1
      %s168 = smul.addr %s167, 8
      %s169 = smul.addr %s168, 8
      %s170 = scalar_lea.vmem %s3, %s169
      %v171 = vld [vmem:[%s165] sm:$0xff]
      %v172 = vld [vmem:[%s165 + $0x8] sm:$0xff]
      %v173 = vld [vmem:[%s165 + $0x10] sm:$0xff]
      %v174 = vld [vmem:[%s165 + $0x18] sm:$0xff]
      %v175 = vunpack.c.l.bf16 %v171
      %v176 = vunpack.c.h.bf16 %v171
      %v177 = vunpack.c.l.bf16 %v172
      %v178 = vunpack.c.h.bf16 %v172
      %v179 = vunpack.c.l.bf16 %v173
      %v180 = vunpack.c.h.bf16 %v173
      %v181 = vunpack.c.l.bf16 %v174
      %v182 = vunpack.c.h.bf16 %v174
      %v183 = vld [vmem:[%s0] sm:$0xff]
      %185 = vset.pattern.permute.xlu0 0
      %186 = vperm.xlu0 %185, %v183
      %v187 = vpop.permute.xlu0 %186
      %v189 = vmul.f32 %v175, %v187
      %v190 = vmul.f32 %v176, %v187
      %v191 = vmul.f32 %v177, %v187
      %v192 = vmul.f32 %v178, %v187
      %v193 = vmul.f32 %v179, %v187
      %v194 = vmul.f32 %v180, %v187
      %v195 = vmul.f32 %v181, %v187
      %v196 = vmul.f32 %v182, %v187
      %v197 = vld [vmem:[%s1] sm:$0xff]
      %199 = vset.pattern.permute.xlu0 0
      %200 = vperm.xlu0 %199, %v197
      %v201 = vpop.permute.xlu0 %200
      %v203 = vadd.f32 %v189, %v201
      %v204 = vadd.f32 %v190, %v201
      %v205 = vadd.f32 %v191, %v201
      %v206 = vadd.f32 %v192, %v201
      %v207 = vadd.f32 %v193, %v201
      %v208 = vadd.f32 %v194, %v201
      %v209 = vadd.f32 %v195, %v201
      %v210 = vadd.f32 %v196, %v201
      %v211 = vmax.f32 %v203, 0.0
      %v212 = vmax.f32 %v204, 0.0
      %v213 = vmax.f32 %v205, 0.0
      %v214 = vmax.f32 %v206, 0.0
      %v215 = vmax.f32 %v207, 0.0
      %v216 = vmax.f32 %v208, 0.0
      %v217 = vmax.f32 %v209, 0.0
      %v218 = vmax.f32 %v210, 0.0
      %219 = vst [vmem:[%s170] sm:$0xff] %v211
      %220 = vst [vmem:[%s170 + $0x8] sm:$0xff] %v212
      %221 = vst [vmem:[%s170 + $0x10] sm:$0xff] %v213
      %222 = vst [vmem:[%s170 + $0x18] sm:$0xff] %v214
      %223 = vst [vmem:[%s170 + $0x20] sm:$0xff] %v215
      %224 = vst [vmem:[%s170 + $0x28] sm:$0xff] %v216
      %225 = vst [vmem:[%s170 + $0x30] sm:$0xff] %v217
      %226 = vst [vmem:[%s170 + $0x38] sm:$0xff] %v218
      %p227 = scmp.lt.s32.totalorder %s14, 1
      %s228 = scalar_select %p227, %s14, 1
      %s229 = smul.addr %s228, 8
      %s230 = smul.addr %s229, 8
      %s231 = scalar_lea.vmem %s3, %s230
      // Predicated region
      $region33: #{relation_conv_block.3} parent=31 // pred_check
        %p232 = pneg %p100
      $region34: #{relation_conv_block.3} parent=31 // pred_check_branch
        %234 = sbr.rel (%p232) target = $region36
      $region35: #{relation_conv_block.3} parent=31 // pred_region
        _
      $region36: #{relation_conv_block.3} parent=31 // pred_fallthru
        _
    $region32: #{relation_conv_block.3} parent=5 // pred_fallthru
      _
    %p235 = scmp.le.s32.totalorder 2, %s9
    // Predicated region
    $region37: #{relation_conv_block.3} parent=5 // pred_check
      %p236 = pneg %p235
    $region38: #{relation_conv_block.3} parent=5 // pred_check_branch
      %238 = sbr.rel (%p236) target = $region40
    $region39: #{relation_conv_block.3} parent=5 // pred_region
      %s239 = ssub.s32 %s9, 2
      // Predicated region
      $region41: #{relation_conv_block.3} parent=39 // pred_check
        %p240 = pneg %p106
      $region42: #{relation_conv_block.3} parent=39 // pred_check_branch
        %242 = sbr.rel (%p240) target = $region44
      $region43: #{relation_conv_block.3} parent=39 // pred_region
        %p243 = scmp.lt.s32.totalorder %s15, 1
        %s244 = scalar_select %p243, %s15, 1
        %s245 = smul.addr %s244, 8
        %s246 = smul.addr %s245, 8
        %s247 = scalar_lea.vmem %s3, %s246
      $region44: #{relation_conv_block.3} parent=39 // pred_fallthru
        _
    $region40: #{relation_conv_block.3} parent=5 // pred_fallthru
      _
  $region6: #{relation_conv_block.3} parent=0 // loop_footer
    %s13 = sadd.s32 1, %s9
  $region7: #{relation_conv_block.3} parent=0 // loop_footer_branch
    %8 = sbr.rel target = $region3
  $region8: #{relation_conv_block.3} parent=0 // loop_exit
    _

// kernel: relation_conv_block.2
$region0: #{relation_conv_block.2}
  #allocation0 [shape = 'u32[]', space=smem, size = 0x4, offset = 0x4, fixed_abs, tag = 'smem constant byte address 0x4 - core index']
  #allocation1 [shape = 'u32[144,128]{1,0:T(1,128)}', space=vmem, size = 0x12000, scoped, tag = 'internal scratch']
  %s0 = inlined_call_operand.vmem [shape: bf16[27,8,4], index: 0, kind: input, shape index: {}]
  %s1 = inlined_call_operand.vmem [shape: bf16[2,4,1280], index: 1, kind: input, shape index: {}]
  %s2 = inlined_call_operand.vmem [shape: f32[1,1024], index: 2, kind: input, shape index: {}]
  %s3 = inlined_call_operand.vmem [shape: bf16[2,8,1024], index: 3, kind: output, shape index: {0}]
  %s4 = inlined_call_operand.vmem [shape: f32[2,8,128], index: 4, kind: output, shape index: {1}]
  %s5 = inlined_call_operand.vmem [shape: f32[2,8,128], index: 5, kind: output, shape index: {2}]
  %6 = xla_tuple %s3, %s4, %s5
  %s7 = sld [smem:[#allocation0]]
  $region61: #{relation_conv_block.2} parent=0
    _
  %s9 = ssub.s32 1, %s7
  %s10 = scalar_select 0, %s9, %s7
  loop: start=0, step=1, limit=4
  $region2: #{relation_conv_block.2} parent=0 // loop_pre_header
    _
  $region3: #{relation_conv_block.2} parent=0 // loop_header
    %s12 = sphi 0, %s16
    %p13 = scmp.ge.s32.totalorder %s12, 4
    %s20 = sphi 0, %s20
    %s22 = sphi 0, %s20
    %s23 = sphi 0, %s22
    %s37 = sphi 0, %s23
    %s43 = sphi 0, %s45
    %s46 = sphi 0, %s43
    %s47 = sphi 0, %s46
    %s63 = sphi 0, %s47
    %s67 = sphi 0, %s67
    %s69 = sphi 0, %s67
    %s70 = sphi 0, %s69
    %s84 = sphi 0, %s70
    %s90 = sphi 0, %s92
    %s93 = sphi 0, %s90
    %s94 = sphi 0, %s93
    %s110 = sphi 0, %s94
    %s116 = sphi 0, %s118
    %s119 = sphi 0, %s116
    %s120 = sphi 0, %s119
    %s136 = sphi 0, %s120
    %s142 = sphi 0, %s144
    %s145 = sphi 0, %s142
    %s146 = sphi 0, %s145
    %s162 = sphi 0, %s146
  $region4: #{relation_conv_block.2} parent=0 // loop_header_branch
    %15 = sbr.rel (%p13) target = $region8
  $region5: #{relation_conv_block.2} parent=0 // loop_body
    %s17 = ssub.s32 %s12, 1
    %s18 = ssub.s32 %s12, 2
    %s19 = sadd.s32 %s12, 1
    %s21 = sadd.s32 %s20, 1
    %p24 = scmp.eq.s32.totalorder %s12, 1
    %p25 = scmp.ne.s32.totalorder %s20, %s22
    %p26 = scmp.eq.s32.totalorder %s12, 0
    %p27 = por %p25, %p26
    %p28 = scmp.ne.s32.totalorder %s20, %s22
    %p29 = scmp.eq.s32.totalorder %s17, 1
    %p30 = por %p28, %p29
    %p31 = scmp.ne.s32.totalorder %s22, %s23
    %p32 = scmp.eq.s32.totalorder %s17, 0
    %p33 = por %p31, %p32
    %p34 = scmp.ne.s32.totalorder %s22, %s23
    %p35 = scmp.eq.s32.totalorder %s18, 1
    %p36 = por %p34, %p35
    %p38 = scmp.ne.s32.totalorder %s23, %s37
    %p39 = scmp.eq.s32.totalorder %s18, 0
    %p40 = por %p38, %p39
    %s41 = ssub.s32 %s12, %s19
    %p42 = scmp.eq.s32.totalorder %s41, 0
    %s44 = sadd.s32 %s43, 1
    %s45 = scalar_select %p42, %s43, %s44
    %p48 = pneg %p42
    %p49 = scmp.eq.s32.totalorder %s12, 1
    %p50 = por %p48, %p49
    %p51 = scmp.ne.s32.totalorder %s43, %s46
    %p52 = scmp.eq.s32.totalorder %s12, 0
    %p53 = por %p51, %p52
    %p54 = scmp.ne.s32.totalorder %s43, %s46
    %p55 = scmp.eq.s32.totalorder %s17, 1
    %p56 = por %p54, %p55
    %p57 = scmp.ne.s32.totalorder %s46, %s47
    %p58 = scmp.eq.s32.totalorder %s17, 0
    %p59 = por %p57, %p58
    %p60 = scmp.ne.s32.totalorder %s46, %s47
    %p61 = scmp.eq.s32.totalorder %s18, 1
    %p62 = por %p60, %p61
    %p64 = scmp.ne.s32.totalorder %s47, %s63
    %p65 = scmp.eq.s32.totalorder %s18, 0
    %p66 = por %p64, %p65
    %s68 = sadd.s32 %s67, 1
    %p71 = scmp.eq.s32.totalorder %s12, 1
    %p72 = scmp.ne.s32.totalorder %s67, %s69
    %p73 = scmp.eq.s32.totalorder %s12, 0
    %p74 = por %p72, %p73
    %p75 = scmp.ne.s32.totalorder %s67, %s69
    %p76 = scmp.eq.s32.totalorder %s17, 1
    %p77 = por %p75, %p76
    %p78 = scmp.ne.s32.totalorder %s69, %s70
    %p79 = scmp.eq.s32.totalorder %s17, 0
    %p80 = por %p78, %p79
    %p81 = scmp.ne.s32.totalorder %s69, %s70
    %p82 = scmp.eq.s32.totalorder %s18, 1
    %p83 = por %p81, %p82
    %p85 = scmp.ne.s32.totalorder %s70, %s84
    %p86 = scmp.eq.s32.totalorder %s18, 0
    %p87 = por %p85, %p86
    %s88 = ssub.s32 %s12, %s19
    %p89 = scmp.eq.s32.totalorder %s88, 0
    %s91 = sadd.s32 %s90, 1
    %s92 = scalar_select %p89, %s90, %s91
    %p95 = pneg %p89
    %p96 = scmp.eq.s32.totalorder %s12, 1
    %p97 = por %p95, %p96
    %p98 = scmp.ne.s32.totalorder %s90, %s93
    %p99 = scmp.eq.s32.totalorder %s12, 0
    %p100 = por %p98, %p99
    %p101 = scmp.ne.s32.totalorder %s90, %s93
    %p102 = scmp.eq.s32.totalorder %s17, 1
    %p103 = por %p101, %p102
    %p104 = scmp.ne.s32.totalorder %s93, %s94
    %p105 = scmp.eq.s32.totalorder %s17, 0
    %p106 = por %p104, %p105
    %p107 = scmp.ne.s32.totalorder %s93, %s94
    %p108 = scmp.eq.s32.totalorder %s18, 1
    %p109 = por %p107, %p108
    %p111 = scmp.ne.s32.totalorder %s94, %s110
    %p112 = scmp.eq.s32.totalorder %s18, 0
    %p113 = por %p111, %p112
    %s114 = ssub.s32 %s12, %s19
    %p115 = scmp.eq.s32.totalorder %s114, 0
    %s117 = sadd.s32 %s116, 1
    %s118 = scalar_select %p115, %s116, %s117
    %p121 = pneg %p115
    %p122 = scmp.eq.s32.totalorder %s12, 1
    %p123 = por %p121, %p122
    %p124 = scmp.ne.s32.totalorder %s116, %s119
    %p125 = scmp.eq.s32.totalorder %s12, 0
    %p126 = por %p124, %p125
    %p127 = scmp.ne.s32.totalorder %s116, %s119
    %p128 = scmp.eq.s32.totalorder %s17, 1
    %p129 = por %p127, %p128
    %p130 = scmp.ne.s32.totalorder %s119, %s120
    %p131 = scmp.eq.s32.totalorder %s17, 0
    %p132 = por %p130, %p131
    %p133 = scmp.ne.s32.totalorder %s119, %s120
    %p134 = scmp.eq.s32.totalorder %s18, 1
    %p135 = por %p133, %p134
    %p137 = scmp.ne.s32.totalorder %s120, %s136
    %p138 = scmp.eq.s32.totalorder %s18, 0
    %p139 = por %p137, %p138
    %s140 = ssub.s32 %s12, %s19
    %p141 = scmp.eq.s32.totalorder %s140, 0
    %s143 = sadd.s32 %s142, 1
    %s144 = scalar_select %p141, %s142, %s143
    %p147 = pneg %p141
    %p148 = scmp.eq.s32.totalorder %s12, 1
    %p149 = por %p147, %p148
    %p150 = scmp.ne.s32.totalorder %s142, %s145
    %p151 = scmp.eq.s32.totalorder %s12, 0
    %p152 = por %p150, %p151
    %p153 = scmp.ne.s32.totalorder %s142, %s145
    %p154 = scmp.eq.s32.totalorder %s17, 1
    %p155 = por %p153, %p154
    %p156 = scmp.ne.s32.totalorder %s145, %s146
    %p157 = scmp.eq.s32.totalorder %s17, 0
    %p158 = por %p156, %p157
    %p159 = scmp.ne.s32.totalorder %s145, %s146
    %p160 = scmp.eq.s32.totalorder %s18, 1
    %p161 = por %p159, %p160
    %p163 = scmp.ne.s32.totalorder %s146, %s162
    %p164 = scmp.eq.s32.totalorder %s18, 0
    %p165 = por %p163, %p164
    %p166 = scmp.le.s32.totalorder 1, %s12
    %p167 = scmp.lt.s32.totalorder %s12, 3
    %p168 = pnand %p166, %p167
    %p169 = pneg %p168
    // Predicated region
    $region9: #{relation_conv_block.2} parent=5 // pred_check
      _
    $region10: #{relation_conv_block.2} parent=5 // pred_check_branch
      %171 = sbr.rel (%p168) target = $region12
    $region11: #{relation_conv_block.2} parent=5 // pred_region
      %s172 = ssub.s32 %s12, 1
      // Predicated region
      $region13: #{relation_conv_block.2} parent=11 // pred_check
        %p173 = pneg %p33
      $region14: #{relation_conv_block.2} parent=11 // pred_check_branch
        %175 = sbr.rel (%p173) target = $region16
      $region15: #{relation_conv_block.2} parent=11 // pred_region
        _
      $region16: #{relation_conv_block.2} parent=11 // pred_fallthru
        _
      // Predicated region
      $region17: #{relation_conv_block.2} parent=11 // pred_check
        %p176 = pneg %p80
      $region18: #{relation_conv_block.2} parent=11 // pred_check_branch
        %178 = sbr.rel (%p176) target = $region20
      $region19: #{relation_conv_block.2} parent=11 // pred_region
        _
      $region20: #{relation_conv_block.2} parent=11 // pred_fallthru
        _
    $region12: #{relation_conv_block.2} parent=5 // pred_fallthru
      _
    %p179 = scmp.lt.s32.totalorder %s12, 2
    // Predicated region
    $region21: #{relation_conv_block.2} parent=5 // pred_check
      %p180 = pneg %p179
    $region22: #{relation_conv_block.2} parent=5 // pred_check_branch
      %182 = sbr.rel (%p180) target = $region24
    $region23: #{relation_conv_block.2} parent=5 // pred_region
      // Predicated region
      $region25: #{relation_conv_block.2} parent=23 // pred_check
        %p183 = pneg %p53
      $region26: #{relation_conv_block.2} parent=23 // pred_check_branch
        %185 = sbr.rel (%p183) target = $region28
      $region27: #{relation_conv_block.2} parent=23 // pred_region
        %p186 = scmp.lt.s32.totalorder %s12, 1
        %s187 = scalar_select %p186, %s12, 1
        %s188 = smul.addr %s187, 10
        %s189 = smul.addr %s188, 2
        %s190 = scalar_lea.vmem %s1, %s189
      $region28: #{relation_conv_block.2} parent=23 // pred_fallthru
        _
    $region24: #{relation_conv_block.2} parent=5 // pred_fallthru
      _
    %p191 = scmp.le.s32.totalorder 1, %s12
    %p192 = scmp.lt.s32.totalorder %s12, 3
    %p193 = pnand %p191, %p192
    %p194 = pneg %p193
    // Predicated region
    $region29: #{relation_conv_block.2} parent=5 // pred_check
      _
    $region30: #{relation_conv_block.2} parent=5 // pred_check_branch
      %196 = sbr.rel (%p193) target = $region32
    $region31: #{relation_conv_block.2} parent=5 // pred_region
      %s197 = ssub.s32 %s12, 1
      %p198 = pneg %p33
      %p199 = pneg %p30
      %p200 = scmp.lt.s32.totalorder %s17, 1
      %s201 = scalar_select %p200, %s17, 1
      %s202 = smul.addr %s201, 10
      %s203 = smul.addr %s202, 2
      %s204 = scalar_lea.vmem %s1, %s203
      %p205 = pneg %p59
      %p206 = pneg %p56
      %p207 = pneg %p80
      %p208 = pneg %p77
      %p209 = pneg %p106
      %p210 = pneg %p103
      %p211 = scmp.lt.s32.totalorder %s17, 1
      %s212 = scalar_select %p211, %s17, 1
      %s213 = smul.addr %s212, 8
      %s214 = smul.addr %s213, 4
      %s215 = scalar_lea.vmem %s3, %s214
      %p216 = pneg %p132
      %p217 = pneg %p129
      %p218 = scmp.lt.s32.totalorder %s17, 1
      %s219 = scalar_select %p218, %s17, 1
      %s220 = smul.addr %s219, 8
      %s221 = scalar_lea.vmem %s4, %s220
      %p222 = pneg %p158
      %p223 = pneg %p155
      %p224 = scmp.lt.s32.totalorder %s17, 1
      %s225 = scalar_select %p224, %s17, 1
      %s226 = smul.addr %s225, 8
      %s227 = scalar_lea.vmem %s5, %s226
      %p228 = scmp.lt.s32.totalorder %s17, 1
      %s229 = scalar_select %p228, %s17, 1
      %s230 = smul.addr %s229, 10
      %s231 = smul.addr %s230, 2
      %s232 = scalar_lea.vmem %s1, %s231
      %p233 = scmp.lt.s32.totalorder %s17, 1
      %s234 = scalar_select %p233, %s17, 1
      %s235 = smul.addr %s234, 8
      %s236 = smul.addr %s235, 4
      %s237 = scalar_lea.vmem %s3, %s236
      %p238 = scmp.lt.s32.totalorder %s17, 1
      %s239 = scalar_select %p238, %s17, 1
      %s240 = smul.addr %s239, 8
      %s241 = scalar_lea.vmem %s4, %s240
      %p242 = scmp.lt.s32.totalorder %s17, 1
      %s243 = scalar_select %p242, %s17, 1
      %s244 = smul.addr %s243, 8
      %s245 = scalar_lea.vmem %s5, %s244
      %v247 = vld [vmem:[%s232] sm:$0xff]
      %v248 = vld [vmem:[%s232 + $0x8] sm:$0xff]
      %v249 = vld [vmem:[%s0] sm:$0xf]
      %v250 = vld [vmem:[%s232 + $0x10] sm:$0x3]
      %s251 = scalar_lea.vmem %s0, 4
      %v252 = vld [vmem:[%s251] sm:$0xf]
      %v256 = vcombine.high %v247, %v247
      %v258 = vunpack.c.l.s4 1983009808
      %v259 = vunpack.c.0.s8 %v258
      %v260 = vlaneseq
      %v261 = vshrl.u32 %v260, 7
      %v262 = vsub.s32 %v259, %v261
      %v263 = vrot.slane %v247, %v262
      %v265 = vunpack.c.l.s4 1983009808
      %v266 = vunpack.c.0.s8 %v265
      %v267 = vlaneseq
      %v268 = vshrl.u32 %v267, 7
      %v269 = vsub.s32 %v266, %v268
      %v270 = vrot.slane %v256, %v269
      %v271 = vcombine.high %v263, %v263
      %v272 = vcombine.high %v270, %v270
      %v273 = vcombine.high %v248, %v248
      %v275 = vunpack.c.l.s4 1983009808
      %v276 = vunpack.c.0.s8 %v275
      %v277 = vlaneseq
      %v278 = vshrl.u32 %v277, 7
      %v279 = vsub.s32 %v276, %v278
      %v280 = vrot.slane %v248, %v279
      %v282 = vunpack.c.l.s4 1983009808
      %v283 = vunpack.c.0.s8 %v282
      %v284 = vlaneseq
      %v285 = vshrl.u32 %v284, 7
      %v286 = vsub.s32 %v283, %v285
      %v287 = vrot.slane %v273, %v286
      %v288 = vcombine.high %v280, %v280
      %v289 = vcombine.high %v287, %v287
      %v291 = vunpack.c.l.s4 1983009808
      %v292 = vunpack.c.0.s8 %v291
      %v293 = vlaneseq
      %v294 = vshrl.u32 %v293, 7
      %v295 = vsub.s32 %v292, %v294
      %v296 = vrot.slane %v250, %v295
      %297 = vrot.lane.b32.xlu0 %v263, 127
      %v298 = vpop.permute.xlu0 %297
      %299 = vrot.lane.b32.xlu0 %v271, 127
      %v300 = vpop.permute.xlu0 %299
      %301 = vrot.lane.b32.xlu0 %v270, 127
      %v302 = vpop.permute.xlu0 %301
      %303 = vrot.lane.b32.xlu0 %v272, 127
      %v304 = vpop.permute.xlu0 %303
      %305 = vrot.lane.b32.xlu0 %v280, 127
      %v306 = vpop.permute.xlu0 %305
      %307 = vrot.lane.b32.xlu0 %v288, 127
      %v308 = vpop.permute.xlu0 %307
      %309 = vrot.lane.b32.xlu0 %v287, 127
      %v310 = vpop.permute.xlu0 %309
      %311 = vrot.lane.b32.xlu0 %v289, 127
      %v312 = vpop.permute.xlu0 %311
      %313 = vrot.lane.b32.xlu0 %v296, 127
      %v314 = vpop.permute.xlu0 %313
      %vm315 = vcmask 1039360
      %v316 = vsel %vm315, %v298, %v300
      %v317 = vsel %vm315, %v300, %v302
      %v318 = vsel %vm315, %v302, %v304
      %v319 = vsel %vm315, %v304, %v306
      %v320 = vsel %vm315, %v306, %v308
      %v321 = vsel %vm315, %v308, %v310
      %v322 = vsel %vm315, %v310, %v312
      %v323 = vsel %vm315, %v312, %v314
      %vm324 = vcmask 31744
      %v326 = vsel %vm324, %v252, 0
      %vm328 = vcmask 1041408
      %v330 = vsel %vm328, %v316, 0
      %v333 = vsel %vm328, %v317, 0
      %v336 = vsel %vm328, %v318, 0
      %v339 = vsel %vm328, %v319, 0
      %v342 = vsel %vm328, %v320, 0
      %v345 = vsel %vm328, %v321, 0
      %v348 = vsel %vm328, %v322, 0
      %v351 = vsel %vm328, %v323, 0
      %353 = vmatprep.subr.bf16.mxu0 %v333
      %354 = vmatpush1.bf16.msra.mxu0 %v330
      %355 = vmatprep.subr.bf16.mxu0 0
      %356 = vmatpush1.bf16.msra.mxu0 0
      %357 = vmatprep.subr.bf16.mxu0 0
      %358 = vmatpush1.bf16.msra.mxu0 0
      %359 = vmatprep.subr.bf16.mxu0 0
      %360 = vmatpush1.bf16.msra.mxu0 0
      %361 = vmatprep.subr.bf16.mxu0 0
      %362 = vmatpush1.bf16.msra.mxu0 0
      %363 = vmatprep.subr.bf16.mxu0 0
      %364 = vmatpush1.bf16.msra.mxu0 0
      %365 = vmatprep.subr.bf16.mxu0 0
      %366 = vmatpush1.bf16.msra.mxu0 0
      %367 = vmatprep.subr.bf16.mxu0 0
      %368 = vmatpush1.bf16.msra.mxu0 0
      %369 = vmatprep.subr.bf16.mxu0 0
      %370 = vmatpush1.bf16.msra.mxu0 0
      %371 = vmatprep.subr.bf16.mxu0 0
      %372 = vmatpush1.bf16.msra.mxu0 0
      %373 = vmatprep.subr.bf16.mxu0 0
      %374 = vmatpush1.bf16.msra.mxu0 0
      %375 = vmatprep.subr.bf16.mxu0 0
      %376 = vmatpush1.bf16.msra.mxu0 0
      %377 = vmatprep.subr.bf16.mxu0 0
      %378 = vmatpush1.bf16.msra.mxu0 0
      %379 = vmatprep.subr.bf16.mxu0 0
      %380 = vmatpush1.bf16.msra.mxu0 0
      %381 = vmatprep.subr.bf16.mxu0 0
      %382 = vmatpush1.bf16.msra.mxu0 0
      %383 = vmatprep.subr.bf16.mxu0 0
      %384 = vmatpush1.bf16.msra.mxu0 0
      %385 = vmatprep.mubr.bf16.mxu0 0
      %386 = vmatmul.mubr.bf16.gmra.mrb[0].mxu0 %v326
      %v387 = vpop.f32.mrb[0].mxu0
      %v388 = vadd.f32 0.0, %v387
      %v389 = vpop.f32.mrb[0].mxu0
      %v390 = vadd.f32 0.0, %v389
      %v391 = vpop.f32.mrb[0].mxu0
      %v392 = vpop.f32.mrb[0].mxu0
      %393 = vdwg.mxu0
      %394 = vmatprep.subr.bf16.mxu0 %v339
      %395 = vmatpush1.bf16.msra.mxu0 %v336
      %396 = vmatprep.subr.bf16.mxu0 0
      %397 = vmatpush1.bf16.msra.mxu0 0
      %398 = vmatprep.subr.bf16.mxu0 0
      %399 = vmatpush1.bf16.msra.mxu0 0
      %400 = vmatprep.subr.bf16.mxu0 0
      %401 = vmatpush1.bf16.msra.mxu0 0
      %402 = vmatprep.subr.bf16.mxu0 0
      %403 = vmatpush1.bf16.msra.mxu0 0
      %404 = vmatprep.subr.bf16.mxu0 0
      %405 = vmatpush1.bf16.msra.mxu0 0
      %406 = vmatprep.subr.bf16.mxu0 0
      %407 = vmatpush1.bf16.msra.mxu0 0
      %408 = vmatprep.subr.bf16.mxu0 0
      %409 = vmatpush1.bf16.msra.mxu0 0
      %410 = vmatprep.subr.bf16.mxu0 0
      %411 = vmatpush1.bf16.msra.mxu0 0
      %412 = vmatprep.subr.bf16.mxu0 0
      %413 = vmatpush1.bf16.msra.mxu0 0
      %414 = vmatprep.subr.bf16.mxu0 0
      %415 = vmatpush1.bf16.msra.mxu0 0
      %416 = vmatprep.subr.bf16.mxu0 0
      %417 = vmatpush1.bf16.msra.mxu0 0
      %418 = vmatprep.subr.bf16.mxu0 0
      %419 = vmatpush1.bf16.msra.mxu0 0
      %420 = vmatprep.subr.bf16.mxu0 0
      %421 = vmatpush1.bf16.msra.mxu0 0
      %422 = vmatprep.subr.bf16.mxu0 0
      %423 = vmatpush1.bf16.msra.mxu0 0
      %424 = vmatprep.subr.bf16.mxu0 0
      %425 = vmatpush1.bf16.msra.mxu0 0
      %426 = vmatprep.mubr.bf16.mxu0 0
      %427 = vmatmul.mubr.bf16.gmra.mrb[0].mxu0 %v326
      %v428 = vpop.f32.mrb[0].mxu0
      %v429 = vadd.f32 0.0, %v428
      %v430 = vpop.f32.mrb[0].mxu0
      %v431 = vadd.f32 0.0, %v430
      %v432 = vpop.f32.mrb[0].mxu0
      %v433 = vpop.f32.mrb[0].mxu0
      %434 = vdwg.mxu0
      %435 = vmatprep.subr.bf16.mxu0 %v345
      %436 = vmatpush1.bf16.msra.mxu0 %v342
      %437 = vmatprep.subr.bf16.mxu0 0
      %438 = vmatpush1.bf16.msra.mxu0 0
      %439 = vmatprep.subr.bf16.mxu0 0
      %440 = vmatpush1.bf16.msra.mxu0 0
      %441 = vmatprep.subr.bf16.mxu0 0
      %442 = vmatpush1.bf16.msra.mxu0 0
      %443 = vmatprep.subr.bf16.mxu0 0
      %444 = vmatpush1.bf16.msra.mxu0 0
      %445 = vmatprep.subr.bf16.mxu0 0
      %446 = vmatpush1.bf16.msra.mxu0 0
      %447 = vmatprep.subr.bf16.mxu0 0
      %448 = vmatpush1.bf16.msra.mxu0 0
      %449 = vmatprep.subr.bf16.mxu0 0
      %450 = vmatpush1.bf16.msra.mxu0 0
      %451 = vmatprep.subr.bf16.mxu0 0
      %452 = vmatpush1.bf16.msra.mxu0 0
      %453 = vmatprep.subr.bf16.mxu0 0
      %454 = vmatpush1.bf16.msra.mxu0 0
      %455 = vmatprep.subr.bf16.mxu0 0
      %456 = vmatpush1.bf16.msra.mxu0 0
      %457 = vmatprep.subr.bf16.mxu0 0
      %458 = vmatpush1.bf16.msra.mxu0 0
      %459 = vmatprep.subr.bf16.mxu0 0
      %460 = vmatpush1.bf16.msra.mxu0 0
      %461 = vmatprep.subr.bf16.mxu0 0
      %462 = vmatpush1.bf16.msra.mxu0 0
      %463 = vmatprep.subr.bf16.mxu0 0
      %464 = vmatpush1.bf16.msra.mxu0 0
      %465 = vmatprep.subr.bf16.mxu0 0
      %466 = vmatpush1.bf16.msra.mxu0 0
      %467 = vmatprep.mubr.bf16.mxu0 0
      %468 = vmatmul.mubr.bf16.gmra.mrb[0].mxu0 %v326
      %v469 = vpop.f32.mrb[0].mxu0
      %v470 = vadd.f32 0.0, %v469
      %v471 = vpop.f32.mrb[0].mxu0
      %v472 = vadd.f32 0.0, %v471
      %v473 = vpop.f32.mrb[0].mxu0
      %v474 = vpop.f32.mrb[0].mxu0
      %475 = vdwg.mxu0
      %476 = vmatprep.subr.bf16.mxu0 %v351
      %477 = vmatpush1.bf16.msra.mxu0 %v348
      %478 = vmatprep.subr.bf16.mxu0 0
      %479 = vmatpush1.bf16.msra.mxu0 0
      %480 = vmatprep.subr.bf16.mxu0 0
      %481 = vmatpush1.bf16.msra.mxu0 0
      %482 = vmatprep.subr.bf16.mxu0 0
      %483 = vmatpush1.bf16.msra.mxu0 0
      %484 = vmatprep.subr.bf16.mxu0 0
      %485 = vmatpush1.bf16.msra.mxu0 0
      %486 = vmatprep.subr.bf16.mxu0 0
      %487 = vmatpush1.bf16.msra.mxu0 0
      %488 = vmatprep.subr.bf16.mxu0 0
      %489 = vmatpush1.bf16.msra.mxu0 0
      %490 = vmatprep.subr.bf16.mxu0 0
      %491 = vmatpush1.bf16.msra.mxu0 0
      %492 = vmatprep.subr.bf16.mxu0 0
      %493 = vmatpush1.bf16.msra.mxu0 0
      %494 = vmatprep.subr.bf16.mxu0 0
      %495 = vmatpush1.bf16.msra.mxu0 0
      %496 = vmatprep.subr.bf16.mxu0 0
      %497 = vmatpush1.bf16.msra.mxu0 0
      %498 = vmatprep.subr.bf16.mxu0 0
      %499 = vmatpush1.bf16.msra.mxu0 0
      %500 = vmatprep.subr.bf16.mxu0 0
      %501 = vmatpush1.bf16.msra.mxu0 0
      %502 = vmatprep.subr.bf16.mxu0 0
      %503 = vmatpush1.bf16.msra.mxu0 0
      %504 = vmatprep.subr.bf16.mxu0 0
      %505 = vmatpush1.bf16.msra.mxu0 0
      %506 = vmatprep.subr.bf16.mxu0 0
      %507 = vmatpush1.bf16.msra.mxu0 0
      %508 = vmatprep.mubr.bf16.mxu0 0
      %509 = vmatmul.mubr.bf16.gmra.mrb[0].mxu0 %v326
      %v510 = vpop.f32.mrb[0].mxu0
      %v511 = vadd.f32 0.0, %v510
      %v512 = vpop.f32.mrb[0].mxu0
      %v513 = vadd.f32 0.0, %v512
      %v514 = vpop.f32.mrb[0].mxu0
      %v515 = vpop.f32.mrb[0].mxu0
      %516 = vdwg.mxu0
      %v518 = vsel %vm324, %v249, 0
      %v521 = vsel %vm328, %v263, 0
      %v524 = vsel %vm328, %v271, 0
      %v527 = vsel %vm328, %v270, 0
      %v530 = vsel %vm328, %v272, 0
      %v533 = vsel %vm328, %v280, 0
      %v536 = vsel %vm328, %v288, 0
      %v539 = vsel %vm328, %v287, 0
      %v542 = vsel %vm328, %v289, 0
      %544 = vmatprep.subr.bf16.mxu0 %v524
      %545 = vmatpush1.bf16.msra.mxu0 %v521
      %546 = vmatprep.subr.bf16.mxu0 0
      %547 = vmatpush1.bf16.msra.mxu0 0
      %548 = vmatprep.subr.bf16.mxu0 0
      %549 = vmatpush1.bf16.msra.mxu0 0
      %550 = vmatprep.subr.bf16.mxu0 0
      %551 = vmatpush1.bf16.msra.mxu0 0
      %552 = vmatprep.subr.bf16.mxu0 0
      %553 = vmatpush1.bf16.msra.mxu0 0
      %554 = vmatprep.subr.bf16.mxu0 0
      %555 = vmatpush1.bf16.msra.mxu0 0
      %556 = vmatprep.subr.bf16.mxu0 0
      %557 = vmatpush1.bf16.msra.mxu0 0
      %558 = vmatprep.subr.bf16.mxu0 0
      %559 = vmatpush1.bf16.msra.mxu0 0
      %560 = vmatprep.subr.bf16.mxu0 0
      %561 = vmatpush1.bf16.msra.mxu0 0
      %562 = vmatprep.subr.bf16.mxu0 0
      %563 = vmatpush1.bf16.msra.mxu0 0
      %564 = vmatprep.subr.bf16.mxu0 0
      %565 = vmatpush1.bf16.msra.mxu0 0
      %566 = vmatprep.subr.bf16.mxu0 0
      %567 = vmatpush1.bf16.msra.mxu0 0
      %568 = vmatprep.subr.bf16.mxu0 0
      %569 = vmatpush1.bf16.msra.mxu0 0
      %570 = vmatprep.subr.bf16.mxu0 0
      %571 = vmatpush1.bf16.msra.mxu0 0
      %572 = vmatprep.subr.bf16.mxu0 0
      %573 = vmatpush1.bf16.msra.mxu0 0
      %574 = vmatprep.subr.bf16.mxu0 0
      %575 = vmatpush1.bf16.msra.mxu0 0
      %576 = vmatprep.mubr.bf16.mxu0 0
      %577 = vmatmul.mubr.bf16.gmra.mrb[0].mxu0 %v518
      %v578 = vpop.f32.mrb[0].mxu0
      %v579 = vadd.f32 %v388, %v578
      %v580 = vpop.f32.mrb[0].mxu0
      %v581 = vadd.f32 %v390, %v580
      %v582 = vpop.f32.mrb[0].mxu0
      %v583 = vpop.f32.mrb[0].mxu0
      %584 = vdwg.mxu0
      %585 = vmatprep.subr.bf16.mxu0 %v530
      %586 = vmatpush1.bf16.msra.mxu0 %v527
      %587 = vmatprep.subr.bf16.mxu0 0
      %588 = vmatpush1.bf16.msra.mxu0 0
      %589 = vmatprep.subr.bf16.mxu0 0
      %590 = vmatpush1.bf16.msra.mxu0 0
      %591 = vmatprep.subr.bf16.mxu0 0
      %592 = vmatpush1.bf16.msra.mxu0 0
      %593 = vmatprep.subr.bf16.mxu0 0
      %594 = vmatpush1.bf16.msra.mxu0 0
      %595 = vmatprep.subr.bf16.mxu0 0
      %596 = vmatpush1.bf16.msra.mxu0 0
      %597 = vmatprep.subr.bf16.mxu0 0
      %598 = vmatpush1.bf16.msra.mxu0 0
      %599 = vmatprep.subr.bf16.mxu0 0
      %600 = vmatpush1.bf16.msra.mxu0 0
      %601 = vmatprep.subr.bf16.mxu0 0
      %602 = vmatpush1.bf16.msra.mxu0 0
      %603 = vmatprep.subr.bf16.mxu0 0
      %604 = vmatpush1.bf16.msra.mxu0 0
      %605 = vmatprep.subr.bf16.mxu0 0
      %606 = vmatpush1.bf16.msra.mxu0 0
      %607 = vmatprep.subr.bf16.mxu0 0
      %608 = vmatpush1.bf16.msra.mxu0 0
      %609 = vmatprep.subr.bf16.mxu0 0
      %610 = vmatpush1.bf16.msra.mxu0 0
      %611 = vmatprep.subr.bf16.mxu0 0
      %612 = vmatpush1.bf16.msra.mxu0 0
      %613 = vmatprep.subr.bf16.mxu0 0
      %614 = vmatpush1.bf16.msra.mxu0 0
      %615 = vmatprep.subr.bf16.mxu0 0
      %616 = vmatpush1.bf16.msra.mxu0 0
      %617 = vmatprep.mubr.bf16.mxu0 0
      %618 = vmatmul.mubr.bf16.gmra.mrb[0].mxu0 %v518
      %v619 = vpop.f32.mrb[0].mxu0
      %v620 = vadd.f32 %v429, %v619
      %v621 = vpop.f32.mrb[0].mxu0
      %v622 = vadd.f32 %v431, %v621
      %v623 = vpop.f32.mrb[0].mxu0
      %v624 = vpop.f32.mrb[0].mxu0
      %625 = vdwg.mxu0
      %626 = vmatprep.subr.bf16.mxu0 %v536
      %627 = vmatpush1.bf16.msra.mxu0 %v533
      %628 = vmatprep.subr.bf16.mxu0 0
      %629 = vmatpush1.bf16.msra.mxu0 0
      %630 = vmatprep.subr.bf16.mxu0 0
      %631 = vmatpush1.bf16.msra.mxu0 0
      %632 = vmatprep.subr.bf16.mxu0 0
      %633 = vmatpush1.bf16.msra.mxu0 0
      %634 = vmatprep.subr.bf16.mxu0 0
      %635 = vmatpush1.bf16.msra.mxu0 0
      %636 = vmatprep.subr.bf16.mxu0 0
      %637 = vmatpush1.bf16.msra.mxu0 0
      %638 = vmatprep.subr.bf16.mxu0 0
      %639 = vmatpush1.bf16.msra.mxu0 0
      %640 = vmatprep.subr.bf16.mxu0 0
      %641 = vmatpush1.bf16.msra.mxu0 0
      %642 = vmatprep.subr.bf16.mxu0 0
      %643 = vmatpush1.bf16.msra.mxu0 0
      %644 = vmatprep.subr.bf16.mxu0 0
      %645 = vmatpush1.bf16.msra.mxu0 0
      %646 = vmatprep.subr.bf16.mxu0 0
      %647 = vmatpush1.bf16.msra.mxu0 0
      %648 = vmatprep.subr.bf16.mxu0 0
      %649 = vmatpush1.bf16.msra.mxu0 0
      %650 = vmatprep.subr.bf16.mxu0 0
      %651 = vmatpush1.bf16.msra.mxu0 0
      %652 = vmatprep.subr.bf16.mxu0 0
      %653 = vmatpush1.bf16.msra.mxu0 0
      %654 = vmatprep.subr.bf16.mxu0 0
      %655 = vmatpush1.bf16.msra.mxu0 0
      %656 = vmatprep.subr.bf16.mxu0 0
      %657 = vmatpush1.bf16.msra.mxu0 0
      %658 = vmatprep.mubr.bf16.mxu0 0
      %659 = vmatmul.mubr.bf16.gmra.mrb[0].mxu0 %v518
      %v660 = vpop.f32.mrb[0].mxu0
      %v661 = vadd.f32 %v470, %v660
      %v662 = vpop.f32.mrb[0].mxu0
      %v663 = vadd.f32 %v472, %v662
      %v664 = vpop.f32.mrb[0].mxu0
      %v665 = vpop.f32.mrb[0].mxu0
      %666 = vdwg.mxu0
      %667 = vmatprep.subr.bf16.mxu0 %v542
      %668 = vmatpush1.bf16.msra.mxu0 %v539
      %669 = vmatprep.subr.bf16.mxu0 0
      %670 = vmatpush1.bf16.msra.mxu0 0
      %671 = vmatprep.subr.bf16.mxu0 0
      %672 = vmatpush1.bf16.msra.mxu0 0
      %673 = vmatprep.subr.bf16.mxu0 0
      %674 = vmatpush1.bf16.msra.mxu0 0
      %675 = vmatprep.subr.bf16.mxu0 0
      %676 = vmatpush1.bf16.msra.mxu0 0
      %677 = vmatprep.subr.bf16.mxu0 0
      %678 = vmatpush1.bf16.msra.mxu0 0
      %679 = vmatprep.subr.bf16.mxu0 0
      %680 = vmatpush1.bf16.msra.mxu0 0
      %681 = vmatprep.subr.bf16.mxu0 0
      %682 = vmatpush1.bf16.msra.mxu0 0
      %683 = vmatprep.subr.bf16.mxu0 0
      %684 = vmatpush1.bf16.msra.mxu0 0
      %685 = vmatprep.subr.bf16.mxu0 0
      %686 = vmatpush1.bf16.msra.mxu0 0
      %687 = vmatprep.subr.bf16.mxu0 0
      %688 = vmatpush1.bf16.msra.mxu0 0
      %689 = vmatprep.subr.bf16.mxu0 0
      %690 = vmatpush1.bf16.msra.mxu0 0
      %691 = vmatprep.subr.bf16.mxu0 0
      %692 = vmatpush1.bf16.msra.mxu0 0
      %693 = vmatprep.subr.bf16.mxu0 0
      %694 = vmatpush1.bf16.msra.mxu0 0
      %695 = vmatprep.subr.bf16.mxu0 0
      %696 = vmatpush1.bf16.msra.mxu0 0
      %697 = vmatprep.subr.bf16.mxu0 0
      %698 = vmatpush1.bf16.msra.mxu0 0
      %699 = vmatprep.mubr.bf16.mxu0 0
      %700 = vmatmul.mubr.bf16.gmra.mrb[0].mxu0 %v518
      %v701 = vpop.f32.mrb[0].mxu0
      %v702 = vadd.f32 %v511, %v701
      %v703 = vpop.f32.mrb[0].mxu0
      %v704 = vadd.f32 %v513, %v703
      %v705 = vpop.f32.mrb[0].mxu0
      %v706 = vpop.f32.mrb[0].mxu0
      %707 = vdwg.mxu0
      %v708 = vld [vmem:[%s232] sm:$0xff]
      %v709 = vld [vmem:[%s232 + $0x8] sm:$0xff]
      %v710 = vld [vmem:[%s232 + $0x10] sm:$0x3]
      %s711 = scalar_lea.vmem %s0, 8
      %v712 = vld [vmem:[%s711] sm:$0xf]
      %v716 = vcombine.high %v708, %v708
      %v718 = vunpack.c.l.s4 1983009808
      %v719 = vunpack.c.0.s8 %v718
      %v720 = vlaneseq
      %v721 = vshrl.u32 %v720, 7
      %v722 = vsub.s32 %v719, %v721
      %v723 = vrot.slane %v708, %v722
      %v725 = vunpack.c.l.s4 1983009808
      %v726 = vunpack.c.0.s8 %v725
      %v727 = vlaneseq
      %v728 = vshrl.u32 %v727, 7
      %v729 = vsub.s32 %v726, %v728
      %v730 = vrot.slane %v716, %v729
      %v731 = vcombine.high %v723, %v723
      %v732 = vcombine.high %v730, %v730
      %v733 = vcombine.high %v709, %v709
      %v735 = vunpack.c.l.s4 1983009808
      %v736 = vunpack.c.0.s8 %v735
      %v737 = vlaneseq
      %v738 = vshrl.u32 %v737, 7
      %v739 = vsub.s32 %v736, %v738
      %v740 = vrot.slane %v709, %v739
      %v742 = vunpack.c.l.s4 1983009808
      %v743 = vunpack.c.0.s8 %v742
      %v744 = vlaneseq
      %v745 = vshrl.u32 %v744, 7
      %v746 = vsub.s32 %v743, %v745
      %v747 = vrot.slane %v733, %v746
      %v748 = vcombine.high %v740, %v740
      %v749 = vcombine.high %v747, %v747
      %v751 = vunpack.c.l.s4 1983009808
      %v752 = vunpack.c.0.s8 %v751
      %v753 = vlaneseq
      %v754 = vshrl.u32 %v753, 7
      %v755 = vsub.s32 %v752, %v754
      %v756 = vrot.slane %v710, %v755
      %757 = vrot.lane.b32.xlu0 %v723, 126
      %v758 = vpop.permute.xlu0 %757
      %759 = vrot.lane.b32.xlu0 %v731, 126
      %v760 = vpop.permute.xlu0 %759
      %761 = vrot.lane.b32.xlu0 %v730, 126
      %v762 = vpop.permute.xlu0 %761
      %763 = vrot.lane.b32.xlu0 %v732, 126
      %v764 = vpop.permute.xlu0 %763
      %765 = vrot.lane.b32.xlu0 %v740, 126
      %v766 = vpop.permute.xlu0 %765
      %767 = vrot.lane.b32.xlu0 %v748, 126
      %v768 = vpop.permute.xlu0 %767
      %769 = vrot.lane.b32.xlu0 %v747, 126
      %v770 = vpop.permute.xlu0 %769
      %771 = vrot.lane.b32.xlu0 %v749, 126
      %v772 = vpop.permute.xlu0 %771
      %773 = vrot.lane.b32.xlu0 %v756, 126
      %v774 = vpop.permute.xlu0 %773
      %vm775 = vcmask 1031168
      %v776 = vsel %vm775, %v758, %v760
      %v777 = vsel %vm775, %v760, %v762
      %v778 = vsel %vm775, %v762, %v764
      %v779 = vsel %vm775, %v764, %v766
      %v780 = vsel %vm775, %v766, %v768
      %v781 = vsel %vm775, %v768, %v770
      %v782 = vsel %vm775, %v770, %v772
      %v783 = vsel %vm775, %v772, %v774
      %v785 = vsel %vm324, %v712, 0
      %v788 = vsel %vm328, %v776, 0
      %v791 = vsel %vm328, %v777, 0
      %v794 = vsel %vm328, %v778, 0
      %v797 = vsel %vm328, %v779, 0
      %v800 = vsel %vm328, %v780, 0
      %v803 = vsel %vm328, %v781, 0
      %v806 = vsel %vm328, %v782, 0
      %v809 = vsel %vm328, %v783, 0
      %811 = vmatprep.subr.bf16.mxu0 %v791
      %812 = vmatpush1.bf16.msra.mxu0 %v788
      %813 = vmatprep.subr.bf16.mxu0 0
      %814 = vmatpush1.bf16.msra.mxu0 0
      %815 = vmatprep.subr.bf16.mxu0 0
      %816 = vmatpush1.bf16.msra.mxu0 0
      %817 = vmatprep.subr.bf16.mxu0 0
      %818 = vmatpush1.bf16.msra.mxu0 0
      %819 = vmatprep.subr.bf16.mxu0 0
      %820 = vmatpush1.bf16.msra.mxu0 0
      %821 = vmatprep.subr.bf16.mxu0 0
      %822 = vmatpush1.bf16.msra.mxu0 0
      %823 = vmatprep.subr.bf16.mxu0 0
      %824 = vmatpush1.bf16.msra.mxu0 0
      %825 = vmatprep.subr.bf16.mxu0 0
      %826 = vmatpush1.bf16.msra.mxu0 0
      %827 = vmatprep.subr.bf16.mxu0 0
      %828 = vmatpush1.bf16.msra.mxu0 0
      %829 = vmatprep.subr.bf16.mxu0 0
      %830 = vmatpush1.bf16.msra.mxu0 0
      %831 = vmatprep.subr.bf16.mxu0 0
      %832 = vmatpush1.bf16.msra.mxu0 0
      %833 = vmatprep.subr.bf16.mxu0 0
      %834 = vmatpush1.bf16.msra.mxu0 0
      %835 = vmatprep.subr.bf16.mxu0 0
      %836 = vmatpush1.bf16.msra.mxu0 0
      %837 = vmatprep.subr.bf16.mxu0 0
      %838 = vmatpush1.bf16.msra.mxu0 0
      %839 = vmatprep.subr.bf16.mxu0 0
      %840 = vmatpush1.bf16.msra.mxu0 0
      %841 = vmatprep.subr.bf16.mxu0 0
      %842 = vmatpush1.bf16.msra.mxu0 0
      %843 = vmatprep.mubr.bf16.mxu0 0
      %844 = vmatmul.mubr.bf16.gmra.mrb[0].mxu0 %v785
      %v845 = vpop.f32.mrb[0].mxu0
      %v846 = vadd.f32 0.0, %v845
      %v847 = vpop.f32.mrb[0].mxu0
      %v848 = vadd.f32 0.0, %v847
      %v849 = vpop.f32.mrb[0].mxu0
      %v850 = vpop.f32.mrb[0].mxu0
      %851 = vdwg.mxu0
      %852 = vmatprep.subr.bf16.mxu0 %v797
      %853 = vmatpush1.bf16.msra.mxu0 %v794
      %854 = vmatprep.subr.bf16.mxu0 0
      %855 = vmatpush1.bf16.msra.mxu0 0
      %856 = vmatprep.subr.bf16.mxu0 0
      %857 = vmatpush1.bf16.msra.mxu0 0
      %858 = vmatprep.subr.bf16.mxu0 0
      %859 = vmatpush1.bf16.msra.mxu0 0
      %860 = vmatprep.subr.bf16.mxu0 0
      %861 = vmatpush1.bf16.msra.mxu0 0
      %862 = vmatprep.subr.bf16.mxu0 0
      %863 = vmatpush1.bf16.msra.mxu0 0
      %864 = vmatprep.subr.bf16.mxu0 0
      %865 = vmatpush1.bf16.msra.mxu0 0
      %866 = vmatprep.subr.bf16.mxu0 0
      %867 = vmatpush1.bf16.msra.mxu0 0
      %868 = vmatprep.subr.bf16.mxu0 0
      %869 = vmatpush1.bf16.msra.mxu0 0
      %870 = vmatprep.subr.bf16.mxu0 0
      %871 = vmatpush1.bf16.msra.mxu0 0
      %872 = vmatprep.subr.bf16.mxu0 0
      %873 = vmatpush1.bf16.msra.mxu0 0
      %874 = vmatprep.subr.bf16.mxu0 0
      %875 = vmatpush1.bf16.msra.mxu0 0
      %876 = vmatprep.subr.bf16.mxu0 0
      %877 = vmatpush1.bf16.msra.mxu0 0
      %878 = vmatprep.subr.bf16.mxu0 0
      %879 = vmatpush1.bf16.msra.mxu0 0
      %880 = vmatprep.subr.bf16.mxu0 0
      %881 = vmatpush1.bf16.msra.mxu0 0
      %882 = vmatprep.subr.bf16.mxu0 0
      %883 = vmatpush1.bf16.msra.mxu0 0
      %884 = vmatprep.mubr.bf16.mxu0 0
      %885 = vmatmul.mubr.bf16.gmra.mrb[0].mxu0 %v785
      %v886 = vpop.f32.mrb[0].mxu0
      %v887 = vadd.f32 0.0, %v886
      %v888 = vpop.f32.mrb[0].mxu0
      %v889 = vadd.f32 0.0, %v888
      %v890 = vpop.f32.mrb[0].mxu0
      %v891 = vpop.f32.mrb[0].mxu0
      %892 = vdwg.mxu0
      %893 = vmatprep.subr.bf16.mxu0 %v803
      %894 = vmatpush1.bf16.msra.mxu0 %v800
      %895 = vmatprep.subr.bf16.mxu0 0
      %896 = vmatpush1.bf16.msra.mxu0 0
      %897 = vmatprep.subr.bf16.mxu0 0
      %898 = vmatpush1.bf16.msra.mxu0 0
      %899 = vmatprep.subr.bf16.mxu0 0
      %900 = vmatpush1.bf16.msra.mxu0 0
      %901 = vmatprep.subr.bf16.mxu0 0
      %902 = vmatpush1.bf16.msra.mxu0 0
      %903 = vmatprep.subr.bf16.mxu0 0
      %904 = vmatpush1.bf16.msra.mxu0 0
      %905 = vmatprep.subr.bf16.mxu0 0
      %906 = vmatpush1.bf16.msra.mxu0 0
      %907 = vmatprep.subr.bf16.mxu0 0
      %908 = vmatpush1.bf16.msra.mxu0 0
      %909 = vmatprep.subr.bf16.mxu0 0
      %910 = vmatpush1.bf16.msra.mxu0 0
      %911 = vmatprep.subr.bf16.mxu0 0
      %912 = vmatpush1.bf16.msra.mxu0 0
      %913 = vmatprep.subr.bf16.mxu0 0
      %914 = vmatpush1.bf16.msra.mxu0 0
      %915 = vmatprep.subr.bf16.mxu0 0
      %916 = vmatpush1.bf16.msra.mxu0 0
      %917 = vmatprep.subr.bf16.mxu0 0
      %918 = vmatpush1.bf16.msra.mxu0 0
      %919 = vmatprep.subr.bf16.mxu0 0
      %920 = vmatpush1.bf16.msra.mxu0 0
      %921 = vmatprep.subr.bf16.mxu0 0
      %922 = vmatpush1.bf16.msra.mxu0 0
      %923 = vmatprep.subr.bf16.mxu0 0
      %924 = vmatpush1.bf16.msra.mxu0 0
      %925 = vmatprep.mubr.bf16.mxu0 0
      %926 = vmatmul.mubr.bf16.gmra.mrb[0].mxu0 %v785
      %v927 = vpop.f32.mrb[0].mxu0
      %v928 = vadd.f32 0.0, %v927
      %v929 = vpop.f32.mrb[0].mxu0
      %v930 = vadd.f32 0.0, %v929
      %v931 = vpop.f32.mrb[0].mxu0
      %v932 = vpop.f32.mrb[0].mxu0
      %933 = vdwg.mxu0
      %934 = vmatprep.subr.bf16.mxu0 %v809
      %935 = vmatpush1.bf16.msra.mxu0 %v806
      %936 = vmatprep.subr.bf16.mxu0 0
      %937 = vmatpush1.bf16.msra.mxu0 0
      %938 = vmatprep.subr.bf16.mxu0 0
      %939 = vmatpush1.bf16.msra.mxu0 0
      %940 = vmatprep.subr.bf16.mxu0 0
      %941 = vmatpush1.bf16.msra.mxu0 0
      %942 = vmatprep.subr.bf16.mxu0 0
      %943 = vmatpush1.bf16.msra.mxu0 0
      %944 = vmatprep.subr.bf16.mxu0 0
      %945 = vmatpush1.bf16.msra.mxu0 0
      %946 = vmatprep.subr.bf16.mxu0 0
      %947 = vmatpush1.bf16.msra.mxu0 0
      %948 = vmatprep.subr.bf16.mxu0 0
      %949 = vmatpush1.bf16.msra.mxu0 0
      %950 = vmatprep.subr.bf16.mxu0 0
      %951 = vmatpush1.bf16.msra.mxu0 0
      %952 = vmatprep.subr.bf16.mxu0 0
      %953 = vmatpush1.bf16.msra.mxu0 0
      %954 = vmatprep.subr.bf16.mxu0 0
      %955 = vmatpush1.bf16.msra.mxu0 0
      %956 = vmatprep.subr.bf16.mxu0 0
      %957 = vmatpush1.bf16.msra.mxu0 0
      %958 = vmatprep.subr.bf16.mxu0 0
      %959 = vmatpush1.bf16.msra.mxu0 0
      %960 = vmatprep.subr.bf16.mxu0 0
      %961 = vmatpush1.bf16.msra.mxu0 0
      %962 = vmatprep.subr.bf16.mxu0 0
      %963 = vmatpush1.bf16.msra.mxu0 0
      %964 = vmatprep.subr.bf16.mxu0 0
      %965 = vmatpush1.bf16.msra.mxu0 0
      %966 = vmatprep.mubr.bf16.mxu0 0
      %967 = vmatmul.mubr.bf16.gmra.mrb[0].mxu0 %v785
      %v968 = vpop.f32.mrb[0].mxu0
      %v969 = vadd.f32 0.0, %v968
      %v970 = vpop.f32.mrb[0].mxu0
      %v971 = vadd.f32 0.0, %v970
      %v972 = vpop.f32.mrb[0].mxu0
      %v973 = vpop.f32.mrb[0].mxu0
      %974 = vdwg.mxu0
      %v975 = vadd.f32 %v579, %v846
      %v976 = vadd.f32 %v581, %v848
      %v977 = vadd.f32 %v620, %v887
      %v978 = vadd.f32 %v622, %v889
      %v979 = vadd.f32 %v661, %v928
      %v980 = vadd.f32 %v663, %v930
      %v981 = vadd.f32 %v702, %v969
      %v982 = vadd.f32 %v704, %v971
      %v983 = vld [vmem:[%s232] sm:$0xff]
      %v984 = vld [vmem:[%s232 + $0x8] sm:$0xff]
      %v985 = vld [vmem:[%s232 + $0x10] sm:$0x3]
      %s986 = scalar_lea.vmem %s0, 12
      %v987 = vld [vmem:[%s986] sm:$0xf]
      %v991 = vcombine.high %v983, %v983
      %v993 = vunpack.c.l.s4 1983009808
      %v994 = vunpack.c.0.s8 %v993
      %v995 = vlaneseq
      %v996 = vshrl.u32 %v995, 7
      %v997 = vsub.s32 %v994, %v996
      %v998 = vrot.slane %v983, %v997
      %v1000 = vunpack.c.l.s4 1983009808
      %v1001 = vunpack.c.0.s8 %v1000
      %v1002 = vlaneseq
      %v1003 = vshrl.u32 %v1002, 7
      %v1004 = vsub.s32 %v1001, %v1003
      %v1005 = vrot.slane %v991, %v1004
      %v1006 = vcombine.high %v998, %v998
      %v1007 = vcombine.high %v1005, %v1005
      %v1008 = vcombine.high %v984, %v984
      %v1010 = vunpack.c.l.s4 1983009808
      %v1011 = vunpack.c.0.s8 %v1010
      %v1012 = vlaneseq
      %v1013 = vshrl.u32 %v1012, 7
      %v1014 = vsub.s32 %v1011, %v1013
      %v1015 = vrot.slane %v984, %v1014
      %v1017 = vunpack.c.l.s4 1983009808
      %v1018 = vunpack.c.0.s8 %v1017
      %v1019 = vlaneseq
      %v1020 = vshrl.u32 %v1019, 7
      %v1021 = vsub.s32 %v1018, %v1020
      %v1022 = vrot.slane %v1008, %v1021
      %v1023 = vcombine.high %v1015, %v1015
      %v1024 = vcombine.high %v1022, %v1022
      %v1026 = vunpack.c.l.s4 1983009808
      %v1027 = vunpack.c.0.s8 %v1026
      %v1028 = vlaneseq
      %v1029 = vshrl.u32 %v1028, 7
      %v1030 = vsub.s32 %v1027, %v1029
      %v1031 = vrot.slane %v985, %v1030
      %1032 = vrot.lane.b32.xlu0 %v998, 118
      %v1033 = vpop.permute.xlu0 %1032
      %1034 = vrot.lane.b32.xlu0 %v1006, 118
      %v1035 = vpop.permute.xlu0 %1034
      %1036 = vrot.lane.b32.xlu0 %v1005, 118
      %v1037 = vpop.permute.xlu0 %1036
      %1038 = vrot.lane.b32.xlu0 %v1007, 118
      %v1039 = vpop.permute.xlu0 %1038
      %1040 = vrot.lane.b32.xlu0 %v1015, 118
      %v1041 = vpop.permute.xlu0 %1040
      %1042 = vrot.lane.b32.xlu0 %v1023, 118
      %v1043 = vpop.permute.xlu0 %1042
      %1044 = vrot.lane.b32.xlu0 %v1022, 118
      %v1045 = vpop.permute.xlu0 %1044
      %1046 = vrot.lane.b32.xlu0 %v1024, 118
      %v1047 = vpop.permute.xlu0 %1046
      %1048 = vrot.lane.b32.xlu0 %v1031, 118
      %v1049 = vpop.permute.xlu0 %1048
      %vm1050 = vcmask 965632
      %v1051 = vsel %vm1050, %v1033, %v1035
      %v1052 = vsel %vm1050, %v1035, %v1037
      %v1053 = vsel %vm1050, %v1037, %v1039
      %v1054 = vsel %vm1050, %v1039, %v1041
      %v1055 = vsel %vm1050, %v1041, %v1043
      %v1056 = vsel %vm1050, %v1043, %v1045
      %v1057 = vsel %vm1050, %v1045, %v1047
      %v1058 = vsel %vm1050, %v1047, %v1049
      %v1060 = vsel %vm324, %v987, 0
      %v1063 = vsel %vm328, %v1051, 0
      %v1066 = vsel %vm328, %v1052, 0
      %v1069 = vsel %vm328, %v1053, 0
      %v1072 = vsel %vm328, %v1054, 0
      %v1075 = vsel %vm328, %v1055, 0
      %v1078 = vsel %vm328, %v1056, 0
      %v1081 = vsel %vm328, %v1057, 0
      %v1084 = vsel %vm328, %v1058, 0
      %1086 = vmatprep.subr.bf16.mxu0 %v1066
      %1087 = vmatpush1.bf16.msra.mxu0 %v1063
      %1088 = vmatprep.subr.bf16.mxu0 0
      %1089 = vmatpush1.bf16.msra.mxu0 0
      %1090 = vmatprep.subr.bf16.mxu0 0
      %1091 = vmatpush1.bf16.msra.mxu0 0
      %1092 = vmatprep.subr.bf16.mxu0 0
      %1093 = vmatpush1.bf16.msra.mxu0 0
      %1094 = vmatprep.subr.bf16.mxu0 0
      %1095 = vmatpush1.bf16.msra.mxu0 0
      %1096 = vmatprep.subr.bf16.mxu0 0
      %1097 = vmatpush1.bf16.msra.mxu0 0
      %1098 = vmatprep.subr.bf16.mxu0 0
      %1099 = vmatpush1.bf16.msra.mxu0 0
      %1100 = vmatprep.subr.bf16.mxu0 0
      %1101 = vmatpush1.bf16.msra.mxu0 0
      %1102 = vmatprep.subr.bf16.mxu0 0
      %1103 = vmatpush1.bf16.msra.mxu0 0
      %1104 = vmatprep.subr.bf16.mxu0 0
      %1105 = vmatpush1.bf16.msra.mxu0 0
      %1106 = vmatprep.subr.bf16.mxu0 0
      %1107 = vmatpush1.bf16.msra.mxu0 0
      %1108 = vmatprep.subr.bf16.mxu0 0
      %1109 = vmatpush1.bf16.msra.mxu0 0
      %1110 = vmatprep.subr.bf16.mxu0 0
      %1111 = vmatpush1.bf16.msra.mxu0 0
      %1112 = vmatprep.subr.bf16.mxu0 0
      %1113 = vmatpush1.bf16.msra.mxu0 0
      %1114 = vmatprep.subr.bf16.mxu0 0
      %1115 = vmatpush1.bf16.msra.mxu0 0
      %1116 = vmatprep.subr.bf16.mxu0 0
      %1117 = vmatpush1.bf16.msra.mxu0 0
      %1118 = vmatprep.mubr.bf16.mxu0 0
      %1119 = vmatmul.mubr.bf16.gmra.mrb[0].mxu0 %v1060
      %v1120 = vpop.f32.mrb[0].mxu0
      %v1121 = vadd.f32 0.0, %v1120
      %v1122 = vpop.f32.mrb[0].mxu0
      %v1123 = vadd.f32 0.0, %v1122
      %v1124 = vpop.f32.mrb[0].mxu0
      %v1125 = vpop.f32.mrb[0].mxu0
      %1126 = vdwg.mxu0
      %1127 = vmatprep.subr.bf16.mxu0 %v1072
      %1128 = vmatpush1.bf16.msra.mxu0 %v1069
      %1129 = vmatprep.subr.bf16.mxu0 0
      %1130 = vmatpush1.bf16.msra.mxu0 0
      %1131 = vmatprep.subr.bf16.mxu0 0
      %1132 = vmatpush1.bf16.msra.mxu0 0
      %1133 = vmatprep.subr.bf16.mxu0 0
      %1134 = vmatpush1.bf16.msra.mxu0 0
      %1135 = vmatprep.subr.bf16.mxu0 0
      %1136 = vmatpush1.bf16.msra.mxu0 0
      %1137 = vmatprep.subr.bf16.mxu0 0
      %1138 = vmatpush1.bf16.msra.mxu0 0
      %1139 = vmatprep.subr.bf16.mxu0 0
      %1140 = vmatpush1.bf16.msra.mxu0 0
      %1141 = vmatprep.subr.bf16.mxu0 0
      %1142 = vmatpush1.bf16.msra.mxu0 0
      %1143 = vmatprep.subr.bf16.mxu0 0
      %1144 = vmatpush1.bf16.msra.mxu0 0
      %1145 = vmatprep.subr.bf16.mxu0 0
      %1146 = vmatpush1.bf16.msra.mxu0 0
      %1147 = vmatprep.subr.bf16.mxu0 0
      %1148 = vmatpush1.bf16.msra.mxu0 0
      %1149 = vmatprep.subr.bf16.mxu0 0
      %1150 = vmatpush1.bf16.msra.mxu0 0
      %1151 = vmatprep.subr.bf16.mxu0 0
      %1152 = vmatpush1.bf16.msra.mxu0 0
      %1153 = vmatprep.subr.bf16.mxu0 0
      %1154 = vmatpush1.bf16.msra.mxu0 0
      %1155 = vmatprep.subr.bf16.mxu0 0
      %1156 = vmatpush1.bf16.msra.mxu0 0
      %1157 = vmatprep.subr.bf16.mxu0 0
      %1158 = vmatpush1.bf16.msra.mxu0 0
      %1159 = vmatprep.mubr.bf16.mxu0 0
      %1160 = vmatmul.mubr.bf16.gmra.mrb[0].mxu0 %v1060
      %v1161 = vpop.f32.mrb[0].mxu0
      %v1162 = vadd.f32 0.0, %v1161
      %v1163 = vpop.f32.mrb[0].mxu0
      %v1164 = vadd.f32 0.0, %v1163
      %v1165 = vpop.f32.mrb[0].mxu0
      %v1166 = vpop.f32.mrb[0].mxu0
      %1167 = vdwg.mxu0
      %1168 = vmatprep.subr.bf16.mxu0 %v1078
      %1169 = vmatpush1.bf16.msra.mxu0 %v1075
      %1170 = vmatprep.subr.bf16.mxu0 0
      %1171 = vmatpush1.bf16.msra.mxu0 0
      %1172 = vmatprep.subr.bf16.mxu0 0
      %1173 = vmatpush1.bf16.msra.mxu0 0
      %1174 = vmatprep.subr.bf16.mxu0 0
      %1175 = vmatpush1.bf16.msra.mxu0 0
      %1176 = vmatprep.subr.bf16.mxu0 0
      %1177 = vmatpush1.bf16.msra.mxu0 0
      %1178 = vmatprep.subr.bf16.mxu0 0
      %1179 = vmatpush1.bf16.msra.mxu0 0
      %1180 = vmatprep.subr.bf16.mxu0 0
      %1181 = vmatpush1.bf16.msra.mxu0 0
      %1182 = vmatprep.subr.bf16.mxu0 0
      %1183 = vmatpush1.bf16.msra.mxu0 0
      %1184 = vmatprep.subr.bf16.mxu0 0
      %1185 = vmatpush1.bf16.msra.mxu0 0
      %1186 = vmatprep.subr.bf16.mxu0 0
      %1187 = vmatpush1.bf16.msra.mxu0 0
      %1188 = vmatprep.subr.bf16.mxu0 0
      %1189 = vmatpush1.bf16.msra.mxu0 0
      %1190 = vmatprep.subr.bf16.mxu0 0
      %1191 = vmatpush1.bf16.msra.mxu0 0
      %1192 = vmatprep.subr.bf16.mxu0 0
      %1193 = vmatpush1.bf16.msra.mxu0 0
      %1194 = vmatprep.subr.bf16.mxu0 0
      %1195 = vmatpush1.bf16.msra.mxu0 0
      %1196 = vmatprep.subr.bf16.mxu0 0
      %1197 = vmatpush1.bf16.msra.mxu0 0
      %1198 = vmatprep.subr.bf16.mxu0 0
      %1199 = vmatpush1.bf16.msra.mxu0 0
      %1200 = vmatprep.mubr.bf16.mxu0 0
      %1201 = vmatmul.mubr.bf16.gmra.mrb[0].mxu0 %v1060
      %v1202 = vpop.f32.mrb[0].mxu0
      %v1203 = vadd.f32 0.0, %v1202
      %v1204 = vpop.f32.mrb[0].mxu0
      %v1205 = vadd.f32 0.0, %v1204
      %v1206 = vpop.f32.mrb[0].mxu0
      %v1207 = vpop.f32.mrb[0].mxu0
      %1208 = vdwg.mxu0
      %1209 = vmatprep.subr.bf16.mxu0 %v1084
      %1210 = vmatpush1.bf16.msra.mxu0 %v1081
      %1211 = vmatprep.subr.bf16.mxu0 0
      %1212 = vmatpush1.bf16.msra.mxu0 0
      %1213 = vmatprep.subr.bf16.mxu0 0
      %1214 = vmatpush1.bf16.msra.mxu0 0
      %1215 = vmatprep.subr.bf16.mxu0 0
      %1216 = vmatpush1.bf16.msra.mxu0 0
      %1217 = vmatprep.subr.bf16.mxu0 0
      %1218 = vmatpush1.bf16.msra.mxu0 0
      %1219 = vmatprep.subr.bf16.mxu0 0
      %1220 = vmatpush1.bf16.msra.mxu0 0
      %1221 = vmatprep.subr.bf16.mxu0 0
      %1222 = vmatpush1.bf16.msra.mxu0 0
      %1223 = vmatprep.subr.bf16.mxu0 0
      %1224 = vmatpush1.bf16.msra.mxu0 0
      %1225 = vmatprep.subr.bf16.mxu0 0
      %1226 = vmatpush1.bf16.msra.mxu0 0
      %1227 = vmatprep.subr.bf16.mxu0 0
      %1228 = vmatpush1.bf16.msra.mxu0 0
      %1229 = vmatprep.subr.bf16.mxu0 0
      %1230 = vmatpush1.bf16.msra.mxu0 0
      %1231 = vmatprep.subr.bf16.mxu0 0
      %1232 = vmatpush1.bf16.msra.mxu0 0
      %1233 = vmatprep.subr.bf16.mxu0 0
      %1234 = vmatpush1.bf16.msra.mxu0 0
      %1235 = vmatprep.subr.bf16.mxu0 0
      %1236 = vmatpush1.bf16.msra.mxu0 0
      %1237 = vmatprep.subr.bf16.mxu0 0
      %1238 = vmatpush1.bf16.msra.mxu0 0
      %1239 = vmatprep.subr.bf16.mxu0 0
      %1240 = vmatpush1.bf16.msra.mxu0 0
      %1241 = vmatprep.mubr.bf16.mxu0 0
      %1242 = vmatmul.mubr.bf16.gmra.mrb[0].mxu0 %v1060
      %v1243 = vpop.f32.mrb[0].mxu0
      %v1244 = vadd.f32 0.0, %v1243
      %v1245 = vpop.f32.mrb[0].mxu0
      %v1246 = vadd.f32 0.0, %v1245
      %v1247 = vpop.f32.mrb[0].mxu0
      %v1248 = vpop.f32.mrb[0].mxu0
      %1249 = vdwg.mxu0
      %v1250 = vadd.f32 %v975, %v1121
      %v1251 = vadd.f32 %v976, %v1123
      %v1252 = vadd.f32 %v977, %v1162
      %v1253 = vadd.f32 %v978, %v1164
      %v1254 = vadd.f32 %v979, %v1203
      %v1255 = vadd.f32 %v980, %v1205
      %v1256 = vadd.f32 %v981, %v1244
      %v1257 = vadd.f32 %v982, %v1246
      %v1258 = vld [vmem:[%s232] sm:$0xff]
      %v1259 = vld [vmem:[%s232 + $0x8] sm:$0xff]
      %v1260 = vld [vmem:[%s232 + $0x10] sm:$0x3]
      %s1261 = scalar_lea.vmem %s0, 16
      %v1262 = vld [vmem:[%s1261] sm:$0xf]
      %v1266 = vcombine.high %v1258, %v1258
      %v1268 = vunpack.c.l.s4 1983009808
      %v1269 = vunpack.c.0.s8 %v1268
      %v1270 = vlaneseq
      %v1271 = vshrl.u32 %v1270, 7
      %v1272 = vsub.s32 %v1269, %v1271
      %v1273 = vrot.slane %v1258, %v1272
      %v1275 = vunpack.c.l.s4 1983009808
      %v1276 = vunpack.c.0.s8 %v1275
      %v1277 = vlaneseq
      %v1278 = vshrl.u32 %v1277, 7
      %v1279 = vsub.s32 %v1276, %v1278
      %v1280 = vrot.slane %v1266, %v1279
      %v1281 = vcombine.high %v1273, %v1273
      %v1282 = vcombine.high %v1280, %v1280
      %v1283 = vcombine.high %v1259, %v1259
      %v1285 = vunpack.c.l.s4 1983009808
      %v1286 = vunpack.c.0.s8 %v1285
      %v1287 = vlaneseq
      %v1288 = vshrl.u32 %v1287, 7
      %v1289 = vsub.s32 %v1286, %v1288
      %v1290 = vrot.slane %v1259, %v1289
      %v1292 = vunpack.c.l.s4 1983009808
      %v1293 = vunpack.c.0.s8 %v1292
      %v1294 = vlaneseq
      %v1295 = vshrl.u32 %v1294, 7
      %v1296 = vsub.s32 %v1293, %v1295
      %v1297 = vrot.slane %v1283, %v1296
      %v1298 = vcombine.high %v1290, %v1290
      %v1299 = vcombine.high %v1297, %v1297
      %v1301 = vunpack.c.l.s4 1983009808
      %v1302 = vunpack.c.0.s8 %v1301
      %v1303 = vlaneseq
      %v1304 = vshrl.u32 %v1303, 7
      %v1305 = vsub.s32 %v1302, %v1304
      %v1306 = vrot.slane %v1260, %v1305
      %1307 = vrot.lane.b32.xlu0 %v1273, 117
      %v1308 = vpop.permute.xlu0 %1307
      %1309 = vrot.lane.b32.xlu0 %v1281, 117
      %v1310 = vpop.permute.xlu0 %1309
      %1311 = vrot.lane.b32.xlu0 %v1280, 117
      %v1312 = vpop.permute.xlu0 %1311
      %1313 = vrot.lane.b32.xlu0 %v1282, 117
      %v1314 = vpop.permute.xlu0 %1313
      %1315 = vrot.lane.b32.xlu0 %v1290, 117
      %v1316 = vpop.permute.xlu0 %1315
      %1317 = vrot.lane.b32.xlu0 %v1298, 117
      %v1318 = vpop.permute.xlu0 %1317
      %1319 = vrot.lane.b32.xlu0 %v1297, 117
      %v1320 = vpop.permute.xlu0 %1319
      %1321 = vrot.lane.b32.xlu0 %v1299, 117
      %v1322 = vpop.permute.xlu0 %1321
      %1323 = vrot.lane.b32.xlu0 %v1306, 117
      %v1324 = vpop.permute.xlu0 %1323
      %vm1325 = vcmask 957440
      %v1326 = vsel %vm1325, %v1308, %v1310
      %v1327 = vsel %vm1325, %v1310, %v1312
      %v1328 = vsel %vm1325, %v1312, %v1314
      %v1329 = vsel %vm1325, %v1314, %v1316
      %v1330 = vsel %vm1325, %v1316, %v1318
      %v1331 = vsel %vm1325, %v1318, %v1320
      %v1332 = vsel %vm1325, %v1320, %v1322
      %v1333 = vsel %vm1325, %v1322, %v1324
      %v1335 = vsel %vm324, %v1262, 0
      %v1338 = vsel %vm328, %v1326, 0
      %v1341 = vsel %vm328, %v1327, 0
      %v1344 = vsel %vm328, %v1328, 0
      %v1347 = vsel %vm328, %v1329, 0
      %v1350 = vsel %vm328, %v1330, 0
      %v1353 = vsel %vm328, %v1331, 0
      %v1356 = vsel %vm328, %v1332, 0
      %v1359 = vsel %vm328, %v1333, 0
      %1361 = vmatprep.subr.bf16.mxu0 %v1341
      %1362 = vmatpush1.bf16.msra.mxu0 %v1338
      %1363 = vmatprep.subr.bf16.mxu0 0
      %1364 = vmatpush1.bf16.msra.mxu0 0
      %1365 = vmatprep.subr.bf16.mxu0 0
      %1366 = vmatpush1.bf16.msra.mxu0 0
      %1367 = vmatprep.subr.bf16.mxu0 0
      %1368 = vmatpush1.bf16.msra.mxu0 0
      %1369 = vmatprep.subr.bf16.mxu0 0
      %1370 = vmatpush1.bf16.msra.mxu0 0
      %1371 = vmatprep.subr.bf16.mxu0 0
      %1372 = vmatpush1.bf16.msra.mxu0 0
      %1373 = vmatprep.subr.bf16.mxu0 0
      %1374 = vmatpush1.bf16.msra.mxu0 0
      %1375 = vmatprep.subr.bf16.mxu0 0
      %1376 = vmatpush1.bf16.msra.mxu0 0
      %1377 = vmatprep.subr.bf16.mxu0 0
      %1378 = vmatpush1.bf16.msra.mxu0 0
      %1379 = vmatprep.subr.bf16.mxu0 0
      %1380 = vmatpush1.bf16.msra.mxu0 0
      %1381 = vmatprep.subr.bf16.mxu0 0
      %1382 = vmatpush1.bf16.msra.mxu0 0
      %1383 = vmatprep.subr.bf16.mxu0 0
      %1384 = vmatpush1.bf16.msra.mxu0 0
      %1385 = vmatprep.subr.bf16.mxu0 0
      %1386 = vmatpush1.bf16.msra.mxu0 0
      %1387 = vmatprep.subr.bf16.mxu0 0
      %1388 = vmatpush1.bf16.msra.mxu0 0
      %1389 = vmatprep.subr.bf16.mxu0 0
      %1390 = vmatpush1.bf16.msra.mxu0 0
      %1391 = vmatprep.subr.bf16.mxu0 0
      %1392 = vmatpush1.bf16.msra.mxu0 0
      %1393 = vmatprep.mubr.bf16.mxu0 0
      %1394 = vmatmul.mubr.bf16.gmra.mrb[0].mxu0 %v1335
      %v1395 = vpop.f32.mrb[0].mxu0
      %v1396 = vadd.f32 0.0, %v1395
      %v1397 = vpop.f32.mrb[0].mxu0
      %v1398 = vadd.f32 0.0, %v1397
      %v1399 = vpop.f32.mrb[0].mxu0
      %v1400 = vpop.f32.mrb[0].mxu0
      %1401 = vdwg.mxu0
      %1402 = vmatprep.subr.bf16.mxu0 %v1347
      %1403 = vmatpush1.bf16.msra.mxu0 %v1344
      %1404 = vmatprep.subr.bf16.mxu0 0
      %1405 = vmatpush1.bf16.msra.mxu0 0
      %1406 = vmatprep.subr.bf16.mxu0 0
      %1407 = vmatpush1.bf16.msra.mxu0 0
      %1408 = vmatprep.subr.bf16.mxu0 0
      %1409 = vmatpush1.bf16.msra.mxu0 0
      %1410 = vmatprep.subr.bf16.mxu0 0
      %1411 = vmatpush1.bf16.msra.mxu0 0
      %1412 = vmatprep.subr.bf16.mxu0 0
      %1413 = vmatpush1.bf16.msra.mxu0 0
      %1414 = vmatprep.subr.bf16.mxu0 0
      %1415 = vmatpush1.bf16.msra.mxu0 0
      %1416 = vmatprep.subr.bf16.mxu0 0
      %1417 = vmatpush1.bf16.msra.mxu0 0
      %1418 = vmatprep.subr.bf16.mxu0 0
      %1419 = vmatpush1.bf16.msra.mxu0 0
      %1420 = vmatprep.subr.bf16.mxu0 0
      %1421 = vmatpush1.bf16.msra.mxu0 0
      %1422 = vmatprep.subr.bf16.mxu0 0
      %1423 = vmatpush1.bf16.msra.mxu0 0
      %1424 = vmatprep.subr.bf16.mxu0 0
      %1425 = vmatpush1.bf16.msra.mxu0 0
      %1426 = vmatprep.subr.bf16.mxu0 0
      %1427 = vmatpush1.bf16.msra.mxu0 0
      %1428 = vmatprep.subr.bf16.mxu0 0
      %1429 = vmatpush1.bf16.msra.mxu0 0
      %1430 = vmatprep.subr.bf16.mxu0 0
      %1431 = vmatpush1.bf16.msra.mxu0 0
      %1432 = vmatprep.subr.bf16.mxu0 0
      %1433 = vmatpush1.bf16.msra.mxu0 0
      %1434 = vmatprep.mubr.bf16.mxu0 0
      %1435 = vmatmul.mubr.bf16.gmra.mrb[0].mxu0 %v1335
      %v1436 = vpop.f32.mrb[0].mxu0
      %v1437 = vadd.f32 0.0, %v1436
      %v1438 = vpop.f32.mrb[0].mxu0
      %v1439 = vadd.f32 0.0, %v1438
      %v1440 = vpop.f32.mrb[0].mxu0
      %v1441 = vpop.f32.mrb[0].mxu0
      %1442 = vdwg.mxu0
      %1443 = vmatprep.subr.bf16.mxu0 %v1353
      %1444 = vmatpush1.bf16.msra.mxu0 %v1350
      %1445 = vmatprep.subr.bf16.mxu0 0
      %1446 = vmatpush1.bf16.msra.mxu0 0
      %1447 = vmatprep.subr.bf16.mxu0 0
      %1448 = vmatpush1.bf16.msra.mxu0 0
      %1449 = vmatprep.subr.bf16.mxu0 0
      %1450 = vmatpush1.bf16.msra.mxu0 0
      %1451 = vmatprep.subr.bf16.mxu0 0
      %1452 = vmatpush1.bf16.msra.mxu0 0
      %1453 = vmatprep.subr.bf16.mxu0 0
      %1454 = vmatpush1.bf16.msra.mxu0 0
      %1455 = vmatprep.subr.bf16.mxu0 0
      %1456 = vmatpush1.bf16.msra.mxu0 0
      %1457 = vmatprep.subr.bf16.mxu0 0
      %1458 = vmatpush1.bf16.msra.mxu0 0
      %1459 = vmatprep.subr.bf16.mxu0 0
      %1460 = vmatpush1.bf16.msra.mxu0 0
      %1461 = vmatprep.subr.bf16.mxu0 0
      %1462 = vmatpush1.bf16.msra.mxu0 0
      %1463 = vmatprep.subr.bf16.mxu0 0
      %1464 = vmatpush1.bf16.msra.mxu0 0
      %1465 = vmatprep.subr.bf16.mxu0 0
      %1466 = vmatpush1.bf16.msra.mxu0 0
      %1467 = vmatprep.subr.bf16.mxu0 0
      %1468 = vmatpush1.bf16.msra.mxu0 0
      %1469 = vmatprep.subr.bf16.mxu0 0
      %1470 = vmatpush1.bf16.msra.mxu0 0
      %1471 = vmatprep.subr.bf16.mxu0 0
      %1472 = vmatpush1.bf16.msra.mxu0 0
      %1473 = vmatprep.subr.bf16.mxu0 0
      %1474 = vmatpush1.bf16.msra.mxu0 0
      %1475 = vmatprep.mubr.bf16.mxu0 0
      %1476 = vmatmul.mubr.bf16.gmra.mrb[0].mxu0 %v1335
      %v1477 = vpop.f32.mrb[0].mxu0
      %v1478 = vadd.f32 0.0, %v1477
      %v1479 = vpop.f32.mrb[0].mxu0
      %v1480 = vadd.f32 0.0, %v1479
      %v1481 = vpop.f32.mrb[0].mxu0
      %v1482 = vpop.f32.mrb[0].mxu0
      %1483 = vdwg.mxu0
      %1484 = vmatprep.subr.bf16.mxu0 %v1359
      %1485 = vmatpush1.bf16.msra.mxu0 %v1356
      %1486 = vmatprep.subr.bf16.mxu0 0
      %1487 = vmatpush1.bf16.msra.mxu0 0
      %1488 = vmatprep.subr.bf16.mxu0 0
      %1489 = vmatpush1.bf16.msra.mxu0 0
      %1490 = vmatprep.subr.bf16.mxu0 0
      %1491 = vmatpush1.bf16.msra.mxu0 0
      %1492 = vmatprep.subr.bf16.mxu0 0
      %1493 = vmatpush1.bf16.msra.mxu0 0
      %1494 = vmatprep.subr.bf16.mxu0 0
      %1495 = vmatpush1.bf16.msra.mxu0 0
      %1496 = vmatprep.subr.bf16.mxu0 0
      %1497 = vmatpush1.bf16.msra.mxu0 0
      %1498 = vmatprep.subr.bf16.mxu0 0
      %1499 = vmatpush1.bf16.msra.mxu0 0
      %1500 = vmatprep.subr.bf16.mxu0 0
      %1501 = vmatpush1.bf16.msra.mxu0 0
      %1502 = vmatprep.subr.bf16.mxu0 0
      %1503 = vmatpush1.bf16.msra.mxu0 0
      %1504 = vmatprep.subr.bf16.mxu0 0
      %1505 = vmatpush1.bf16.msra.mxu0 0
      %1506 = vmatprep.subr.bf16.mxu0 0
      %1507 = vmatpush1.bf16.msra.mxu0 0
      %1508 = vmatprep.subr.bf16.mxu0 0
      %1509 = vmatpush1.bf16.msra.mxu0 0
      %1510 = vmatprep.subr.bf16.mxu0 0
      %1511 = vmatpush1.bf16.msra.mxu0 0
      %1512 = vmatprep.subr.bf16.mxu0 0
      %1513 = vmatpush1.bf16.msra.mxu0 0
      %1514 = vmatprep.subr.bf16.mxu0 0
      %1515 = vmatpush1.bf16.msra.mxu0 0
      %1516 = vmatprep.mubr.bf16.mxu0 0
      %1517 = vmatmul.mubr.bf16.gmra.mrb[0].mxu0 %v1335
      %v1518 = vpop.f32.mrb[0].mxu0
      %v1519 = vadd.f32 0.0, %v1518
      %v1520 = vpop.f32.mrb[0].mxu0
      %v1521 = vadd.f32 0.0, %v1520
      %v1522 = vpop.f32.mrb[0].mxu0
      %v1523 = vpop.f32.mrb[0].mxu0
      %1524 = vdwg.mxu0
      %v1525 = vadd.f32 %v1250, %v1396
      %v1526 = vadd.f32 %v1251, %v1398
      %v1527 = vadd.f32 %v1252, %v1437
      %v1528 = vadd.f32 %v1253, %v1439
      %v1529 = vadd.f32 %v1254, %v1478
      %v1530 = vadd.f32 %v1255, %v1480
      %v1531 = vadd.f32 %v1256, %v1519
      %v1532 = vadd.f32 %v1257, %v1521
      %v1533 = vld [vmem:[%s232] sm:$0xff]
      %v1534 = vld [vmem:[%s232 + $0x8] sm:$0xff]
      %v1535 = vld [vmem:[%s232 + $0x10] sm:$0x3]
      %s1536 = scalar_lea.vmem %s0, 20
      %v1537 = vld [vmem:[%s1536] sm:$0xf]
      %v1541 = vcombine.high %v1533, %v1533
      %v1543 = vunpack.c.l.s4 1983009808
      %v1544 = vunpack.c.0.s8 %v1543
      %v1545 = vlaneseq
      %v1546 = vshrl.u32 %v1545, 7
      %v1547 = vsub.s32 %v1544, %v1546
      %v1548 = vrot.slane %v1533, %v1547
      %v1550 = vunpack.c.l.s4 1983009808
      %v1551 = vunpack.c.0.s8 %v1550
      %v1552 = vlaneseq
      %v1553 = vshrl.u32 %v1552, 7
      %v1554 = vsub.s32 %v1551, %v1553
      %v1555 = vrot.slane %v1541, %v1554
      %v1556 = vcombine.high %v1548, %v1548
      %v1557 = vcombine.high %v1555, %v1555
      %v1558 = vcombine.high %v1534, %v1534
      %v1560 = vunpack.c.l.s4 1983009808
      %v1561 = vunpack.c.0.s8 %v1560
      %v1562 = vlaneseq
      %v1563 = vshrl.u32 %v1562, 7
      %v1564 = vsub.s32 %v1561, %v1563
      %v1565 = vrot.slane %v1534, %v1564
      %v1567 = vunpack.c.l.s4 1983009808
      %v1568 = vunpack.c.0.s8 %v1567
      %v1569 = vlaneseq
      %v1570 = vshrl.u32 %v1569, 7
      %v1571 = vsub.s32 %v1568, %v1570
      %v1572 = vrot.slane %v1558, %v1571
      %v1573 = vcombine.high %v1565, %v1565
      %v1574 = vcombine.high %v1572, %v1572
      %v1576 = vunpack.c.l.s4 1983009808
      %v1577 = vunpack.c.0.s8 %v1576
      %v1578 = vlaneseq
      %v1579 = vshrl.u32 %v1578, 7
      %v1580 = vsub.s32 %v1577, %v1579
      %v1581 = vrot.slane %v1535, %v1580
      %1582 = vrot.lane.b32.xlu0 %v1548, 116
      %v1583 = vpop.permute.xlu0 %1582
      %1584 = vrot.lane.b32.xlu0 %v1556, 116
      %v1585 = vpop.permute.xlu0 %1584
      %1586 = vrot.lane.b32.xlu0 %v1555, 116
      %v1587 = vpop.permute.xlu0 %1586
      %1588 = vrot.lane.b32.xlu0 %v1557, 116
      %v1589 = vpop.permute.xlu0 %1588
      %1590 = vrot.lane.b32.xlu0 %v1565, 116
      %v1591 = vpop.permute.xlu0 %1590
      %1592 = vrot.lane.b32.xlu0 %v1573, 116
      %v1593 = vpop.permute.xlu0 %1592
      %1594 = vrot.lane.b32.xlu0 %v1572, 116
      %v1595 = vpop.permute.xlu0 %1594
      %1596 = vrot.lane.b32.xlu0 %v1574, 116
      %v1597 = vpop.permute.xlu0 %1596
      %1598 = vrot.lane.b32.xlu0 %v1581, 116
      %v1599 = vpop.permute.xlu0 %1598
      %vm1600 = vcmask 949248
      %v1601 = vsel %vm1600, %v1583, %v1585
      %v1602 = vsel %vm1600, %v1585, %v1587
      %v1603 = vsel %vm1600, %v1587, %v1589
      %v1604 = vsel %vm1600, %v1589, %v1591
      %v1605 = vsel %vm1600, %v1591, %v1593
      %v1606 = vsel %vm1600, %v1593, %v1595
      %v1607 = vsel %vm1600, %v1595, %v1597
      %v1608 = vsel %vm1600, %v1597, %v1599
      %v1610 = vsel %vm324, %v1537, 0
      %v1613 = vsel %vm328, %v1601, 0
      %v1616 = vsel %vm328, %v1602, 0
      %v1619 = vsel %vm328, %v1603, 0
      %v1622 = vsel %vm328, %v1604, 0
      %v1625 = vsel %vm328, %v1605, 0
      %v1628 = vsel %vm328, %v1606, 0
      %v1631 = vsel %vm328, %v1607, 0
      %v1634 = vsel %vm328, %v1608, 0
      %1636 = vmatprep.subr.bf16.mxu0 %v1616
      %1637 = vmatpush1.bf16.msra.mxu0 %v1613
      %1638 = vmatprep.subr.bf16.mxu0 0
      %1639 = vmatpush1.bf16.msra.mxu0 0
      %1640 = vmatprep.subr.bf16.mxu0 0
      %1641 = vmatpush1.bf16.msra.mxu0 0
      %1642 = vmatprep.subr.bf16.mxu0 0
      %1643 = vmatpush1.bf16.msra.mxu0 0
      %1644 = vmatprep.subr.bf16.mxu0 0
      %1645 = vmatpush1.bf16.msra.mxu0 0
      %1646 = vmatprep.subr.bf16.mxu0 0
      %1647 = vmatpush1.bf16.msra.mxu0 0
      %1648 = vmatprep.subr.bf16.mxu0 0
      %1649 = vmatpush1.bf16.msra.mxu0 0
      %1650 = vmatprep.subr.bf16.mxu0 0
      %1651 = vmatpush1.bf16.msra.mxu0 0
      %1652 = vmatprep.subr.bf16.mxu0 0
      %1653 = vmatpush1.bf16.msra.mxu0 0
      %1654 = vmatprep.subr.bf16.mxu0 0
      %1655 = vmatpush1.bf16.msra.mxu0 0
      %1656 = vmatprep.subr.bf16.mxu0 0
      %1657 = vmatpush1.bf16.msra.mxu0 0
      %1658 = vmatprep.subr.bf16.mxu0 0
      %1659 = vmatpush1.bf16.msra.mxu0 0
      %1660 = vmatprep.subr.bf16.mxu0 0
      %1661 = vmatpush1.bf16.msra.mxu0 0
      %1662 = vmatprep.subr.bf16.mxu0 0
      %1663 = vmatpush1.bf16.msra.mxu0 0
      %1664 = vmatprep.subr.bf16.mxu0 0
      %1665 = vmatpush1.bf16.msra.mxu0 0
      %1666 = vmatprep.subr.bf16.mxu0 0
      %1667 = vmatpush1.bf16.msra.mxu0 0
      %1668 = vmatprep.mubr.bf16.mxu0 0
      %1669 = vmatmul.mubr.bf16.gmra.mrb[0].mxu0 %v1610
      %v1670 = vpop.f32.mrb[0].mxu0
      %v1671 = vadd.f32 0.0, %v1670
      %v1672 = vpop.f32.mrb[0].mxu0
      %v1673 = vadd.f32 0.0, %v1672
      %v1674 = vpop.f32.mrb[0].mxu0
      %v1675 = vpop.f32.mrb[0].mxu0
      %1676 = vdwg.mxu0
      %1677 = vmatprep.subr.bf16.mxu0 %v1622
      %1678 = vmatpush1.bf16.msra.mxu0 %v1619
      %1679 = vmatprep.subr.bf16.mxu0 0
      %1680 = vmatpush1.bf16.msra.mxu0 0
      %1681 = vmatprep.subr.bf16.mxu0 0
      %1682 = vmatpush1.bf16.msra.mxu0 0
      %1683 = vmatprep.subr.bf16.mxu0 0
      %1684 = vmatpush1.bf16.msra.mxu0 0
      %1685 = vmatprep.subr.bf16.mxu0 0
      %1686 = vmatpush1.bf16.msra.mxu0 0
      %1687 = vmatprep.subr.bf16.mxu0 0
      %1688 = vmatpush1.bf16.msra.mxu0 0
      %1689 = vmatprep.subr.bf16.mxu0 0
      %1690 = vmatpush1.bf16.msra.mxu0 0
      %1691 = vmatprep.subr.bf16.mxu0 0
      %1692 = vmatpush1.bf16.msra.mxu0 0
      %1693 = vmatprep.subr.bf16.mxu0 0
      %1694 = vmatpush1.bf16.msra.mxu0 0
      %1695 = vmatprep.subr.bf16.mxu0 0
      %1696 = vmatpush1.bf16.msra.mxu0 0
      %1697 = vmatprep.subr.bf16.mxu0 0
      %1698 = vmatpush1.bf16.msra.mxu0 0
      %1699 = vmatprep.subr.bf16.mxu0 0
      %1700 = vmatpush1.bf16.msra.mxu0 0
      %1701 = vmatprep.subr.bf16.mxu0 0
      %1702 = vmatpush1.bf16.msra.mxu0 0
      %1703 = vmatprep.subr.bf16.mxu0 0
      %1704 = vmatpush1.bf16.msra.mxu0 0
      %1705 = vmatprep.subr.bf16.mxu0 0
      %1706 = vmatpush1.bf16.msra.mxu0 0
      %1707 = vmatprep.subr.bf16.mxu0 0
      %1708 = vmatpush1.bf16.msra.mxu0 0
      %1709 = vmatprep.mubr.bf16.mxu0 0
      %1710 = vmatmul.mubr.bf16.gmra.mrb[0].mxu0 %v1610
      %v1711 = vpop.f32.mrb[0].mxu0
      %v1712 = vadd.f32 0.0, %v1711
      %v1713 = vpop.f32.mrb[0].mxu0
      %v1714 = vadd.f32 0.0, %v1713
      %v1715 = vpop.f32.mrb[0].mxu0
      %v1716 = vpop.f32.mrb[0].mxu0
      %1717 = vdwg.mxu0
      %1718 = vmatprep.subr.bf16.mxu0 %v1628
      %1719 = vmatpush1.bf16.msra.mxu0 %v1625
      %1720 = vmatprep.subr.bf16.mxu0 0
      %1721 = vmatpush1.bf16.msra.mxu0 0
      %1722 = vmatprep.subr.bf16.mxu0 0
      %1723 = vmatpush1.bf16.msra.mxu0 0
      %1724 = vmatprep.subr.bf16.mxu0 0
      %1725 = vmatpush1.bf16.msra.mxu0 0
      %1726 = vmatprep.subr.bf16.mxu0 0
      %1727 = vmatpush1.bf16.msra.mxu0 0
      %1728 = vmatprep.subr.bf16.mxu0 0
      %1729 = vmatpush1.bf16.msra.mxu0 0
      %1730 = vmatprep.subr.bf16.mxu0 0
      %1731 = vmatpush1.bf16.msra.mxu0 0
      %1732 = vmatprep.subr.bf16.mxu0 0
      %1733 = vmatpush1.bf16.msra.mxu0 0
      %1734 = vmatprep.subr.bf16.mxu0 0
      %1735 = vmatpush1.bf16.msra.mxu0 0
      %1736 = vmatprep.subr.bf16.mxu0 0
      %1737 = vmatpush1.bf16.msra.mxu0 0
      %1738 = vmatprep.subr.bf16.mxu0 0
      %1739 = vmatpush1.bf16.msra.mxu0 0
      %1740 = vmatprep.subr.bf16.mxu0 0
      %1741 = vmatpush1.bf16.msra.mxu0 0
      %1742 = vmatprep.subr.bf16.mxu0 0
      %1743 = vmatpush1.bf16.msra.mxu0 0
      %1744 = vmatprep.subr.bf16.mxu0 0
      %1745 = vmatpush1.bf16.msra.mxu0 0
      %1746 = vmatprep.subr.bf16.mxu0 0
      %1747 = vmatpush1.bf16.msra.mxu0 0
      %1748 = vmatprep.subr.bf16.mxu0 0
      %1749 = vmatpush1.bf16.msra.mxu0 0
      %1750 = vmatprep.mubr.bf16.mxu0 0
      %1751 = vmatmul.mubr.bf16.gmra.mrb[0].mxu0 %v1610
      %v1752 = vpop.f32.mrb[0].mxu0
      %v1753 = vadd.f32 0.0, %v1752
      %v1754 = vpop.f32.mrb[0].mxu0
      %v1755 = vadd.f32 0.0, %v1754
      %v1756 = vpop.f32.mrb[0].mxu0
      %v1757 = vpop.f32.mrb[0].mxu0
      %1758 = vdwg.mxu0
      %1759 = vmatprep.subr.bf16.mxu0 %v1634
      %1760 = vmatpush1.bf16.msra.mxu0 %v1631
      %1761 = vmatprep.subr.bf16.mxu0 0
      %1762 = vmatpush1.bf16.msra.mxu0 0
      %1763 = vmatprep.subr.bf16.mxu0 0
      %1764 = vmatpush1.bf16.msra.mxu0 0
      %1765 = vmatprep.subr.bf16.mxu0 0
      %1766 = vmatpush1.bf16.msra.mxu0 0
      %1767 = vmatprep.subr.bf16.mxu0 0
      %1768 = vmatpush1.bf16.msra.mxu0 0
      %1769 = vmatprep.subr.bf16.mxu0 0
      %1770 = vmatpush1.bf16.msra.mxu0 0
      %1771 = vmatprep.subr.bf16.mxu0 0
      %1772 = vmatpush1.bf16.msra.mxu0 0
      %1773 = vmatprep.subr.bf16.mxu0 0
      %1774 = vmatpush1.bf16.msra.mxu0 0
      %1775 = vmatprep.subr.bf16.mxu0 0
      %1776 = vmatpush1.bf16.msra.mxu0 0
      %1777 = vmatprep.subr.bf16.mxu0 0
      %1778 = vmatpush1.bf16.msra.mxu0 0
      %1779 = vmatprep.subr.bf16.mxu0 0
      %1780 = vmatpush1.bf16.msra.mxu0 0
      %1781 = vmatprep.subr.bf16.mxu0 0
      %1782 = vmatpush1.bf16.msra.mxu0 0
      %1783 = vmatprep.subr.bf16.mxu0 0
      %1784 = vmatpush1.bf16.msra.mxu0 0
      %1785 = vmatprep.subr.bf16.mxu0 0
      %1786 = vmatpush1.bf16.msra.mxu0 0
      %1787 = vmatprep.subr.bf16.mxu0 0
      %1788 = vmatpush1.bf16.msra.mxu0 0
      %1789 = vmatprep.subr.bf16.mxu0 0
      %1790 = vmatpush1.bf16.msra.mxu0 0
      %1791 = vmatprep.mubr.bf16.mxu0 0
      %1792 = vmatmul.mubr.bf16.gmra.mrb[0].mxu0 %v1610
      %v1793 = vpop.f32.mrb[0].mxu0
      %v1794 = vadd.f32 0.0, %v1793
      %v1795 = vpop.f32.mrb[0].mxu0
      %v1796 = vadd.f32 0.0, %v1795
      %v1797 = vpop.f32.mrb[0].mxu0
      %v1798 = vpop.f32.mrb[0].mxu0
      %1799 = vdwg.mxu0
      %v1800 = vadd.f32 %v1525, %v1671
      %v1801 = vadd.f32 %v1526, %v1673
      %v1802 = vadd.f32 %v1527, %v1712
      %v1803 = vadd.f32 %v1528, %v1714
      %v1804 = vadd.f32 %v1529, %v1753
      %v1805 = vadd.f32 %v1530, %v1755
      %v1806 = vadd.f32 %v1531, %v1794
      %v1807 = vadd.f32 %v1532, %v1796
      %v1808 = vld [vmem:[%s232] sm:$0xff]
      %v1809 = vld [vmem:[%s232 + $0x8] sm:$0xff]
      %v1810 = vld [vmem:[%s232 + $0x10] sm:$0x3]
      %s1811 = scalar_lea.vmem %s0, 24
      %v1812 = vld [vmem:[%s1811] sm:$0xf]
      %v1816 = vcombine.high %v1808, %v1808
      %v1818 = vunpack.c.l.s4 1983009808
      %v1819 = vunpack.c.0.s8 %v1818
      %v1820 = vlaneseq
      %v1821 = vshrl.u32 %v1820, 7
      %v1822 = vsub.s32 %v1819, %v1821
      %v1823 = vrot.slane %v1808, %v1822
      %v1825 = vunpack.c.l.s4 1983009808
      %v1826 = vunpack.c.0.s8 %v1825
      %v1827 = vlaneseq
      %v1828 = vshrl.u32 %v1827, 7
      %v1829 = vsub.s32 %v1826, %v1828
      %v1830 = vrot.slane %v1816, %v1829
      %v1831 = vcombine.high %v1823, %v1823
      %v1832 = vcombine.high %v1830, %v1830
      %v1833 = vcombine.high %v1809, %v1809
      %v1835 = vunpack.c.l.s4 1983009808
      %v1836 = vunpack.c.0.s8 %v1835
      %v1837 = vlaneseq
      %v1838 = vshrl.u32 %v1837, 7
      %v1839 = vsub.s32 %v1836, %v1838
      %v1840 = vrot.slane %v1809, %v1839
      %v1842 = vunpack.c.l.s4 1983009808
      %v1843 = vunpack.c.0.s8 %v1842
      %v1844 = vlaneseq
      %v1845 = vshrl.u32 %v1844, 7
      %v1846 = vsub.s32 %v1843, %v1845
      %v1847 = vrot.slane %v1833, %v1846
      %v1848 = vcombine.high %v1840, %v1840
      %v1849 = vcombine.high %v1847, %v1847
      %v1851 = vunpack.c.l.s4 1983009808
      %v1852 = vunpack.c.0.s8 %v1851
      %v1853 = vlaneseq
      %v1854 = vshrl.u32 %v1853, 7
      %v1855 = vsub.s32 %v1852, %v1854
      %v1856 = vrot.slane %v1810, %v1855
      %1857 = vrot.lane.b32.xlu0 %v1823, 108
      %v1858 = vpop.permute.xlu0 %1857
      %1859 = vrot.lane.b32.xlu0 %v1831, 108
      %v1860 = vpop.permute.xlu0 %1859
      %1861 = vrot.lane.b32.xlu0 %v1830, 108
      %v1862 = vpop.permute.xlu0 %1861
      %1863 = vrot.lane.b32.xlu0 %v1832, 108
      %v1864 = vpop.permute.xlu0 %1863
      %1865 = vrot.lane.b32.xlu0 %v1840, 108
      %v1866 = vpop.permute.xlu0 %1865
      %1867 = vrot.lane.b32.xlu0 %v1848, 108
      %v1868 = vpop.permute.xlu0 %1867
      %1869 = vrot.lane.b32.xlu0 %v1847, 108
      %v1870 = vpop.permute.xlu0 %1869
      %1871 = vrot.lane.b32.xlu0 %v1849, 108
      %v1872 = vpop.permute.xlu0 %1871
      %1873 = vrot.lane.b32.xlu0 %v1856, 108
      %v1874 = vpop.permute.xlu0 %1873
      %vm1875 = vcmask 883712
      %v1876 = vsel %vm1875, %v1858, %v1860
      %v1877 = vsel %vm1875, %v1860, %v1862
      %v1878 = vsel %vm1875, %v1862, %v1864
      %v1879 = vsel %vm1875, %v1864, %v1866
      %v1880 = vsel %vm1875, %v1866, %v1868
      %v1881 = vsel %vm1875, %v1868, %v1870
      %v1882 = vsel %vm1875, %v1870, %v1872
      %v1883 = vsel %vm1875, %v1872, %v1874
      %v1885 = vsel %vm324, %v1812, 0
      %v1888 = vsel %vm328, %v1876, 0
      %v1891 = vsel %vm328, %v1877, 0
      %v1894 = vsel %vm328, %v1878, 0
      %v1897 = vsel %vm328, %v1879, 0
      %v1900 = vsel %vm328, %v1880, 0
      %v1903 = vsel %vm328, %v1881, 0
      %v1906 = vsel %vm328, %v1882, 0
      %v1909 = vsel %vm328, %v1883, 0
      %1911 = vmatprep.subr.bf16.mxu0 %v1891
      %1912 = vmatpush1.bf16.msra.mxu0 %v1888
      %1913 = vmatprep.subr.bf16.mxu0 0
      %1914 = vmatpush1.bf16.msra.mxu0 0
      %1915 = vmatprep.subr.bf16.mxu0 0
      %1916 = vmatpush1.bf16.msra.mxu0 0
      %1917 = vmatprep.subr.bf16.mxu0 0
      %1918 = vmatpush1.bf16.msra.mxu0 0
      %1919 = vmatprep.subr.bf16.mxu0 0
      %1920 = vmatpush1.bf16.msra.mxu0 0
      %1921 = vmatprep.subr.bf16.mxu0 0
      %1922 = vmatpush1.bf16.msra.mxu0 0
      %1923 = vmatprep.subr.bf16.mxu0 0
      %1924 = vmatpush1.bf16.msra.mxu0 0
      %1925 = vmatprep.subr.bf16.mxu0 0
      %1926 = vmatpush1.bf16.msra.mxu0 0
      %1927 = vmatprep.subr.bf16.mxu0 0
      %1928 = vmatpush1.bf16.msra.mxu0 0
      %1929 = vmatprep.subr.bf16.mxu0 0
      %1930 = vmatpush1.bf16.msra.mxu0 0
      %1931 = vmatprep.subr.bf16.mxu0 0
      %1932 = vmatpush1.bf16.msra.mxu0 0
      %1933 = vmatprep.subr.bf16.mxu0 0
      %1934 = vmatpush1.bf16.msra.mxu0 0
      %1935 = vmatprep.subr.bf16.mxu0 0
      %1936 = vmatpush1.bf16.msra.mxu0 0
      %1937 = vmatprep.subr.bf16.mxu0 0
      %1938 = vmatpush1.bf16.msra.mxu0 0
      %1939 = vmatprep.subr.bf16.mxu0 0
      %1940 = vmatpush1.bf16.msra.mxu0 0
      %1941 = vmatprep.subr.bf16.mxu0 0
      %1942 = vmatpush1.bf16.msra.mxu0 0
      %1943 = vmatprep.mubr.bf16.mxu0 0
      %1944 = vmatmul.mubr.bf16.gmra.mrb[0].mxu0 %v1885
      %v1945 = vpop.f32.mrb[0].mxu0
      %v1946 = vadd.f32 0.0, %v1945
      %v1947 = vpop.f32.mrb[0].mxu0
      %v1948 = vadd.f32 0.0, %v1947
      %v1949 = vpop.f32.mrb[0].mxu0
      %v1950 = vpop.f32.mrb[0].mxu0
      %1951 = vdwg.mxu0
      %1952 = vmatprep.subr.bf16.mxu0 %v1897
      %1953 = vmatpush1.bf16.msra.mxu0 %v1894
      %1954 = vmatprep.subr.bf16.mxu0 0
      %1955 = vmatpush1.bf16.msra.mxu0 0
      %1956 = vmatprep.subr.bf16.mxu0 0
      %1957 = vmatpush1.bf16.msra.mxu0 0
      %1958 = vmatprep.subr.bf16.mxu0 0
      %1959 = vmatpush1.bf16.msra.mxu0 0
      %1960 = vmatprep.subr.bf16.mxu0 0
      %1961 = vmatpush1.bf16.msra.mxu0 0
      %1962 = vmatprep.subr.bf16.mxu0 0
      %1963 = vmatpush1.bf16.msra.mxu0 0
      %1964 = vmatprep.subr.bf16.mxu0 0
      %1965 = vmatpush1.bf16.msra.mxu0 0
      %1966 = vmatprep.subr.bf16.mxu0 0
      %1967 = vmatpush1.bf16.msra.mxu0 0
      %1968 = vmatprep.subr.bf16.mxu0 0
      %1969 = vmatpush1.bf16.msra.mxu0 0
      %1970 = vmatprep.subr.bf16.mxu0 0
      %1971 = vmatpush1.bf16.msra.mxu0 0
      %1972 = vmatprep.subr.bf16.mxu0 0
      %1973 = vmatpush1.bf16.msra.mxu0 0
      %1974 = vmatprep.subr.bf16.mxu0 0
      %1975 = vmatpush1.bf16.msra.mxu0 0
      %1976 = vmatprep.subr.bf16.mxu0 0
      %1977 = vmatpush1.bf16.msra.mxu0 0
      %1978 = vmatprep.subr.bf16.mxu0 0
      %1979 = vmatpush1.bf16.msra.mxu0 0
      %1980 = vmatprep.subr.bf16.mxu0 0
      %1981 = vmatpush1.bf16.msra.mxu0 0
      %1982 = vmatprep.subr.bf16.mxu0 0
      %1983 = vmatpush1.bf16.msra.mxu0 0
      %1984 = vmatprep.mubr.bf16.mxu0 0
      %1985 = vmatmul.mubr.bf16.gmra.mrb[0].mxu0 %v1885
      %v1986 = vpop.f32.mrb[0].mxu0
      %v1987 = vadd.f32 0.0, %v1986
      %v1988 = vpop.f32.mrb[0].mxu0
      %v1989 = vadd.f32 0.0, %v1988
      %v1990 = vpop.f32.mrb[0].mxu0
      %v1991 = vpop.f32.mrb[0].mxu0
      %1992 = vdwg.mxu0
      %1993 = vmatprep.subr.bf16.mxu0 %v1903
      %1994 = vmatpush1.bf16.msra.mxu0 %v1900
      %1995 = vmatprep.subr.bf16.mxu0 0
      %1996 = vmatpush1.bf16.msra.mxu0 0
      %1997 = vmatprep.subr.bf16.mxu0 0
      %1998 = vmatpush1.bf16.msra.mxu0 0
      %1999 = vmatprep.subr.bf16.mxu0 0
      %2000 = vmatpush1.bf16.msra.mxu0 0
      %2001 = vmatprep.subr.bf16.mxu0 0
      %2002 = vmatpush1.bf16.msra.mxu0 0
      %2003 = vmatprep.subr.bf16.mxu0 0
      %2004 = vmatpush1.bf16.msra.mxu0 0
      %2005 = vmatprep.subr.bf16.mxu0 0
      %2006 = vmatpush1.bf16.msra.mxu0 0
      %2007 = vmatprep.subr.bf16.mxu0 0
      %2008 = vmatpush1.bf16.msra.mxu0 0
      %2009 = vmatprep.subr.bf16.mxu0 0
      %2010 = vmatpush1.bf16.msra.mxu0 0
      %2011 = vmatprep.subr.bf16.mxu0 0
      %2012 = vmatpush1.bf16.msra.mxu0 0
      %2013 = vmatprep.subr.bf16.mxu0 0
      %2014 = vmatpush1.bf16.msra.mxu0 0
      %2015 = vmatprep.subr.bf16.mxu0 0
      %2016 = vmatpush1.bf16.msra.mxu0 0
      %2017 = vmatprep.subr.bf16.mxu0 0
      %2018 = vmatpush1.bf16.msra.mxu0 0
      %2019 = vmatprep.subr.bf16.mxu0 0
      %2020 = vmatpush1.bf16.msra.mxu0 0
      %2021 = vmatprep.subr.bf16.mxu0 0
      %2022 = vmatpush1.bf16.msra.mxu0 0
      %2023 = vmatprep.subr.bf16.mxu0 0
      %2024 = vmatpush1.bf16.msra.mxu0 0
      %2025 = vmatprep.mubr.bf16.mxu0 0
      %2026 = vmatmul.mubr.bf16.gmra.mrb[0].mxu0 %v1885
      %v2027 = vpop.f32.mrb[0].mxu0
      %v2028 = vadd.f32 0.0, %v2027
      %v2029 = vpop.f32.mrb[0].mxu0
      %v2030 = vadd.f32 0.0, %v2029
      %v2031 = vpop.f32.mrb[0].mxu0
      %v2032 = vpop.f32.mrb[0].mxu0
      %2033 = vdwg.mxu0
      %2034 = vmatprep.subr.bf16.mxu0 %v1909
      %2035 = vmatpush1.bf16.msra.mxu0 %v1906
      %2036 = vmatprep.subr.bf16.mxu0 0
      %2037 = vmatpush1.bf16.msra.mxu0 0
      %2038 = vmatprep.subr.bf16.mxu0 0
      %2039 = vmatpush1.bf16.msra.mxu0 0
      %2040 = vmatprep.subr.bf16.mxu0 0
      %2041 = vmatpush1.bf16.msra.mxu0 0
      %2042 = vmatprep.subr.bf16.mxu0 0
      %2043 = vmatpush1.bf16.msra.mxu0 0
      %2044 = vmatprep.subr.bf16.mxu0 0
      %2045 = vmatpush1.bf16.msra.mxu0 0
      %2046 = vmatprep.subr.bf16.mxu0 0
      %2047 = vmatpush1.bf16.msra.mxu0 0
      %2048 = vmatprep.subr.bf16.mxu0 0
      %2049 = vmatpush1.bf16.msra.mxu0 0
      %2050 = vmatprep.subr.bf16.mxu0 0
      %2051 = vmatpush1.bf16.msra.mxu0 0
      %2052 = vmatprep.subr.bf16.mxu0 0
      %2053 = vmatpush1.bf16.msra.mxu0 0
      %2054 = vmatprep.subr.bf16.mxu0 0
      %2055 = vmatpush1.bf16.msra.mxu0 0
      %2056 = vmatprep.subr.bf16.mxu0 0
      %2057 = vmatpush1.bf16.msra.mxu0 0
      %2058 = vmatprep.subr.bf16.mxu0 0
      %2059 = vmatpush1.bf16.msra.mxu0 0
      %2060 = vmatprep.subr.bf16.mxu0 0
      %2061 = vmatpush1.bf16.msra.mxu0 0
      %2062 = vmatprep.subr.bf16.mxu0 0
      %2063 = vmatpush1.bf16.msra.mxu0 0
      %2064 = vmatprep.subr.bf16.mxu0 0
      %2065 = vmatpush1.bf16.msra.mxu0 0
      %2066 = vmatprep.mubr.bf16.mxu0 0
      %2067 = vmatmul.mubr.bf16.gmra.mrb[0].mxu0 %v1885
      %v2068 = vpop.f32.mrb[0].mxu0
      %v2069 = vadd.f32 0.0, %v2068
      %v2070 = vpop.f32.mrb[0].mxu0
      %v2071 = vadd.f32 0.0, %v2070
      %v2072 = vpop.f32.mrb[0].mxu0
      %v2073 = vpop.f32.mrb[0].mxu0
      %2074 = vdwg.mxu0
      %v2075 = vadd.f32 %v1800, %v1946
      %v2076 = vadd.f32 %v1801, %v1948
      %v2077 = vadd.f32 %v1802, %v1987
      %v2078 = vadd.f32 %v1803, %v1989
      %v2079 = vadd.f32 %v1804, %v2028
      %v2080 = vadd.f32 %v1805, %v2030
      %v2081 = vadd.f32 %v1806, %v2069
      %v2082 = vadd.f32 %v1807, %v2071
      %v2083 = vld [vmem:[%s232] sm:$0xff]
      %v2084 = vld [vmem:[%s232 + $0x8] sm:$0xff]
      %v2085 = vld [vmem:[%s232 + $0x10] sm:$0x3]
      %s2086 = scalar_lea.vmem %s0, 28
      %v2087 = vld [vmem:[%s2086] sm:$0xf]
      %v2091 = vcombine.high %v2083, %v2083
      %v2093 = vunpack.c.l.s4 1983009808
      %v2094 = vunpack.c.0.s8 %v2093
      %v2095 = vlaneseq
      %v2096 = vshrl.u32 %v2095, 7
      %v2097 = vsub.s32 %v2094, %v2096
      %v2098 = vrot.slane %v2083, %v2097
      %v2100 = vunpack.c.l.s4 1983009808
      %v2101 = vunpack.c.0.s8 %v2100
      %v2102 = vlaneseq
      %v2103 = vshrl.u32 %v2102, 7
      %v2104 = vsub.s32 %v2101, %v2103
      %v2105 = vrot.slane %v2091, %v2104
      %v2106 = vcombine.high %v2098, %v2098
      %v2107 = vcombine.high %v2105, %v2105
      %v2108 = vcombine.high %v2084, %v2084
      %v2110 = vunpack.c.l.s4 1983009808
      %v2111 = vunpack.c.0.s8 %v2110
      %v2112 = vlaneseq
      %v2113 = vshrl.u32 %v2112, 7
      %v2114 = vsub.s32 %v2111, %v2113
      %v2115 = vrot.slane %v2084, %v2114
      %v2117 = vunpack.c.l.s4 1983009808
      %v2118 = vunpack.c.0.s8 %v2117
      %v2119 = vlaneseq
      %v2120 = vshrl.u32 %v2119, 7
      %v2121 = vsub.s32 %v2118, %v2120
      %v2122 = vrot.slane %v2108, %v2121
      %v2123 = vcombine.high %v2115, %v2115
      %v2124 = vcombine.high %v2122, %v2122
      %v2126 = vunpack.c.l.s4 1983009808
      %v2127 = vunpack.c.0.s8 %v2126
      %v2128 = vlaneseq
      %v2129 = vshrl.u32 %v2128, 7
      %v2130 = vsub.s32 %v2127, %v2129
      %v2131 = vrot.slane %v2085, %v2130
      %2132 = vrot.lane.b32.xlu0 %v2098, 107
      %v2133 = vpop.permute.xlu0 %2132
      %2134 = vrot.lane.b32.xlu0 %v2106, 107
      %v2135 = vpop.permute.xlu0 %2134
      %2136 = vrot.lane.b32.xlu0 %v2105, 107
      %v2137 = vpop.permute.xlu0 %2136
      %2138 = vrot.lane.b32.xlu0 %v2107, 107
      %v2139 = vpop.permute.xlu0 %2138
      %2140 = vrot.lane.b32.xlu0 %v2115, 107
      %v2141 = vpop.permute.xlu0 %2140
      %2142 = vrot.lane.b32.xlu0 %v2123, 107
      %v2143 = vpop.permute.xlu0 %2142
      %2144 = vrot.lane.b32.xlu0 %v2122, 107
      %v2145 = vpop.permute.xlu0 %2144
      %2146 = vrot.lane.b32.xlu0 %v2124, 107
      %v2147 = vpop.permute.xlu0 %2146
      %2148 = vrot.lane.b32.xlu0 %v2131, 107
      %v2149 = vpop.permute.xlu0 %2148
      %vm2150 = vcmask 875520
      %v2151 = vsel %vm2150, %v2133, %v2135
      %v2152 = vsel %vm2150, %v2135, %v2137
      %v2153 = vsel %vm2150, %v2137, %v2139
      %v2154 = vsel %vm2150, %v2139, %v2141
      %v2155 = vsel %vm2150, %v2141, %v2143
      %v2156 = vsel %vm2150, %v2143, %v2145
      %v2157 = vsel %vm2150, %v2145, %v2147
      %v2158 = vsel %vm2150, %v2147, %v2149
      %v2160 = vsel %vm324, %v2087, 0
      %v2163 = vsel %vm328, %v2151, 0
      %v2166 = vsel %vm328, %v2152, 0
      %v2169 = vsel %vm328, %v2153, 0
      %v2172 = vsel %vm328, %v2154, 0
      %v2175 = vsel %vm328, %v2155, 0
      %v2178 = vsel %vm328, %v2156, 0
      %v2181 = vsel %vm328, %v2157, 0
      %v2184 = vsel %vm328, %v2158, 0
      %2186 = vmatprep.subr.bf16.mxu0 %v2166
      %2187 = vmatpush1.bf16.msra.mxu0 %v2163
      %2188 = vmatprep.subr.bf16.mxu0 0
      %2189 = vmatpush1.bf16.msra.mxu0 0
      %2190 = vmatprep.subr.bf16.mxu0 0
      %2191 = vmatpush1.bf16.msra.mxu0 0
      %2192 = vmatprep.subr.bf16.mxu0 0
      %2193 = vmatpush1.bf16.msra.mxu0 0
      %2194 = vmatprep.subr.bf16.mxu0 0
      %2195 = vmatpush1.bf16.msra.mxu0 0
      %2196 = vmatprep.subr.bf16.mxu0 0
      %2197 = vmatpush1.bf16.msra.mxu0 0
      %2198 = vmatprep.subr.bf16.mxu0 0
      %2199 = vmatpush1.bf16.msra.mxu0 0
      %2200 = vmatprep.subr.bf16.mxu0 0
      %2201 = vmatpush1.bf16.msra.mxu0 0
      %2202 = vmatprep.subr.bf16.mxu0 0
      %2203 = vmatpush1.bf16.msra.mxu0 0
      %2204 = vmatprep.subr.bf16.mxu0 0
      %2205 = vmatpush1.bf16.msra.mxu0 0
      %2206 = vmatprep.subr.bf16.mxu0 0
      %2207 = vmatpush1.bf16.msra.mxu0 0
      %2208 = vmatprep.subr.bf16.mxu0 0
      %2209 = vmatpush1.bf16.msra.mxu0 0
      %2210 = vmatprep.subr.bf16.mxu0 0
      %2211 = vmatpush1.bf16.msra.mxu0 0
      %2212 = vmatprep.subr.bf16.mxu0 0
      %2213 = vmatpush1.bf16.msra.mxu0 0
      %2214 = vmatprep.subr.bf16.mxu0 0
      %2215 = vmatpush1.bf16.msra.mxu0 0
      %2216 = vmatprep.subr.bf16.mxu0 0
      %2217 = vmatpush1.bf16.msra.mxu0 0
      %2218 = vmatprep.mubr.bf16.mxu0 0
      %2219 = vmatmul.mubr.bf16.gmra.mrb[0].mxu0 %v2160
      %v2220 = vpop.f32.mrb[0].mxu0
      %v2221 = vadd.f32 0.0, %v2220
      %v2222 = vpop.f32.mrb[0].mxu0
      %v2223 = vadd.f32 0.0, %v2222
      %v2224 = vpop.f32.mrb[0].mxu0
      %v2225 = vpop.f32.mrb[0].mxu0
      %2226 = vdwg.mxu0
      %2227 = vmatprep.subr.bf16.mxu0 %v2172
      %2228 = vmatpush1.bf16.msra.mxu0 %v2169
      %2229 = vmatprep.subr.bf16.mxu0 0
      %2230 = vmatpush1.bf16.msra.mxu0 0
      %2231 = vmatprep.subr.bf16.mxu0 0
      %2232 = vmatpush1.bf16.msra.mxu0 0
      %2233 = vmatprep.subr.bf16.mxu0 0
      %2234 = vmatpush1.bf16.msra.mxu0 0
      %2235 = vmatprep.subr.bf16.mxu0 0
      %2236 = vmatpush1.bf16.msra.mxu0 0
      %2237 = vmatprep.subr.bf16.mxu0 0
      %2238 = vmatpush1.bf16.msra.mxu0 0
      %2239 = vmatprep.subr.bf16.mxu0 0
      %2240 = vmatpush1.bf16.msra.mxu0 0
      %2241 = vmatprep.subr.bf16.mxu0 0
      %2242 = vmatpush1.bf16.msra.mxu0 0
      %2243 = vmatprep.subr.bf16.mxu0 0
      %2244 = vmatpush1.bf16.msra.mxu0 0
      %2245 = vmatprep.subr.bf16.mxu0 0
      %2246 = vmatpush1.bf16.msra.mxu0 0
      %2247 = vmatprep.subr.bf16.mxu0 0
      %2248 = vmatpush1.bf16.msra.mxu0 0
      %2249 = vmatprep.subr.bf16.mxu0 0
      %2250 = vmatpush1.bf16.msra.mxu0 0
      %2251 = vmatprep.subr.bf16.mxu0 0
      %2252 = vmatpush1.bf16.msra.mxu0 0
      %2253 = vmatprep.subr.bf16.mxu0 0
      %2254 = vmatpush1.bf16.msra.mxu0 0
      %2255 = vmatprep.subr.bf16.mxu0 0
      %2256 = vmatpush1.bf16.msra.mxu0 0
      %2257 = vmatprep.subr.bf16.mxu0 0
      %2258 = vmatpush1.bf16.msra.mxu0 0
      %2259 = vmatprep.mubr.bf16.mxu0 0
      %2260 = vmatmul.mubr.bf16.gmra.mrb[0].mxu0 %v2160
      %v2261 = vpop.f32.mrb[0].mxu0
      %v2262 = vadd.f32 0.0, %v2261
      %v2263 = vpop.f32.mrb[0].mxu0
      %v2264 = vadd.f32 0.0, %v2263
      %v2265 = vpop.f32.mrb[0].mxu0
      %v2266 = vpop.f32.mrb[0].mxu0
      %2267 = vdwg.mxu0
      %2268 = vmatprep.subr.bf16.mxu0 %v2178
      %2269 = vmatpush1.bf16.msra.mxu0 %v2175
      %2270 = vmatprep.subr.bf16.mxu0 0
      %2271 = vmatpush1.bf16.msra.mxu0 0
      %2272 = vmatprep.subr.bf16.mxu0 0
      %2273 = vmatpush1.bf16.msra.mxu0 0
      %2274 = vmatprep.subr.bf16.mxu0 0
      %2275 = vmatpush1.bf16.msra.mxu0 0
      %2276 = vmatprep.subr.bf16.mxu0 0
      %2277 = vmatpush1.bf16.msra.mxu0 0
      %2278 = vmatprep.subr.bf16.mxu0 0
      %2279 = vmatpush1.bf16.msra.mxu0 0
      %2280 = vmatprep.subr.bf16.mxu0 0
      %2281 = vmatpush1.bf16.msra.mxu0 0
      %2282 = vmatprep.subr.bf16.mxu0 0
      %2283 = vmatpush1.bf16.msra.mxu0 0
      %2284 = vmatprep.subr.bf16.mxu0 0
      %2285 = vmatpush1.bf16.msra.mxu0 0
      %2286 = vmatprep.subr.bf16.mxu0 0
      %2287 = vmatpush1.bf16.msra.mxu0 0
      %2288 = vmatprep.subr.bf16.mxu0 0
      %2289 = vmatpush1.bf16.msra.mxu0 0
      %2290 = vmatprep.subr.bf16.mxu0 0
      %2291 = vmatpush1.bf16.msra.mxu0 0
      %2292 = vmatprep.subr.bf16.mxu0 0
      %2293 = vmatpush1.bf16.msra.mxu0 0
      %2294 = vmatprep.subr.bf16.mxu0 0
      %2295 = vmatpush1.bf16.msra.mxu0 0
      %2296 = vmatprep.subr.bf16.mxu0 0
      %2297 = vmatpush1.bf16.msra.mxu0 0
      %2298 = vmatprep.subr.bf16.mxu0 0
      %2299 = vmatpush1.bf16.msra.mxu0 0
      %2300 = vmatprep.mubr.bf16.mxu0 0
      %2301 = vmatmul.mubr.bf16.gmra.mrb[0].mxu0 %v2160
      %v2302 = vpop.f32.mrb[0].mxu0
      %v2303 = vadd.f32 0.0, %v2302
      %v2304 = vpop.f32.mrb[0].mxu0
      %v2305 = vadd.f32 0.0, %v2304
      %v2306 = vpop.f32.mrb[0].mxu0
      %v2307 = vpop.f32.mrb[0].mxu0
      %2308 = vdwg.mxu0
      %2309 = vmatprep.subr.bf16.mxu0 %v2184
      %2310 = vmatpush1.bf16.msra.mxu0 %v2181
      %2311 = vmatprep.subr.bf16.mxu0 0
      %2312 = vmatpush1.bf16.msra.mxu0 0
      %2313 = vmatprep.subr.bf16.mxu0 0
      %2314 = vmatpush1.bf16.msra.mxu0 0
      %2315 = vmatprep.subr.bf16.mxu0 0
      %2316 = vmatpush1.bf16.msra.mxu0 0
      %2317 = vmatprep.subr.bf16.mxu0 0
      %2318 = vmatpush1.bf16.msra.mxu0 0
      %2319 = vmatprep.subr.bf16.mxu0 0
      %2320 = vmatpush1.bf16.msra.mxu0 0
      %2321 = vmatprep.subr.bf16.mxu0 0
      %2322 = vmatpush1.bf16.msra.mxu0 0
      %2323 = vmatprep.subr.bf16.mxu0 0
      %2324 = vmatpush1.bf16.msra.mxu0 0
      %2325 = vmatprep.subr.bf16.mxu0 0
      %2326 = vmatpush1.bf16.msra.mxu0 0
      %2327 = vmatprep.subr.bf16.mxu0 0
      %2328 = vmatpush1.bf16.msra.mxu0 0
      %2329 = vmatprep.subr.bf16.mxu0 0
      %2330 = vmatpush1.bf16.msra.mxu0 0
      %2331 = vmatprep.subr.bf16.mxu0 0
      %2332 = vmatpush1.bf16.msra.mxu0 0
      %2333 = vmatprep.subr.bf16.mxu0 0
      %2334 = vmatpush1.bf16.msra.mxu0 0
      %2335 = vmatprep.subr.bf16.mxu0 0
      %2336 = vmatpush1.bf16.msra.mxu0 0
      %2337 = vmatprep.subr.bf16.mxu0 0
      %2338 = vmatpush1.bf16.msra.mxu0 0
      %2339 = vmatprep.subr.bf16.mxu0 0
      %2340 = vmatpush1.bf16.msra.mxu0 0
      %2341 = vmatprep.mubr.bf16.mxu0 0
      %2342 = vmatmul.mubr.bf16.gmra.mrb[0].mxu0 %v2160
      %v2343 = vpop.f32.mrb[0].mxu0
      %v2344 = vadd.f32 0.0, %v2343
      %v2345 = vpop.f32.mrb[0].mxu0
      %v2346 = vadd.f32 0.0, %v2345
      %v2347 = vpop.f32.mrb[0].mxu0
      %v2348 = vpop.f32.mrb[0].mxu0
      %2349 = vdwg.mxu0
      %v2350 = vadd.f32 %v2075, %v2221
      %v2351 = vadd.f32 %v2076, %v2223
      %v2352 = vadd.f32 %v2077, %v2262
      %v2353 = vadd.f32 %v2078, %v2264
      %v2354 = vadd.f32 %v2079, %v2303
      %v2355 = vadd.f32 %v2080, %v2305
      %v2356 = vadd.f32 %v2081, %v2344
      %v2357 = vadd.f32 %v2082, %v2346
      %v2358 = vld [vmem:[%s232] sm:$0xff]
      %v2359 = vld [vmem:[%s232 + $0x8] sm:$0xff]
      %v2360 = vld [vmem:[%s232 + $0x10] sm:$0x3]
      %s2361 = scalar_lea.vmem %s0, 32
      %v2362 = vld [vmem:[%s2361] sm:$0xf]
      %v2366 = vcombine.high %v2358, %v2358
      %v2368 = vunpack.c.l.s4 1983009808
      %v2369 = vunpack.c.0.s8 %v2368
      %v2370 = vlaneseq
      %v2371 = vshrl.u32 %v2370, 7
      %v2372 = vsub.s32 %v2369, %v2371
      %v2373 = vrot.slane %v2358, %v2372
      %v2375 = vunpack.c.l.s4 1983009808
      %v2376 = vunpack.c.0.s8 %v2375
      %v2377 = vlaneseq
      %v2378 = vshrl.u32 %v2377, 7
      %v2379 = vsub.s32 %v2376, %v2378
      %v2380 = vrot.slane %v2366, %v2379
      %v2381 = vcombine.high %v2373, %v2373
      %v2382 = vcombine.high %v2380, %v2380
      %v2383 = vcombine.high %v2359, %v2359
      %v2385 = vunpack.c.l.s4 1983009808
      %v2386 = vunpack.c.0.s8 %v2385
      %v2387 = vlaneseq
      %v2388 = vshrl.u32 %v2387, 7
      %v2389 = vsub.s32 %v2386, %v2388
      %v2390 = vrot.slane %v2359, %v2389
      %v2392 = vunpack.c.l.s4 1983009808
      %v2393 = vunpack.c.0.s8 %v2392
      %v2394 = vlaneseq
      %v2395 = vshrl.u32 %v2394, 7
      %v2396 = vsub.s32 %v2393, %v2395
      %v2397 = vrot.slane %v2383, %v2396
      %v2398 = vcombine.high %v2390, %v2390
      %v2399 = vcombine.high %v2397, %v2397
      %v2401 = vunpack.c.l.s4 1983009808
      %v2402 = vunpack.c.0.s8 %v2401
      %v2403 = vlaneseq
      %v2404 = vshrl.u32 %v2403, 7
      %v2405 = vsub.s32 %v2402, %v2404
      %v2406 = vrot.slane %v2360, %v2405
      %2407 = vrot.lane.b32.xlu0 %v2373, 106
      %v2408 = vpop.permute.xlu0 %2407
      %2409 = vrot.lane.b32.xlu0 %v2381, 106
      %v2410 = vpop.permute.xlu0 %2409
      %2411 = vrot.lane.b32.xlu0 %v2380, 106
      %v2412 = vpop.permute.xlu0 %2411
      %2413 = vrot.lane.b32.xlu0 %v2382, 106
      %v2414 = vpop.permute.xlu0 %2413
      %2415 = vrot.lane.b32.xlu0 %v2390, 106
      %v2416 = vpop.permute.xlu0 %2415
      %2417 = vrot.lane.b32.xlu0 %v2398, 106
      %v2418 = vpop.permute.xlu0 %2417
      %2419 = vrot.lane.b32.xlu0 %v2397, 106
      %v2420 = vpop.permute.xlu0 %2419
      %2421 = vrot.lane.b32.xlu0 %v2399, 106
      %v2422 = vpop.permute.xlu0 %2421
      %2423 = vrot.lane.b32.xlu0 %v2406, 106
      %v2424 = vpop.permute.xlu0 %2423
      %vm2425 = vcmask 867328
      %v2426 = vsel %vm2425, %v2408, %v2410
      %v2427 = vsel %vm2425, %v2410, %v2412
      %v2428 = vsel %vm2425, %v2412, %v2414
      %v2429 = vsel %vm2425, %v2414, %v2416
      %v2430 = vsel %vm2425, %v2416, %v2418
      %v2431 = vsel %vm2425, %v2418, %v2420
      %v2432 = vsel %vm2425, %v2420, %v2422
      %v2433 = vsel %vm2425, %v2422, %v2424
      %v2435 = vsel %vm324, %v2362, 0
      %v2438 = vsel %vm328, %v2426, 0
      %v2441 = vsel %vm328, %v2427, 0
      %v2444 = vsel %vm328, %v2428, 0
      %v2447 = vsel %vm328, %v2429, 0
      %v2450 = vsel %vm328, %v2430, 0
      %v2453 = vsel %vm328, %v2431, 0
      %v2456 = vsel %vm328, %v2432, 0
      %v2459 = vsel %vm328, %v2433, 0
      %2461 = vmatprep.subr.bf16.mxu0 %v2441
      %2462 = vmatpush1.bf16.msra.mxu0 %v2438
      %2463 = vmatprep.subr.bf16.mxu0 0
      %2464 = vmatpush1.bf16.msra.mxu0 0
      %2465 = vmatprep.subr.bf16.mxu0 0
      %2466 = vmatpush1.bf16.msra.mxu0 0
      %2467 = vmatprep.subr.bf16.mxu0 0
      %2468 = vmatpush1.bf16.msra.mxu0 0
      %2469 = vmatprep.subr.bf16.mxu0 0
      %2470 = vmatpush1.bf16.msra.mxu0 0
      %2471 = vmatprep.subr.bf16.mxu0 0
      %2472 = vmatpush1.bf16.msra.mxu0 0
      %2473 = vmatprep.subr.bf16.mxu0 0
      %2474 = vmatpush1.bf16.msra.mxu0 0
      %2475 = vmatprep.subr.bf16.mxu0 0
      %2476 = vmatpush1.bf16.msra.mxu0 0
      %2477 = vmatprep.subr.bf16.mxu0 0
      %2478 = vmatpush1.bf16.msra.mxu0 0
      %2479 = vmatprep.subr.bf16.mxu0 0
      %2480 = vmatpush1.bf16.msra.mxu0 0
      %2481 = vmatprep.subr.bf16.mxu0 0
      %2482 = vmatpush1.bf16.msra.mxu0 0
      %2483 = vmatprep.subr.bf16.mxu0 0
      %2484 = vmatpush1.bf16.msra.mxu0 0
      %2485 = vmatprep.subr.bf16.mxu0 0
      %2486 = vmatpush1.bf16.msra.mxu0 0
      %2487 = vmatprep.subr.bf16.mxu0 0
      %2488 = vmatpush1.bf16.msra.mxu0 0
      %2489 = vmatprep.subr.bf16.mxu0 0
      %2490 = vmatpush1.bf16.msra.mxu0 0
      %2491 = vmatprep.subr.bf16.mxu0 0
      %2492 = vmatpush1.bf16.msra.mxu0 0
      %2493 = vmatprep.mubr.bf16.mxu0 0
      %2494 = vmatmul.mubr.bf16.gmra.mrb[0].mxu0 %v2435
      %v2495 = vpop.f32.mrb[0].mxu0
      %v2496 = vadd.f32 0.0, %v2495
      %v2497 = vpop.f32.mrb[0].mxu0
      %v2498 = vadd.f32 0.0, %v2497
      %v2499 = vpop.f32.mrb[0].mxu0
      %v2500 = vpop.f32.mrb[0].mxu0
      %2501 = vdwg.mxu0
      %2502 = vmatprep.subr.bf16.mxu0 %v2447
      %2503 = vmatpush1.bf16.msra.mxu0 %v2444
      %2504 = vmatprep.subr.bf16.mxu0 0
      %2505 = vmatpush1.bf16.msra.mxu0 0
      %2506 = vmatprep.subr.bf16.mxu0 0
      %2507 = vmatpush1.bf16.msra.mxu0 0
      %2508 = vmatprep.subr.bf16.mxu0 0
      %2509 = vmatpush1.bf16.msra.mxu0 0
      %2510 = vmatprep.subr.bf16.mxu0 0
      %2511 = vmatpush1.bf16.msra.mxu0 0
      %2512 = vmatprep.subr.bf16.mxu0 0
      %2513 = vmatpush1.bf16.msra.mxu0 0
      %2514 = vmatprep.subr.bf16.mxu0 0
      %2515 = vmatpush1.bf16.msra.mxu0 0
      %2516 = vmatprep.subr.bf16.mxu0 0
      %2517 = vmatpush1.bf16.msra.mxu0 0
      %2518 = vmatprep.subr.bf16.mxu0 0
      %2519 = vmatpush1.bf16.msra.mxu0 0
      %2520 = vmatprep.subr.bf16.mxu0 0
      %2521 = vmatpush1.bf16.msra.mxu0 0
      %2522 = vmatprep.subr.bf16.mxu0 0
      %2523 = vmatpush1.bf16.msra.mxu0 0
      %2524 = vmatprep.subr.bf16.mxu0 0
      %2525 = vmatpush1.bf16.msra.mxu0 0
      %2526 = vmatprep.subr.bf16.mxu0 0
      %2527 = vmatpush1.bf16.msra.mxu0 0
      %2528 = vmatprep.subr.bf16.mxu0 0
      %2529 = vmatpush1.bf16.msra.mxu0 0
      %2530 = vmatprep.subr.bf16.mxu0 0
      %2531 = vmatpush1.bf16.msra.mxu0 0
      %2532 = vmatprep.subr.bf16.mxu0 0
      %2533 = vmatpush1.bf16.msra.mxu0 0
      %2534 = vmatprep.mubr.bf16.mxu0 0
      %2535 = vmatmul.mubr.bf16.gmra.mrb[0].mxu0 %v2435
      %v2536 = vpop.f32.mrb[0].mxu0
      %v2537 = vadd.f32 0.0, %v2536
      %v2538 = vpop.f32.mrb[0].mxu0
      %v2539 = vadd.f32 0.0, %v2538
      %v2540 = vpop.f32.mrb[0].mxu0
      %v2541 = vpop.f32.mrb[0].mxu0
      %2542 = vdwg.mxu0
      %2543 = vmatprep.subr.bf16.mxu0 %v2453
      %2544 = vmatpush1.bf16.msra.mxu0 %v2450
      %2545 = vmatprep.subr.bf16.mxu0 0
      %2546 = vmatpush1.bf16.msra.mxu0 0
      %2547 = vmatprep.subr.bf16.mxu0 0
      %2548 = vmatpush1.bf16.msra.mxu0 0
      %2549 = vmatprep.subr.bf16.mxu0 0
      %2550 = vmatpush1.bf16.msra.mxu0 0
      %2551 = vmatprep.subr.bf16.mxu0 0
      %2552 = vmatpush1.bf16.msra.mxu0 0
      %2553 = vmatprep.subr.bf16.mxu0 0
      %2554 = vmatpush1.bf16.msra.mxu0 0
      %2555 = vmatprep.subr.bf16.mxu0 0
      %2556 = vmatpush1.bf16.msra.mxu0 0
      %2557 = vmatprep.subr.bf16.mxu0 0
      %2558 = vmatpush1.bf16.msra.mxu0 0
      %2559 = vmatprep.subr.bf16.mxu0 0
      %2560 = vmatpush1.bf16.msra.mxu0 0
      %2561 = vmatprep.subr.bf16.mxu0 0
      %2562 = vmatpush1.bf16.msra.mxu0 0
      %2563 = vmatprep.subr.bf16.mxu0 0
      %2564 = vmatpush1.bf16.msra.mxu0 0
      %2565 = vmatprep.subr.bf16.mxu0 0
      %2566 = vmatpush1.bf16.msra.mxu0 0
      %2567 = vmatprep.subr.bf16.mxu0 0
      %2568 = vmatpush1.bf16.msra.mxu0 0
      %2569 = vmatprep.subr.bf16.mxu0 0
      %2570 = vmatpush1.bf16.msra.mxu0 0
      %2571 = vmatprep.subr.bf16.mxu0 0
      %2572 = vmatpush1.bf16.msra.mxu0 0
      %2573 = vmatprep.subr.bf16.mxu0 0
      %2574 = vmatpush1.bf16.msra.mxu0 0
      %2575 = vmatprep.mubr.bf16.mxu0 0
      %2576 = vmatmul.mubr.bf16.gmra.mrb[0].mxu0 %v2435
      %v2577 = vpop.f32.mrb[0].mxu0
      %v2578 = vadd.f32 0.0, %v2577
      %v2579 = vpop.f32.mrb[0].mxu0
      %v2580 = vadd.f32 0.0, %v2579
      %v2581 = vpop.f32.mrb[0].mxu0
      %v2582 = vpop.f32.mrb[0].mxu0
      %2583 = vdwg.mxu0
      %2584 = vmatprep.subr.bf16.mxu0 %v2459
      %2585 = vmatpush1.bf16.msra.mxu0 %v2456
      %2586 = vmatprep.subr.bf16.mxu0 0
      %2587 = vmatpush1.bf16.msra.mxu0 0
      %2588 = vmatprep.subr.bf16.mxu0 0
      %2589 = vmatpush1.bf16.msra.mxu0 0
      %2590 = vmatprep.subr.bf16.mxu0 0
      %2591 = vmatpush1.bf16.msra.mxu0 0
      %2592 = vmatprep.subr.bf16.mxu0 0
      %2593 = vmatpush1.bf16.msra.mxu0 0
      %2594 = vmatprep.subr.bf16.mxu0 0
      %2595 = vmatpush1.bf16.msra.mxu0 0
      %2596 = vmatprep.subr.bf16.mxu0 0
      %2597 = vmatpush1.bf16.msra.mxu0 0
      %2598 = vmatprep.subr.bf16.mxu0 0
      %2599 = vmatpush1.bf16.msra.mxu0 0
      %2600 = vmatprep.subr.bf16.mxu0 0
      %2601 = vmatpush1.bf16.msra.mxu0 0
      %2602 = vmatprep.subr.bf16.mxu0 0
      %2603 = vmatpush1.bf16.msra.mxu0 0
      %2604 = vmatprep.subr.bf16.mxu0 0
      %2605 = vmatpush1.bf16.msra.mxu0 0
      %2606 = vmatprep.subr.bf16.mxu0 0
      %2607 = vmatpush1.bf16.msra.mxu0 0
      %2608 = vmatprep.subr.bf16.mxu0 0
      %2609 = vmatpush1.bf16.msra.mxu0 0
      %2610 = vmatprep.subr.bf16.mxu0 0
      %2611 = vmatpush1.bf16.msra.mxu0 0
      %2612 = vmatprep.subr.bf16.mxu0 0
      %2613 = vmatpush1.bf16.msra.mxu0 0
      %2614 = vmatprep.subr.bf16.mxu0 0
      %2615 = vmatpush1.bf16.msra.mxu0 0
      %2616 = vmatprep.mubr.bf16.mxu0 0
      %2617 = vmatmul.mubr.bf16.gmra.mrb[0].mxu0 %v2435
      %v2618 = vpop.f32.mrb[0].mxu0
      %v2619 = vadd.f32 0.0, %v2618
      %v2620 = vpop.f32.mrb[0].mxu0
      %v2621 = vadd.f32 0.0, %v2620
      %v2622 = vpop.f32.mrb[0].mxu0
      %v2623 = vpop.f32.mrb[0].mxu0
      %2624 = vdwg.mxu0
      %v2625 = vadd.f32 %v2350, %v2496
      %v2626 = vadd.f32 %v2351, %v2498
      %v2627 = vadd.f32 %v2352, %v2537
      %v2628 = vadd.f32 %v2353, %v2539
      %v2629 = vadd.f32 %v2354, %v2578
      %v2630 = vadd.f32 %v2355, %v2580
      %v2631 = vadd.f32 %v2356, %v2619
      %v2632 = vadd.f32 %v2357, %v2621
      %v2633 = vld [vmem:[%s232] sm:$0xff]
      %v2634 = vld [vmem:[%s232 + $0x8] sm:$0xff]
      %v2635 = vld [vmem:[%s232 + $0x10] sm:$0x3]
      %s2636 = scalar_lea.vmem %s0, 36
      %v2637 = vld [vmem:[%s2636] sm:$0xf]
      %v2641 = vcombine.high %v2633, %v2633
      %v2643 = vunpack.c.l.s4 1983009808
      %v2644 = vunpack.c.0.s8 %v2643
      %v2645 = vlaneseq
      %v2646 = vshrl.u32 %v2645, 7
      %v2647 = vsub.s32 %v2644, %v2646
      %v2648 = vrot.slane %v2633, %v2647
      %v2650 = vunpack.c.l.s4 1983009808
      %v2651 = vunpack.c.0.s8 %v2650
      %v2652 = vlaneseq
      %v2653 = vshrl.u32 %v2652, 7
      %v2654 = vsub.s32 %v2651, %v2653
      %v2655 = vrot.slane %v2641, %v2654
      %v2656 = vcombine.high %v2648, %v2648
      %v2657 = vcombine.high %v2655, %v2655
      %v2658 = vcombine.high %v2634, %v2634
      %v2660 = vunpack.c.l.s4 1983009808
      %v2661 = vunpack.c.0.s8 %v2660
      %v2662 = vlaneseq
      %v2663 = vshrl.u32 %v2662, 7
      %v2664 = vsub.s32 %v2661, %v2663
      %v2665 = vrot.slane %v2634, %v2664
      %v2667 = vunpack.c.l.s4 1983009808
      %v2668 = vunpack.c.0.s8 %v2667
      %v2669 = vlaneseq
      %v2670 = vshrl.u32 %v2669, 7
      %v2671 = vsub.s32 %v2668, %v2670
      %v2672 = vrot.slane %v2658, %v2671
      %v2673 = vcombine.high %v2665, %v2665
      %v2674 = vcombine.high %v2672, %v2672
      %v2676 = vunpack.c.l.s4 1983009808
      %v2677 = vunpack.c.0.s8 %v2676
      %v2678 = vlaneseq
      %v2679 = vshrl.u32 %v2678, 7
      %v2680 = vsub.s32 %v2677, %v2679
      %v2681 = vrot.slane %v2635, %v2680
      %2682 = vrot.lane.b32.xlu0 %v2648, 28
      %v2683 = vpop.permute.xlu0 %2682
      %2684 = vrot.lane.b32.xlu0 %v2656, 28
      %v2685 = vpop.permute.xlu0 %2684
      %2686 = vrot.lane.b32.xlu0 %v2655, 28
      %v2687 = vpop.permute.xlu0 %2686
      %2688 = vrot.lane.b32.xlu0 %v2657, 28
      %v2689 = vpop.permute.xlu0 %2688
      %2690 = vrot.lane.b32.xlu0 %v2665, 28
      %v2691 = vpop.permute.xlu0 %2690
      %2692 = vrot.lane.b32.xlu0 %v2673, 28
      %v2693 = vpop.permute.xlu0 %2692
      %2694 = vrot.lane.b32.xlu0 %v2672, 28
      %v2695 = vpop.permute.xlu0 %2694
      %2696 = vrot.lane.b32.xlu0 %v2674, 28
      %v2697 = vpop.permute.xlu0 %2696
      %2698 = vrot.lane.b32.xlu0 %v2681, 28
      %v2699 = vpop.permute.xlu0 %2698
      %vm2700 = vcmask 228352
      %v2701 = vsel %vm2700, %v2683, %v2685
      %v2702 = vsel %vm2700, %v2685, %v2687
      %v2703 = vsel %vm2700, %v2687, %v2689
      %v2704 = vsel %vm2700, %v2689, %v2691
      %v2705 = vsel %vm2700, %v2691, %v2693
      %v2706 = vsel %vm2700, %v2693, %v2695
      %v2707 = vsel %vm2700, %v2695, %v2697
      %v2708 = vsel %vm2700, %v2697, %v2699
      %v2710 = vsel %vm324, %v2637, 0
      %v2713 = vsel %vm328, %v2701, 0
      %v2716 = vsel %vm328, %v2702, 0
      %v2719 = vsel %vm328, %v2703, 0
      %v2722 = vsel %vm328, %v2704, 0
      %v2725 = vsel %vm328, %v2705, 0
      %v2728 = vsel %vm328, %v2706, 0
      %v2731 = vsel %vm328, %v2707, 0
      %v2734 = vsel %vm328, %v2708, 0
      %2736 = vmatprep.subr.bf16.mxu0 %v2716
      %2737 = vmatpush1.bf16.msra.mxu0 %v2713
      %2738 = vmatprep.subr.bf16.mxu0 0
      %2739 = vmatpush1.bf16.msra.mxu0 0
      %2740 = vmatprep.subr.bf16.mxu0 0
      %2741 = vmatpush1.bf16.msra.mxu0 0
      %2742 = vmatprep.subr.bf16.mxu0 0
      %2743 = vmatpush1.bf16.msra.mxu0 0
      %2744 = vmatprep.subr.bf16.mxu0 0
      %2745 = vmatpush1.bf16.msra.mxu0 0
      %2746 = vmatprep.subr.bf16.mxu0 0
      %2747 = vmatpush1.bf16.msra.mxu0 0
      %2748 = vmatprep.subr.bf16.mxu0 0
      %2749 = vmatpush1.bf16.msra.mxu0 0
      %2750 = vmatprep.subr.bf16.mxu0 0
      %2751 = vmatpush1.bf16.msra.mxu0 0
      %2752 = vmatprep.subr.bf16.mxu0 0
      %2753 = vmatpush1.bf16.msra.mxu0 0
      %2754 = vmatprep.subr.bf16.mxu0 0
      %2755 = vmatpush1.bf16.msra.mxu0 0
      %2756 = vmatprep.subr.bf16.mxu0 0
      %2757 = vmatpush1.bf16.msra.mxu0 0
      %2758 = vmatprep.subr.bf16.mxu0 0
      %2759 = vmatpush1.bf16.msra.mxu0 0
      %2760 = vmatprep.subr.bf16.mxu0 0
      %2761 = vmatpush1.bf16.msra.mxu0 0
      %2762 = vmatprep.subr.bf16.mxu0 0
      %2763 = vmatpush1.bf16.msra.mxu0 0
      %2764 = vmatprep.subr.bf16.mxu0 0
      %2765 = vmatpush1.bf16.msra.mxu0 0
      %2766 = vmatprep.subr.bf16.mxu0 0
      %2767 = vmatpush1.bf16.msra.mxu0 0
      %2768 = vmatprep.mubr.bf16.mxu0 0
      %2769 = vmatmul.mubr.bf16.gmra.mrb[0].mxu0 %v2710
      %v2770 = vpop.f32.mrb[0].mxu0
      %v2771 = vadd.f32 0.0, %v2770
      %v2772 = vpop.f32.mrb[0].mxu0
      %v2773 = vadd.f32 0.0, %v2772
      %v2774 = vpop.f32.mrb[0].mxu0
      %v2775 = vpop.f32.mrb[0].mxu0
      %2776 = vdwg.mxu0
      %2777 = vmatprep.subr.bf16.mxu0 %v2722
      %2778 = vmatpush1.bf16.msra.mxu0 %v2719
      %2779 = vmatprep.subr.bf16.mxu0 0
      %2780 = vmatpush1.bf16.msra.mxu0 0
      %2781 = vmatprep.subr.bf16.mxu0 0
      %2782 = vmatpush1.bf16.msra.mxu0 0
      %2783 = vmatprep.subr.bf16.mxu0 0
      %2784 = vmatpush1.bf16.msra.mxu0 0
      %2785 = vmatprep.subr.bf16.mxu0 0
      %2786 = vmatpush1.bf16.msra.mxu0 0
      %2787 = vmatprep.subr.bf16.mxu0 0
      %2788 = vmatpush1.bf16.msra.mxu0 0
      %2789 = vmatprep.subr.bf16.mxu0 0
      %2790 = vmatpush1.bf16.msra.mxu0 0
      %2791 = vmatprep.subr.bf16.mxu0 0
      %2792 = vmatpush1.bf16.msra.mxu0 0
      %2793 = vmatprep.subr.bf16.mxu0 0
      %2794 = vmatpush1.bf16.msra.mxu0 0
      %2795 = vmatprep.subr.bf16.mxu0 0
      %2796 = vmatpush1.bf16.msra.mxu0 0
      %2797 = vmatprep.subr.bf16.mxu0 0
      %2798 = vmatpush1.bf16.msra.mxu0 0
      %2799 = vmatprep.subr.bf16.mxu0 0
      %2800 = vmatpush1.bf16.msra.mxu0 0
      %2801 = vmatprep.subr.bf16.mxu0 0
      %2802 = vmatpush1.bf16.msra.mxu0 0
      %2803 = vmatprep.subr.bf16.mxu0 0
      %2804 = vmatpush1.bf16.msra.mxu0 0
      %2805 = vmatprep.subr.bf16.mxu0 0
      %2806 = vmatpush1.bf16.msra.mxu0 0
      %2807 = vmatprep.subr.bf16.mxu0 0
      %2808 = vmatpush1.bf16.msra.mxu0 0
      %2809 = vmatprep.mubr.bf16.mxu0 0
      %2810 = vmatmul.mubr.bf16.gmra.mrb[0].mxu0 %v2710
      %v2811 = vpop.f32.mrb[0].mxu0
      %v2812 = vadd.f32 0.0, %v2811
      %v2813 = vpop.f32.mrb[0].mxu0
      %v2814 = vadd.f32 0.0, %v2813
      %v2815 = vpop.f32.mrb[0].mxu0
      %v2816 = vpop.f32.mrb[0].mxu0
      %2817 = vdwg.mxu0
      %2818 = vmatprep.subr.bf16.mxu0 %v2728
      %2819 = vmatpush1.bf16.msra.mxu0 %v2725
      %2820 = vmatprep.subr.bf16.mxu0 0
      %2821 = vmatpush1.bf16.msra.mxu0 0
      %2822 = vmatprep.subr.bf16.mxu0 0
      %2823 = vmatpush1.bf16.msra.mxu0 0
      %2824 = vmatprep.subr.bf16.mxu0 0
      %2825 = vmatpush1.bf16.msra.mxu0 0
      %2826 = vmatprep.subr.bf16.mxu0 0
      %2827 = vmatpush1.bf16.msra.mxu0 0
      %2828 = vmatprep.subr.bf16.mxu0 0
      %2829 = vmatpush1.bf16.msra.mxu0 0
      %2830 = vmatprep.subr.bf16.mxu0 0
      %2831 = vmatpush1.bf16.msra.mxu0 0
      %2832 = vmatprep.subr.bf16.mxu0 0
      %2833 = vmatpush1.bf16.msra.mxu0 0
      %2834 = vmatprep.subr.bf16.mxu0 0
      %2835 = vmatpush1.bf16.msra.mxu0 0
      %2836 = vmatprep.subr.bf16.mxu0 0
      %2837 = vmatpush1.bf16.msra.mxu0 0
      %2838 = vmatprep.subr.bf16.mxu0 0
      %2839 = vmatpush1.bf16.msra.mxu0 0
      %2840 = vmatprep.subr.bf16.mxu0 0
      %2841 = vmatpush1.bf16.msra.mxu0 0
      %2842 = vmatprep.subr.bf16.mxu0 0
      %2843 = vmatpush1.bf16.msra.mxu0 0
      %2844 = vmatprep.subr.bf16.mxu0 0
      %2845 = vmatpush1.bf16.msra.mxu0 0
      %2846 = vmatprep.subr.bf16.mxu0 0
      %2847 = vmatpush1.bf16.msra.mxu0 0
      %2848 = vmatprep.subr.bf16.mxu0 0
      %2849 = vmatpush1.bf16.msra.mxu0 0
      %2850 = vmatprep.mubr.bf16.mxu0 0
      %2851 = vmatmul.mubr.bf16.gmra.mrb[0].mxu0 %v2710
      %v2852 = vpop.f32.mrb[0].mxu0
      %v2853 = vadd.f32 0.0, %v2852
      %v2854 = vpop.f32.mrb[0].mxu0
      %v2855 = vadd.f32 0.0, %v2854
      %v2856 = vpop.f32.mrb[0].mxu0
      %v2857 = vpop.f32.mrb[0].mxu0
      %2858 = vdwg.mxu0
      %2859 = vmatprep.subr.bf16.mxu0 %v2734
      %2860 = vmatpush1.bf16.msra.mxu0 %v2731
      %2861 = vmatprep.subr.bf16.mxu0 0
      %2862 = vmatpush1.bf16.msra.mxu0 0
      %2863 = vmatprep.subr.bf16.mxu0 0
      %2864 = vmatpush1.bf16.msra.mxu0 0
      %2865 = vmatprep.subr.bf16.mxu0 0
      %2866 = vmatpush1.bf16.msra.mxu0 0
      %2867 = vmatprep.subr.bf16.mxu0 0
      %2868 = vmatpush1.bf16.msra.mxu0 0
      %2869 = vmatprep.subr.bf16.mxu0 0
      %2870 = vmatpush1.bf16.msra.mxu0 0
      %2871 = vmatprep.subr.bf16.mxu0 0
      %2872 = vmatpush1.bf16.msra.mxu0 0
      %2873 = vmatprep.subr.bf16.mxu0 0
      %2874 = vmatpush1.bf16.msra.mxu0 0
      %2875 = vmatprep.subr.bf16.mxu0 0
      %2876 = vmatpush1.bf16.msra.mxu0 0
      %2877 = vmatprep.subr.bf16.mxu0 0
      %2878 = vmatpush1.bf16.msra.mxu0 0
      %2879 = vmatprep.subr.bf16.mxu0 0
      %2880 = vmatpush1.bf16.msra.mxu0 0
      %2881 = vmatprep.subr.bf16.mxu0 0
      %2882 = vmatpush1.bf16.msra.mxu0 0
      %2883 = vmatprep.subr.bf16.mxu0 0
      %2884 = vmatpush1.bf16.msra.mxu0 0
      %2885 = vmatprep.subr.bf16.mxu0 0
      %2886 = vmatpush1.bf16.msra.mxu0 0
      %2887 = vmatprep.subr.bf16.mxu0 0
      %2888 = vmatpush1.bf16.msra.mxu0 0
      %2889 = vmatprep.subr.bf16.mxu0 0
      %2890 = vmatpush1.bf16.msra.mxu0 0
      %2891 = vmatprep.mubr.bf16.mxu0 0
      %2892 = vmatmul.mubr.bf16.gmra.mrb[0].mxu0 %v2710
      %v2893 = vpop.f32.mrb[0].mxu0
      %v2894 = vadd.f32 0.0, %v2893
      %v2895 = vpop.f32.mrb[0].mxu0
      %v2896 = vadd.f32 0.0, %v2895
      %v2897 = vpop.f32.mrb[0].mxu0
      %v2898 = vpop.f32.mrb[0].mxu0
      %2899 = vdwg.mxu0
      %v2900 = vadd.f32 %v2625, %v2771
      %v2901 = vadd.f32 %v2626, %v2773
      %v2902 = vadd.f32 %v2627, %v2812
      %v2903 = vadd.f32 %v2628, %v2814
      %v2904 = vadd.f32 %v2629, %v2853
      %v2905 = vadd.f32 %v2630, %v2855
      %v2906 = vadd.f32 %v2631, %v2894
      %v2907 = vadd.f32 %v2632, %v2896
      %v2908 = vld [vmem:[%s232] sm:$0xff]
      %v2909 = vld [vmem:[%s232 + $0x8] sm:$0xff]
      %v2910 = vld [vmem:[%s232 + $0x10] sm:$0x3]
      %s2911 = scalar_lea.vmem %s0, 40
      %v2912 = vld [vmem:[%s2911] sm:$0xf]
      %v2916 = vcombine.high %v2908, %v2908
      %v2918 = vunpack.c.l.s4 1983009808
      %v2919 = vunpack.c.0.s8 %v2918
      %v2920 = vlaneseq
      %v2921 = vshrl.u32 %v2920, 7
      %v2922 = vsub.s32 %v2919, %v2921
      %v2923 = vrot.slane %v2908, %v2922
      %v2925 = vunpack.c.l.s4 1983009808
      %v2926 = vunpack.c.0.s8 %v2925
      %v2927 = vlaneseq
      %v2928 = vshrl.u32 %v2927, 7
      %v2929 = vsub.s32 %v2926, %v2928
      %v2930 = vrot.slane %v2916, %v2929
      %v2931 = vcombine.high %v2923, %v2923
      %v2932 = vcombine.high %v2930, %v2930
      %v2933 = vcombine.high %v2909, %v2909
      %v2935 = vunpack.c.l.s4 1983009808
      %v2936 = vunpack.c.0.s8 %v2935
      %v2937 = vlaneseq
      %v2938 = vshrl.u32 %v2937, 7
      %v2939 = vsub.s32 %v2936, %v2938
      %v2940 = vrot.slane %v2909, %v2939
      %v2942 = vunpack.c.l.s4 1983009808
      %v2943 = vunpack.c.0.s8 %v2942
      %v2944 = vlaneseq
      %v2945 = vshrl.u32 %v2944, 7
      %v2946 = vsub.s32 %v2943, %v2945
      %v2947 = vrot.slane %v2933, %v2946
      %v2948 = vcombine.high %v2940, %v2940
      %v2949 = vcombine.high %v2947, %v2947
      %v2951 = vunpack.c.l.s4 1983009808
      %v2952 = vunpack.c.0.s8 %v2951
      %v2953 = vlaneseq
      %v2954 = vshrl.u32 %v2953, 7
      %v2955 = vsub.s32 %v2952, %v2954
      %v2956 = vrot.slane %v2910, %v2955
      %2957 = vrot.lane.b32.xlu0 %v2923, 27
      %v2958 = vpop.permute.xlu0 %2957
      %2959 = vrot.lane.b32.xlu0 %v2931, 27
      %v2960 = vpop.permute.xlu0 %2959
      %2961 = vrot.lane.b32.xlu0 %v2930, 27
      %v2962 = vpop.permute.xlu0 %2961
      %2963 = vrot.lane.b32.xlu0 %v2932, 27
      %v2964 = vpop.permute.xlu0 %2963
      %2965 = vrot.lane.b32.xlu0 %v2940, 27
      %v2966 = vpop.permute.xlu0 %2965
      %2967 = vrot.lane.b32.xlu0 %v2948, 27
      %v2968 = vpop.permute.xlu0 %2967
      %2969 = vrot.lane.b32.xlu0 %v2947, 27
      %v2970 = vpop.permute.xlu0 %2969
      %2971 = vrot.lane.b32.xlu0 %v2949, 27
      %v2972 = vpop.permute.xlu0 %2971
      %2973 = vrot.lane.b32.xlu0 %v2956, 27
      %v2974 = vpop.permute.xlu0 %2973
      %vm2975 = vcmask 220160
      %v2976 = vsel %vm2975, %v2958, %v2960
      %v2977 = vsel %vm2975, %v2960, %v2962
      %v2978 = vsel %vm2975, %v2962, %v2964
      %v2979 = vsel %vm2975, %v2964, %v2966
      %v2980 = vsel %vm2975, %v2966, %v2968
      %v2981 = vsel %vm2975, %v2968, %v2970
      %v2982 = vsel %vm2975, %v2970, %v2972
      %v2983 = vsel %vm2975, %v2972, %v2974
      %v2985 = vsel %vm324, %v2912, 0
      %v2988 = vsel %vm328, %v2976, 0
      %v2991 = vsel %vm328, %v2977, 0
      %v2994 = vsel %vm328, %v2978, 0
      %v2997 = vsel %vm328, %v2979, 0
      %v3000 = vsel %vm328, %v2980, 0
      %v3003 = vsel %vm328, %v2981, 0
      %v3006 = vsel %vm328, %v2982, 0
      %v3009 = vsel %vm328, %v2983, 0
      %3011 = vmatprep.subr.bf16.mxu0 %v2991
      %3012 = vmatpush1.bf16.msra.mxu0 %v2988
      %3013 = vmatprep.subr.bf16.mxu0 0
      %3014 = vmatpush1.bf16.msra.mxu0 0
      %3015 = vmatprep.subr.bf16.mxu0 0
      %3016 = vmatpush1.bf16.msra.mxu0 0
      %3017 = vmatprep.subr.bf16.mxu0 0
      %3018 = vmatpush1.bf16.msra.mxu0 0
      %3019 = vmatprep.subr.bf16.mxu0 0
      %3020 = vmatpush1.bf16.msra.mxu0 0
      %3021 = vmatprep.subr.bf16.mxu0 0
      %3022 = vmatpush1.bf16.msra.mxu0 0
      %3023 = vmatprep.subr.bf16.mxu0 0
      %3024 = vmatpush1.bf16.msra.mxu0 0
      %3025 = vmatprep.subr.bf16.mxu0 0
      %3026 = vmatpush1.bf16.msra.mxu0 0
      %3027 = vmatprep.subr.bf16.mxu0 0
      %3028 = vmatpush1.bf16.msra.mxu0 0
      %3029 = vmatprep.subr.bf16.mxu0 0
      %3030 = vmatpush1.bf16.msra.mxu0 0
      %3031 = vmatprep.subr.bf16.mxu0 0
      %3032 = vmatpush1.bf16.msra.mxu0 0
      %3033 = vmatprep.subr.bf16.mxu0 0
      %3034 = vmatpush1.bf16.msra.mxu0 0
      %3035 = vmatprep.subr.bf16.mxu0 0
      %3036 = vmatpush1.bf16.msra.mxu0 0
      %3037 = vmatprep.subr.bf16.mxu0 0
      %3038 = vmatpush1.bf16.msra.mxu0 0
      %3039 = vmatprep.subr.bf16.mxu0 0
      %3040 = vmatpush1.bf16.msra.mxu0 0
      %3041 = vmatprep.subr.bf16.mxu0 0
      %3042 = vmatpush1.bf16.msra.mxu0 0
      %3043 = vmatprep.mubr.bf16.mxu0 0
      %3044 = vmatmul.mubr.bf16.gmra.mrb[0].mxu0 %v2985
      %v3045 = vpop.f32.mrb[0].mxu0
      %v3046 = vadd.f32 0.0, %v3045
      %v3047 = vpop.f32.mrb[0].mxu0
      %v3048 = vadd.f32 0.0, %v3047
      %v3049 = vpop.f32.mrb[0].mxu0
      %v3050 = vpop.f32.mrb[0].mxu0
      %3051 = vdwg.mxu0
      %3052 = vmatprep.subr.bf16.mxu0 %v2997
      %3053 = vmatpush1.bf16.msra.mxu0 %v2994
      %3054 = vmatprep.subr.bf16.mxu0 0
      %3055 = vmatpush1.bf16.msra.mxu0 0
      %3056 = vmatprep.subr.bf16.mxu0 0
      %3057 = vmatpush1.bf16.msra.mxu0 0
      %3058 = vmatprep.subr.bf16.mxu0 0
      %3059 = vmatpush1.bf16.msra.mxu0 0
      %3060 = vmatprep.subr.bf16.mxu0 0
      %3061 = vmatpush1.bf16.msra.mxu0 0
      %3062 = vmatprep.subr.bf16.mxu0 0
      %3063 = vmatpush1.bf16.msra.mxu0 0
      %3064 = vmatprep.subr.bf16.mxu0 0
      %3065 = vmatpush1.bf16.msra.mxu0 0
      %3066 = vmatprep.subr.bf16.mxu0 0
      %3067 = vmatpush1.bf16.msra.mxu0 0
      %3068 = vmatprep.subr.bf16.mxu0 0
      %3069 = vmatpush1.bf16.msra.mxu0 0
      %3070 = vmatprep.subr.bf16.mxu0 0
      %3071 = vmatpush1.bf16.msra.mxu0 0
      %3072 = vmatprep.subr.bf16.mxu0 0
      %3073 = vmatpush1.bf16.msra.mxu0 0
      %3074 = vmatprep.subr.bf16.mxu0 0
      %3075 = vmatpush1.bf16.msra.mxu0 0
      %3076 = vmatprep.subr.bf16.mxu0 0
      %3077 = vmatpush1.bf16.msra.mxu0 0
      %3078 = vmatprep.subr.bf16.mxu0 0
      %3079 = vmatpush1.bf16.msra.mxu0 0
      %3080 = vmatprep.subr.bf16.mxu0 0
      %3081 = vmatpush1.bf16.msra.mxu0 0
      %3082 = vmatprep.subr.bf16.mxu0 0
      %3083 = vmatpush1.bf16.msra.mxu0 0
      %3084 = vmatprep.mubr.bf16.mxu0 0
      %3085 = vmatmul.mubr.bf16.gmra.mrb[0].mxu0 %v2985
      %v3086 = vpop.f32.mrb[0].mxu0
      %v3087 = vadd.f32 0.0, %v3086
      %v3088 = vpop.f32.mrb[0].mxu0
      %v3089 = vadd.f32 0.0, %v3088
      %v3090 = vpop.f32.mrb[0].mxu0
      %v3091 = vpop.f32.mrb[0].mxu0
      %3092 = vdwg.mxu0
      %3093 = vmatprep.subr.bf16.mxu0 %v3003
      %3094 = vmatpush1.bf16.msra.mxu0 %v3000
      %3095 = vmatprep.subr.bf16.mxu0 0
      %3096 = vmatpush1.bf16.msra.mxu0 0
      %3097 = vmatprep.subr.bf16.mxu0 0
      %3098 = vmatpush1.bf16.msra.mxu0 0
      %3099 = vmatprep.subr.bf16.mxu0 0
      %3100 = vmatpush1.bf16.msra.mxu0 0
      %3101 = vmatprep.subr.bf16.mxu0 0
      %3102 = vmatpush1.bf16.msra.mxu0 0
      %3103 = vmatprep.subr.bf16.mxu0 0
      %3104 = vmatpush1.bf16.msra.mxu0 0
      %3105 = vmatprep.subr.bf16.mxu0 0
      %3106 = vmatpush1.bf16.msra.mxu0 0
      %3107 = vmatprep.subr.bf16.mxu0 0
      %3108 = vmatpush1.bf16.msra.mxu0 0
      %3109 = vmatprep.subr.bf16.mxu0 0
      %3110 = vmatpush1.bf16.msra.mxu0 0
      %3111 = vmatprep.subr.bf16.mxu0 0
      %3112 = vmatpush1.bf16.msra.mxu0 0
      %3113 = vmatprep.subr.bf16.mxu0 0
      %3114 = vmatpush1.bf16.msra.mxu0 0
      %3115 = vmatprep.subr.bf16.mxu0 0
      %3116 = vmatpush1.bf16.msra.mxu0 0
      %3117 = vmatprep.subr.bf16.mxu0 0
      %3118 = vmatpush1.bf16.msra.mxu0 0
      %3119 = vmatprep.subr.bf16.mxu0 0
      %3120 = vmatpush1.bf16.msra.mxu0 0
      %3121 = vmatprep.subr.bf16.mxu0 0
      %3122 = vmatpush1.bf16.msra.mxu0 0
      %3123 = vmatprep.subr.bf16.mxu0 0
      %3124 = vmatpush1.bf16.msra.mxu0 0
      %3125 = vmatprep.mubr.bf16.mxu0 0
      %3126 = vmatmul.mubr.bf16.gmra.mrb[0].mxu0 %v2985
      %v3127 = vpop.f32.mrb[0].mxu0
      %v3128 = vadd.f32 0.0, %v3127
      %v3129 = vpop.f32.mrb[0].mxu0
      %v3130 = vadd.f32 0.0, %v3129
      %v3131 = vpop.f32.mrb[0].mxu0
      %v3132 = vpop.f32.mrb[0].mxu0
      %3133 = vdwg.mxu0
      %3134 = vmatprep.subr.bf16.mxu0 %v3009
      %3135 = vmatpush1.bf16.msra.mxu0 %v3006
      %3136 = vmatprep.subr.bf16.mxu0 0
      %3137 = vmatpush1.bf16.msra.mxu0 0
      %3138 = vmatprep.subr.bf16.mxu0 0
      %3139 = vmatpush1.bf16.msra.mxu0 0
      %3140 = vmatprep.subr.bf16.mxu0 0
      %3141 = vmatpush1.bf16.msra.mxu0 0
      %3142 = vmatprep.subr.bf16.mxu0 0
      %3143 = vmatpush1.bf16.msra.mxu0 0
      %3144 = vmatprep.subr.bf16.mxu0 0
      %3145 = vmatpush1.bf16.msra.mxu0 0
      %3146 = vmatprep.subr.bf16.mxu0 0
      %3147 = vmatpush1.bf16.msra.mxu0 0
      %3148 = vmatprep.subr.bf16.mxu0 0
      %3149 = vmatpush1.bf16.msra.mxu0 0
      %3150 = vmatprep.subr.bf16.mxu0 0
      %3151 = vmatpush1.bf16.msra.mxu0 0
      %3152 = vmatprep.subr.bf16.mxu0 0
      %3153 = vmatpush1.bf16.msra.mxu0 0
      %3154 = vmatprep.subr.bf16.mxu0 0
      %3155 = vmatpush1.bf16.msra.mxu0 0
      %3156 = vmatprep.subr.bf16.mxu0 0
      %3157 = vmatpush1.bf16.msra.mxu0 0
      %3158 = vmatprep.subr.bf16.mxu0 0
      %3159 = vmatpush1.bf16.msra.mxu0 0
      %3160 = vmatprep.subr.bf16.mxu0 0
      %3161 = vmatpush1.bf16.msra.mxu0 0
      %3162 = vmatprep.subr.bf16.mxu0 0
      %3163 = vmatpush1.bf16.msra.mxu0 0
      %3164 = vmatprep.subr.bf16.mxu0 0
      %3165 = vmatpush1.bf16.msra.mxu0 0
      %3166 = vmatprep.mubr.bf16.mxu0 0
      %3167 = vmatmul.mubr.bf16.gmra.mrb[0].mxu0 %v2985
      %v3168 = vpop.f32.mrb[0].mxu0
      %v3169 = vadd.f32 0.0, %v3168
      %v3170 = vpop.f32.mrb[0].mxu0
      %v3171 = vadd.f32 0.0, %v3170
      %v3172 = vpop.f32.mrb[0].mxu0
      %v3173 = vpop.f32.mrb[0].mxu0
      %3174 = vdwg.mxu0
      %v3175 = vadd.f32 %v2900, %v3046
      %v3176 = vadd.f32 %v2901, %v3048
      %v3177 = vadd.f32 %v2902, %v3087
      %v3178 = vadd.f32 %v2903, %v3089
      %v3179 = vadd.f32 %v2904, %v3128
      %v3180 = vadd.f32 %v2905, %v3130
      %v3181 = vadd.f32 %v2906, %v3169
      %v3182 = vadd.f32 %v2907, %v3171
      %v3183 = vld [vmem:[%s232] sm:$0xff]
      %v3184 = vld [vmem:[%s232 + $0x8] sm:$0xff]
      %v3185 = vld [vmem:[%s232 + $0x10] sm:$0x3]
      %s3186 = scalar_lea.vmem %s0, 44
      %v3187 = vld [vmem:[%s3186] sm:$0xf]
      %v3191 = vcombine.high %v3183, %v3183
      %v3193 = vunpack.c.l.s4 1983009808
      %v3194 = vunpack.c.0.s8 %v3193
      %v3195 = vlaneseq
      %v3196 = vshrl.u32 %v3195, 7
      %v3197 = vsub.s32 %v3194, %v3196
      %v3198 = vrot.slane %v3183, %v3197
      %v3200 = vunpack.c.l.s4 1983009808
      %v3201 = vunpack.c.0.s8 %v3200
      %v3202 = vlaneseq
      %v3203 = vshrl.u32 %v3202, 7
      %v3204 = vsub.s32 %v3201, %v3203
      %v3205 = vrot.slane %v3191, %v3204
      %v3206 = vcombine.high %v3198, %v3198
      %v3207 = vcombine.high %v3205, %v3205
      %v3208 = vcombine.high %v3184, %v3184
      %v3210 = vunpack.c.l.s4 1983009808
      %v3211 = vunpack.c.0.s8 %v3210
      %v3212 = vlaneseq
      %v3213 = vshrl.u32 %v3212, 7
      %v3214 = vsub.s32 %v3211, %v3213
      %v3215 = vrot.slane %v3184, %v3214
      %v3217 = vunpack.c.l.s4 1983009808
      %v3218 = vunpack.c.0.s8 %v3217
      %v3219 = vlaneseq
      %v3220 = vshrl.u32 %v3219, 7
      %v3221 = vsub.s32 %v3218, %v3220
      %v3222 = vrot.slane %v3208, %v3221
      %v3223 = vcombine.high %v3215, %v3215
      %v3224 = vcombine.high %v3222, %v3222
      %v3226 = vunpack.c.l.s4 1983009808
      %v3227 = vunpack.c.0.s8 %v3226
      %v3228 = vlaneseq
      %v3229 = vshrl.u32 %v3228, 7
      %v3230 = vsub.s32 %v3227, %v3229
      %v3231 = vrot.slane %v3185, %v3230
      %3232 = vrot.lane.b32.xlu0 %v3198, 26
      %v3233 = vpop.permute.xlu0 %3232
      %3234 = vrot.lane.b32.xlu0 %v3206, 26
      %v3235 = vpop.permute.xlu0 %3234
      %3236 = vrot.lane.b32.xlu0 %v3205, 26
      %v3237 = vpop.permute.xlu0 %3236
      %3238 = vrot.lane.b32.xlu0 %v3207, 26
      %v3239 = vpop.permute.xlu0 %3238
      %3240 = vrot.lane.b32.xlu0 %v3215, 26
      %v3241 = vpop.permute.xlu0 %3240
      %3242 = vrot.lane.b32.xlu0 %v3223, 26
      %v3243 = vpop.permute.xlu0 %3242
      %3244 = vrot.lane.b32.xlu0 %v3222, 26
      %v3245 = vpop.permute.xlu0 %3244
      %3246 = vrot.lane.b32.xlu0 %v3224, 26
      %v3247 = vpop.permute.xlu0 %3246
      %3248 = vrot.lane.b32.xlu0 %v3231, 26
      %v3249 = vpop.permute.xlu0 %3248
      %vm3250 = vcmask 211968
      %v3251 = vsel %vm3250, %v3233, %v3235
      %v3252 = vsel %vm3250, %v3235, %v3237
      %v3253 = vsel %vm3250, %v3237, %v3239
      %v3254 = vsel %vm3250, %v3239, %v3241
      %v3255 = vsel %vm3250, %v3241, %v3243
      %v3256 = vsel %vm3250, %v3243, %v3245
      %v3257 = vsel %vm3250, %v3245, %v3247
      %v3258 = vsel %vm3250, %v3247, %v3249
      %v3260 = vsel %vm324, %v3187, 0
      %v3263 = vsel %vm328, %v3251, 0
      %v3266 = vsel %vm328, %v3252, 0
      %v3269 = vsel %vm328, %v3253, 0
      %v3272 = vsel %vm328, %v3254, 0
      %v3275 = vsel %vm328, %v3255, 0
      %v3278 = vsel %vm328, %v3256, 0
      %v3281 = vsel %vm328, %v3257, 0
      %v3284 = vsel %vm328, %v3258, 0
      %3286 = vmatprep.subr.bf16.mxu0 %v3266
      %3287 = vmatpush1.bf16.msra.mxu0 %v3263
      %3288 = vmatprep.subr.bf16.mxu0 0
      %3289 = vmatpush1.bf16.msra.mxu0 0
      %3290 = vmatprep.subr.bf16.mxu0 0
      %3291 = vmatpush1.bf16.msra.mxu0 0
      %3292 = vmatprep.subr.bf16.mxu0 0
      %3293 = vmatpush1.bf16.msra.mxu0 0
      %3294 = vmatprep.subr.bf16.mxu0 0
      %3295 = vmatpush1.bf16.msra.mxu0 0
      %3296 = vmatprep.subr.bf16.mxu0 0
      %3297 = vmatpush1.bf16.msra.mxu0 0
      %3298 = vmatprep.subr.bf16.mxu0 0
      %3299 = vmatpush1.bf16.msra.mxu0 0
      %3300 = vmatprep.subr.bf16.mxu0 0
      %3301 = vmatpush1.bf16.msra.mxu0 0
      %3302 = vmatprep.subr.bf16.mxu0 0
      %3303 = vmatpush1.bf16.msra.mxu0 0
      %3304 = vmatprep.subr.bf16.mxu0 0
      %3305 = vmatpush1.bf16.msra.mxu0 0
      %3306 = vmatprep.subr.bf16.mxu0 0
      %3307 = vmatpush1.bf16.msra.mxu0 0
      %3308 = vmatprep.subr.bf16.mxu0 0
      %3309 = vmatpush1.bf16.msra.mxu0 0
      %3310 = vmatprep.subr.bf16.mxu0 0
      %3311 = vmatpush1.bf16.msra.mxu0 0
      %3312 = vmatprep.subr.bf16.mxu0 0
      %3313 = vmatpush1.bf16.msra.mxu0 0
      %3314 = vmatprep.subr.bf16.mxu0 0
      %3315 = vmatpush1.bf16.msra.mxu0 0
      %3316 = vmatprep.subr.bf16.mxu0 0
      %3317 = vmatpush1.bf16.msra.mxu0 0
      %3318 = vmatprep.mubr.bf16.mxu0 0
      %3319 = vmatmul.mubr.bf16.gmra.mrb[0].mxu0 %v3260
      %v3320 = vpop.f32.mrb[0].mxu0
      %v3321 = vadd.f32 0.0, %v3320
      %v3322 = vpop.f32.mrb[0].mxu0
      %v3323 = vadd.f32 0.0, %v3322
      %v3324 = vpop.f32.mrb[0].mxu0
      %v3325 = vpop.f32.mrb[0].mxu0
      %3326 = vdwg.mxu0
      %3327 = vmatprep.subr.bf16.mxu0 %v3272
      %3328 = vmatpush1.bf16.msra.mxu0 %v3269
      %3329 = vmatprep.subr.bf16.mxu0 0
      %3330 = vmatpush1.bf16.msra.mxu0 0
      %3331 = vmatprep.subr.bf16.mxu0 0
      %3332 = vmatpush1.bf16.msra.mxu0 0
      %3333 = vmatprep.subr.bf16.mxu0 0
      %3334 = vmatpush1.bf16.msra.mxu0 0
      %3335 = vmatprep.subr.bf16.mxu0 0
      %3336 = vmatpush1.bf16.msra.mxu0 0
      %3337 = vmatprep.subr.bf16.mxu0 0
      %3338 = vmatpush1.bf16.msra.mxu0 0
      %3339 = vmatprep.subr.bf16.mxu0 0
      %3340 = vmatpush1.bf16.msra.mxu0 0
      %3341 = vmatprep.subr.bf16.mxu0 0
      %3342 = vmatpush1.bf16.msra.mxu0 0
      %3343 = vmatprep.subr.bf16.mxu0 0
      %3344 = vmatpush1.bf16.msra.mxu0 0
      %3345 = vmatprep.subr.bf16.mxu0 0
      %3346 = vmatpush1.bf16.msra.mxu0 0
      %3347 = vmatprep.subr.bf16.mxu0 0
      %3348 = vmatpush1.bf16.msra.mxu0 0
      %3349 = vmatprep.subr.bf16.mxu0 0
      %3350 = vmatpush1.bf16.msra.mxu0 0
      %3351 = vmatprep.subr.bf16.mxu0 0
      %3352 = vmatpush1.bf16.msra.mxu0 0
      %3353 = vmatprep.subr.bf16.mxu0 0
      %3354 = vmatpush1.bf16.msra.mxu0 0
      %3355 = vmatprep.subr.bf16.mxu0 0
      %3356 = vmatpush1.bf16.msra.mxu0 0
      %3357 = vmatprep.subr.bf16.mxu0 0
      %3358 = vmatpush1.bf16.msra.mxu0 0
      %3359 = vmatprep.mubr.bf16.mxu0 0
      %3360 = vmatmul.mubr.bf16.gmra.mrb[0].mxu0 %v3260
      %v3361 = vpop.f32.mrb[0].mxu0
      %v3362 = vadd.f32 0.0, %v3361
      %v3363 = vpop.f32.mrb[0].mxu0
      %v3364 = vadd.f32 0.0, %v3363
      %v3365 = vpop.f32.mrb[0].mxu0
      %v3366 = vpop.f32.mrb[0].mxu0
      %3367 = vdwg.mxu0
      %3368 = vmatprep.subr.bf16.mxu0 %v3278
      %3369 = vmatpush1.bf16.msra.mxu0 %v3275
      %3370 = vmatprep.subr.bf16.mxu0 0
      %3371 = vmatpush1.bf16.msra.mxu0 0
      %3372 = vmatprep.subr.bf16.mxu0 0
      %3373 = vmatpush1.bf16.msra.mxu0 0
      %3374 = vmatprep.subr.bf16.mxu0 0
      %3375 = vmatpush1.bf16.msra.mxu0 0
      %3376 = vmatprep.subr.bf16.mxu0 0
      %3377 = vmatpush1.bf16.msra.mxu0 0
      %3378 = vmatprep.subr.bf16.mxu0 0
      %3379 = vmatpush1.bf16.msra.mxu0 0
      %3380 = vmatprep.subr.bf16.mxu0 0
      %3381 = vmatpush1.bf16.msra.mxu0 0
      %3382 = vmatprep.subr.bf16.mxu0 0
      %3383 = vmatpush1.bf16.msra.mxu0 0
      %3384 = vmatprep.subr.bf16.mxu0 0
      %3385 = vmatpush1.bf16.msra.mxu0 0
      %3386 = vmatprep.subr.bf16.mxu0 0
      %3387 = vmatpush1.bf16.msra.mxu0 0
      %3388 = vmatprep.subr.bf16.mxu0 0
      %3389 = vmatpush1.bf16.msra.mxu0 0
      %3390 = vmatprep.subr.bf16.mxu0 0
      %3391 = vmatpush1.bf16.msra.mxu0 0
      %3392 = vmatprep.subr.bf16.mxu0 0
      %3393 = vmatpush1.bf16.msra.mxu0 0
      %3394 = vmatprep.subr.bf16.mxu0 0
      %3395 = vmatpush1.bf16.msra.mxu0 0
      %3396 = vmatprep.subr.bf16.mxu0 0
      %3397 = vmatpush1.bf16.msra.mxu0 0
      %3398 = vmatprep.subr.bf16.mxu0 0
      %3399 = vmatpush1.bf16.msra.mxu0 0
      %3400 = vmatprep.mubr.bf16.mxu0 0
      %3401 = vmatmul.mubr.bf16.gmra.mrb[0].mxu0 %v3260
      %v3402 = vpop.f32.mrb[0].mxu0
      %v3403 = vadd.f32 0.0, %v3402
      %v3404 = vpop.f32.mrb[0].mxu0
      %v3405 = vadd.f32 0.0, %v3404
      %v3406 = vpop.f32.mrb[0].mxu0
      %v3407 = vpop.f32.mrb[0].mxu0
      %3408 = vdwg.mxu0
      %3409 = vmatprep.subr.bf16.mxu0 %v3284
      %3410 = vmatpush1.bf16.msra.mxu0 %v3281
      %3411 = vmatprep.subr.bf16.mxu0 0
      %3412 = vmatpush1.bf16.msra.mxu0 0
      %3413 = vmatprep.subr.bf16.mxu0 0
      %3414 = vmatpush1.bf16.msra.mxu0 0
      %3415 = vmatprep.subr.bf16.mxu0 0
      %3416 = vmatpush1.bf16.msra.mxu0 0
      %3417 = vmatprep.subr.bf16.mxu0 0
      %3418 = vmatpush1.bf16.msra.mxu0 0
      %3419 = vmatprep.subr.bf16.mxu0 0
      %3420 = vmatpush1.bf16.msra.mxu0 0
      %3421 = vmatprep.subr.bf16.mxu0 0
      %3422 = vmatpush1.bf16.msra.mxu0 0
      %3423 = vmatprep.subr.bf16.mxu0 0
      %3424 = vmatpush1.bf16.msra.mxu0 0
      %3425 = vmatprep.subr.bf16.mxu0 0
      %3426 = vmatpush1.bf16.msra.mxu0 0
      %3427 = vmatprep.subr.bf16.mxu0 0
      %3428 = vmatpush1.bf16.msra.mxu0 0
      %3429 = vmatprep.subr.bf16.mxu0 0
      %3430 = vmatpush1.bf16.msra.mxu0 0
      %3431 = vmatprep.subr.bf16.mxu0 0
      %3432 = vmatpush1.bf16.msra.mxu0 0
      %3433 = vmatprep.subr.bf16.mxu0 0
      %3434 = vmatpush1.bf16.msra.mxu0 0
      %3435 = vmatprep.subr.bf16.mxu0 0
      %3436 = vmatpush1.bf16.msra.mxu0 0
      %3437 = vmatprep.subr.bf16.mxu0 0
      %3438 = vmatpush1.bf16.msra.mxu0 0
      %3439 = vmatprep.subr.bf16.mxu0 0
      %3440 = vmatpush1.bf16.msra.mxu0 0
      %3441 = vmatprep.mubr.bf16.mxu0 0
      %3442 = vmatmul.mubr.bf16.gmra.mrb[0].mxu0 %v3260
      %v3443 = vpop.f32.mrb[0].mxu0
      %v3444 = vadd.f32 0.0, %v3443
      %v3445 = vpop.f32.mrb[0].mxu0
      %v3446 = vadd.f32 0.0, %v3445
      %v3447 = vpop.f32.mrb[0].mxu0
      %v3448 = vpop.f32.mrb[0].mxu0
      %3449 = vdwg.mxu0
      %v3450 = vadd.f32 %v3175, %v3321
      %v3451 = vadd.f32 %v3176, %v3323
      %v3452 = vadd.f32 %v3177, %v3362
      %v3453 = vadd.f32 %v3178, %v3364
      %v3454 = vadd.f32 %v3179, %v3403
      %v3455 = vadd.f32 %v3180, %v3405
      %v3456 = vadd.f32 %v3181, %v3444
      %v3457 = vadd.f32 %v3182, %v3446
      %v3458 = vld [vmem:[%s232] sm:$0xff]
      %v3459 = vld [vmem:[%s232 + $0x8] sm:$0xff]
      %v3460 = vld [vmem:[%s232 + $0x10] sm:$0x3]
      %s3461 = scalar_lea.vmem %s0, 48
      %v3462 = vld [vmem:[%s3461] sm:$0xf]
      %v3466 = vcombine.high %v3458, %v3458
      %v3468 = vunpack.c.l.s4 1983009808
      %v3469 = vunpack.c.0.s8 %v3468
      %v3470 = vlaneseq
      %v3471 = vshrl.u32 %v3470, 7
      %v3472 = vsub.s32 %v3469, %v3471
      %v3473 = vrot.slane %v3458, %v3472
      %v3475 = vunpack.c.l.s4 1983009808
      %v3476 = vunpack.c.0.s8 %v3475
      %v3477 = vlaneseq
      %v3478 = vshrl.u32 %v3477, 7
      %v3479 = vsub.s32 %v3476, %v3478
      %v3480 = vrot.slane %v3466, %v3479
      %v3481 = vcombine.high %v3473, %v3473
      %v3482 = vcombine.high %v3480, %v3480
      %v3483 = vcombine.high %v3459, %v3459
      %v3485 = vunpack.c.l.s4 1983009808
      %v3486 = vunpack.c.0.s8 %v3485
      %v3487 = vlaneseq
      %v3488 = vshrl.u32 %v3487, 7
      %v3489 = vsub.s32 %v3486, %v3488
      %v3490 = vrot.slane %v3459, %v3489
      %v3492 = vunpack.c.l.s4 1983009808
      %v3493 = vunpack.c.0.s8 %v3492
      %v3494 = vlaneseq
      %v3495 = vshrl.u32 %v3494, 7
      %v3496 = vsub.s32 %v3493, %v3495
      %v3497 = vrot.slane %v3483, %v3496
      %v3498 = vcombine.high %v3490, %v3490
      %v3499 = vcombine.high %v3497, %v3497
      %v3501 = vunpack.c.l.s4 1983009808
      %v3502 = vunpack.c.0.s8 %v3501
      %v3503 = vlaneseq
      %v3504 = vshrl.u32 %v3503, 7
      %v3505 = vsub.s32 %v3502, %v3504
      %v3506 = vrot.slane %v3460, %v3505
      %3507 = vrot.lane.b32.xlu0 %v3473, 18
      %v3508 = vpop.permute.xlu0 %3507
      %3509 = vrot.lane.b32.xlu0 %v3481, 18
      %v3510 = vpop.permute.xlu0 %3509
      %3511 = vrot.lane.b32.xlu0 %v3480, 18
      %v3512 = vpop.permute.xlu0 %3511
      %3513 = vrot.lane.b32.xlu0 %v3482, 18
      %v3514 = vpop.permute.xlu0 %3513
      %3515 = vrot.lane.b32.xlu0 %v3490, 18
      %v3516 = vpop.permute.xlu0 %3515
      %3517 = vrot.lane.b32.xlu0 %v3498, 18
      %v3518 = vpop.permute.xlu0 %3517
      %3519 = vrot.lane.b32.xlu0 %v3497, 18
      %v3520 = vpop.permute.xlu0 %3519
      %3521 = vrot.lane.b32.xlu0 %v3499, 18
      %v3522 = vpop.permute.xlu0 %3521
      %3523 = vrot.lane.b32.xlu0 %v3506, 18
      %v3524 = vpop.permute.xlu0 %3523
      %vm3525 = vcmask 146432
      %v3526 = vsel %vm3525, %v3508, %v3510
      %v3527 = vsel %vm3525, %v3510, %v3512
      %v3528 = vsel %vm3525, %v3512, %v3514
      %v3529 = vsel %vm3525, %v3514, %v3516
      %v3530 = vsel %vm3525, %v3516, %v3518
      %v3531 = vsel %vm3525, %v3518, %v3520
      %v3532 = vsel %vm3525, %v3520, %v3522
      %v3533 = vsel %vm3525, %v3522, %v3524
      %v3535 = vsel %vm324, %v3462, 0
      %v3538 = vsel %vm328, %v3526, 0
      %v3541 = vsel %vm328, %v3527, 0
      %v3544 = vsel %vm328, %v3528, 0
      %v3547 = vsel %vm328, %v3529, 0
      %v3550 = vsel %vm328, %v3530, 0
      %v3553 = vsel %vm328, %v3531, 0
      %v3556 = vsel %vm328, %v3532, 0
      %v3559 = vsel %vm328, %v3533, 0
      %3561 = vmatprep.subr.bf16.mxu0 %v3541
      %3562 = vmatpush1.bf16.msra.mxu0 %v3538
      %3563 = vmatprep.subr.bf16.mxu0 0
      %3564 = vmatpush1.bf16.msra.mxu0 0
      %3565 = vmatprep.subr.bf16.mxu0 0
      %3566 = vmatpush1.bf16.msra.mxu0 0
      %3567 = vmatprep.subr.bf16.mxu0 0
      %3568 = vmatpush1.bf16.msra.mxu0 0
      %3569 = vmatprep.subr.bf16.mxu0 0
      %3570 = vmatpush1.bf16.msra.mxu0 0
      %3571 = vmatprep.subr.bf16.mxu0 0
      %3572 = vmatpush1.bf16.msra.mxu0 0
      %3573 = vmatprep.subr.bf16.mxu0 0
      %3574 = vmatpush1.bf16.msra.mxu0 0
      %3575 = vmatprep.subr.bf16.mxu0 0
      %3576 = vmatpush1.bf16.msra.mxu0 0
      %3577 = vmatprep.subr.bf16.mxu0 0
      %3578 = vmatpush1.bf16.msra.mxu0 0
      %3579 = vmatprep.subr.bf16.mxu0 0
      %3580 = vmatpush1.bf16.msra.mxu0 0
      %3581 = vmatprep.subr.bf16.mxu0 0
      %3582 = vmatpush1.bf16.msra.mxu0 0
      %3583 = vmatprep.subr.bf16.mxu0 0
      %3584 = vmatpush1.bf16.msra.mxu0 0
      %3585 = vmatprep.subr.bf16.mxu0 0
      %3586 = vmatpush1.bf16.msra.mxu0 0
      %3587 = vmatprep.subr.bf16.mxu0 0
      %3588 = vmatpush1.bf16.msra.mxu0 0
      %3589 = vmatprep.subr.bf16.mxu0 0
      %3590 = vmatpush1.bf16.msra.mxu0 0
      %3591 = vmatprep.subr.bf16.mxu0 0
      %3592 = vmatpush1.bf16.msra.mxu0 0
      %3593 = vmatprep.mubr.bf16.mxu0 0
      %3594 = vmatmul.mubr.bf16.gmra.mrb[0].mxu0 %v3535
      %v3595 = vpop.f32.mrb[0].mxu0
      %v3596 = vadd.f32 0.0, %v3595
      %v3597 = vpop.f32.mrb[0].mxu0
      %v3598 = vadd.f32 0.0, %v3597
      %v3599 = vpop.f32.mrb[0].mxu0
      %v3600 = vpop.f32.mrb[0].mxu0
      %3601 = vdwg.mxu0
      %3602 = vmatprep.subr.bf16.mxu0 %v3547
      %3603 = vmatpush1.bf16.msra.mxu0 %v3544
      %3604 = vmatprep.subr.bf16.mxu0 0
      %3605 = vmatpush1.bf16.msra.mxu0 0
      %3606 = vmatprep.subr.bf16.mxu0 0
      %3607 = vmatpush1.bf16.msra.mxu0 0
      %3608 = vmatprep.subr.bf16.mxu0 0
      %3609 = vmatpush1.bf16.msra.mxu0 0
      %3610 = vmatprep.subr.bf16.mxu0 0
      %3611 = vmatpush1.bf16.msra.mxu0 0
      %3612 = vmatprep.subr.bf16.mxu0 0
      %3613 = vmatpush1.bf16.msra.mxu0 0
      %3614 = vmatprep.subr.bf16.mxu0 0
      %3615 = vmatpush1.bf16.msra.mxu0 0
      %3616 = vmatprep.subr.bf16.mxu0 0
      %3617 = vmatpush1.bf16.msra.mxu0 0
      %3618 = vmatprep.subr.bf16.mxu0 0
      %3619 = vmatpush1.bf16.msra.mxu0 0
      %3620 = vmatprep.subr.bf16.mxu0 0
      %3621 = vmatpush1.bf16.msra.mxu0 0
      %3622 = vmatprep.subr.bf16.mxu0 0
      %3623 = vmatpush1.bf16.msra.mxu0 0
      %3624 = vmatprep.subr.bf16.mxu0 0
      %3625 = vmatpush1.bf16.msra.mxu0 0
      %3626 = vmatprep.subr.bf16.mxu0 0
      %3627 = vmatpush1.bf16.msra.mxu0 0
      %3628 = vmatprep.subr.bf16.mxu0 0
      %3629 = vmatpush1.bf16.msra.mxu0 0
      %3630 = vmatprep.subr.bf16.mxu0 0
      %3631 = vmatpush1.bf16.msra.mxu0 0
      %3632 = vmatprep.subr.bf16.mxu0 0
      %3633 = vmatpush1.bf16.msra.mxu0 0
      %3634 = vmatprep.mubr.bf16.mxu0 0
      %3635 = vmatmul.mubr.bf16.gmra.mrb[0].mxu0 %v3535
      %v3636 = vpop.f32.mrb[0].mxu0
      %v3637 = vadd.f32 0.0, %v3636
      %v3638 = vpop.f32.mrb[0].mxu0
      %v3639 = vadd.f32 0.0, %v3638
      %v3640 = vpop.f32.mrb[0].mxu0
      %v3641 = vpop.f32.mrb[0].mxu0
      %3642 = vdwg.mxu0
      %3643 = vmatprep.subr.bf16.mxu0 %v3553
      %3644 = vmatpush1.bf16.msra.mxu0 %v3550
      %3645 = vmatprep.subr.bf16.mxu0 0
      %3646 = vmatpush1.bf16.msra.mxu0 0
      %3647 = vmatprep.subr.bf16.mxu0 0
      %3648 = vmatpush1.bf16.msra.mxu0 0
      %3649 = vmatprep.subr.bf16.mxu0 0
      %3650 = vmatpush1.bf16.msra.mxu0 0
      %3651 = vmatprep.subr.bf16.mxu0 0
      %3652 = vmatpush1.bf16.msra.mxu0 0
      %3653 = vmatprep.subr.bf16.mxu0 0
      %3654 = vmatpush1.bf16.msra.mxu0 0
      %3655 = vmatprep.subr.bf16.mxu0 0
      %3656 = vmatpush1.bf16.msra.mxu0 0
      %3657 = vmatprep.subr.bf16.mxu0 0
      %3658 = vmatpush1.bf16.msra.mxu0 0
      %3659 = vmatprep.subr.bf16.mxu0 0
      %3660 = vmatpush1.bf16.msra.mxu0 0
      %3661 = vmatprep.subr.bf16.mxu0 0
      %3662 = vmatpush1.bf16.msra.mxu0 0
      %3663 = vmatprep.subr.bf16.mxu0 0
      %3664 = vmatpush1.bf16.msra.mxu0 0
      %3665 = vmatprep.subr.bf16.mxu0 0
      %3666 = vmatpush1.bf16.msra.mxu0 0
      %3667 = vmatprep.subr.bf16.mxu0 0
      %3668 = vmatpush1.bf16.msra.mxu0 0
      %3669 = vmatprep.subr.bf16.mxu0 0
      %3670 = vmatpush1.bf16.msra.mxu0 0
      %3671 = vmatprep.subr.bf16.mxu0 0
      %3672 = vmatpush1.bf16.msra.mxu0 0
      %3673 = vmatprep.subr.bf16.mxu0 0
      %3674 = vmatpush1.bf16.msra.mxu0 0
      %3675 = vmatprep.mubr.bf16.mxu0 0
      %3676 = vmatmul.mubr.bf16.gmra.mrb[0].mxu0 %v3535
      %v3677 = vpop.f32.mrb[0].mxu0
      %v3678 = vadd.f32 0.0, %v3677
      %v3679 = vpop.f32.mrb[0].mxu0
      %v3680 = vadd.f32 0.0, %v3679
      %v3681 = vpop.f32.mrb[0].mxu0
      %v3682 = vpop.f32.mrb[0].mxu0
      %3683 = vdwg.mxu0
      %3684 = vmatprep.subr.bf16.mxu0 %v3559
      %3685 = vmatpush1.bf16.msra.mxu0 %v3556
      %3686 = vmatprep.subr.bf16.mxu0 0
      %3687 = vmatpush1.bf16.msra.mxu0 0
      %3688 = vmatprep.subr.bf16.mxu0 0
      %3689 = vmatpush1.bf16.msra.mxu0 0
      %3690 = vmatprep.subr.bf16.mxu0 0
      %3691 = vmatpush1.bf16.msra.mxu0 0
      %3692 = vmatprep.subr.bf16.mxu0 0
      %3693 = vmatpush1.bf16.msra.mxu0 0
      %3694 = vmatprep.subr.bf16.mxu0 0
      %3695 = vmatpush1.bf16.msra.mxu0 0
      %3696 = vmatprep.subr.bf16.mxu0 0
      %3697 = vmatpush1.bf16.msra.mxu0 0
      %3698 = vmatprep.subr.bf16.mxu0 0
      %3699 = vmatpush1.bf16.msra.mxu0 0
      %3700 = vmatprep.subr.bf16.mxu0 0
      %3701 = vmatpush1.bf16.msra.mxu0 0
      %3702 = vmatprep.subr.bf16.mxu0 0
      %3703 = vmatpush1.bf16.msra.mxu0 0
      %3704 = vmatprep.subr.bf16.mxu0 0
      %3705 = vmatpush1.bf16.msra.mxu0 0
      %3706 = vmatprep.subr.bf16.mxu0 0
      %3707 = vmatpush1.bf16.msra.mxu0 0
      %3708 = vmatprep.subr.bf16.mxu0 0
      %3709 = vmatpush1.bf16.msra.mxu0 0
      %3710 = vmatprep.subr.bf16.mxu0 0
      %3711 = vmatpush1.bf16.msra.mxu0 0
      %3712 = vmatprep.subr.bf16.mxu0 0
      %3713 = vmatpush1.bf16.msra.mxu0 0
      %3714 = vmatprep.subr.bf16.mxu0 0
      %3715 = vmatpush1.bf16.msra.mxu0 0
      %3716 = vmatprep.mubr.bf16.mxu0 0
      %3717 = vmatmul.mubr.bf16.gmra.mrb[0].mxu0 %v3535
      %v3718 = vpop.f32.mrb[0].mxu0
      %v3719 = vadd.f32 0.0, %v3718
      %v3720 = vpop.f32.mrb[0].mxu0
      %v3721 = vadd.f32 0.0, %v3720
      %v3722 = vpop.f32.mrb[0].mxu0
      %v3723 = vpop.f32.mrb[0].mxu0
      %3724 = vdwg.mxu0
      %v3725 = vadd.f32 %v3450, %v3596
      %v3726 = vadd.f32 %v3451, %v3598
      %v3727 = vadd.f32 %v3452, %v3637
      %v3728 = vadd.f32 %v3453, %v3639
      %v3729 = vadd.f32 %v3454, %v3678
      %v3730 = vadd.f32 %v3455, %v3680
      %v3731 = vadd.f32 %v3456, %v3719
      %v3732 = vadd.f32 %v3457, %v3721
      %v3733 = vld [vmem:[%s232] sm:$0xff]
      %v3734 = vld [vmem:[%s232 + $0x8] sm:$0xff]
      %v3735 = vld [vmem:[%s232 + $0x10] sm:$0x3]
      %s3736 = scalar_lea.vmem %s0, 52
      %v3737 = vld [vmem:[%s3736] sm:$0xf]
      %v3741 = vcombine.high %v3733, %v3733
      %v3743 = vunpack.c.l.s4 1983009808
      %v3744 = vunpack.c.0.s8 %v3743
      %v3745 = vlaneseq
      %v3746 = vshrl.u32 %v3745, 7
      %v3747 = vsub.s32 %v3744, %v3746
      %v3748 = vrot.slane %v3733, %v3747
      %v3750 = vunpack.c.l.s4 1983009808
      %v3751 = vunpack.c.0.s8 %v3750
      %v3752 = vlaneseq
      %v3753 = vshrl.u32 %v3752, 7
      %v3754 = vsub.s32 %v3751, %v3753
      %v3755 = vrot.slane %v3741, %v3754
      %v3756 = vcombine.high %v3748, %v3748
      %v3757 = vcombine.high %v3755, %v3755
      %v3758 = vcombine.high %v3734, %v3734
      %v3760 = vunpack.c.l.s4 1983009808
      %v3761 = vunpack.c.0.s8 %v3760
      %v3762 = vlaneseq
      %v3763 = vshrl.u32 %v3762, 7
      %v3764 = vsub.s32 %v3761, %v3763
      %v3765 = vrot.slane %v3734, %v3764
      %v3767 = vunpack.c.l.s4 1983009808
      %v3768 = vunpack.c.0.s8 %v3767
      %v3769 = vlaneseq
      %v3770 = vshrl.u32 %v3769, 7
      %v3771 = vsub.s32 %v3768, %v3770
      %v3772 = vrot.slane %v3758, %v3771
      %v3773 = vcombine.high %v3765, %v3765
      %v3774 = vcombine.high %v3772, %v3772
      %v3776 = vunpack.c.l.s4 1983009808
      %v3777 = vunpack.c.0.s8 %v3776
      %v3778 = vlaneseq
      %v3779 = vshrl.u32 %v3778, 7
      %v3780 = vsub.s32 %v3777, %v3779
      %v3781 = vrot.slane %v3735, %v3780
      %3782 = vrot.lane.b32.xlu0 %v3748, 17
      %v3783 = vpop.permute.xlu0 %3782
      %3784 = vrot.lane.b32.xlu0 %v3756, 17
      %v3785 = vpop.permute.xlu0 %3784
      %3786 = vrot.lane.b32.xlu0 %v3755, 17
      %v3787 = vpop.permute.xlu0 %3786
      %3788 = vrot.lane.b32.xlu0 %v3757, 17
      %v3789 = vpop.permute.xlu0 %3788
      %3790 = vrot.lane.b32.xlu0 %v3765, 17
      %v3791 = vpop.permute.xlu0 %3790
      %3792 = vrot.lane.b32.xlu0 %v3773, 17
      %v3793 = vpop.permute.xlu0 %3792
      %3794 = vrot.lane.b32.xlu0 %v3772, 17
      %v3795 = vpop.permute.xlu0 %3794
      %3796 = vrot.lane.b32.xlu0 %v3774, 17
      %v3797 = vpop.permute.xlu0 %3796
      %3798 = vrot.lane.b32.xlu0 %v3781, 17
      %v3799 = vpop.permute.xlu0 %3798
      %vm3800 = vcmask 138240
      %v3801 = vsel %vm3800, %v3783, %v3785
      %v3802 = vsel %vm3800, %v3785, %v3787
      %v3803 = vsel %vm3800, %v3787, %v3789
      %v3804 = vsel %vm3800, %v3789, %v3791
      %v3805 = vsel %vm3800, %v3791, %v3793
      %v3806 = vsel %vm3800, %v3793, %v3795
      %v3807 = vsel %vm3800, %v3795, %v3797
      %v3808 = vsel %vm3800, %v3797, %v3799
      %v3810 = vsel %vm324, %v3737, 0
      %v3813 = vsel %vm328, %v3801, 0
      %v3816 = vsel %vm328, %v3802, 0
      %v3819 = vsel %vm328, %v3803, 0
      %v3822 = vsel %vm328, %v3804, 0
      %v3825 = vsel %vm328, %v3805, 0
      %v3828 = vsel %vm328, %v3806, 0
      %v3831 = vsel %vm328, %v3807, 0
      %v3834 = vsel %vm328, %v3808, 0
      %3836 = vmatprep.subr.bf16.mxu0 %v3816
      %3837 = vmatpush1.bf16.msra.mxu0 %v3813
      %3838 = vmatprep.subr.bf16.mxu0 0
      %3839 = vmatpush1.bf16.msra.mxu0 0
      %3840 = vmatprep.subr.bf16.mxu0 0
      %3841 = vmatpush1.bf16.msra.mxu0 0
      %3842 = vmatprep.subr.bf16.mxu0 0
      %3843 = vmatpush1.bf16.msra.mxu0 0
      %3844 = vmatprep.subr.bf16.mxu0 0
      %3845 = vmatpush1.bf16.msra.mxu0 0
      %3846 = vmatprep.subr.bf16.mxu0 0
      %3847 = vmatpush1.bf16.msra.mxu0 0
      %3848 = vmatprep.subr.bf16.mxu0 0
      %3849 = vmatpush1.bf16.msra.mxu0 0
      %3850 = vmatprep.subr.bf16.mxu0 0
      %3851 = vmatpush1.bf16.msra.mxu0 0
      %3852 = vmatprep.subr.bf16.mxu0 0
      %3853 = vmatpush1.bf16.msra.mxu0 0
      %3854 = vmatprep.subr.bf16.mxu0 0
      %3855 = vmatpush1.bf16.msra.mxu0 0
      %3856 = vmatprep.subr.bf16.mxu0 0
      %3857 = vmatpush1.bf16.msra.mxu0 0
      %3858 = vmatprep.subr.bf16.mxu0 0
      %3859 = vmatpush1.bf16.msra.mxu0 0
      %3860 = vmatprep.subr.bf16.mxu0 0
      %3861 = vmatpush1.bf16.msra.mxu0 0
      %3862 = vmatprep.subr.bf16.mxu0 0
      %3863 = vmatpush1.bf16.msra.mxu0 0
      %3864 = vmatprep.subr.bf16.mxu0 0
      %3865 = vmatpush1.bf16.msra.mxu0 0
      %3866 = vmatprep.subr.bf16.mxu0 0
      %3867 = vmatpush1.bf16.msra.mxu0 0
      %3868 = vmatprep.mubr.bf16.mxu0 0
      %3869 = vmatmul.mubr.bf16.gmra.mrb[0].mxu0 %v3810
      %v3870 = vpop.f32.mrb[0].mxu0
      %v3871 = vadd.f32 0.0, %v3870
      %v3872 = vpop.f32.mrb[0].mxu0
      %v3873 = vadd.f32 0.0, %v3872
      %v3874 = vpop.f32.mrb[0].mxu0
      %v3875 = vpop.f32.mrb[0].mxu0
      %3876 = vdwg.mxu0
      %3877 = vmatprep.subr.bf16.mxu0 %v3822
      %3878 = vmatpush1.bf16.msra.mxu0 %v3819
      %3879 = vmatprep.subr.bf16.mxu0 0
      %3880 = vmatpush1.bf16.msra.mxu0 0
      %3881 = vmatprep.subr.bf16.mxu0 0
      %3882 = vmatpush1.bf16.msra.mxu0 0
      %3883 = vmatprep.subr.bf16.mxu0 0
      %3884 = vmatpush1.bf16.msra.mxu0 0
      %3885 = vmatprep.subr.bf16.mxu0 0
      %3886 = vmatpush1.bf16.msra.mxu0 0
      %3887 = vmatprep.subr.bf16.mxu0 0
      %3888 = vmatpush1.bf16.msra.mxu0 0
      %3889 = vmatprep.subr.bf16.mxu0 0
      %3890 = vmatpush1.bf16.msra.mxu0 0
      %3891 = vmatprep.subr.bf16.mxu0 0
      %3892 = vmatpush1.bf16.msra.mxu0 0
      %3893 = vmatprep.subr.bf16.mxu0 0
      %3894 = vmatpush1.bf16.msra.mxu0 0
      %3895 = vmatprep.subr.bf16.mxu0 0
      %3896 = vmatpush1.bf16.msra.mxu0 0
      %3897 = vmatprep.subr.bf16.mxu0 0
      %3898 = vmatpush1.bf16.msra.mxu0 0
      %3899 = vmatprep.subr.bf16.mxu0 0
      %3900 = vmatpush1.bf16.msra.mxu0 0
      %3901 = vmatprep.subr.bf16.mxu0 0
      %3902 = vmatpush1.bf16.msra.mxu0 0
      %3903 = vmatprep.subr.bf16.mxu0 0
      %3904 = vmatpush1.bf16.msra.mxu0 0
      %3905 = vmatprep.subr.bf16.mxu0 0
      %3906 = vmatpush1.bf16.msra.mxu0 0
      %3907 = vmatprep.subr.bf16.mxu0 0
      %3908 = vmatpush1.bf16.msra.mxu0 0
      %3909 = vmatprep.mubr.bf16.mxu0 0
      %3910 = vmatmul.mubr.bf16.gmra.mrb[0].mxu0 %v3810
      %v3911 = vpop.f32.mrb[0].mxu0
      %v3912 = vadd.f32 0.0, %v3911
      %v3913 = vpop.f32.mrb[0].mxu0
      %v3914 = vadd.f32 0.0, %v3913
      %v3915 = vpop.f32.mrb[0].mxu0
      %v3916 = vpop.f32.mrb[0].mxu0
      %3917 = vdwg.mxu0
      %3918 = vmatprep.subr.bf16.mxu0 %v3828
      %3919 = vmatpush1.bf16.msra.mxu0 %v3825
      %3920 = vmatprep.subr.bf16.mxu0 0
      %3921 = vmatpush1.bf16.msra.mxu0 0
      %3922 = vmatprep.subr.bf16.mxu0 0
      %3923 = vmatpush1.bf16.msra.mxu0 0
      %3924 = vmatprep.subr.bf16.mxu0 0
      %3925 = vmatpush1.bf16.msra.mxu0 0
      %3926 = vmatprep.subr.bf16.mxu0 0
      %3927 = vmatpush1.bf16.msra.mxu0 0
      %3928 = vmatprep.subr.bf16.mxu0 0
      %3929 = vmatpush1.bf16.msra.mxu0 0
      %3930 = vmatprep.subr.bf16.mxu0 0
      %3931 = vmatpush1.bf16.msra.mxu0 0
      %3932 = vmatprep.subr.bf16.mxu0 0
      %3933 = vmatpush1.bf16.msra.mxu0 0
      %3934 = vmatprep.subr.bf16.mxu0 0
      %3935 = vmatpush1.bf16.msra.mxu0 0
      %3936 = vmatprep.subr.bf16.mxu0 0
      %3937 = vmatpush1.bf16.msra.mxu0 0
      %3938 = vmatprep.subr.bf16.mxu0 0
      %3939 = vmatpush1.bf16.msra.mxu0 0
      %3940 = vmatprep.subr.bf16.mxu0 0
      %3941 = vmatpush1.bf16.msra.mxu0 0
      %3942 = vmatprep.subr.bf16.mxu0 0
      %3943 = vmatpush1.bf16.msra.mxu0 0
      %3944 = vmatprep.subr.bf16.mxu0 0
      %3945 = vmatpush1.bf16.msra.mxu0 0
      %3946 = vmatprep.subr.bf16.mxu0 0
      %3947 = vmatpush1.bf16.msra.mxu0 0
      %3948 = vmatprep.subr.bf16.mxu0 0
      %3949 = vmatpush1.bf16.msra.mxu0 0
      %3950 = vmatprep.mubr.bf16.mxu0 0
      %3951 = vmatmul.mubr.bf16.gmra.mrb[0].mxu0 %v3810
      %v3952 = vpop.f32.mrb[0].mxu0
      %v3953 = vadd.f32 0.0, %v3952
      %v3954 = vpop.f32.mrb[0].mxu0
      %v3955 = vadd.f32 0.0, %v3954
      %v3956 = vpop.f32.mrb[0].mxu0
      %v3957 = vpop.f32.mrb[0].mxu0
      %3958 = vdwg.mxu0
      %3959 = vmatprep.subr.bf16.mxu0 %v3834
      %3960 = vmatpush1.bf16.msra.mxu0 %v3831
      %3961 = vmatprep.subr.bf16.mxu0 0
      %3962 = vmatpush1.bf16.msra.mxu0 0
      %3963 = vmatprep.subr.bf16.mxu0 0
      %3964 = vmatpush1.bf16.msra.mxu0 0
      %3965 = vmatprep.subr.bf16.mxu0 0
      %3966 = vmatpush1.bf16.msra.mxu0 0
      %3967 = vmatprep.subr.bf16.mxu0 0
      %3968 = vmatpush1.bf16.msra.mxu0 0
      %3969 = vmatprep.subr.bf16.mxu0 0
      %3970 = vmatpush1.bf16.msra.mxu0 0
      %3971 = vmatprep.subr.bf16.mxu0 0
      %3972 = vmatpush1.bf16.msra.mxu0 0
      %3973 = vmatprep.subr.bf16.mxu0 0
      %3974 = vmatpush1.bf16.msra.mxu0 0
      %3975 = vmatprep.subr.bf16.mxu0 0
      %3976 = vmatpush1.bf16.msra.mxu0 0
      %3977 = vmatprep.subr.bf16.mxu0 0
      %3978 = vmatpush1.bf16.msra.mxu0 0
      %3979 = vmatprep.subr.bf16.mxu0 0
      %3980 = vmatpush1.bf16.msra.mxu0 0
      %3981 = vmatprep.subr.bf16.mxu0 0
      %3982 = vmatpush1.bf16.msra.mxu0 0
      %3983 = vmatprep.subr.bf16.mxu0 0
      %3984 = vmatpush1.bf16.msra.mxu0 0
      %3985 = vmatprep.subr.bf16.mxu0 0
      %3986 = vmatpush1.bf16.msra.mxu0 0
      %3987 = vmatprep.subr.bf16.mxu0 0
      %3988 = vmatpush1.bf16.msra.mxu0 0
      %3989 = vmatprep.subr.bf16.mxu0 0
      %3990 = vmatpush1.bf16.msra.mxu0 0
      %3991 = vmatprep.mubr.bf16.mxu0 0
      %3992 = vmatmul.mubr.bf16.gmra.mrb[0].mxu0 %v3810
      %v3993 = vpop.f32.mrb[0].mxu0
      %v3994 = vadd.f32 0.0, %v3993
      %v3995 = vpop.f32.mrb[0].mxu0
      %v3996 = vadd.f32 0.0, %v3995
      %v3997 = vpop.f32.mrb[0].mxu0
      %v3998 = vpop.f32.mrb[0].mxu0
      %3999 = vdwg.mxu0
      %v4000 = vadd.f32 %v3725, %v3871
      %v4001 = vadd.f32 %v3726, %v3873
      %v4002 = vadd.f32 %v3727, %v3912
      %v4003 = vadd.f32 %v3728, %v3914
      %v4004 = vadd.f32 %v3729, %v3953
      %v4005 = vadd.f32 %v3730, %v3955
      %v4006 = vadd.f32 %v3731, %v3994
      %v4007 = vadd.f32 %v3732, %v3996
      %v4008 = vld [vmem:[%s232] sm:$0xff]
      %v4009 = vld [vmem:[%s232 + $0x8] sm:$0xff]
      %v4010 = vld [vmem:[%s232 + $0x10] sm:$0x3]
      %s4011 = scalar_lea.vmem %s0, 56
      %v4012 = vld [vmem:[%s4011] sm:$0xf]
      %v4016 = vcombine.high %v4008, %v4008
      %v4018 = vunpack.c.l.s4 1983009808
      %v4019 = vunpack.c.0.s8 %v4018
      %v4020 = vlaneseq
      %v4021 = vshrl.u32 %v4020, 7
      %v4022 = vsub.s32 %v4019, %v4021
      %v4023 = vrot.slane %v4008, %v4022
      %v4025 = vunpack.c.l.s4 1983009808
      %v4026 = vunpack.c.0.s8 %v4025
      %v4027 = vlaneseq
      %v4028 = vshrl.u32 %v4027, 7
      %v4029 = vsub.s32 %v4026, %v4028
      %v4030 = vrot.slane %v4016, %v4029
      %v4031 = vcombine.high %v4023, %v4023
      %v4032 = vcombine.high %v4030, %v4030
      %v4033 = vcombine.high %v4009, %v4009
      %v4035 = vunpack.c.l.s4 1983009808
      %v4036 = vunpack.c.0.s8 %v4035
      %v4037 = vlaneseq
      %v4038 = vshrl.u32 %v4037, 7
      %v4039 = vsub.s32 %v4036, %v4038
      %v4040 = vrot.slane %v4009, %v4039
      %v4042 = vunpack.c.l.s4 1983009808
      %v4043 = vunpack.c.0.s8 %v4042
      %v4044 = vlaneseq
      %v4045 = vshrl.u32 %v4044, 7
      %v4046 = vsub.s32 %v4043, %v4045
      %v4047 = vrot.slane %v4033, %v4046
      %v4048 = vcombine.high %v4040, %v4040
      %v4049 = vcombine.high %v4047, %v4047
      %v4051 = vunpack.c.l.s4 1983009808
      %v4052 = vunpack.c.0.s8 %v4051
      %v4053 = vlaneseq
      %v4054 = vshrl.u32 %v4053, 7
      %v4055 = vsub.s32 %v4052, %v4054
      %v4056 = vrot.slane %v4010, %v4055
      %4057 = vrot.lane.b32.xlu0 %v4023, 16
      %v4058 = vpop.permute.xlu0 %4057
      %4059 = vrot.lane.b32.xlu0 %v4031, 16
      %v4060 = vpop.permute.xlu0 %4059
      %4061 = vrot.lane.b32.xlu0 %v4030, 16
      %v4062 = vpop.permute.xlu0 %4061
      %4063 = vrot.lane.b32.xlu0 %v4032, 16
      %v4064 = vpop.permute.xlu0 %4063
      %4065 = vrot.lane.b32.xlu0 %v4040, 16
      %v4066 = vpop.permute.xlu0 %4065
      %4067 = vrot.lane.b32.xlu0 %v4048, 16
      %v4068 = vpop.permute.xlu0 %4067
      %4069 = vrot.lane.b32.xlu0 %v4047, 16
      %v4070 = vpop.permute.xlu0 %4069
      %4071 = vrot.lane.b32.xlu0 %v4049, 16
      %v4072 = vpop.permute.xlu0 %4071
      %4073 = vrot.lane.b32.xlu0 %v4056, 16
      %v4074 = vpop.permute.xlu0 %4073
      %vm4075 = vcmask 130048
      %v4076 = vsel %vm4075, %v4058, %v4060
      %v4077 = vsel %vm4075, %v4060, %v4062
      %v4078 = vsel %vm4075, %v4062, %v4064
      %v4079 = vsel %vm4075, %v4064, %v4066
      %v4080 = vsel %vm4075, %v4066, %v4068
      %v4081 = vsel %vm4075, %v4068, %v4070
      %v4082 = vsel %vm4075, %v4070, %v4072
      %v4083 = vsel %vm4075, %v4072, %v4074
      %v4085 = vsel %vm324, %v4012, 0
      %v4088 = vsel %vm328, %v4076, 0
      %v4091 = vsel %vm328, %v4077, 0
      %v4094 = vsel %vm328, %v4078, 0
      %v4097 = vsel %vm328, %v4079, 0
      %v4100 = vsel %vm328, %v4080, 0
      %v4103 = vsel %vm328, %v4081, 0
      %v4106 = vsel %vm328, %v4082, 0
      %v4109 = vsel %vm328, %v4083, 0
      %4111 = vmatprep.subr.bf16.mxu0 %v4091
      %4112 = vmatpush1.bf16.msra.mxu0 %v4088
      %4113 = vmatprep.subr.bf16.mxu0 0
      %4114 = vmatpush1.bf16.msra.mxu0 0
      %4115 = vmatprep.subr.bf16.mxu0 0
      %4116 = vmatpush1.bf16.msra.mxu0 0
      %4117 = vmatprep.subr.bf16.mxu0 0
      %4118 = vmatpush1.bf16.msra.mxu0 0
      %4119 = vmatprep.subr.bf16.mxu0 0
      %4120 = vmatpush1.bf16.msra.mxu0 0
      %4121 = vmatprep.subr.bf16.mxu0 0
      %4122 = vmatpush1.bf16.msra.mxu0 0
      %4123 = vmatprep.subr.bf16.mxu0 0
      %4124 = vmatpush1.bf16.msra.mxu0 0
      %4125 = vmatprep.subr.bf16.mxu0 0
      %4126 = vmatpush1.bf16.msra.mxu0 0
      %4127 = vmatprep.subr.bf16.mxu0 0
      %4128 = vmatpush1.bf16.msra.mxu0 0
      %4129 = vmatprep.subr.bf16.mxu0 0
      %4130 = vmatpush1.bf16.msra.mxu0 0
      %4131 = vmatprep.subr.bf16.mxu0 0
      %4132 = vmatpush1.bf16.msra.mxu0 0
      %4133 = vmatprep.subr.bf16.mxu0 0
      %4134 = vmatpush1.bf16.msra.mxu0 0
      %4135 = vmatprep.subr.bf16.mxu0 0
      %4136 = vmatpush1.bf16.msra.mxu0 0
      %4137 = vmatprep.subr.bf16.mxu0 0
      %4138 = vmatpush1.bf16.msra.mxu0 0
      %4139 = vmatprep.subr.bf16.mxu0 0
      %4140 = vmatpush1.bf16.msra.mxu0 0
      %4141 = vmatprep.subr.bf16.mxu0 0
      %4142 = vmatpush1.bf16.msra.mxu0 0
      %4143 = vmatprep.mubr.bf16.mxu0 0
      %4144 = vmatmul.mubr.bf16.gmra.mrb[0].mxu0 %v4085
      %v4145 = vpop.f32.mrb[0].mxu0
      %v4146 = vadd.f32 0.0, %v4145
      %v4147 = vpop.f32.mrb[0].mxu0
      %v4148 = vadd.f32 0.0, %v4147
      %v4149 = vpop.f32.mrb[0].mxu0
      %v4150 = vpop.f32.mrb[0].mxu0
      %4151 = vdwg.mxu0
      %4152 = vmatprep.subr.bf16.mxu0 %v4097
      %4153 = vmatpush1.bf16.msra.mxu0 %v4094
      %4154 = vmatprep.subr.bf16.mxu0 0
      %4155 = vmatpush1.bf16.msra.mxu0 0
      %4156 = vmatprep.subr.bf16.mxu0 0
      %4157 = vmatpush1.bf16.msra.mxu0 0
      %4158 = vmatprep.subr.bf16.mxu0 0
      %4159 = vmatpush1.bf16.msra.mxu0 0
      %4160 = vmatprep.subr.bf16.mxu0 0
      %4161 = vmatpush1.bf16.msra.mxu0 0
      %4162 = vmatprep.subr.bf16.mxu0 0
      %4163 = vmatpush1.bf16.msra.mxu0 0
      %4164 = vmatprep.subr.bf16.mxu0 0
      %4165 = vmatpush1.bf16.msra.mxu0 0
      %4166 = vmatprep.subr.bf16.mxu0 0
      %4167 = vmatpush1.bf16.msra.mxu0 0
      %4168 = vmatprep.subr.bf16.mxu0 0
      %4169 = vmatpush1.bf16.msra.mxu0 0
      %4170 = vmatprep.subr.bf16.mxu0 0
      %4171 = vmatpush1.bf16.msra.mxu0 0
      %4172 = vmatprep.subr.bf16.mxu0 0
      %4173 = vmatpush1.bf16.msra.mxu0 0
      %4174 = vmatprep.subr.bf16.mxu0 0
      %4175 = vmatpush1.bf16.msra.mxu0 0
      %4176 = vmatprep.subr.bf16.mxu0 0
      %4177 = vmatpush1.bf16.msra.mxu0 0
      %4178 = vmatprep.subr.bf16.mxu0 0
      %4179 = vmatpush1.bf16.msra.mxu0 0
      %4180 = vmatprep.subr.bf16.mxu0 0
      %4181 = vmatpush1.bf16.msra.mxu0 0
      %4182 = vmatprep.subr.bf16.mxu0 0
      %4183 = vmatpush1.bf16.msra.mxu0 0
      %4184 = vmatprep.mubr.bf16.mxu0 0
      %4185 = vmatmul.mubr.bf16.gmra.mrb[0].mxu0 %v4085
      %v4186 = vpop.f32.mrb[0].mxu0
      %v4187 = vadd.f32 0.0, %v4186
      %v4188 = vpop.f32.mrb[0].mxu0
      %v4189 = vadd.f32 0.0, %v4188
      %v4190 = vpop.f32.mrb[0].mxu0
      %v4191 = vpop.f32.mrb[0].mxu0
      %4192 = vdwg.mxu0
      %4193 = vmatprep.subr.bf16.mxu0 %v4103
      %4194 = vmatpush1.bf16.msra.mxu0 %v4100
      %4195 = vmatprep.subr.bf16.mxu0 0
      %4196 = vmatpush1.bf16.msra.mxu0 0
      %4197 = vmatprep.subr.bf16.mxu0 0
      %4198 = vmatpush1.bf16.msra.mxu0 0
      %4199 = vmatprep.subr.bf16.mxu0 0
      %4200 = vmatpush1.bf16.msra.mxu0 0
      %4201 = vmatprep.subr.bf16.mxu0 0
      %4202 = vmatpush1.bf16.msra.mxu0 0
      %4203 = vmatprep.subr.bf16.mxu0 0
      %4204 = vmatpush1.bf16.msra.mxu0 0
      %4205 = vmatprep.subr.bf16.mxu0 0
      %4206 = vmatpush1.bf16.msra.mxu0 0
      %4207 = vmatprep.subr.bf16.mxu0 0
      %4208 = vmatpush1.bf16.msra.mxu0 0
      %4209 = vmatprep.subr.bf16.mxu0 0
      %4210 = vmatpush1.bf16.msra.mxu0 0
      %4211 = vmatprep.subr.bf16.mxu0 0
      %4212 = vmatpush1.bf16.msra.mxu0 0
      %4213 = vmatprep.subr.bf16.mxu0 0
      %4214 = vmatpush1.bf16.msra.mxu0 0
      %4215 = vmatprep.subr.bf16.mxu0 0
      %4216 = vmatpush1.bf16.msra.mxu0 0
      %4217 = vmatprep.subr.bf16.mxu0 0
      %4218 = vmatpush1.bf16.msra.mxu0 0
      %4219 = vmatprep.subr.bf16.mxu0 0
      %4220 = vmatpush1.bf16.msra.mxu0 0
      %4221 = vmatprep.subr.bf16.mxu0 0
      %4222 = vmatpush1.bf16.msra.mxu0 0
      %4223 = vmatprep.subr.bf16.mxu0 0
      %4224 = vmatpush1.bf16.msra.mxu0 0
      %4225 = vmatprep.mubr.bf16.mxu0 0
      %4226 = vmatmul.mubr.bf16.gmra.mrb[0].mxu0 %v4085
      %v4227 = vpop.f32.mrb[0].mxu0
      %v4228 = vadd.f32 0.0, %v4227
      %v4229 = vpop.f32.mrb[0].mxu0
      %v4230 = vadd.f32 0.0, %v4229
      %v4231 = vpop.f32.mrb[0].mxu0
      %v4232 = vpop.f32.mrb[0].mxu0
      %4233 = vdwg.mxu0
      %4234 = vmatprep.subr.bf16.mxu0 %v4109
      %4235 = vmatpush1.bf16.msra.mxu0 %v4106
      %4236 = vmatprep.subr.bf16.mxu0 0
      %4237 = vmatpush1.bf16.msra.mxu0 0
      %4238 = vmatprep.subr.bf16.mxu0 0
      %4239 = vmatpush1.bf16.msra.mxu0 0
      %4240 = vmatprep.subr.bf16.mxu0 0
      %4241 = vmatpush1.bf16.msra.mxu0 0
      %4242 = vmatprep.subr.bf16.mxu0 0
      %4243 = vmatpush1.bf16.msra.mxu0 0
      %4244 = vmatprep.subr.bf16.mxu0 0
      %4245 = vmatpush1.bf16.msra.mxu0 0
      %4246 = vmatprep.subr.bf16.mxu0 0
      %4247 = vmatpush1.bf16.msra.mxu0 0
      %4248 = vmatprep.subr.bf16.mxu0 0
      %4249 = vmatpush1.bf16.msra.mxu0 0
      %4250 = vmatprep.subr.bf16.mxu0 0
      %4251 = vmatpush1.bf16.msra.mxu0 0
      %4252 = vmatprep.subr.bf16.mxu0 0
      %4253 = vmatpush1.bf16.msra.mxu0 0
      %4254 = vmatprep.subr.bf16.mxu0 0
      %4255 = vmatpush1.bf16.msra.mxu0 0
      %4256 = vmatprep.subr.bf16.mxu0 0
      %4257 = vmatpush1.bf16.msra.mxu0 0
      %4258 = vmatprep.subr.bf16.mxu0 0
      %4259 = vmatpush1.bf16.msra.mxu0 0
      %4260 = vmatprep.subr.bf16.mxu0 0
      %4261 = vmatpush1.bf16.msra.mxu0 0
      %4262 = vmatprep.subr.bf16.mxu0 0
      %4263 = vmatpush1.bf16.msra.mxu0 0
      %4264 = vmatprep.subr.bf16.mxu0 0
      %4265 = vmatpush1.bf16.msra.mxu0 0
      %4266 = vmatprep.mubr.bf16.mxu0 0
      %4267 = vmatmul.mubr.bf16.gmra.mrb[0].mxu0 %v4085
      %v4268 = vpop.f32.mrb[0].mxu0
      %v4269 = vadd.f32 0.0, %v4268
      %v4270 = vpop.f32.mrb[0].mxu0
      %v4271 = vadd.f32 0.0, %v4270
      %v4272 = vpop.f32.mrb[0].mxu0
      %v4273 = vpop.f32.mrb[0].mxu0
      %4274 = vdwg.mxu0
      %v4275 = vadd.f32 %v4000, %v4146
      %v4276 = vadd.f32 %v4001, %v4148
      %v4277 = vadd.f32 %v4002, %v4187
      %v4278 = vadd.f32 %v4003, %v4189
      %v4279 = vadd.f32 %v4004, %v4228
      %v4280 = vadd.f32 %v4005, %v4230
      %v4281 = vadd.f32 %v4006, %v4269
      %v4282 = vadd.f32 %v4007, %v4271
      %v4283 = vld [vmem:[%s232] sm:$0xff]
      %v4284 = vld [vmem:[%s232 + $0x8] sm:$0xff]
      %v4285 = vld [vmem:[%s232 + $0x10] sm:$0x3]
      %s4286 = scalar_lea.vmem %s0, 60
      %v4287 = vld [vmem:[%s4286] sm:$0xf]
      %v4291 = vcombine.high %v4283, %v4283
      %v4293 = vunpack.c.l.s4 1983009808
      %v4294 = vunpack.c.0.s8 %v4293
      %v4295 = vlaneseq
      %v4296 = vshrl.u32 %v4295, 7
      %v4297 = vsub.s32 %v4294, %v4296
      %v4298 = vrot.slane %v4283, %v4297
      %v4300 = vunpack.c.l.s4 1983009808
      %v4301 = vunpack.c.0.s8 %v4300
      %v4302 = vlaneseq
      %v4303 = vshrl.u32 %v4302, 7
      %v4304 = vsub.s32 %v4301, %v4303
      %v4305 = vrot.slane %v4291, %v4304
      %v4306 = vcombine.high %v4298, %v4298
      %v4307 = vcombine.high %v4305, %v4305
      %v4308 = vcombine.high %v4284, %v4284
      %v4310 = vunpack.c.l.s4 1983009808
      %v4311 = vunpack.c.0.s8 %v4310
      %v4312 = vlaneseq
      %v4313 = vshrl.u32 %v4312, 7
      %v4314 = vsub.s32 %v4311, %v4313
      %v4315 = vrot.slane %v4284, %v4314
      %v4317 = vunpack.c.l.s4 1983009808
      %v4318 = vunpack.c.0.s8 %v4317
      %v4319 = vlaneseq
      %v4320 = vshrl.u32 %v4319, 7
      %v4321 = vsub.s32 %v4318, %v4320
      %v4322 = vrot.slane %v4308, %v4321
      %v4323 = vcombine.high %v4315, %v4315
      %v4324 = vcombine.high %v4322, %v4322
      %v4326 = vunpack.c.l.s4 1983009808
      %v4327 = vunpack.c.0.s8 %v4326
      %v4328 = vlaneseq
      %v4329 = vshrl.u32 %v4328, 7
      %v4330 = vsub.s32 %v4327, %v4329
      %v4331 = vrot.slane %v4285, %v4330
      %4332 = vrot.lane.b32.xlu0 %v4298, 8
      %v4333 = vpop.permute.xlu0 %4332
      %4334 = vrot.lane.b32.xlu0 %v4306, 8
      %v4335 = vpop.permute.xlu0 %4334
      %4336 = vrot.lane.b32.xlu0 %v4305, 8
      %v4337 = vpop.permute.xlu0 %4336
      %4338 = vrot.lane.b32.xlu0 %v4307, 8
      %v4339 = vpop.permute.xlu0 %4338
      %4340 = vrot.lane.b32.xlu0 %v4315, 8
      %v4341 = vpop.permute.xlu0 %4340
      %4342 = vrot.lane.b32.xlu0 %v4323, 8
      %v4343 = vpop.permute.xlu0 %4342
      %4344 = vrot.lane.b32.xlu0 %v4322, 8
      %v4345 = vpop.permute.xlu0 %4344
      %4346 = vrot.lane.b32.xlu0 %v4324, 8
      %v4347 = vpop.permute.xlu0 %4346
      %4348 = vrot.lane.b32.xlu0 %v4331, 8
      %v4349 = vpop.permute.xlu0 %4348
      %vm4350 = vcmask 64512
      %v4351 = vsel %vm4350, %v4333, %v4335
      %v4352 = vsel %vm4350, %v4335, %v4337
      %v4353 = vsel %vm4350, %v4337, %v4339
      %v4354 = vsel %vm4350, %v4339, %v4341
      %v4355 = vsel %vm4350, %v4341, %v4343
      %v4356 = vsel %vm4350, %v4343, %v4345
      %v4357 = vsel %vm4350, %v4345, %v4347
      %v4358 = vsel %vm4350, %v4347, %v4349
      %v4360 = vsel %vm324, %v4287, 0
      %v4363 = vsel %vm328, %v4351, 0
      %v4366 = vsel %vm328, %v4352, 0
      %v4369 = vsel %vm328, %v4353, 0
      %v4372 = vsel %vm328, %v4354, 0
      %v4375 = vsel %vm328, %v4355, 0
      %v4378 = vsel %vm328, %v4356, 0
      %v4381 = vsel %vm328, %v4357, 0
      %v4384 = vsel %vm328, %v4358, 0
      %4386 = vmatprep.subr.bf16.mxu0 %v4366
      %4387 = vmatpush1.bf16.msra.mxu0 %v4363
      %4388 = vmatprep.subr.bf16.mxu0 0
      %4389 = vmatpush1.bf16.msra.mxu0 0
      %4390 = vmatprep.subr.bf16.mxu0 0
      %4391 = vmatpush1.bf16.msra.mxu0 0
      %4392 = vmatprep.subr.bf16.mxu0 0
      %4393 = vmatpush1.bf16.msra.mxu0 0
      %4394 = vmatprep.subr.bf16.mxu0 0
      %4395 = vmatpush1.bf16.msra.mxu0 0
      %4396 = vmatprep.subr.bf16.mxu0 0
      %4397 = vmatpush1.bf16.msra.mxu0 0
      %4398 = vmatprep.subr.bf16.mxu0 0
      %4399 = vmatpush1.bf16.msra.mxu0 0
      %4400 = vmatprep.subr.bf16.mxu0 0
      %4401 = vmatpush1.bf16.msra.mxu0 0
      %4402 = vmatprep.subr.bf16.mxu0 0
      %4403 = vmatpush1.bf16.msra.mxu0 0
      %4404 = vmatprep.subr.bf16.mxu0 0
      %4405 = vmatpush1.bf16.msra.mxu0 0
      %4406 = vmatprep.subr.bf16.mxu0 0
      %4407 = vmatpush1.bf16.msra.mxu0 0
      %4408 = vmatprep.subr.bf16.mxu0 0
      %4409 = vmatpush1.bf16.msra.mxu0 0
      %4410 = vmatprep.subr.bf16.mxu0 0
      %4411 = vmatpush1.bf16.msra.mxu0 0
      %4412 = vmatprep.subr.bf16.mxu0 0
      %4413 = vmatpush1.bf16.msra.mxu0 0
      %4414 = vmatprep.subr.bf16.mxu0 0
      %4415 = vmatpush1.bf16.msra.mxu0 0
      %4416 = vmatprep.subr.bf16.mxu0 0
      %4417 = vmatpush1.bf16.msra.mxu0 0
      %4418 = vmatprep.mubr.bf16.mxu0 0
      %4419 = vmatmul.mubr.bf16.gmra.mrb[0].mxu0 %v4360
      %v4420 = vpop.f32.mrb[0].mxu0
      %v4421 = vadd.f32 0.0, %v4420
      %v4422 = vpop.f32.mrb[0].mxu0
      %v4423 = vadd.f32 0.0, %v4422
      %v4424 = vpop.f32.mrb[0].mxu0
      %v4425 = vpop.f32.mrb[0].mxu0
      %4426 = vdwg.mxu0
      %4427 = vmatprep.subr.bf16.mxu0 %v4372
      %4428 = vmatpush1.bf16.msra.mxu0 %v4369
      %4429 = vmatprep.subr.bf16.mxu0 0
      %4430 = vmatpush1.bf16.msra.mxu0 0
      %4431 = vmatprep.subr.bf16.mxu0 0
      %4432 = vmatpush1.bf16.msra.mxu0 0
      %4433 = vmatprep.subr.bf16.mxu0 0
      %4434 = vmatpush1.bf16.msra.mxu0 0
      %4435 = vmatprep.subr.bf16.mxu0 0
      %4436 = vmatpush1.bf16.msra.mxu0 0
      %4437 = vmatprep.subr.bf16.mxu0 0
      %4438 = vmatpush1.bf16.msra.mxu0 0
      %4439 = vmatprep.subr.bf16.mxu0 0
      %4440 = vmatpush1.bf16.msra.mxu0 0
      %4441 = vmatprep.subr.bf16.mxu0 0
      %4442 = vmatpush1.bf16.msra.mxu0 0
      %4443 = vmatprep.subr.bf16.mxu0 0
      %4444 = vmatpush1.bf16.msra.mxu0 0
      %4445 = vmatprep.subr.bf16.mxu0 0
      %4446 = vmatpush1.bf16.msra.mxu0 0
      %4447 = vmatprep.subr.bf16.mxu0 0
      %4448 = vmatpush1.bf16.msra.mxu0 0
      %4449 = vmatprep.subr.bf16.mxu0 0
      %4450 = vmatpush1.bf16.msra.mxu0 0
      %4451 = vmatprep.subr.bf16.mxu0 0
      %4452 = vmatpush1.bf16.msra.mxu0 0
      %4453 = vmatprep.subr.bf16.mxu0 0
      %4454 = vmatpush1.bf16.msra.mxu0 0
      %4455 = vmatprep.subr.bf16.mxu0 0
      %4456 = vmatpush1.bf16.msra.mxu0 0
      %4457 = vmatprep.subr.bf16.mxu0 0
      %4458 = vmatpush1.bf16.msra.mxu0 0
      %4459 = vmatprep.mubr.bf16.mxu0 0
      %4460 = vmatmul.mubr.bf16.gmra.mrb[0].mxu0 %v4360
      %v4461 = vpop.f32.mrb[0].mxu0
      %v4462 = vadd.f32 0.0, %v4461
      %v4463 = vpop.f32.mrb[0].mxu0
      %v4464 = vadd.f32 0.0, %v4463
      %v4465 = vpop.f32.mrb[0].mxu0
      %v4466 = vpop.f32.mrb[0].mxu0
      %4467 = vdwg.mxu0
      %4468 = vmatprep.subr.bf16.mxu0 %v4378
      %4469 = vmatpush1.bf16.msra.mxu0 %v4375
      %4470 = vmatprep.subr.bf16.mxu0 0
      %4471 = vmatpush1.bf16.msra.mxu0 0
      %4472 = vmatprep.subr.bf16.mxu0 0
      %4473 = vmatpush1.bf16.msra.mxu0 0
      %4474 = vmatprep.subr.bf16.mxu0 0
      %4475 = vmatpush1.bf16.msra.mxu0 0
      %4476 = vmatprep.subr.bf16.mxu0 0
      %4477 = vmatpush1.bf16.msra.mxu0 0
      %4478 = vmatprep.subr.bf16.mxu0 0
      %4479 = vmatpush1.bf16.msra.mxu0 0
      %4480 = vmatprep.subr.bf16.mxu0 0
      %4481 = vmatpush1.bf16.msra.mxu0 0
      %4482 = vmatprep.subr.bf16.mxu0 0
      %4483 = vmatpush1.bf16.msra.mxu0 0
      %4484 = vmatprep.subr.bf16.mxu0 0
      %4485 = vmatpush1.bf16.msra.mxu0 0
      %4486 = vmatprep.subr.bf16.mxu0 0
      %4487 = vmatpush1.bf16.msra.mxu0 0
      %4488 = vmatprep.subr.bf16.mxu0 0
      %4489 = vmatpush1.bf16.msra.mxu0 0
      %4490 = vmatprep.subr.bf16.mxu0 0
      %4491 = vmatpush1.bf16.msra.mxu0 0
      %4492 = vmatprep.subr.bf16.mxu0 0
      %4493 = vmatpush1.bf16.msra.mxu0 0
      %4494 = vmatprep.subr.bf16.mxu0 0
      %4495 = vmatpush1.bf16.msra.mxu0 0
      %4496 = vmatprep.subr.bf16.mxu0 0
      %4497 = vmatpush1.bf16.msra.mxu0 0
      %4498 = vmatprep.subr.bf16.mxu0 0
      %4499 = vmatpush1.bf16.msra.mxu0 0
      %4500 = vmatprep.mubr.bf16.mxu0 0
      %4501 = vmatmul.mubr.bf16.gmra.mrb[0].mxu0 %v4360
      %v4502 = vpop.f32.mrb[0].mxu0
      %v4503 = vadd.f32 0.0, %v4502
      %v4504 = vpop.f32.mrb[0].mxu0
      %v4505 = vadd.f32 0.0, %v4504
      %v4506 = vpop.f32.mrb[0].mxu0
      %v4507 = vpop.f32.mrb[0].mxu0
      %4508 = vdwg.mxu0
      %4509 = vmatprep.subr.bf16.mxu0 %v4384
      %4510 = vmatpush1.bf16.msra.mxu0 %v4381
      %4511 = vmatprep.subr.bf16.mxu0 0
      %4512 = vmatpush1.bf16.msra.mxu0 0
      %4513 = vmatprep.subr.bf16.mxu0 0
      %4514 = vmatpush1.bf16.msra.mxu0 0
      %4515 = vmatprep.subr.bf16.mxu0 0
      %4516 = vmatpush1.bf16.msra.mxu0 0
      %4517 = vmatprep.subr.bf16.mxu0 0
      %4518 = vmatpush1.bf16.msra.mxu0 0
      %4519 = vmatprep.subr.bf16.mxu0 0
      %4520 = vmatpush1.bf16.msra.mxu0 0
      %4521 = vmatprep.subr.bf16.mxu0 0
      %4522 = vmatpush1.bf16.msra.mxu0 0
      %4523 = vmatprep.subr.bf16.mxu0 0
      %4524 = vmatpush1.bf16.msra.mxu0 0
      %4525 = vmatprep.subr.bf16.mxu0 0
      %4526 = vmatpush1.bf16.msra.mxu0 0
      %4527 = vmatprep.subr.bf16.mxu0 0
      %4528 = vmatpush1.bf16.msra.mxu0 0
      %4529 = vmatprep.subr.bf16.mxu0 0
      %4530 = vmatpush1.bf16.msra.mxu0 0
      %4531 = vmatprep.subr.bf16.mxu0 0
      %4532 = vmatpush1.bf16.msra.mxu0 0
      %4533 = vmatprep.subr.bf16.mxu0 0
      %4534 = vmatpush1.bf16.msra.mxu0 0
      %4535 = vmatprep.subr.bf16.mxu0 0
      %4536 = vmatpush1.bf16.msra.mxu0 0
      %4537 = vmatprep.subr.bf16.mxu0 0
      %4538 = vmatpush1.bf16.msra.mxu0 0
      %4539 = vmatprep.subr.bf16.mxu0 0
      %4540 = vmatpush1.bf16.msra.mxu0 0
      %4541 = vmatprep.mubr.bf16.mxu0 0
      %4542 = vmatmul.mubr.bf16.gmra.mrb[0].mxu0 %v4360
      %v4543 = vpop.f32.mrb[0].mxu0
      %v4544 = vadd.f32 0.0, %v4543
      %v4545 = vpop.f32.mrb[0].mxu0
      %v4546 = vadd.f32 0.0, %v4545
      %v4547 = vpop.f32.mrb[0].mxu0
      %v4548 = vpop.f32.mrb[0].mxu0
      %4549 = vdwg.mxu0
      %v4550 = vadd.f32 %v4275, %v4421
      %v4551 = vadd.f32 %v4276, %v4423
      %v4552 = vadd.f32 %v4277, %v4462
      %v4553 = vadd.f32 %v4278, %v4464
      %v4554 = vadd.f32 %v4279, %v4503
      %v4555 = vadd.f32 %v4280, %v4505
      %v4556 = vadd.f32 %v4281, %v4544
      %v4557 = vadd.f32 %v4282, %v4546
      %v4558 = vld [vmem:[%s232] sm:$0xff]
      %v4559 = vld [vmem:[%s232 + $0x8] sm:$0xff]
      %v4560 = vld [vmem:[%s232 + $0x10] sm:$0x3]
      %s4561 = scalar_lea.vmem %s0, 64
      %v4562 = vld [vmem:[%s4561] sm:$0xf]
      %v4566 = vcombine.high %v4558, %v4558
      %v4568 = vunpack.c.l.s4 1983009808
      %v4569 = vunpack.c.0.s8 %v4568
      %v4570 = vlaneseq
      %v4571 = vshrl.u32 %v4570, 7
      %v4572 = vsub.s32 %v4569, %v4571
      %v4573 = vrot.slane %v4558, %v4572
      %v4575 = vunpack.c.l.s4 1983009808
      %v4576 = vunpack.c.0.s8 %v4575
      %v4577 = vlaneseq
      %v4578 = vshrl.u32 %v4577, 7
      %v4579 = vsub.s32 %v4576, %v4578
      %v4580 = vrot.slane %v4566, %v4579
      %v4581 = vcombine.high %v4573, %v4573
      %v4582 = vcombine.high %v4580, %v4580
      %v4583 = vcombine.high %v4559, %v4559
      %v4585 = vunpack.c.l.s4 1983009808
      %v4586 = vunpack.c.0.s8 %v4585
      %v4587 = vlaneseq
      %v4588 = vshrl.u32 %v4587, 7
      %v4589 = vsub.s32 %v4586, %v4588
      %v4590 = vrot.slane %v4559, %v4589
      %v4592 = vunpack.c.l.s4 1983009808
      %v4593 = vunpack.c.0.s8 %v4592
      %v4594 = vlaneseq
      %v4595 = vshrl.u32 %v4594, 7
      %v4596 = vsub.s32 %v4593, %v4595
      %v4597 = vrot.slane %v4583, %v4596
      %v4598 = vcombine.high %v4590, %v4590
      %v4599 = vcombine.high %v4597, %v4597
      %v4601 = vunpack.c.l.s4 1983009808
      %v4602 = vunpack.c.0.s8 %v4601
      %v4603 = vlaneseq
      %v4604 = vshrl.u32 %v4603, 7
      %v4605 = vsub.s32 %v4602, %v4604
      %v4606 = vrot.slane %v4560, %v4605
      %4607 = vrot.lane.b32.xlu0 %v4573, 7
      %v4608 = vpop.permute.xlu0 %4607
      %4609 = vrot.lane.b32.xlu0 %v4581, 7
      %v4610 = vpop.permute.xlu0 %4609
      %4611 = vrot.lane.b32.xlu0 %v4580, 7
      %v4612 = vpop.permute.xlu0 %4611
      %4613 = vrot.lane.b32.xlu0 %v4582, 7
      %v4614 = vpop.permute.xlu0 %4613
      %4615 = vrot.lane.b32.xlu0 %v4590, 7
      %v4616 = vpop.permute.xlu0 %4615
      %4617 = vrot.lane.b32.xlu0 %v4598, 7
      %v4618 = vpop.permute.xlu0 %4617
      %4619 = vrot.lane.b32.xlu0 %v4597, 7
      %v4620 = vpop.permute.xlu0 %4619
      %4621 = vrot.lane.b32.xlu0 %v4599, 7
      %v4622 = vpop.permute.xlu0 %4621
      %4623 = vrot.lane.b32.xlu0 %v4606, 7
      %v4624 = vpop.permute.xlu0 %4623
      %vm4625 = vcmask 56320
      %v4626 = vsel %vm4625, %v4608, %v4610
      %v4627 = vsel %vm4625, %v4610, %v4612
      %v4628 = vsel %vm4625, %v4612, %v4614
      %v4629 = vsel %vm4625, %v4614, %v4616
      %v4630 = vsel %vm4625, %v4616, %v4618
      %v4631 = vsel %vm4625, %v4618, %v4620
      %v4632 = vsel %vm4625, %v4620, %v4622
      %v4633 = vsel %vm4625, %v4622, %v4624
      %v4635 = vsel %vm324, %v4562, 0
      %v4638 = vsel %vm328, %v4626, 0
      %v4641 = vsel %vm328, %v4627, 0
      %v4644 = vsel %vm328, %v4628, 0
      %v4647 = vsel %vm328, %v4629, 0
      %v4650 = vsel %vm328, %v4630, 0
      %v4653 = vsel %vm328, %v4631, 0
      %v4656 = vsel %vm328, %v4632, 0
      %v4659 = vsel %vm328, %v4633, 0
      %4661 = vmatprep.subr.bf16.mxu0 %v4641
      %4662 = vmatpush1.bf16.msra.mxu0 %v4638
      %4663 = vmatprep.subr.bf16.mxu0 0
      %4664 = vmatpush1.bf16.msra.mxu0 0
      %4665 = vmatprep.subr.bf16.mxu0 0
      %4666 = vmatpush1.bf16.msra.mxu0 0
      %4667 = vmatprep.subr.bf16.mxu0 0
      %4668 = vmatpush1.bf16.msra.mxu0 0
      %4669 = vmatprep.subr.bf16.mxu0 0
      %4670 = vmatpush1.bf16.msra.mxu0 0
      %4671 = vmatprep.subr.bf16.mxu0 0
      %4672 = vmatpush1.bf16.msra.mxu0 0
      %4673 = vmatprep.subr.bf16.mxu0 0
      %4674 = vmatpush1.bf16.msra.mxu0 0
      %4675 = vmatprep.subr.bf16.mxu0 0
      %4676 = vmatpush1.bf16.msra.mxu0 0
      %4677 = vmatprep.subr.bf16.mxu0 0
      %4678 = vmatpush1.bf16.msra.mxu0 0
      %4679 = vmatprep.subr.bf16.mxu0 0
      %4680 = vmatpush1.bf16.msra.mxu0 0
      %4681 = vmatprep.subr.bf16.mxu0 0
      %4682 = vmatpush1.bf16.msra.mxu0 0
      %4683 = vmatprep.subr.bf16.mxu0 0
      %4684 = vmatpush1.bf16.msra.mxu0 0
      %4685 = vmatprep.subr.bf16.mxu0 0
      %4686 = vmatpush1.bf16.msra.mxu0 0
      %4687 = vmatprep.subr.bf16.mxu0 0
      %4688 = vmatpush1.bf16.msra.mxu0 0
      %4689 = vmatprep.subr.bf16.mxu0 0
      %4690 = vmatpush1.bf16.msra.mxu0 0
      %4691 = vmatprep.subr.bf16.mxu0 0
      %4692 = vmatpush1.bf16.msra.mxu0 0
      %4693 = vmatprep.mubr.bf16.mxu0 0
      %4694 = vmatmul.mubr.bf16.gmra.mrb[0].mxu0 %v4635
      %v4695 = vpop.f32.mrb[0].mxu0
      %v4696 = vadd.f32 0.0, %v4695
      %v4697 = vpop.f32.mrb[0].mxu0
      %v4698 = vadd.f32 0.0, %v4697
      %v4699 = vpop.f32.mrb[0].mxu0
      %v4700 = vpop.f32.mrb[0].mxu0
      %4701 = vdwg.mxu0
      %4702 = vmatprep.subr.bf16.mxu0 %v4647
      %4703 = vmatpush1.bf16.msra.mxu0 %v4644
      %4704 = vmatprep.subr.bf16.mxu0 0
      %4705 = vmatpush1.bf16.msra.mxu0 0
      %4706 = vmatprep.subr.bf16.mxu0 0
      %4707 = vmatpush1.bf16.msra.mxu0 0
      %4708 = vmatprep.subr.bf16.mxu0 0
      %4709 = vmatpush1.bf16.msra.mxu0 0
      %4710 = vmatprep.subr.bf16.mxu0 0
      %4711 = vmatpush1.bf16.msra.mxu0 0
      %4712 = vmatprep.subr.bf16.mxu0 0
      %4713 = vmatpush1.bf16.msra.mxu0 0
      %4714 = vmatprep.subr.bf16.mxu0 0
      %4715 = vmatpush1.bf16.msra.mxu0 0
      %4716 = vmatprep.subr.bf16.mxu0 0
      %4717 = vmatpush1.bf16.msra.mxu0 0
      %4718 = vmatprep.subr.bf16.mxu0 0
      %4719 = vmatpush1.bf16.msra.mxu0 0
      %4720 = vmatprep.subr.bf16.mxu0 0
      %4721 = vmatpush1.bf16.msra.mxu0 0
      %4722 = vmatprep.subr.bf16.mxu0 0
      %4723 = vmatpush1.bf16.msra.mxu0 0
      %4724 = vmatprep.subr.bf16.mxu0 0
      %4725 = vmatpush1.bf16.msra.mxu0 0
      %4726 = vmatprep.subr.bf16.mxu0 0
      %4727 = vmatpush1.bf16.msra.mxu0 0
      %4728 = vmatprep.subr.bf16.mxu0 0
      %4729 = vmatpush1.bf16.msra.mxu0 0
      %4730 = vmatprep.subr.bf16.mxu0 0
      %4731 = vmatpush1.bf16.msra.mxu0 0
      %4732 = vmatprep.subr.bf16.mxu0 0
      %4733 = vmatpush1.bf16.msra.mxu0 0
      %4734 = vmatprep.mubr.bf16.mxu0 0
      %4735 = vmatmul.mubr.bf16.gmra.mrb[0].mxu0 %v4635
      %v4736 = vpop.f32.mrb[0].mxu0
      %v4737 = vadd.f32 0.0, %v4736
      %v4738 = vpop.f32.mrb[0].mxu0
      %v4739 = vadd.f32 0.0, %v4738
      %v4740 = vpop.f32.mrb[0].mxu0
      %v4741 = vpop.f32.mrb[0].mxu0
      %4742 = vdwg.mxu0
      %4743 = vmatprep.subr.bf16.mxu0 %v4653
      %4744 = vmatpush1.bf16.msra.mxu0 %v4650
      %4745 = vmatprep.subr.bf16.mxu0 0
      %4746 = vmatpush1.bf16.msra.mxu0 0
      %4747 = vmatprep.subr.bf16.mxu0 0
      %4748 = vmatpush1.bf16.msra.mxu0 0
      %4749 = vmatprep.subr.bf16.mxu0 0
      %4750 = vmatpush1.bf16.msra.mxu0 0
      %4751 = vmatprep.subr.bf16.mxu0 0
      %4752 = vmatpush1.bf16.msra.mxu0 0
      %4753 = vmatprep.subr.bf16.mxu0 0
      %4754 = vmatpush1.bf16.msra.mxu0 0
      %4755 = vmatprep.subr.bf16.mxu0 0
      %4756 = vmatpush1.bf16.msra.mxu0 0
      %4757 = vmatprep.subr.bf16.mxu0 0
      %4758 = vmatpush1.bf16.msra.mxu0 0
      %4759 = vmatprep.subr.bf16.mxu0 0
      %4760 = vmatpush1.bf16.msra.mxu0 0
      %4761 = vmatprep.subr.bf16.mxu0 0
      %4762 = vmatpush1.bf16.msra.mxu0 0
      %4763 = vmatprep.subr.bf16.mxu0 0
      %4764 = vmatpush1.bf16.msra.mxu0 0
      %4765 = vmatprep.subr.bf16.mxu0 0
      %4766 = vmatpush1.bf16.msra.mxu0 0
      %4767 = vmatprep.subr.bf16.mxu0 0
      %4768 = vmatpush1.bf16.msra.mxu0 0
      %4769 = vmatprep.subr.bf16.mxu0 0
      %4770 = vmatpush1.bf16.msra.mxu0 0
      %4771 = vmatprep.subr.bf16.mxu0 0
      %4772 = vmatpush1.bf16.msra.mxu0 0
      %4773 = vmatprep.subr.bf16.mxu0 0
      %4774 = vmatpush1.bf16.msra.mxu0 0
      %4775 = vmatprep.mubr.bf16.mxu0 0
      %4776 = vmatmul.mubr.bf16.gmra.mrb[0].mxu0 %v4635
      %v4777 = vpop.f32.mrb[0].mxu0
      %v4778 = vadd.f32 0.0, %v4777
      %v4779 = vpop.f32.mrb[0].mxu0
      %v4780 = vadd.f32 0.0, %v4779
      %v4781 = vpop.f32.mrb[0].mxu0
      %v4782 = vpop.f32.mrb[0].mxu0
      %4783 = vdwg.mxu0
      %4784 = vmatprep.subr.bf16.mxu0 %v4659
      %4785 = vmatpush1.bf16.msra.mxu0 %v4656
      %4786 = vmatprep.subr.bf16.mxu0 0
      %4787 = vmatpush1.bf16.msra.mxu0 0
      %4788 = vmatprep.subr.bf16.mxu0 0
      %4789 = vmatpush1.bf16.msra.mxu0 0
      %4790 = vmatprep.subr.bf16.mxu0 0
      %4791 = vmatpush1.bf16.msra.mxu0 0
      %4792 = vmatprep.subr.bf16.mxu0 0
      %4793 = vmatpush1.bf16.msra.mxu0 0
      %4794 = vmatprep.subr.bf16.mxu0 0
      %4795 = vmatpush1.bf16.msra.mxu0 0
      %4796 = vmatprep.subr.bf16.mxu0 0
      %4797 = vmatpush1.bf16.msra.mxu0 0
      %4798 = vmatprep.subr.bf16.mxu0 0
      %4799 = vmatpush1.bf16.msra.mxu0 0
      %4800 = vmatprep.subr.bf16.mxu0 0
      %4801 = vmatpush1.bf16.msra.mxu0 0
      %4802 = vmatprep.subr.bf16.mxu0 0
      %4803 = vmatpush1.bf16.msra.mxu0 0
      %4804 = vmatprep.subr.bf16.mxu0 0
      %4805 = vmatpush1.bf16.msra.mxu0 0
      %4806 = vmatprep.subr.bf16.mxu0 0
      %4807 = vmatpush1.bf16.msra.mxu0 0
      %4808 = vmatprep.subr.bf16.mxu0 0
      %4809 = vmatpush1.bf16.msra.mxu0 0
      %4810 = vmatprep.subr.bf16.mxu0 0
      %4811 = vmatpush1.bf16.msra.mxu0 0
      %4812 = vmatprep.subr.bf16.mxu0 0
      %4813 = vmatpush1.bf16.msra.mxu0 0
      %4814 = vmatprep.subr.bf16.mxu0 0
      %4815 = vmatpush1.bf16.msra.mxu0 0
      %4816 = vmatprep.mubr.bf16.mxu0 0
      %4817 = vmatmul.mubr.bf16.gmra.mrb[0].mxu0 %v4635
      %v4818 = vpop.f32.mrb[0].mxu0
      %v4819 = vadd.f32 0.0, %v4818
      %v4820 = vpop.f32.mrb[0].mxu0
      %v4821 = vadd.f32 0.0, %v4820
      %v4822 = vpop.f32.mrb[0].mxu0
      %v4823 = vpop.f32.mrb[0].mxu0
      %4824 = vdwg.mxu0
      %v4825 = vadd.f32 %v4550, %v4696
      %v4826 = vadd.f32 %v4551, %v4698
      %v4827 = vadd.f32 %v4552, %v4737
      %v4828 = vadd.f32 %v4553, %v4739
      %v4829 = vadd.f32 %v4554, %v4778
      %v4830 = vadd.f32 %v4555, %v4780
      %v4831 = vadd.f32 %v4556, %v4819
      %v4832 = vadd.f32 %v4557, %v4821
      %v4833 = vld [vmem:[%s232] sm:$0xff]
      %v4834 = vld [vmem:[%s232 + $0x8] sm:$0xff]
      %v4835 = vld [vmem:[%s232 + $0x10] sm:$0x3]
      %s4836 = scalar_lea.vmem %s0, 68
      %v4837 = vld [vmem:[%s4836] sm:$0xf]
      %v4841 = vcombine.high %v4833, %v4833
      %v4843 = vunpack.c.l.s4 1983009808
      %v4844 = vunpack.c.0.s8 %v4843
      %v4845 = vlaneseq
      %v4846 = vshrl.u32 %v4845, 7
      %v4847 = vsub.s32 %v4844, %v4846
      %v4848 = vrot.slane %v4833, %v4847
      %v4850 = vunpack.c.l.s4 1983009808
      %v4851 = vunpack.c.0.s8 %v4850
      %v4852 = vlaneseq
      %v4853 = vshrl.u32 %v4852, 7
      %v4854 = vsub.s32 %v4851, %v4853
      %v4855 = vrot.slane %v4841, %v4854
      %v4856 = vcombine.high %v4848, %v4848
      %v4857 = vcombine.high %v4855, %v4855
      %v4858 = vcombine.high %v4834, %v4834
      %v4860 = vunpack.c.l.s4 1983009808
      %v4861 = vunpack.c.0.s8 %v4860
      %v4862 = vlaneseq
      %v4863 = vshrl.u32 %v4862, 7
      %v4864 = vsub.s32 %v4861, %v4863
      %v4865 = vrot.slane %v4834, %v4864
      %v4867 = vunpack.c.l.s4 1983009808
      %v4868 = vunpack.c.0.s8 %v4867
      %v4869 = vlaneseq
      %v4870 = vshrl.u32 %v4869, 7
      %v4871 = vsub.s32 %v4868, %v4870
      %v4872 = vrot.slane %v4858, %v4871
      %v4873 = vcombine.high %v4865, %v4865
      %v4874 = vcombine.high %v4872, %v4872
      %v4876 = vunpack.c.l.s4 1983009808
      %v4877 = vunpack.c.0.s8 %v4876
      %v4878 = vlaneseq
      %v4879 = vshrl.u32 %v4878, 7
      %v4880 = vsub.s32 %v4877, %v4879
      %v4881 = vrot.slane %v4835, %v4880
      %4882 = vrot.lane.b32.xlu0 %v4848, 6
      %v4883 = vpop.permute.xlu0 %4882
      %4884 = vrot.lane.b32.xlu0 %v4856, 6
      %v4885 = vpop.permute.xlu0 %4884
      %4886 = vrot.lane.b32.xlu0 %v4855, 6
      %v4887 = vpop.permute.xlu0 %4886
      %4888 = vrot.lane.b32.xlu0 %v4857, 6
      %v4889 = vpop.permute.xlu0 %4888
      %4890 = vrot.lane.b32.xlu0 %v4865, 6
      %v4891 = vpop.permute.xlu0 %4890
      %4892 = vrot.lane.b32.xlu0 %v4873, 6
      %v4893 = vpop.permute.xlu0 %4892
      %4894 = vrot.lane.b32.xlu0 %v4872, 6
      %v4895 = vpop.permute.xlu0 %4894
      %4896 = vrot.lane.b32.xlu0 %v4874, 6
      %v4897 = vpop.permute.xlu0 %4896
      %4898 = vrot.lane.b32.xlu0 %v4881, 6
      %v4899 = vpop.permute.xlu0 %4898
      %vm4900 = vcmask 48128
      %v4901 = vsel %vm4900, %v4883, %v4885
      %v4902 = vsel %vm4900, %v4885, %v4887
      %v4903 = vsel %vm4900, %v4887, %v4889
      %v4904 = vsel %vm4900, %v4889, %v4891
      %v4905 = vsel %vm4900, %v4891, %v4893
      %v4906 = vsel %vm4900, %v4893, %v4895
      %v4907 = vsel %vm4900, %v4895, %v4897
      %v4908 = vsel %vm4900, %v4897, %v4899
      %v4910 = vsel %vm324, %v4837, 0
      %v4913 = vsel %vm328, %v4901, 0
      %v4916 = vsel %vm328, %v4902, 0
      %v4919 = vsel %vm328, %v4903, 0
      %v4922 = vsel %vm328, %v4904, 0
      %v4925 = vsel %vm328, %v4905, 0
      %v4928 = vsel %vm328, %v4906, 0
      %v4931 = vsel %vm328, %v4907, 0
      %v4934 = vsel %vm328, %v4908, 0
      %4936 = vmatprep.subr.bf16.mxu0 %v4916
      %4937 = vmatpush1.bf16.msra.mxu0 %v4913
      %4938 = vmatprep.subr.bf16.mxu0 0
      %4939 = vmatpush1.bf16.msra.mxu0 0
      %4940 = vmatprep.subr.bf16.mxu0 0
      %4941 = vmatpush1.bf16.msra.mxu0 0
      %4942 = vmatprep.subr.bf16.mxu0 0
      %4943 = vmatpush1.bf16.msra.mxu0 0
      %4944 = vmatprep.subr.bf16.mxu0 0
      %4945 = vmatpush1.bf16.msra.mxu0 0
      %4946 = vmatprep.subr.bf16.mxu0 0
      %4947 = vmatpush1.bf16.msra.mxu0 0
      %4948 = vmatprep.subr.bf16.mxu0 0
      %4949 = vmatpush1.bf16.msra.mxu0 0
      %4950 = vmatprep.subr.bf16.mxu0 0
      %4951 = vmatpush1.bf16.msra.mxu0 0
      %4952 = vmatprep.subr.bf16.mxu0 0
      %4953 = vmatpush1.bf16.msra.mxu0 0
      %4954 = vmatprep.subr.bf16.mxu0 0
      %4955 = vmatpush1.bf16.msra.mxu0 0
      %4956 = vmatprep.subr.bf16.mxu0 0
      %4957 = vmatpush1.bf16.msra.mxu0 0
      %4958 = vmatprep.subr.bf16.mxu0 0
      %4959 = vmatpush1.bf16.msra.mxu0 0
      %4960 = vmatprep.subr.bf16.mxu0 0
      %4961 = vmatpush1.bf16.msra.mxu0 0
      %4962 = vmatprep.subr.bf16.mxu0 0
      %4963 = vmatpush1.bf16.msra.mxu0 0
      %4964 = vmatprep.subr.bf16.mxu0 0
      %4965 = vmatpush1.bf16.msra.mxu0 0
      %4966 = vmatprep.subr.bf16.mxu0 0
      %4967 = vmatpush1.bf16.msra.mxu0 0
      %4968 = vmatprep.mubr.bf16.mxu0 0
      %4969 = vmatmul.mubr.bf16.gmra.mrb[0].mxu0 %v4910
      %v4970 = vpop.f32.mrb[0].mxu0
      %v4971 = vadd.f32 0.0, %v4970
      %v4972 = vpop.f32.mrb[0].mxu0
      %v4973 = vadd.f32 0.0, %v4972
      %v4974 = vpop.f32.mrb[0].mxu0
      %v4975 = vpop.f32.mrb[0].mxu0
      %4976 = vdwg.mxu0
      %4977 = vmatprep.subr.bf16.mxu0 %v4922
      %4978 = vmatpush1.bf16.msra.mxu0 %v4919
      %4979 = vmatprep.subr.bf16.mxu0 0
      %4980 = vmatpush1.bf16.msra.mxu0 0
      %4981 = vmatprep.subr.bf16.mxu0 0
      %4982 = vmatpush1.bf16.msra.mxu0 0
      %4983 = vmatprep.subr.bf16.mxu0 0
      %4984 = vmatpush1.bf16.msra.mxu0 0
      %4985 = vmatprep.subr.bf16.mxu0 0
      %4986 = vmatpush1.bf16.msra.mxu0 0
      %4987 = vmatprep.subr.bf16.mxu0 0
      %4988 = vmatpush1.bf16.msra.mxu0 0
      %4989 = vmatprep.subr.bf16.mxu0 0
      %4990 = vmatpush1.bf16.msra.mxu0 0
      %4991 = vmatprep.subr.bf16.mxu0 0
      %4992 = vmatpush1.bf16.msra.mxu0 0
      %4993 = vmatprep.subr.bf16.mxu0 0
      %4994 = vmatpush1.bf16.msra.mxu0 0
      %4995 = vmatprep.subr.bf16.mxu0 0
      %4996 = vmatpush1.bf16.msra.mxu0 0
      %4997 = vmatprep.subr.bf16.mxu0 0
      %4998 = vmatpush1.bf16.msra.mxu0 0
      %4999 = vmatprep.subr.bf16.mxu0 0
      %5000 = vmatpush1.bf16.msra.mxu0 0
      %5001 = vmatprep.subr.bf16.mxu0 0
      %5002 = vmatpush1.bf16.msra.mxu0 0
      %5003 = vmatprep.subr.bf16.mxu0 0
      %5004 = vmatpush1.bf16.msra.mxu0 0
      %5005 = vmatprep.subr.bf16.mxu0 0
      %5006 = vmatpush1.bf16.msra.mxu0 0
      %5007 = vmatprep.subr.bf16.mxu0 0
      %5008 = vmatpush1.bf16.msra.mxu0 0
      %5009 = vmatprep.mubr.bf16.mxu0 0
      %5010 = vmatmul.mubr.bf16.gmra.mrb[0].mxu0 %v4910
      %v5011 = vpop.f32.mrb[0].mxu0
      %v5012 = vadd.f32 0.0, %v5011
      %v5013 = vpop.f32.mrb[0].mxu0
      %v5014 = vadd.f32 0.0, %v5013
      %v5015 = vpop.f32.mrb[0].mxu0
      %v5016 = vpop.f32.mrb[0].mxu0
      %5017 = vdwg.mxu0
      %5018 = vmatprep.subr.bf16.mxu0 %v4928
      %5019 = vmatpush1.bf16.msra.mxu0 %v4925
      %5020 = vmatprep.subr.bf16.mxu0 0
      %5021 = vmatpush1.bf16.msra.mxu0 0
      %5022 = vmatprep.subr.bf16.mxu0 0
      %5023 = vmatpush1.bf16.msra.mxu0 0
      %5024 = vmatprep.subr.bf16.mxu0 0
      %5025 = vmatpush1.bf16.msra.mxu0 0
      %5026 = vmatprep.subr.bf16.mxu0 0
      %5027 = vmatpush1.bf16.msra.mxu0 0
      %5028 = vmatprep.subr.bf16.mxu0 0
      %5029 = vmatpush1.bf16.msra.mxu0 0
      %5030 = vmatprep.subr.bf16.mxu0 0
      %5031 = vmatpush1.bf16.msra.mxu0 0
      %5032 = vmatprep.subr.bf16.mxu0 0
      %5033 = vmatpush1.bf16.msra.mxu0 0
      %5034 = vmatprep.subr.bf16.mxu0 0
      %5035 = vmatpush1.bf16.msra.mxu0 0
      %5036 = vmatprep.subr.bf16.mxu0 0
      %5037 = vmatpush1.bf16.msra.mxu0 0
      %5038 = vmatprep.subr.bf16.mxu0 0
      %5039 = vmatpush1.bf16.msra.mxu0 0
      %5040 = vmatprep.subr.bf16.mxu0 0
      %5041 = vmatpush1.bf16.msra.mxu0 0
      %5042 = vmatprep.subr.bf16.mxu0 0
      %5043 = vmatpush1.bf16.msra.mxu0 0
      %5044 = vmatprep.subr.bf16.mxu0 0
      %5045 = vmatpush1.bf16.msra.mxu0 0
      %5046 = vmatprep.subr.bf16.mxu0 0
      %5047 = vmatpush1.bf16.msra.mxu0 0
      %5048 = vmatprep.subr.bf16.mxu0 0
      %5049 = vmatpush1.bf16.msra.mxu0 0
      %5050 = vmatprep.mubr.bf16.mxu0 0
      %5051 = vmatmul.mubr.bf16.gmra.mrb[0].mxu0 %v4910
      %v5052 = vpop.f32.mrb[0].mxu0
      %v5053 = vadd.f32 0.0, %v5052
      %v5054 = vpop.f32.mrb[0].mxu0
      %v5055 = vadd.f32 0.0, %v5054
      %v5056 = vpop.f32.mrb[0].mxu0
      %v5057 = vpop.f32.mrb[0].mxu0
      %5058 = vdwg.mxu0
      %5059 = vmatprep.subr.bf16.mxu0 %v4934
      %5060 = vmatpush1.bf16.msra.mxu0 %v4931
      %5061 = vmatprep.subr.bf16.mxu0 0
      %5062 = vmatpush1.bf16.msra.mxu0 0
      %5063 = vmatprep.subr.bf16.mxu0 0
      %5064 = vmatpush1.bf16.msra.mxu0 0
      %5065 = vmatprep.subr.bf16.mxu0 0
      %5066 = vmatpush1.bf16.msra.mxu0 0
      %5067 = vmatprep.subr.bf16.mxu0 0
      %5068 = vmatpush1.bf16.msra.mxu0 0
      %5069 = vmatprep.subr.bf16.mxu0 0
      %5070 = vmatpush1.bf16.msra.mxu0 0
      %5071 = vmatprep.subr.bf16.mxu0 0
      %5072 = vmatpush1.bf16.msra.mxu0 0
      %5073 = vmatprep.subr.bf16.mxu0 0
      %5074 = vmatpush1.bf16.msra.mxu0 0
      %5075 = vmatprep.subr.bf16.mxu0 0
      %5076 = vmatpush1.bf16.msra.mxu0 0
      %5077 = vmatprep.subr.bf16.mxu0 0
      %5078 = vmatpush1.bf16.msra.mxu0 0
      %5079 = vmatprep.subr.bf16.mxu0 0
      %5080 = vmatpush1.bf16.msra.mxu0 0
      %5081 = vmatprep.subr.bf16.mxu0 0
      %5082 = vmatpush1.bf16.msra.mxu0 0
      %5083 = vmatprep.subr.bf16.mxu0 0
      %5084 = vmatpush1.bf16.msra.mxu0 0
      %5085 = vmatprep.subr.bf16.mxu0 0
      %5086 = vmatpush1.bf16.msra.mxu0 0
      %5087 = vmatprep.subr.bf16.mxu0 0
      %5088 = vmatpush1.bf16.msra.mxu0 0
      %5089 = vmatprep.subr.bf16.mxu0 0
      %5090 = vmatpush1.bf16.msra.mxu0 0
      %5091 = vmatprep.mubr.bf16.mxu0 0
      %5092 = vmatmul.mubr.bf16.gmra.mrb[0].mxu0 %v4910
      %v5093 = vpop.f32.mrb[0].mxu0
      %v5094 = vadd.f32 0.0, %v5093
      %v5095 = vpop.f32.mrb[0].mxu0
      %v5096 = vadd.f32 0.0, %v5095
      %v5097 = vpop.f32.mrb[0].mxu0
      %v5098 = vpop.f32.mrb[0].mxu0
      %5099 = vdwg.mxu0
      %v5100 = vadd.f32 %v4825, %v4971
      %v5101 = vadd.f32 %v4826, %v4973
      %v5102 = vadd.f32 %v4827, %v5012
      %v5103 = vadd.f32 %v4828, %v5014
      %v5104 = vadd.f32 %v4829, %v5053
      %v5105 = vadd.f32 %v4830, %v5055
      %v5106 = vadd.f32 %v4831, %v5094
      %v5107 = vadd.f32 %v4832, %v5096
      %v5108 = vld [vmem:[%s232 + $0x2] sm:$0xff]
      %v5109 = vld [vmem:[%s232 + $0xa] sm:$0xff]
      %v5110 = vld [vmem:[%s232 + $0x12] sm:$0x3]
      %s5111 = scalar_lea.vmem %s0, 72
      %v5112 = vld [vmem:[%s5111] sm:$0xf]
      %v5116 = vcombine.high %v5108, %v5108
      %v5118 = vunpack.c.l.s4 1983009808
      %v5119 = vunpack.c.0.s8 %v5118
      %v5120 = vlaneseq
      %v5121 = vshrl.u32 %v5120, 7
      %v5122 = vsub.s32 %v5119, %v5121
      %v5123 = vrot.slane %v5108, %v5122
      %v5125 = vunpack.c.l.s4 1983009808
      %v5126 = vunpack.c.0.s8 %v5125
      %v5127 = vlaneseq
      %v5128 = vshrl.u32 %v5127, 7
      %v5129 = vsub.s32 %v5126, %v5128
      %v5130 = vrot.slane %v5116, %v5129
      %v5131 = vcombine.high %v5123, %v5123
      %v5132 = vcombine.high %v5130, %v5130
      %v5133 = vcombine.high %v5109, %v5109
      %v5135 = vunpack.c.l.s4 1983009808
      %v5136 = vunpack.c.0.s8 %v5135
      %v5137 = vlaneseq
      %v5138 = vshrl.u32 %v5137, 7
      %v5139 = vsub.s32 %v5136, %v5138
      %v5140 = vrot.slane %v5109, %v5139
      %v5142 = vunpack.c.l.s4 1983009808
      %v5143 = vunpack.c.0.s8 %v5142
      %v5144 = vlaneseq
      %v5145 = vshrl.u32 %v5144, 7
      %v5146 = vsub.s32 %v5143, %v5145
      %v5147 = vrot.slane %v5133, %v5146
      %v5148 = vcombine.high %v5140, %v5140
      %v5149 = vcombine.high %v5147, %v5147
      %v5151 = vunpack.c.l.s4 1983009808
      %v5152 = vunpack.c.0.s8 %v5151
      %v5153 = vlaneseq
      %v5154 = vshrl.u32 %v5153, 7
      %v5155 = vsub.s32 %v5152, %v5154
      %v5156 = vrot.slane %v5110, %v5155
      %5157 = vrot.lane.b32.xlu0 %v5123, 56
      %v5158 = vpop.permute.xlu0 %5157
      %5159 = vrot.lane.b32.xlu0 %v5131, 56
      %v5160 = vpop.permute.xlu0 %5159
      %5161 = vrot.lane.b32.xlu0 %v5130, 56
      %v5162 = vpop.permute.xlu0 %5161
      %5163 = vrot.lane.b32.xlu0 %v5132, 56
      %v5164 = vpop.permute.xlu0 %5163
      %5165 = vrot.lane.b32.xlu0 %v5140, 56
      %v5166 = vpop.permute.xlu0 %5165
      %5167 = vrot.lane.b32.xlu0 %v5148, 56
      %v5168 = vpop.permute.xlu0 %5167
      %5169 = vrot.lane.b32.xlu0 %v5147, 56
      %v5170 = vpop.permute.xlu0 %5169
      %5171 = vrot.lane.b32.xlu0 %v5149, 56
      %v5172 = vpop.permute.xlu0 %5171
      %5173 = vrot.lane.b32.xlu0 %v5156, 56
      %v5174 = vpop.permute.xlu0 %5173
      %vm5175 = vcmask 457728
      %v5176 = vsel %vm5175, %v5158, %v5160
      %v5177 = vsel %vm5175, %v5160, %v5162
      %v5178 = vsel %vm5175, %v5162, %v5164
      %v5179 = vsel %vm5175, %v5164, %v5166
      %v5180 = vsel %vm5175, %v5166, %v5168
      %v5181 = vsel %vm5175, %v5168, %v5170
      %v5182 = vsel %vm5175, %v5170, %v5172
      %v5183 = vsel %vm5175, %v5172, %v5174
      %v5185 = vsel %vm324, %v5112, 0
      %v5188 = vsel %vm328, %v5176, 0
      %v5191 = vsel %vm328, %v5177, 0
      %v5194 = vsel %vm328, %v5178, 0
      %v5197 = vsel %vm328, %v5179, 0
      %v5200 = vsel %vm328, %v5180, 0
      %v5203 = vsel %vm328, %v5181, 0
      %v5206 = vsel %vm328, %v5182, 0
      %v5209 = vsel %vm328, %v5183, 0
      %5211 = vmatprep.subr.bf16.mxu0 %v5191
      %5212 = vmatpush1.bf16.msra.mxu0 %v5188
      %5213 = vmatprep.subr.bf16.mxu0 0
      %5214 = vmatpush1.bf16.msra.mxu0 0
      %5215 = vmatprep.subr.bf16.mxu0 0
      %5216 = vmatpush1.bf16.msra.mxu0 0
      %5217 = vmatprep.subr.bf16.mxu0 0
      %5218 = vmatpush1.bf16.msra.mxu0 0
      %5219 = vmatprep.subr.bf16.mxu0 0
      %5220 = vmatpush1.bf16.msra.mxu0 0
      %5221 = vmatprep.subr.bf16.mxu0 0
      %5222 = vmatpush1.bf16.msra.mxu0 0
      %5223 = vmatprep.subr.bf16.mxu0 0
      %5224 = vmatpush1.bf16.msra.mxu0 0
      %5225 = vmatprep.subr.bf16.mxu0 0
      %5226 = vmatpush1.bf16.msra.mxu0 0
      %5227 = vmatprep.subr.bf16.mxu0 0
      %5228 = vmatpush1.bf16.msra.mxu0 0
      %5229 = vmatprep.subr.bf16.mxu0 0
      %5230 = vmatpush1.bf16.msra.mxu0 0
      %5231 = vmatprep.subr.bf16.mxu0 0
      %5232 = vmatpush1.bf16.msra.mxu0 0
      %5233 = vmatprep.subr.bf16.mxu0 0
      %5234 = vmatpush1.bf16.msra.mxu0 0
      %5235 = vmatprep.subr.bf16.mxu0 0
      %5236 = vmatpush1.bf16.msra.mxu0 0
      %5237 = vmatprep.subr.bf16.mxu0 0
      %5238 = vmatpush1.bf16.msra.mxu0 0
      %5239 = vmatprep.subr.bf16.mxu0 0
      %5240 = vmatpush1.bf16.msra.mxu0 0
      %5241 = vmatprep.subr.bf16.mxu0 0
      %5242 = vmatpush1.bf16.msra.mxu0 0
      %5243 = vmatprep.mubr.bf16.mxu0 0
      %5244 = vmatmul.mubr.bf16.gmra.mrb[0].mxu0 %v5185
      %v5245 = vpop.f32.mrb[0].mxu0
      %v5246 = vadd.f32 0.0, %v5245
      %v5247 = vpop.f32.mrb[0].mxu0
      %v5248 = vadd.f32 0.0, %v5247
      %v5249 = vpop.f32.mrb[0].mxu0
      %v5250 = vpop.f32.mrb[0].mxu0
      %5251 = vdwg.mxu0
      %5252 = vmatprep.subr.bf16.mxu0 %v5197
      %5253 = vmatpush1.bf16.msra.mxu0 %v5194
      %5254 = vmatprep.subr.bf16.mxu0 0
      %5255 = vmatpush1.bf16.msra.mxu0 0
      %5256 = vmatprep.subr.bf16.mxu0 0
      %5257 = vmatpush1.bf16.msra.mxu0 0
      %5258 = vmatprep.subr.bf16.mxu0 0
      %5259 = vmatpush1.bf16.msra.mxu0 0
      %5260 = vmatprep.subr.bf16.mxu0 0
      %5261 = vmatpush1.bf16.msra.mxu0 0
      %5262 = vmatprep.subr.bf16.mxu0 0
      %5263 = vmatpush1.bf16.msra.mxu0 0
      %5264 = vmatprep.subr.bf16.mxu0 0
      %5265 = vmatpush1.bf16.msra.mxu0 0
      %5266 = vmatprep.subr.bf16.mxu0 0
      %5267 = vmatpush1.bf16.msra.mxu0 0
      %5268 = vmatprep.subr.bf16.mxu0 0
      %5269 = vmatpush1.bf16.msra.mxu0 0
      %5270 = vmatprep.subr.bf16.mxu0 0
      %5271 = vmatpush1.bf16.msra.mxu0 0
      %5272 = vmatprep.subr.bf16.mxu0 0
      %5273 = vmatpush1.bf16.msra.mxu0 0
      %5274 = vmatprep.subr.bf16.mxu0 0
      %5275 = vmatpush1.bf16.msra.mxu0 0
      %5276 = vmatprep.subr.bf16.mxu0 0
      %5277 = vmatpush1.bf16.msra.mxu0 0
      %5278 = vmatprep.subr.bf16.mxu0 0
      %5279 = vmatpush1.bf16.msra.mxu0 0
      %5280 = vmatprep.subr.bf16.mxu0 0
      %5281 = vmatpush1.bf16.msra.mxu0 0
      %5282 = vmatprep.subr.bf16.mxu0 0
      %5283 = vmatpush1.bf16.msra.mxu0 0
      %5284 = vmatprep.mubr.bf16.mxu0 0
      %5285 = vmatmul.mubr.bf16.gmra.mrb[0].mxu0 %v5185
      %v5286 = vpop.f32.mrb[0].mxu0
      %v5287 = vadd.f32 0.0, %v5286
      %v5288 = vpop.f32.mrb[0].mxu0
      %v5289 = vadd.f32 0.0, %v5288
      %v5290 = vpop.f32.mrb[0].mxu0
      %v5291 = vpop.f32.mrb[0].mxu0
      %5292 = vdwg.mxu0
      %5293 = vmatprep.subr.bf16.mxu0 %v5203
      %5294 = vmatpush1.bf16.msra.mxu0 %v5200
      %5295 = vmatprep.subr.bf16.mxu0 0
      %5296 = vmatpush1.bf16.msra.mxu0 0
      %5297 = vmatprep.subr.bf16.mxu0 0
      %5298 = vmatpush1.bf16.msra.mxu0 0
      %5299 = vmatprep.subr.bf16.mxu0 0
      %5300 = vmatpush1.bf16.msra.mxu0 0
      %5301 = vmatprep.subr.bf16.mxu0 0
      %5302 = vmatpush1.bf16.msra.mxu0 0
      %5303 = vmatprep.subr.bf16.mxu0 0
      %5304 = vmatpush1.bf16.msra.mxu0 0
      %5305 = vmatprep.subr.bf16.mxu0 0
      %5306 = vmatpush1.bf16.msra.mxu0 0
      %5307 = vmatprep.subr.bf16.mxu0 0
      %5308 = vmatpush1.bf16.msra.mxu0 0
      %5309 = vmatprep.subr.bf16.mxu0 0
      %5310 = vmatpush1.bf16.msra.mxu0 0
      %5311 = vmatprep.subr.bf16.mxu0 0
      %5312 = vmatpush1.bf16.msra.mxu0 0
      %5313 = vmatprep.subr.bf16.mxu0 0
      %5314 = vmatpush1.bf16.msra.mxu0 0
      %5315 = vmatprep.subr.bf16.mxu0 0
      %5316 = vmatpush1.bf16.msra.mxu0 0
      %5317 = vmatprep.subr.bf16.mxu0 0
      %5318 = vmatpush1.bf16.msra.mxu0 0
      %5319 = vmatprep.subr.bf16.mxu0 0
      %5320 = vmatpush1.bf16.msra.mxu0 0
      %5321 = vmatprep.subr.bf16.mxu0 0
      %5322 = vmatpush1.bf16.msra.mxu0 0
      %5323 = vmatprep.subr.bf16.mxu0 0
      %5324 = vmatpush1.bf16.msra.mxu0 0
      %5325 = vmatprep.mubr.bf16.mxu0 0
      %5326 = vmatmul.mubr.bf16.gmra.mrb[0].mxu0 %v5185
      %v5327 = vpop.f32.mrb[0].mxu0
      %v5328 = vadd.f32 0.0, %v5327
      %v5329 = vpop.f32.mrb[0].mxu0
      %v5330 = vadd.f32 0.0, %v5329
      %v5331 = vpop.f32.mrb[0].mxu0
      %v5332 = vpop.f32.mrb[0].mxu0
      %5333 = vdwg.mxu0
      %5334 = vmatprep.subr.bf16.mxu0 %v5209
      %5335 = vmatpush1.bf16.msra.mxu0 %v5206
      %5336 = vmatprep.subr.bf16.mxu0 0
      %5337 = vmatpush1.bf16.msra.mxu0 0
      %5338 = vmatprep.subr.bf16.mxu0 0
      %5339 = vmatpush1.bf16.msra.mxu0 0
      %5340 = vmatprep.subr.bf16.mxu0 0
      %5341 = vmatpush1.bf16.msra.mxu0 0
      %5342 = vmatprep.subr.bf16.mxu0 0
      %5343 = vmatpush1.bf16.msra.mxu0 0
      %5344 = vmatprep.subr.bf16.mxu0 0
      %5345 = vmatpush1.bf16.msra.mxu0 0
      %5346 = vmatprep.subr.bf16.mxu0 0
      %5347 = vmatpush1.bf16.msra.mxu0 0
      %5348 = vmatprep.subr.bf16.mxu0 0
      %5349 = vmatpush1.bf16.msra.mxu0 0
      %5350 = vmatprep.subr.bf16.mxu0 0
      %5351 = vmatpush1.bf16.msra.mxu0 0
      %5352 = vmatprep.subr.bf16.mxu0 0
      %5353 = vmatpush1.bf16.msra.mxu0 0
      %5354 = vmatprep.subr.bf16.mxu0 0
      %5355 = vmatpush1.bf16.msra.mxu0 0
      %5356 = vmatprep.subr.bf16.mxu0 0
      %5357 = vmatpush1.bf16.msra.mxu0 0
      %5358 = vmatprep.subr.bf16.mxu0 0
      %5359 = vmatpush1.bf16.msra.mxu0 0
      %5360 = vmatprep.subr.bf16.mxu0 0
      %5361 = vmatpush1.bf16.msra.mxu0 0
      %5362 = vmatprep.subr.bf16.mxu0 0
      %5363 = vmatpush1.bf16.msra.mxu0 0
      %5364 = vmatprep.subr.bf16.mxu0 0
      %5365 = vmatpush1.bf16.msra.mxu0 0
      %5366 = vmatprep.mubr.bf16.mxu0 0
      %5367 = vmatmul.mubr.bf16.gmra.mrb[0].mxu0 %v5185
      %v5368 = vpop.f32.mrb[0].mxu0
      %v5369 = vadd.f32 0.0, %v5368
      %v5370 = vpop.f32.mrb[0].mxu0
      %v5371 = vadd.f32 0.0, %v5370
      %v5372 = vpop.f32.mrb[0].mxu0
      %v5373 = vpop.f32.mrb[0].mxu0
      %5374 = vdwg.mxu0
      %v5375 = vadd.f32 %v5100, %v5246
      %v5376 = vadd.f32 %v5101, %v5248
      %v5377 = vadd.f32 %v5102, %v5287
      %v5378 = vadd.f32 %v5103, %v5289
      %v5379 = vadd.f32 %v5104, %v5328
      %v5380 = vadd.f32 %v5105, %v5330
      %v5381 = vadd.f32 %v5106, %v5369
      %v5382 = vadd.f32 %v5107, %v5371
      %v5383 = vld [vmem:[%s232 + $0x2] sm:$0xff]
      %v5384 = vld [vmem:[%s232 + $0xa] sm:$0xff]
      %v5385 = vld [vmem:[%s232 + $0x12] sm:$0x3]
      %s5386 = scalar_lea.vmem %s0, 76
      %v5387 = vld [vmem:[%s5386] sm:$0xf]
      %v5391 = vcombine.high %v5383, %v5383
      %v5393 = vunpack.c.l.s4 1983009808
      %v5394 = vunpack.c.0.s8 %v5393
      %v5395 = vlaneseq
      %v5396 = vshrl.u32 %v5395, 7
      %v5397 = vsub.s32 %v5394, %v5396
      %v5398 = vrot.slane %v5383, %v5397
      %v5400 = vunpack.c.l.s4 1983009808
      %v5401 = vunpack.c.0.s8 %v5400
      %v5402 = vlaneseq
      %v5403 = vshrl.u32 %v5402, 7
      %v5404 = vsub.s32 %v5401, %v5403
      %v5405 = vrot.slane %v5391, %v5404
      %v5406 = vcombine.high %v5398, %v5398
      %v5407 = vcombine.high %v5405, %v5405
      %v5408 = vcombine.high %v5384, %v5384
      %v5410 = vunpack.c.l.s4 1983009808
      %v5411 = vunpack.c.0.s8 %v5410
      %v5412 = vlaneseq
      %v5413 = vshrl.u32 %v5412, 7
      %v5414 = vsub.s32 %v5411, %v5413
      %v5415 = vrot.slane %v5384, %v5414
      %v5417 = vunpack.c.l.s4 1983009808
      %v5418 = vunpack.c.0.s8 %v5417
      %v5419 = vlaneseq
      %v5420 = vshrl.u32 %v5419, 7
      %v5421 = vsub.s32 %v5418, %v5420
      %v5422 = vrot.slane %v5408, %v5421
      %v5423 = vcombine.high %v5415, %v5415
      %v5424 = vcombine.high %v5422, %v5422
      %v5426 = vunpack.c.l.s4 1983009808
      %v5427 = vunpack.c.0.s8 %v5426
      %v5428 = vlaneseq
      %v5429 = vshrl.u32 %v5428, 7
      %v5430 = vsub.s32 %v5427, %v5429
      %v5431 = vrot.slane %v5385, %v5430
      %5432 = vrot.lane.b32.xlu0 %v5398, 55
      %v5433 = vpop.permute.xlu0 %5432
      %5434 = vrot.lane.b32.xlu0 %v5406, 55
      %v5435 = vpop.permute.xlu0 %5434
      %5436 = vrot.lane.b32.xlu0 %v5405, 55
      %v5437 = vpop.permute.xlu0 %5436
      %5438 = vrot.lane.b32.xlu0 %v5407, 55
      %v5439 = vpop.permute.xlu0 %5438
      %5440 = vrot.lane.b32.xlu0 %v5415, 55
      %v5441 = vpop.permute.xlu0 %5440
      %5442 = vrot.lane.b32.xlu0 %v5423, 55
      %v5443 = vpop.permute.xlu0 %5442
      %5444 = vrot.lane.b32.xlu0 %v5422, 55
      %v5445 = vpop.permute.xlu0 %5444
      %5446 = vrot.lane.b32.xlu0 %v5424, 55
      %v5447 = vpop.permute.xlu0 %5446
      %5448 = vrot.lane.b32.xlu0 %v5431, 55
      %v5449 = vpop.permute.xlu0 %5448
      %vm5450 = vcmask 449536
      %v5451 = vsel %vm5450, %v5433, %v5435
      %v5452 = vsel %vm5450, %v5435, %v5437
      %v5453 = vsel %vm5450, %v5437, %v5439
      %v5454 = vsel %vm5450, %v5439, %v5441
      %v5455 = vsel %vm5450, %v5441, %v5443
      %v5456 = vsel %vm5450, %v5443, %v5445
      %v5457 = vsel %vm5450, %v5445, %v5447
      %v5458 = vsel %vm5450, %v5447, %v5449
      %v5460 = vsel %vm324, %v5387, 0
      %v5463 = vsel %vm328, %v5451, 0
      %v5466 = vsel %vm328, %v5452, 0
      %v5469 = vsel %vm328, %v5453, 0
      %v5472 = vsel %vm328, %v5454, 0
      %v5475 = vsel %vm328, %v5455, 0
      %v5478 = vsel %vm328, %v5456, 0
      %v5481 = vsel %vm328, %v5457, 0
      %v5484 = vsel %vm328, %v5458, 0
      %5486 = vmatprep.subr.bf16.mxu0 %v5466
      %5487 = vmatpush1.bf16.msra.mxu0 %v5463
      %5488 = vmatprep.subr.bf16.mxu0 0
      %5489 = vmatpush1.bf16.msra.mxu0 0
      %5490 = vmatprep.subr.bf16.mxu0 0
      %5491 = vmatpush1.bf16.msra.mxu0 0
      %5492 = vmatprep.subr.bf16.mxu0 0
      %5493 = vmatpush1.bf16.msra.mxu0 0
      %5494 = vmatprep.subr.bf16.mxu0 0
      %5495 = vmatpush1.bf16.msra.mxu0 0
      %5496 = vmatprep.subr.bf16.mxu0 0
      %5497 = vmatpush1.bf16.msra.mxu0 0
      %5498 = vmatprep.subr.bf16.mxu0 0
      %5499 = vmatpush1.bf16.msra.mxu0 0
      %5500 = vmatprep.subr.bf16.mxu0 0
      %5501 = vmatpush1.bf16.msra.mxu0 0
      %5502 = vmatprep.subr.bf16.mxu0 0
      %5503 = vmatpush1.bf16.msra.mxu0 0
      %5504 = vmatprep.subr.bf16.mxu0 0
      %5505 = vmatpush1.bf16.msra.mxu0 0
      %5506 = vmatprep.subr.bf16.mxu0 0
      %5507 = vmatpush1.bf16.msra.mxu0 0
      %5508 = vmatprep.subr.bf16.mxu0 0
      %5509 = vmatpush1.bf16.msra.mxu0 0
      %5510 = vmatprep.subr.bf16.mxu0 0
      %5511 = vmatpush1.bf16.msra.mxu0 0
      %5512 = vmatprep.subr.bf16.mxu0 0
      %5513 = vmatpush1.bf16.msra.mxu0 0
      %5514 = vmatprep.subr.bf16.mxu0 0
      %5515 = vmatpush1.bf16.msra.mxu0 0
      %5516 = vmatprep.subr.bf16.mxu0 0
      %5517 = vmatpush1.bf16.msra.mxu0 0
      %5518 = vmatprep.mubr.bf16.mxu0 0
      %5519 = vmatmul.mubr.bf16.gmra.mrb[0].mxu0 %v5460
      %v5520 = vpop.f32.mrb[0].mxu0
      %v5521 = vadd.f32 0.0, %v5520
      %v5522 = vpop.f32.mrb[0].mxu0
      %v5523 = vadd.f32 0.0, %v5522
      %v5524 = vpop.f32.mrb[0].mxu0
      %v5525 = vpop.f32.mrb[0].mxu0
      %5526 = vdwg.mxu0
      %5527 = vmatprep.subr.bf16.mxu0 %v5472
      %5528 = vmatpush1.bf16.msra.mxu0 %v5469
      %5529 = vmatprep.subr.bf16.mxu0 0
      %5530 = vmatpush1.bf16.msra.mxu0 0
      %5531 = vmatprep.subr.bf16.mxu0 0
      %5532 = vmatpush1.bf16.msra.mxu0 0
      %5533 = vmatprep.subr.bf16.mxu0 0
      %5534 = vmatpush1.bf16.msra.mxu0 0
      %5535 = vmatprep.subr.bf16.mxu0 0
      %5536 = vmatpush1.bf16.msra.mxu0 0
      %5537 = vmatprep.subr.bf16.mxu0 0
      %5538 = vmatpush1.bf16.msra.mxu0 0
      %5539 = vmatprep.subr.bf16.mxu0 0
      %5540 = vmatpush1.bf16.msra.mxu0 0
      %5541 = vmatprep.subr.bf16.mxu0 0
      %5542 = vmatpush1.bf16.msra.mxu0 0
      %5543 = vmatprep.subr.bf16.mxu0 0
      %5544 = vmatpush1.bf16.msra.mxu0 0
      %5545 = vmatprep.subr.bf16.mxu0 0
      %5546 = vmatpush1.bf16.msra.mxu0 0
      %5547 = vmatprep.subr.bf16.mxu0 0
      %5548 = vmatpush1.bf16.msra.mxu0 0
      %5549 = vmatprep.subr.bf16.mxu0 0
      %5550 = vmatpush1.bf16.msra.mxu0 0
      %5551 = vmatprep.subr.bf16.mxu0 0
      %5552 = vmatpush1.bf16.msra.mxu0 0
      %5553 = vmatprep.subr.bf16.mxu0 0
      %5554 = vmatpush1.bf16.msra.mxu0 0
      %5555 = vmatprep.subr.bf16.mxu0 0
      %5556 = vmatpush1.bf16.msra.mxu0 0
      %5557 = vmatprep.subr.bf16.mxu0 0
      %5558 = vmatpush1.bf16.msra.mxu0 0
      %5559 = vmatprep.mubr.bf16.mxu0 0
      %5560 = vmatmul.mubr.bf16.gmra.mrb[0].mxu0 %v5460
      %v5561 = vpop.f32.mrb[0].mxu0
      %v5562 = vadd.f32 0.0, %v5561
      %v5563 = vpop.f32.mrb[0].mxu0
      %v5564 = vadd.f32 0.0, %v5563
      %v5565 = vpop.f32.mrb[0].mxu0
      %v5566 = vpop.f32.mrb[0].mxu0
      %5567 = vdwg.mxu0
      %5568 = vmatprep.subr.bf16.mxu0 %v5478
      %5569 = vmatpush1.bf16.msra.mxu0 %v5475
      %5570 = vmatprep.subr.bf16.mxu0 0
      %5571 = vmatpush1.bf16.msra.mxu0 0
      %5572 = vmatprep.subr.bf16.mxu0 0
      %5573 = vmatpush1.bf16.msra.mxu0 0
      %5574 = vmatprep.subr.bf16.mxu0 0
      %5575 = vmatpush1.bf16.msra.mxu0 0
      %5576 = vmatprep.subr.bf16.mxu0 0
      %5577 = vmatpush1.bf16.msra.mxu0 0
      %5578 = vmatprep.subr.bf16.mxu0 0
      %5579 = vmatpush1.bf16.msra.mxu0 0
      %5580 = vmatprep.subr.bf16.mxu0 0
      %5581 = vmatpush1.bf16.msra.mxu0 0
      %5582 = vmatprep.subr.bf16.mxu0 0
      %5583 = vmatpush1.bf16.msra.mxu0 0
      %5584 = vmatprep.subr.bf16.mxu0 0
      %5585 = vmatpush1.bf16.msra.mxu0 0
      %5586 = vmatprep.subr.bf16.mxu0 0
      %5587 = vmatpush1.bf16.msra.mxu0 0
      %5588 = vmatprep.subr.bf16.mxu0 0
      %5589 = vmatpush1.bf16.msra.mxu0 0
      %5590 = vmatprep.subr.bf16.mxu0 0
      %5591 = vmatpush1.bf16.msra.mxu0 0
      %5592 = vmatprep.subr.bf16.mxu0 0
      %5593 = vmatpush1.bf16.msra.mxu0 0
      %5594 = vmatprep.subr.bf16.mxu0 0
      %5595 = vmatpush1.bf16.msra.mxu0 0
      %5596 = vmatprep.subr.bf16.mxu0 0
      %5597 = vmatpush1.bf16.msra.mxu0 0
      %5598 = vmatprep.subr.bf16.mxu0 0
      %5599 = vmatpush1.bf16.msra.mxu0 0
      %5600 = vmatprep.mubr.bf16.mxu0 0
      %5601 = vmatmul.mubr.bf16.gmra.mrb[0].mxu0 %v5460
      %v5602 = vpop.f32.mrb[0].mxu0
      %v5603 = vadd.f32 0.0, %v5602
      %v5604 = vpop.f32.mrb[0].mxu0
      %v5605 = vadd.f32 0.0, %v5604
      %v5606 = vpop.f32.mrb[0].mxu0
      %v5607 = vpop.f32.mrb[0].mxu0
      %5608 = vdwg.mxu0
      %5609 = vmatprep.subr.bf16.mxu0 %v5484
      %5610 = vmatpush1.bf16.msra.mxu0 %v5481
      %5611 = vmatprep.subr.bf16.mxu0 0
      %5612 = vmatpush1.bf16.msra.mxu0 0
      %5613 = vmatprep.subr.bf16.mxu0 0
      %5614 = vmatpush1.bf16.msra.mxu0 0
      %5615 = vmatprep.subr.bf16.mxu0 0
      %5616 = vmatpush1.bf16.msra.mxu0 0
      %5617 = vmatprep.subr.bf16.mxu0 0
      %5618 = vmatpush1.bf16.msra.mxu0 0
      %5619 = vmatprep.subr.bf16.mxu0 0
      %5620 = vmatpush1.bf16.msra.mxu0 0
      %5621 = vmatprep.subr.bf16.mxu0 0
      %5622 = vmatpush1.bf16.msra.mxu0 0
      %5623 = vmatprep.subr.bf16.mxu0 0
      %5624 = vmatpush1.bf16.msra.mxu0 0
      %5625 = vmatprep.subr.bf16.mxu0 0
      %5626 = vmatpush1.bf16.msra.mxu0 0
      %5627 = vmatprep.subr.bf16.mxu0 0
      %5628 = vmatpush1.bf16.msra.mxu0 0
      %5629 = vmatprep.subr.bf16.mxu0 0
      %5630 = vmatpush1.bf16.msra.mxu0 0
      %5631 = vmatprep.subr.bf16.mxu0 0
      %5632 = vmatpush1.bf16.msra.mxu0 0
      %5633 = vmatprep.subr.bf16.mxu0 0
      %5634 = vmatpush1.bf16.msra.mxu0 0
      %5635 = vmatprep.subr.bf16.mxu0 0
      %5636 = vmatpush1.bf16.msra.mxu0 0
      %5637 = vmatprep.subr.bf16.mxu0 0
      %5638 = vmatpush1.bf16.msra.mxu0 0
      %5639 = vmatprep.subr.bf16.mxu0 0
      %5640 = vmatpush1.bf16.msra.mxu0 0
      %5641 = vmatprep.mubr.bf16.mxu0 0
      %5642 = vmatmul.mubr.bf16.gmra.mrb[0].mxu0 %v5460
      %v5643 = vpop.f32.mrb[0].mxu0
      %v5644 = vadd.f32 0.0, %v5643
      %v5645 = vpop.f32.mrb[0].mxu0
      %v5646 = vadd.f32 0.0, %v5645
      %v5647 = vpop.f32.mrb[0].mxu0
      %v5648 = vpop.f32.mrb[0].mxu0
      %5649 = vdwg.mxu0
      %v5650 = vadd.f32 %v5375, %v5521
      %v5651 = vadd.f32 %v5376, %v5523
      %v5652 = vadd.f32 %v5377, %v5562
      %v5653 = vadd.f32 %v5378, %v5564
      %v5654 = vadd.f32 %v5379, %v5603
      %v5655 = vadd.f32 %v5380, %v5605
      %v5656 = vadd.f32 %v5381, %v5644
      %v5657 = vadd.f32 %v5382, %v5646
      %v5658 = vld [vmem:[%s232 + $0x2] sm:$0xff]
      %v5659 = vld [vmem:[%s232 + $0xa] sm:$0xff]
      %v5660 = vld [vmem:[%s232 + $0x12] sm:$0x3]
      %s5661 = scalar_lea.vmem %s0, 80
      %v5662 = vld [vmem:[%s5661] sm:$0xf]
      %v5666 = vcombine.high %v5658, %v5658
      %v5668 = vunpack.c.l.s4 1983009808
      %v5669 = vunpack.c.0.s8 %v5668
      %v5670 = vlaneseq
      %v5671 = vshrl.u32 %v5670, 7
      %v5672 = vsub.s32 %v5669, %v5671
      %v5673 = vrot.slane %v5658, %v5672
      %v5675 = vunpack.c.l.s4 1983009808
      %v5676 = vunpack.c.0.s8 %v5675
      %v5677 = vlaneseq
      %v5678 = vshrl.u32 %v5677, 7
      %v5679 = vsub.s32 %v5676, %v5678
      %v5680 = vrot.slane %v5666, %v5679
      %v5681 = vcombine.high %v5673, %v5673
      %v5682 = vcombine.high %v5680, %v5680
      %v5683 = vcombine.high %v5659, %v5659
      %v5685 = vunpack.c.l.s4 1983009808
      %v5686 = vunpack.c.0.s8 %v5685
      %v5687 = vlaneseq
      %v5688 = vshrl.u32 %v5687, 7
      %v5689 = vsub.s32 %v5686, %v5688
      %v5690 = vrot.slane %v5659, %v5689
      %v5692 = vunpack.c.l.s4 1983009808
      %v5693 = vunpack.c.0.s8 %v5692
      %v5694 = vlaneseq
      %v5695 = vshrl.u32 %v5694, 7
      %v5696 = vsub.s32 %v5693, %v5695
      %v5697 = vrot.slane %v5683, %v5696
      %v5698 = vcombine.high %v5690, %v5690
      %v5699 = vcombine.high %v5697, %v5697
      %v5701 = vunpack.c.l.s4 1983009808
      %v5702 = vunpack.c.0.s8 %v5701
      %v5703 = vlaneseq
      %v5704 = vshrl.u32 %v5703, 7
      %v5705 = vsub.s32 %v5702, %v5704
      %v5706 = vrot.slane %v5660, %v5705
      %5707 = vrot.lane.b32.xlu0 %v5673, 54
      %v5708 = vpop.permute.xlu0 %5707
      %5709 = vrot.lane.b32.xlu0 %v5681, 54
      %v5710 = vpop.permute.xlu0 %5709
      %5711 = vrot.lane.b32.xlu0 %v5680, 54
      %v5712 = vpop.permute.xlu0 %5711
      %5713 = vrot.lane.b32.xlu0 %v5682, 54
      %v5714 = vpop.permute.xlu0 %5713
      %5715 = vrot.lane.b32.xlu0 %v5690, 54
      %v5716 = vpop.permute.xlu0 %5715
      %5717 = vrot.lane.b32.xlu0 %v5698, 54
      %v5718 = vpop.permute.xlu0 %5717
      %5719 = vrot.lane.b32.xlu0 %v5697, 54
      %v5720 = vpop.permute.xlu0 %5719
      %5721 = vrot.lane.b32.xlu0 %v5699, 54
      %v5722 = vpop.permute.xlu0 %5721
      %5723 = vrot.lane.b32.xlu0 %v5706, 54
      %v5724 = vpop.permute.xlu0 %5723
      %vm5725 = vcmask 441344
      %v5726 = vsel %vm5725, %v5708, %v5710
      %v5727 = vsel %vm5725, %v5710, %v5712
      %v5728 = vsel %vm5725, %v5712, %v5714
      %v5729 = vsel %vm5725, %v5714, %v5716
      %v5730 = vsel %vm5725, %v5716, %v5718
      %v5731 = vsel %vm5725, %v5718, %v5720
      %v5732 = vsel %vm5725, %v5720, %v5722
      %v5733 = vsel %vm5725, %v5722, %v5724
      %v5735 = vsel %vm324, %v5662, 0
      %v5738 = vsel %vm328, %v5726, 0
      %v5741 = vsel %vm328, %v5727, 0
      %v5744 = vsel %vm328, %v5728, 0
      %v5747 = vsel %vm328, %v5729, 0
      %v5750 = vsel %vm328, %v5730, 0
      %v5753 = vsel %vm328, %v5731, 0
      %v5756 = vsel %vm328, %v5732, 0
      %v5759 = vsel %vm328, %v5733, 0
      %5761 = vmatprep.subr.bf16.mxu0 %v5741
      %5762 = vmatpush1.bf16.msra.mxu0 %v5738
      %5763 = vmatprep.subr.bf16.mxu0 0
      %5764 = vmatpush1.bf16.msra.mxu0 0
      %5765 = vmatprep.subr.bf16.mxu0 0
      %5766 = vmatpush1.bf16.msra.mxu0 0
      %5767 = vmatprep.subr.bf16.mxu0 0
      %5768 = vmatpush1.bf16.msra.mxu0 0
      %5769 = vmatprep.subr.bf16.mxu0 0
      %5770 = vmatpush1.bf16.msra.mxu0 0
      %5771 = vmatprep.subr.bf16.mxu0 0
      %5772 = vmatpush1.bf16.msra.mxu0 0
      %5773 = vmatprep.subr.bf16.mxu0 0
      %5774 = vmatpush1.bf16.msra.mxu0 0
      %5775 = vmatprep.subr.bf16.mxu0 0
      %5776 = vmatpush1.bf16.msra.mxu0 0
      %5777 = vmatprep.subr.bf16.mxu0 0
      %5778 = vmatpush1.bf16.msra.mxu0 0
      %5779 = vmatprep.subr.bf16.mxu0 0
      %5780 = vmatpush1.bf16.msra.mxu0 0
      %5781 = vmatprep.subr.bf16.mxu0 0
      %5782 = vmatpush1.bf16.msra.mxu0 0
      %5783 = vmatprep.subr.bf16.mxu0 0
      %5784 = vmatpush1.bf16.msra.mxu0 0
      %5785 = vmatprep.subr.bf16.mxu0 0
      %5786 = vmatpush1.bf16.msra.mxu0 0
      %5787 = vmatprep.subr.bf16.mxu0 0
      %5788 = vmatpush1.bf16.msra.mxu0 0
      %5789 = vmatprep.subr.bf16.mxu0 0
      %5790 = vmatpush1.bf16.msra.mxu0 0
      %5791 = vmatprep.subr.bf16.mxu0 0
      %5792 = vmatpush1.bf16.msra.mxu0 0
      %5793 = vmatprep.mubr.bf16.mxu0 0
      %5794 = vmatmul.mubr.bf16.gmra.mrb[0].mxu0 %v5735
      %v5795 = vpop.f32.mrb[0].mxu0
      %v5796 = vadd.f32 0.0, %v5795
      %v5797 = vpop.f32.mrb[0].mxu0
      %v5798 = vadd.f32 0.0, %v5797
      %v5799 = vpop.f32.mrb[0].mxu0
      %v5800 = vpop.f32.mrb[0].mxu0
      %5801 = vdwg.mxu0
      %5802 = vmatprep.subr.bf16.mxu0 %v5747
      %5803 = vmatpush1.bf16.msra.mxu0 %v5744
      %5804 = vmatprep.subr.bf16.mxu0 0
      %5805 = vmatpush1.bf16.msra.mxu0 0
      %5806 = vmatprep.subr.bf16.mxu0 0
      %5807 = vmatpush1.bf16.msra.mxu0 0
      %5808 = vmatprep.subr.bf16.mxu0 0
      %5809 = vmatpush1.bf16.msra.mxu0 0
      %5810 = vmatprep.subr.bf16.mxu0 0
      %5811 = vmatpush1.bf16.msra.mxu0 0
      %5812 = vmatprep.subr.bf16.mxu0 0
      %5813 = vmatpush1.bf16.msra.mxu0 0
      %5814 = vmatprep.subr.bf16.mxu0 0
      %5815 = vmatpush1.bf16.msra.mxu0 0
      %5816 = vmatprep.subr.bf16.mxu0 0
      %5817 = vmatpush1.bf16.msra.mxu0 0
      %5818 = vmatprep.subr.bf16.mxu0 0
      %5819 = vmatpush1.bf16.msra.mxu0 0
      %5820 = vmatprep.subr.bf16.mxu0 0
      %5821 = vmatpush1.bf16.msra.mxu0 0
      %5822 = vmatprep.subr.bf16.mxu0 0
      %5823 = vmatpush1.bf16.msra.mxu0 0
      %5824 = vmatprep.subr.bf16.mxu0 0
      %5825 = vmatpush1.bf16.msra.mxu0 0
      %5826 = vmatprep.subr.bf16.mxu0 0
      %5827 = vmatpush1.bf16.msra.mxu0 0
      %5828 = vmatprep.subr.bf16.mxu0 0
      %5829 = vmatpush1.bf16.msra.mxu0 0
      %5830 = vmatprep.subr.bf16.mxu0 0
      %5831 = vmatpush1.bf16.msra.mxu0 0
      %5832 = vmatprep.subr.bf16.mxu0 0
      %5833 = vmatpush1.bf16.msra.mxu0 0
      %5834 = vmatprep.mubr.bf16.mxu0 0
      %5835 = vmatmul.mubr.bf16.gmra.mrb[0].mxu0 %v5735
      %v5836 = vpop.f32.mrb[0].mxu0
      %v5837 = vadd.f32 0.0, %v5836
      %v5838 = vpop.f32.mrb[0].mxu0
      %v5839 = vadd.f32 0.0, %v5838
      %v5840 = vpop.f32.mrb[0].mxu0
      %v5841 = vpop.f32.mrb[0].mxu0
      %5842 = vdwg.mxu0
      %5843 = vmatprep.subr.bf16.mxu0 %v5753
      %5844 = vmatpush1.bf16.msra.mxu0 %v5750
      %5845 = vmatprep.subr.bf16.mxu0 0
      %5846 = vmatpush1.bf16.msra.mxu0 0
      %5847 = vmatprep.subr.bf16.mxu0 0
      %5848 = vmatpush1.bf16.msra.mxu0 0
      %5849 = vmatprep.subr.bf16.mxu0 0
      %5850 = vmatpush1.bf16.msra.mxu0 0
      %5851 = vmatprep.subr.bf16.mxu0 0
      %5852 = vmatpush1.bf16.msra.mxu0 0
      %5853 = vmatprep.subr.bf16.mxu0 0
      %5854 = vmatpush1.bf16.msra.mxu0 0
      %5855 = vmatprep.subr.bf16.mxu0 0
      %5856 = vmatpush1.bf16.msra.mxu0 0
      %5857 = vmatprep.subr.bf16.mxu0 0
      %5858 = vmatpush1.bf16.msra.mxu0 0
      %5859 = vmatprep.subr.bf16.mxu0 0
      %5860 = vmatpush1.bf16.msra.mxu0 0
      %5861 = vmatprep.subr.bf16.mxu0 0
      %5862 = vmatpush1.bf16.msra.mxu0 0
      %5863 = vmatprep.subr.bf16.mxu0 0
      %5864 = vmatpush1.bf16.msra.mxu0 0
      %5865 = vmatprep.subr.bf16.mxu0 0
      %5866 = vmatpush1.bf16.msra.mxu0 0
      %5867 = vmatprep.subr.bf16.mxu0 0
      %5868 = vmatpush1.bf16.msra.mxu0 0
      %5869 = vmatprep.subr.bf16.mxu0 0
      %5870 = vmatpush1.bf16.msra.mxu0 0
      %5871 = vmatprep.subr.bf16.mxu0 0
      %5872 = vmatpush1.bf16.msra.mxu0 0
      %5873 = vmatprep.subr.bf16.mxu0 0
      %5874 = vmatpush1.bf16.msra.mxu0 0
      %5875 = vmatprep.mubr.bf16.mxu0 0
      %5876 = vmatmul.mubr.bf16.gmra.mrb[0].mxu0 %v5735
      %v5877 = vpop.f32.mrb[0].mxu0
      %v5878 = vadd.f32 0.0, %v5877
      %v5879 = vpop.f32.mrb[0].mxu0
      %v5880 = vadd.f32 0.0, %v5879
      %v5881 = vpop.f32.mrb[0].mxu0
      %v5882 = vpop.f32.mrb[0].mxu0
      %5883 = vdwg.mxu0
      %5884 = vmatprep.subr.bf16.mxu0 %v5759
      %5885 = vmatpush1.bf16.msra.mxu0 %v5756
      %5886 = vmatprep.subr.bf16.mxu0 0
      %5887 = vmatpush1.bf16.msra.mxu0 0
      %5888 = vmatprep.subr.bf16.mxu0 0
      %5889 = vmatpush1.bf16.msra.mxu0 0
      %5890 = vmatprep.subr.bf16.mxu0 0
      %5891 = vmatpush1.bf16.msra.mxu0 0
      %5892 = vmatprep.subr.bf16.mxu0 0
      %5893 = vmatpush1.bf16.msra.mxu0 0
      %5894 = vmatprep.subr.bf16.mxu0 0
      %5895 = vmatpush1.bf16.msra.mxu0 0
      %5896 = vmatprep.subr.bf16.mxu0 0
      %5897 = vmatpush1.bf16.msra.mxu0 0
      %5898 = vmatprep.subr.bf16.mxu0 0
      %5899 = vmatpush1.bf16.msra.mxu0 0
      %5900 = vmatprep.subr.bf16.mxu0 0
      %5901 = vmatpush1.bf16.msra.mxu0 0
      %5902 = vmatprep.subr.bf16.mxu0 0
      %5903 = vmatpush1.bf16.msra.mxu0 0
      %5904 = vmatprep.subr.bf16.mxu0 0
      %5905 = vmatpush1.bf16.msra.mxu0 0
      %5906 = vmatprep.subr.bf16.mxu0 0
      %5907 = vmatpush1.bf16.msra.mxu0 0
      %5908 = vmatprep.subr.bf16.mxu0 0
      %5909 = vmatpush1.bf16.msra.mxu0 0
      %5910 = vmatprep.subr.bf16.mxu0 0
      %5911 = vmatpush1.bf16.msra.mxu0 0
      %5912 = vmatprep.subr.bf16.mxu0 0
      %5913 = vmatpush1.bf16.msra.mxu0 0
      %5914 = vmatprep.subr.bf16.mxu0 0
      %5915 = vmatpush1.bf16.msra.mxu0 0
      %5916 = vmatprep.mubr.bf16.mxu0 0
      %5917 = vmatmul.mubr.bf16.gmra.mrb[0].mxu0 %v5735
      %v5918 = vpop.f32.mrb[0].mxu0
      %v5919 = vadd.f32 0.0, %v5918
      %v5920 = vpop.f32.mrb[0].mxu0
      %v5921 = vadd.f32 0.0, %v5920
      %v5922 = vpop.f32.mrb[0].mxu0
      %v5923 = vpop.f32.mrb[0].mxu0
      %5924 = vdwg.mxu0
      %v5925 = vadd.f32 %v5650, %v5796
      %v5926 = vadd.f32 %v5651, %v5798
      %v5927 = vadd.f32 %v5652, %v5837
      %v5928 = vadd.f32 %v5653, %v5839
      %v5929 = vadd.f32 %v5654, %v5878
      %v5930 = vadd.f32 %v5655, %v5880
      %v5931 = vadd.f32 %v5656, %v5919
      %v5932 = vadd.f32 %v5657, %v5921
      %v5933 = vld [vmem:[%s232 + $0x2] sm:$0xff]
      %v5934 = vld [vmem:[%s232 + $0xa] sm:$0xff]
      %v5935 = vld [vmem:[%s232 + $0x12] sm:$0x3]
      %s5936 = scalar_lea.vmem %s0, 84
      %v5937 = vld [vmem:[%s5936] sm:$0xf]
      %v5941 = vcombine.high %v5933, %v5933
      %v5943 = vunpack.c.l.s4 1983009808
      %v5944 = vunpack.c.0.s8 %v5943
      %v5945 = vlaneseq
      %v5946 = vshrl.u32 %v5945, 7
      %v5947 = vsub.s32 %v5944, %v5946
      %v5948 = vrot.slane %v5933, %v5947
      %v5950 = vunpack.c.l.s4 1983009808
      %v5951 = vunpack.c.0.s8 %v5950
      %v5952 = vlaneseq
      %v5953 = vshrl.u32 %v5952, 7
      %v5954 = vsub.s32 %v5951, %v5953
      %v5955 = vrot.slane %v5941, %v5954
      %v5956 = vcombine.high %v5948, %v5948
      %v5957 = vcombine.high %v5955, %v5955
      %v5958 = vcombine.high %v5934, %v5934
      %v5960 = vunpack.c.l.s4 1983009808
      %v5961 = vunpack.c.0.s8 %v5960
      %v5962 = vlaneseq
      %v5963 = vshrl.u32 %v5962, 7
      %v5964 = vsub.s32 %v5961, %v5963
      %v5965 = vrot.slane %v5934, %v5964
      %v5967 = vunpack.c.l.s4 1983009808
      %v5968 = vunpack.c.0.s8 %v5967
      %v5969 = vlaneseq
      %v5970 = vshrl.u32 %v5969, 7
      %v5971 = vsub.s32 %v5968, %v5970
      %v5972 = vrot.slane %v5958, %v5971
      %v5973 = vcombine.high %v5965, %v5965
      %v5974 = vcombine.high %v5972, %v5972
      %v5976 = vunpack.c.l.s4 1983009808
      %v5977 = vunpack.c.0.s8 %v5976
      %v5978 = vlaneseq
      %v5979 = vshrl.u32 %v5978, 7
      %v5980 = vsub.s32 %v5977, %v5979
      %v5981 = vrot.slane %v5935, %v5980
      %5982 = vrot.lane.b32.xlu0 %v5948, 46
      %v5983 = vpop.permute.xlu0 %5982
      %5984 = vrot.lane.b32.xlu0 %v5956, 46
      %v5985 = vpop.permute.xlu0 %5984
      %5986 = vrot.lane.b32.xlu0 %v5955, 46
      %v5987 = vpop.permute.xlu0 %5986
      %5988 = vrot.lane.b32.xlu0 %v5957, 46
      %v5989 = vpop.permute.xlu0 %5988
      %5990 = vrot.lane.b32.xlu0 %v5965, 46
      %v5991 = vpop.permute.xlu0 %5990
      %5992 = vrot.lane.b32.xlu0 %v5973, 46
      %v5993 = vpop.permute.xlu0 %5992
      %5994 = vrot.lane.b32.xlu0 %v5972, 46
      %v5995 = vpop.permute.xlu0 %5994
      %5996 = vrot.lane.b32.xlu0 %v5974, 46
      %v5997 = vpop.permute.xlu0 %5996
      %5998 = vrot.lane.b32.xlu0 %v5981, 46
      %v5999 = vpop.permute.xlu0 %5998
      %vm6000 = vcmask 375808
      %v6001 = vsel %vm6000, %v5983, %v5985
      %v6002 = vsel %vm6000, %v5985, %v5987
      %v6003 = vsel %vm6000, %v5987, %v5989
      %v6004 = vsel %vm6000, %v5989, %v5991
      %v6005 = vsel %vm6000, %v5991, %v5993
      %v6006 = vsel %vm6000, %v5993, %v5995
      %v6007 = vsel %vm6000, %v5995, %v5997
      %v6008 = vsel %vm6000, %v5997, %v5999
      %v6010 = vsel %vm324, %v5937, 0
      %v6013 = vsel %vm328, %v6001, 0
      %v6016 = vsel %vm328, %v6002, 0
      %v6019 = vsel %vm328, %v6003, 0
      %v6022 = vsel %vm328, %v6004, 0
      %v6025 = vsel %vm328, %v6005, 0
      %v6028 = vsel %vm328, %v6006, 0
      %v6031 = vsel %vm328, %v6007, 0
      %v6034 = vsel %vm328, %v6008, 0
      %6036 = vmatprep.subr.bf16.mxu0 %v6016
      %6037 = vmatpush1.bf16.msra.mxu0 %v6013
      %6038 = vmatprep.subr.bf16.mxu0 0
      %6039 = vmatpush1.bf16.msra.mxu0 0
      %6040 = vmatprep.subr.bf16.mxu0 0
      %6041 = vmatpush1.bf16.msra.mxu0 0
      %6042 = vmatprep.subr.bf16.mxu0 0
      %6043 = vmatpush1.bf16.msra.mxu0 0
      %6044 = vmatprep.subr.bf16.mxu0 0
      %6045 = vmatpush1.bf16.msra.mxu0 0
      %6046 = vmatprep.subr.bf16.mxu0 0
      %6047 = vmatpush1.bf16.msra.mxu0 0
      %6048 = vmatprep.subr.bf16.mxu0 0
      %6049 = vmatpush1.bf16.msra.mxu0 0
      %6050 = vmatprep.subr.bf16.mxu0 0
      %6051 = vmatpush1.bf16.msra.mxu0 0
      %6052 = vmatprep.subr.bf16.mxu0 0
      %6053 = vmatpush1.bf16.msra.mxu0 0
      %6054 = vmatprep.subr.bf16.mxu0 0
      %6055 = vmatpush1.bf16.msra.mxu0 0
      %6056 = vmatprep.subr.bf16.mxu0 0
      %6057 = vmatpush1.bf16.msra.mxu0 0
      %6058 = vmatprep.subr.bf16.mxu0 0
      %6059 = vmatpush1.bf16.msra.mxu0 0
      %6060 = vmatprep.subr.bf16.mxu0 0
      %6061 = vmatpush1.bf16.msra.mxu0 0
      %6062 = vmatprep.subr.bf16.mxu0 0
      %6063 = vmatpush1.bf16.msra.mxu0 0
      %6064 = vmatprep.subr.bf16.mxu0 0
      %6065 = vmatpush1.bf16.msra.mxu0 0
      %6066 = vmatprep.subr.bf16.mxu0 0
      %6067 = vmatpush1.bf16.msra.mxu0 0
      %6068 = vmatprep.mubr.bf16.mxu0 0
      %6069 = vmatmul.mubr.bf16.gmra.mrb[0].mxu0 %v6010
      %v6070 = vpop.f32.mrb[0].mxu0
      %v6071 = vadd.f32 0.0, %v6070
      %v6072 = vpop.f32.mrb[0].mxu0
      %v6073 = vadd.f32 0.0, %v6072
      %v6074 = vpop.f32.mrb[0].mxu0
      %v6075 = vpop.f32.mrb[0].mxu0
      %6076 = vdwg.mxu0
      %6077 = vmatprep.subr.bf16.mxu0 %v6022
      %6078 = vmatpush1.bf16.msra.mxu0 %v6019
      %6079 = vmatprep.subr.bf16.mxu0 0
      %6080 = vmatpush1.bf16.msra.mxu0 0
      %6081 = vmatprep.subr.bf16.mxu0 0
      %6082 = vmatpush1.bf16.msra.mxu0 0
      %6083 = vmatprep.subr.bf16.mxu0 0
      %6084 = vmatpush1.bf16.msra.mxu0 0
      %6085 = vmatprep.subr.bf16.mxu0 0
      %6086 = vmatpush1.bf16.msra.mxu0 0
      %6087 = vmatprep.subr.bf16.mxu0 0
      %6088 = vmatpush1.bf16.msra.mxu0 0
      %6089 = vmatprep.subr.bf16.mxu0 0
      %6090 = vmatpush1.bf16.msra.mxu0 0
      %6091 = vmatprep.subr.bf16.mxu0 0
      %6092 = vmatpush1.bf16.msra.mxu0 0
      %6093 = vmatprep.subr.bf16.mxu0 0
      %6094 = vmatpush1.bf16.msra.mxu0 0
      %6095 = vmatprep.subr.bf16.mxu0 0
      %6096 = vmatpush1.bf16.msra.mxu0 0
      %6097 = vmatprep.subr.bf16.mxu0 0
      %6098 = vmatpush1.bf16.msra.mxu0 0
      %6099 = vmatprep.subr.bf16.mxu0 0
      %6100 = vmatpush1.bf16.msra.mxu0 0
      %6101 = vmatprep.subr.bf16.mxu0 0
      %6102 = vmatpush1.bf16.msra.mxu0 0
      %6103 = vmatprep.subr.bf16.mxu0 0
      %6104 = vmatpush1.bf16.msra.mxu0 0
      %6105 = vmatprep.subr.bf16.mxu0 0
      %6106 = vmatpush1.bf16.msra.mxu0 0
      %6107 = vmatprep.subr.bf16.mxu0 0
      %6108 = vmatpush1.bf16.msra.mxu0 0
      %6109 = vmatprep.mubr.bf16.mxu0 0
      %6110 = vmatmul.mubr.bf16.gmra.mrb[0].mxu0 %v6010
      %v6111 = vpop.f32.mrb[0].mxu0
      %v6112 = vadd.f32 0.0, %v6111
      %v6113 = vpop.f32.mrb[0].mxu0
      %v6114 = vadd.f32 0.0, %v6113
      %v6115 = vpop.f32.mrb[0].mxu0
      %v6116 = vpop.f32.mrb[0].mxu0
      %6117 = vdwg.mxu0
      %6118 = vmatprep.subr.bf16.mxu0 %v6028
      %6119 = vmatpush1.bf16.msra.mxu0 %v6025
      %6120 = vmatprep.subr.bf16.mxu0 0
      %6121 = vmatpush1.bf16.msra.mxu0 0
      %6122 = vmatprep.subr.bf16.mxu0 0
      %6123 = vmatpush1.bf16.msra.mxu0 0
      %6124 = vmatprep.subr.bf16.mxu0 0
      %6125 = vmatpush1.bf16.msra.mxu0 0
      %6126 = vmatprep.subr.bf16.mxu0 0
      %6127 = vmatpush1.bf16.msra.mxu0 0
      %6128 = vmatprep.subr.bf16.mxu0 0
      %6129 = vmatpush1.bf16.msra.mxu0 0
      %6130 = vmatprep.subr.bf16.mxu0 0
      %6131 = vmatpush1.bf16.msra.mxu0 0
      %6132 = vmatprep.subr.bf16.mxu0 0
      %6133 = vmatpush1.bf16.msra.mxu0 0
      %6134 = vmatprep.subr.bf16.mxu0 0
      %6135 = vmatpush1.bf16.msra.mxu0 0
      %6136 = vmatprep.subr.bf16.mxu0 0
      %6137 = vmatpush1.bf16.msra.mxu0 0
      %6138 = vmatprep.subr.bf16.mxu0 0
      %6139 = vmatpush1.bf16.msra.mxu0 0
      %6140 = vmatprep.subr.bf16.mxu0 0
      %6141 = vmatpush1.bf16.msra.mxu0 0
      %6142 = vmatprep.subr.bf16.mxu0 0
      %6143 = vmatpush1.bf16.msra.mxu0 0
      %6144 = vmatprep.subr.bf16.mxu0 0
      %6145 = vmatpush1.bf16.msra.mxu0 0
      %6146 = vmatprep.subr.bf16.mxu0 0
      %6147 = vmatpush1.bf16.msra.mxu0 0
      %6148 = vmatprep.subr.bf16.mxu0 0
      %6149 = vmatpush1.bf16.msra.mxu0 0
      %6150 = vmatprep.mubr.bf16.mxu0 0
      %6151 = vmatmul.mubr.bf16.gmra.mrb[0].mxu0 %v6010
      %v6152 = vpop.f32.mrb[0].mxu0
      %v6153 = vadd.f32 0.0, %v6152
      %v6154 = vpop.f32.mrb[0].mxu0
      %v6155 = vadd.f32 0.0, %v6154
      %v6156 = vpop.f32.mrb[0].mxu0
      %v6157 = vpop.f32.mrb[0].mxu0
      %6158 = vdwg.mxu0
      %6159 = vmatprep.subr.bf16.mxu0 %v6034
      %6160 = vmatpush1.bf16.msra.mxu0 %v6031
      %6161 = vmatprep.subr.bf16.mxu0 0
      %6162 = vmatpush1.bf16.msra.mxu0 0
      %6163 = vmatprep.subr.bf16.mxu0 0
      %6164 = vmatpush1.bf16.msra.mxu0 0
      %6165 = vmatprep.subr.bf16.mxu0 0
      %6166 = vmatpush1.bf16.msra.mxu0 0
      %6167 = vmatprep.subr.bf16.mxu0 0
      %6168 = vmatpush1.bf16.msra.mxu0 0
      %6169 = vmatprep.subr.bf16.mxu0 0
      %6170 = vmatpush1.bf16.msra.mxu0 0
      %6171 = vmatprep.subr.bf16.mxu0 0
      %6172 = vmatpush1.bf16.msra.mxu0 0
      %6173 = vmatprep.subr.bf16.mxu0 0
      %6174 = vmatpush1.bf16.msra.mxu0 0
      %6175 = vmatprep.subr.bf16.mxu0 0
      %6176 = vmatpush1.bf16.msra.mxu0 0
      %6177 = vmatprep.subr.bf16.mxu0 0
      %6178 = vmatpush1.bf16.msra.mxu0 0
      %6179 = vmatprep.subr.bf16.mxu0 0
      %6180 = vmatpush1.bf16.msra.mxu0 0
      %6181 = vmatprep.subr.bf16.mxu0 0
      %6182 = vmatpush1.bf16.msra.mxu0 0
      %6183 = vmatprep.subr.bf16.mxu0 0
      %6184 = vmatpush1.bf16.msra.mxu0 0
      %6185 = vmatprep.subr.bf16.mxu0 0
      %6186 = vmatpush1.bf16.msra.mxu0 0
      %6187 = vmatprep.subr.bf16.mxu0 0
      %6188 = vmatpush1.bf16.msra.mxu0 0
      %6189 = vmatprep.subr.bf16.mxu0 0
      %6190 = vmatpush1.bf16.msra.mxu0 0
      %6191 = vmatprep.mubr.bf16.mxu0 0
      %6192 = vmatmul.mubr.bf16.gmra.mrb[0].mxu0 %v6010
      %v6193 = vpop.f32.mrb[0].mxu0
      %v6194 = vadd.f32 0.0, %v6193
      %v6195 = vpop.f32.mrb[0].mxu0
      %v6196 = vadd.f32 0.0, %v6195
      %v6197 = vpop.f32.mrb[0].mxu0
      %v6198 = vpop.f32.mrb[0].mxu0
      %6199 = vdwg.mxu0
      %v6200 = vadd.f32 %v5925, %v6071
      %v6201 = vadd.f32 %v5926, %v6073
      %v6202 = vadd.f32 %v5927, %v6112
      %v6203 = vadd.f32 %v5928, %v6114
      %v6204 = vadd.f32 %v5929, %v6153
      %v6205 = vadd.f32 %v5930, %v6155
      %v6206 = vadd.f32 %v5931, %v6194
      %v6207 = vadd.f32 %v5932, %v6196
      %v6208 = vld [vmem:[%s232 + $0x2] sm:$0xff]
      %v6209 = vld [vmem:[%s232 + $0xa] sm:$0xff]
      %v6210 = vld [vmem:[%s232 + $0x12] sm:$0x3]
      %s6211 = scalar_lea.vmem %s0, 88
      %v6212 = vld [vmem:[%s6211] sm:$0xf]
      %v6216 = vcombine.high %v6208, %v6208
      %v6218 = vunpack.c.l.s4 1983009808
      %v6219 = vunpack.c.0.s8 %v6218
      %v6220 = vlaneseq
      %v6221 = vshrl.u32 %v6220, 7
      %v6222 = vsub.s32 %v6219, %v6221
      %v6223 = vrot.slane %v6208, %v6222
      %v6225 = vunpack.c.l.s4 1983009808
      %v6226 = vunpack.c.0.s8 %v6225
      %v6227 = vlaneseq
      %v6228 = vshrl.u32 %v6227, 7
      %v6229 = vsub.s32 %v6226, %v6228
      %v6230 = vrot.slane %v6216, %v6229
      %v6231 = vcombine.high %v6223, %v6223
      %v6232 = vcombine.high %v6230, %v6230
      %v6233 = vcombine.high %v6209, %v6209
      %v6235 = vunpack.c.l.s4 1983009808
      %v6236 = vunpack.c.0.s8 %v6235
      %v6237 = vlaneseq
      %v6238 = vshrl.u32 %v6237, 7
      %v6239 = vsub.s32 %v6236, %v6238
      %v6240 = vrot.slane %v6209, %v6239
      %v6242 = vunpack.c.l.s4 1983009808
      %v6243 = vunpack.c.0.s8 %v6242
      %v6244 = vlaneseq
      %v6245 = vshrl.u32 %v6244, 7
      %v6246 = vsub.s32 %v6243, %v6245
      %v6247 = vrot.slane %v6233, %v6246
      %v6248 = vcombine.high %v6240, %v6240
      %v6249 = vcombine.high %v6247, %v6247
      %v6251 = vunpack.c.l.s4 1983009808
      %v6252 = vunpack.c.0.s8 %v6251
      %v6253 = vlaneseq
      %v6254 = vshrl.u32 %v6253, 7
      %v6255 = vsub.s32 %v6252, %v6254
      %v6256 = vrot.slane %v6210, %v6255
      %6257 = vrot.lane.b32.xlu0 %v6223, 45
      %v6258 = vpop.permute.xlu0 %6257
      %6259 = vrot.lane.b32.xlu0 %v6231, 45
      %v6260 = vpop.permute.xlu0 %6259
      %6261 = vrot.lane.b32.xlu0 %v6230, 45
      %v6262 = vpop.permute.xlu0 %6261
      %6263 = vrot.lane.b32.xlu0 %v6232, 45
      %v6264 = vpop.permute.xlu0 %6263
      %6265 = vrot.lane.b32.xlu0 %v6240, 45
      %v6266 = vpop.permute.xlu0 %6265
      %6267 = vrot.lane.b32.xlu0 %v6248, 45
      %v6268 = vpop.permute.xlu0 %6267
      %6269 = vrot.lane.b32.xlu0 %v6247, 45
      %v6270 = vpop.permute.xlu0 %6269
      %6271 = vrot.lane.b32.xlu0 %v6249, 45
      %v6272 = vpop.permute.xlu0 %6271
      %6273 = vrot.lane.b32.xlu0 %v6256, 45
      %v6274 = vpop.permute.xlu0 %6273
      %vm6275 = vcmask 367616
      %v6276 = vsel %vm6275, %v6258, %v6260
      %v6277 = vsel %vm6275, %v6260, %v6262
      %v6278 = vsel %vm6275, %v6262, %v6264
      %v6279 = vsel %vm6275, %v6264, %v6266
      %v6280 = vsel %vm6275, %v6266, %v6268
      %v6281 = vsel %vm6275, %v6268, %v6270
      %v6282 = vsel %vm6275, %v6270, %v6272
      %v6283 = vsel %vm6275, %v6272, %v6274
      %v6285 = vsel %vm324, %v6212, 0
      %v6288 = vsel %vm328, %v6276, 0
      %v6291 = vsel %vm328, %v6277, 0
      %v6294 = vsel %vm328, %v6278, 0
      %v6297 = vsel %vm328, %v6279, 0
      %v6300 = vsel %vm328, %v6280, 0
      %v6303 = vsel %vm328, %v6281, 0
      %v6306 = vsel %vm328, %v6282, 0
      %v6309 = vsel %vm328, %v6283, 0
      %6311 = vmatprep.subr.bf16.mxu0 %v6291
      %6312 = vmatpush1.bf16.msra.mxu0 %v6288
      %6313 = vmatprep.subr.bf16.mxu0 0
      %6314 = vmatpush1.bf16.msra.mxu0 0
      %6315 = vmatprep.subr.bf16.mxu0 0
      %6316 = vmatpush1.bf16.msra.mxu0 0
      %6317 = vmatprep.subr.bf16.mxu0 0
      %6318 = vmatpush1.bf16.msra.mxu0 0
      %6319 = vmatprep.subr.bf16.mxu0 0
      %6320 = vmatpush1.bf16.msra.mxu0 0
      %6321 = vmatprep.subr.bf16.mxu0 0
      %6322 = vmatpush1.bf16.msra.mxu0 0
      %6323 = vmatprep.subr.bf16.mxu0 0
      %6324 = vmatpush1.bf16.msra.mxu0 0
      %6325 = vmatprep.subr.bf16.mxu0 0
      %6326 = vmatpush1.bf16.msra.mxu0 0
      %6327 = vmatprep.subr.bf16.mxu0 0
      %6328 = vmatpush1.bf16.msra.mxu0 0
      %6329 = vmatprep.subr.bf16.mxu0 0
      %6330 = vmatpush1.bf16.msra.mxu0 0
      %6331 = vmatprep.subr.bf16.mxu0 0
      %6332 = vmatpush1.bf16.msra.mxu0 0
      %6333 = vmatprep.subr.bf16.mxu0 0
      %6334 = vmatpush1.bf16.msra.mxu0 0
      %6335 = vmatprep.subr.bf16.mxu0 0
      %6336 = vmatpush1.bf16.msra.mxu0 0
      %6337 = vmatprep.subr.bf16.mxu0 0
      %6338 = vmatpush1.bf16.msra.mxu0 0
      %6339 = vmatprep.subr.bf16.mxu0 0
      %6340 = vmatpush1.bf16.msra.mxu0 0
      %6341 = vmatprep.subr.bf16.mxu0 0
      %6342 = vmatpush1.bf16.msra.mxu0 0
      %6343 = vmatprep.mubr.bf16.mxu0 0
      %6344 = vmatmul.mubr.bf16.gmra.mrb[0].mxu0 %v6285
      %v6345 = vpop.f32.mrb[0].mxu0
      %v6346 = vadd.f32 0.0, %v6345
      %v6347 = vpop.f32.mrb[0].mxu0
      %v6348 = vadd.f32 0.0, %v6347
      %v6349 = vpop.f32.mrb[0].mxu0
      %v6350 = vpop.f32.mrb[0].mxu0
      %6351 = vdwg.mxu0
      %6352 = vmatprep.subr.bf16.mxu0 %v6297
      %6353 = vmatpush1.bf16.msra.mxu0 %v6294
      %6354 = vmatprep.subr.bf16.mxu0 0
      %6355 = vmatpush1.bf16.msra.mxu0 0
      %6356 = vmatprep.subr.bf16.mxu0 0
      %6357 = vmatpush1.bf16.msra.mxu0 0
      %6358 = vmatprep.subr.bf16.mxu0 0
      %6359 = vmatpush1.bf16.msra.mxu0 0
      %6360 = vmatprep.subr.bf16.mxu0 0
      %6361 = vmatpush1.bf16.msra.mxu0 0
      %6362 = vmatprep.subr.bf16.mxu0 0
      %6363 = vmatpush1.bf16.msra.mxu0 0
      %6364 = vmatprep.subr.bf16.mxu0 0
      %6365 = vmatpush1.bf16.msra.mxu0 0
      %6366 = vmatprep.subr.bf16.mxu0 0
      %6367 = vmatpush1.bf16.msra.mxu0 0
      %6368 = vmatprep.subr.bf16.mxu0 0
      %6369 = vmatpush1.bf16.msra.mxu0 0
      %6370 = vmatprep.subr.bf16.mxu0 0
      %6371 = vmatpush1.bf16.msra.mxu0 0
      %6372 = vmatprep.subr.bf16.mxu0 0
      %6373 = vmatpush1.bf16.msra.mxu0 0
      %6374 = vmatprep.subr.bf16.mxu0 0
      %6375 = vmatpush1.bf16.msra.mxu0 0
      %6376 = vmatprep.subr.bf16.mxu0 0
      %6377 = vmatpush1.bf16.msra.mxu0 0
      %6378 = vmatprep.subr.bf16.mxu0 0
      %6379 = vmatpush1.bf16.msra.mxu0 0
      %6380 = vmatprep.subr.bf16.mxu0 0
      %6381 = vmatpush1.bf16.msra.mxu0 0
      %6382 = vmatprep.subr.bf16.mxu0 0
      %6383 = vmatpush1.bf16.msra.mxu0 0
      %6384 = vmatprep.mubr.bf16.mxu0 0
      %6385 = vmatmul.mubr.bf16.gmra.mrb[0].mxu0 %v6285
      %v6386 = vpop.f32.mrb[0].mxu0
      %v6387 = vadd.f32 0.0, %v6386
      %v6388 = vpop.f32.mrb[0].mxu0
      %v6389 = vadd.f32 0.0, %v6388
      %v6390 = vpop.f32.mrb[0].mxu0
      %v6391 = vpop.f32.mrb[0].mxu0
      %6392 = vdwg.mxu0
      %6393 = vmatprep.subr.bf16.mxu0 %v6303
      %6394 = vmatpush1.bf16.msra.mxu0 %v6300
      %6395 = vmatprep.subr.bf16.mxu0 0
      %6396 = vmatpush1.bf16.msra.mxu0 0
      %6397 = vmatprep.subr.bf16.mxu0 0
      %6398 = vmatpush1.bf16.msra.mxu0 0
      %6399 = vmatprep.subr.bf16.mxu0 0
      %6400 = vmatpush1.bf16.msra.mxu0 0
      %6401 = vmatprep.subr.bf16.mxu0 0
      %6402 = vmatpush1.bf16.msra.mxu0 0
      %6403 = vmatprep.subr.bf16.mxu0 0
      %6404 = vmatpush1.bf16.msra.mxu0 0
      %6405 = vmatprep.subr.bf16.mxu0 0
      %6406 = vmatpush1.bf16.msra.mxu0 0
      %6407 = vmatprep.subr.bf16.mxu0 0
      %6408 = vmatpush1.bf16.msra.mxu0 0
      %6409 = vmatprep.subr.bf16.mxu0 0
      %6410 = vmatpush1.bf16.msra.mxu0 0
      %6411 = vmatprep.subr.bf16.mxu0 0
      %6412 = vmatpush1.bf16.msra.mxu0 0
      %6413 = vmatprep.subr.bf16.mxu0 0
      %6414 = vmatpush1.bf16.msra.mxu0 0
      %6415 = vmatprep.subr.bf16.mxu0 0
      %6416 = vmatpush1.bf16.msra.mxu0 0
      %6417 = vmatprep.subr.bf16.mxu0 0
      %6418 = vmatpush1.bf16.msra.mxu0 0
      %6419 = vmatprep.subr.bf16.mxu0 0
      %6420 = vmatpush1.bf16.msra.mxu0 0
      %6421 = vmatprep.subr.bf16.mxu0 0
      %6422 = vmatpush1.bf16.msra.mxu0 0
      %6423 = vmatprep.subr.bf16.mxu0 0
      %6424 = vmatpush1.bf16.msra.mxu0 0
      %6425 = vmatprep.mubr.bf16.mxu0 0
      %6426 = vmatmul.mubr.bf16.gmra.mrb[0].mxu0 %v6285
      %v6427 = vpop.f32.mrb[0].mxu0
      %v6428 = vadd.f32 0.0, %v6427
      %v6429 = vpop.f32.mrb[0].mxu0
      %v6430 = vadd.f32 0.0, %v6429
      %v6431 = vpop.f32.mrb[0].mxu0
      %v6432 = vpop.f32.mrb[0].mxu0
      %6433 = vdwg.mxu0
      %6434 = vmatprep.subr.bf16.mxu0 %v6309
      %6435 = vmatpush1.bf16.msra.mxu0 %v6306
      %6436 = vmatprep.subr.bf16.mxu0 0
      %6437 = vmatpush1.bf16.msra.mxu0 0
      %6438 = vmatprep.subr.bf16.mxu0 0
      %6439 = vmatpush1.bf16.msra.mxu0 0
      %6440 = vmatprep.subr.bf16.mxu0 0
      %6441 = vmatpush1.bf16.msra.mxu0 0
      %6442 = vmatprep.subr.bf16.mxu0 0
      %6443 = vmatpush1.bf16.msra.mxu0 0
      %6444 = vmatprep.subr.bf16.mxu0 0
      %6445 = vmatpush1.bf16.msra.mxu0 0
      %6446 = vmatprep.subr.bf16.mxu0 0
      %6447 = vmatpush1.bf16.msra.mxu0 0
      %6448 = vmatprep.subr.bf16.mxu0 0
      %6449 = vmatpush1.bf16.msra.mxu0 0
      %6450 = vmatprep.subr.bf16.mxu0 0
      %6451 = vmatpush1.bf16.msra.mxu0 0
      %6452 = vmatprep.subr.bf16.mxu0 0
      %6453 = vmatpush1.bf16.msra.mxu0 0
      %6454 = vmatprep.subr.bf16.mxu0 0
      %6455 = vmatpush1.bf16.msra.mxu0 0
      %6456 = vmatprep.subr.bf16.mxu0 0
      %6457 = vmatpush1.bf16.msra.mxu0 0
      %6458 = vmatprep.subr.bf16.mxu0 0
      %6459 = vmatpush1.bf16.msra.mxu0 0
      %6460 = vmatprep.subr.bf16.mxu0 0
      %6461 = vmatpush1.bf16.msra.mxu0 0
      %6462 = vmatprep.subr.bf16.mxu0 0
      %6463 = vmatpush1.bf16.msra.mxu0 0
      %6464 = vmatprep.subr.bf16.mxu0 0
      %6465 = vmatpush1.bf16.msra.mxu0 0
      %6466 = vmatprep.mubr.bf16.mxu0 0
      %6467 = vmatmul.mubr.bf16.gmra.mrb[0].mxu0 %v6285
      %v6468 = vpop.f32.mrb[0].mxu0
      %v6469 = vadd.f32 0.0, %v6468
      %v6470 = vpop.f32.mrb[0].mxu0
      %v6471 = vadd.f32 0.0, %v6470
      %v6472 = vpop.f32.mrb[0].mxu0
      %v6473 = vpop.f32.mrb[0].mxu0
      %6474 = vdwg.mxu0
      %v6475 = vadd.f32 %v6200, %v6346
      %v6476 = vadd.f32 %v6201, %v6348
      %v6477 = vadd.f32 %v6202, %v6387
      %v6478 = vadd.f32 %v6203, %v6389
      %v6479 = vadd.f32 %v6204, %v6428
      %v6480 = vadd.f32 %v6205, %v6430
      %v6481 = vadd.f32 %v6206, %v6469
      %v6482 = vadd.f32 %v6207, %v6471
      %v6483 = vld [vmem:[%s232 + $0x2] sm:$0xff]
      %v6484 = vld [vmem:[%s232 + $0xa] sm:$0xff]
      %v6485 = vld [vmem:[%s232 + $0x12] sm:$0x3]
      %s6486 = scalar_lea.vmem %s0, 92
      %v6487 = vld [vmem:[%s6486] sm:$0xf]
      %v6491 = vcombine.high %v6483, %v6483
      %v6493 = vunpack.c.l.s4 1983009808
      %v6494 = vunpack.c.0.s8 %v6493
      %v6495 = vlaneseq
      %v6496 = vshrl.u32 %v6495, 7
      %v6497 = vsub.s32 %v6494, %v6496
      %v6498 = vrot.slane %v6483, %v6497
      %v6500 = vunpack.c.l.s4 1983009808
      %v6501 = vunpack.c.0.s8 %v6500
      %v6502 = vlaneseq
      %v6503 = vshrl.u32 %v6502, 7
      %v6504 = vsub.s32 %v6501, %v6503
      %v6505 = vrot.slane %v6491, %v6504
      %v6506 = vcombine.high %v6498, %v6498
      %v6507 = vcombine.high %v6505, %v6505
      %v6508 = vcombine.high %v6484, %v6484
      %v6510 = vunpack.c.l.s4 1983009808
      %v6511 = vunpack.c.0.s8 %v6510
      %v6512 = vlaneseq
      %v6513 = vshrl.u32 %v6512, 7
      %v6514 = vsub.s32 %v6511, %v6513
      %v6515 = vrot.slane %v6484, %v6514
      %v6517 = vunpack.c.l.s4 1983009808
      %v6518 = vunpack.c.0.s8 %v6517
      %v6519 = vlaneseq
      %v6520 = vshrl.u32 %v6519, 7
      %v6521 = vsub.s32 %v6518, %v6520
      %v6522 = vrot.slane %v6508, %v6521
      %v6523 = vcombine.high %v6515, %v6515
      %v6524 = vcombine.high %v6522, %v6522
      %v6526 = vunpack.c.l.s4 1983009808
      %v6527 = vunpack.c.0.s8 %v6526
      %v6528 = vlaneseq
      %v6529 = vshrl.u32 %v6528, 7
      %v6530 = vsub.s32 %v6527, %v6529
      %v6531 = vrot.slane %v6485, %v6530
      %6532 = vrot.lane.b32.xlu0 %v6498, 44
      %v6533 = vpop.permute.xlu0 %6532
      %6534 = vrot.lane.b32.xlu0 %v6506, 44
      %v6535 = vpop.permute.xlu0 %6534
      %6536 = vrot.lane.b32.xlu0 %v6505, 44
      %v6537 = vpop.permute.xlu0 %6536
      %6538 = vrot.lane.b32.xlu0 %v6507, 44
      %v6539 = vpop.permute.xlu0 %6538
      %6540 = vrot.lane.b32.xlu0 %v6515, 44
      %v6541 = vpop.permute.xlu0 %6540
      %6542 = vrot.lane.b32.xlu0 %v6523, 44
      %v6543 = vpop.permute.xlu0 %6542
      %6544 = vrot.lane.b32.xlu0 %v6522, 44
      %v6545 = vpop.permute.xlu0 %6544
      %6546 = vrot.lane.b32.xlu0 %v6524, 44
      %v6547 = vpop.permute.xlu0 %6546
      %6548 = vrot.lane.b32.xlu0 %v6531, 44
      %v6549 = vpop.permute.xlu0 %6548
      %vm6550 = vcmask 359424
      %v6551 = vsel %vm6550, %v6533, %v6535
      %v6552 = vsel %vm6550, %v6535, %v6537
      %v6553 = vsel %vm6550, %v6537, %v6539
      %v6554 = vsel %vm6550, %v6539, %v6541
      %v6555 = vsel %vm6550, %v6541, %v6543
      %v6556 = vsel %vm6550, %v6543, %v6545
      %v6557 = vsel %vm6550, %v6545, %v6547
      %v6558 = vsel %vm6550, %v6547, %v6549
      %v6560 = vsel %vm324, %v6487, 0
      %v6563 = vsel %vm328, %v6551, 0
      %v6566 = vsel %vm328, %v6552, 0
      %v6569 = vsel %vm328, %v6553, 0
      %v6572 = vsel %vm328, %v6554, 0
      %v6575 = vsel %vm328, %v6555, 0
      %v6578 = vsel %vm328, %v6556, 0
      %v6581 = vsel %vm328, %v6557, 0
      %v6584 = vsel %vm328, %v6558, 0
      %6586 = vmatprep.subr.bf16.mxu0 %v6566
      %6587 = vmatpush1.bf16.msra.mxu0 %v6563
      %6588 = vmatprep.subr.bf16.mxu0 0
      %6589 = vmatpush1.bf16.msra.mxu0 0
      %6590 = vmatprep.subr.bf16.mxu0 0
      %6591 = vmatpush1.bf16.msra.mxu0 0
      %6592 = vmatprep.subr.bf16.mxu0 0
      %6593 = vmatpush1.bf16.msra.mxu0 0
      %6594 = vmatprep.subr.bf16.mxu0 0
      %6595 = vmatpush1.bf16.msra.mxu0 0
      %6596 = vmatprep.subr.bf16.mxu0 0
      %6597 = vmatpush1.bf16.msra.mxu0 0
      %6598 = vmatprep.subr.bf16.mxu0 0
      %6599 = vmatpush1.bf16.msra.mxu0 0
      %6600 = vmatprep.subr.bf16.mxu0 0
      %6601 = vmatpush1.bf16.msra.mxu0 0
      %6602 = vmatprep.subr.bf16.mxu0 0
      %6603 = vmatpush1.bf16.msra.mxu0 0
      %6604 = vmatprep.subr.bf16.mxu0 0
      %6605 = vmatpush1.bf16.msra.mxu0 0
      %6606 = vmatprep.subr.bf16.mxu0 0
      %6607 = vmatpush1.bf16.msra.mxu0 0
      %6608 = vmatprep.subr.bf16.mxu0 0
      %6609 = vmatpush1.bf16.msra.mxu0 0
      %6610 = vmatprep.subr.bf16.mxu0 0
      %6611 = vmatpush1.bf16.msra.mxu0 0
      %6612 = vmatprep.subr.bf16.mxu0 0
      %6613 = vmatpush1.bf16.msra.mxu0 0
      %6614 = vmatprep.subr.bf16.mxu0 0
      %6615 = vmatpush1.bf16.msra.mxu0 0
      %6616 = vmatprep.subr.bf16.mxu0 0
      %6617 = vmatpush1.bf16.msra.mxu0 0
      %6618 = vmatprep.mubr.bf16.mxu0 0
      %6619 = vmatmul.mubr.bf16.gmra.mrb[0].mxu0 %v6560
      %v6620 = vpop.f32.mrb[0].mxu0
      %v6621 = vadd.f32 0.0, %v6620
      %v6622 = vpop.f32.mrb[0].mxu0
      %v6623 = vadd.f32 0.0, %v6622
      %v6624 = vpop.f32.mrb[0].mxu0
      %v6625 = vpop.f32.mrb[0].mxu0
      %6626 = vdwg.mxu0
      %6627 = vmatprep.subr.bf16.mxu0 %v6572
      %6628 = vmatpush1.bf16.msra.mxu0 %v6569
      %6629 = vmatprep.subr.bf16.mxu0 0
      %6630 = vmatpush1.bf16.msra.mxu0 0
      %6631 = vmatprep.subr.bf16.mxu0 0
      %6632 = vmatpush1.bf16.msra.mxu0 0
      %6633 = vmatprep.subr.bf16.mxu0 0
      %6634 = vmatpush1.bf16.msra.mxu0 0
      %6635 = vmatprep.subr.bf16.mxu0 0
      %6636 = vmatpush1.bf16.msra.mxu0 0
      %6637 = vmatprep.subr.bf16.mxu0 0
      %6638 = vmatpush1.bf16.msra.mxu0 0
      %6639 = vmatprep.subr.bf16.mxu0 0
      %6640 = vmatpush1.bf16.msra.mxu0 0
      %6641 = vmatprep.subr.bf16.mxu0 0
      %6642 = vmatpush1.bf16.msra.mxu0 0
      %6643 = vmatprep.subr.bf16.mxu0 0
      %6644 = vmatpush1.bf16.msra.mxu0 0
      %6645 = vmatprep.subr.bf16.mxu0 0
      %6646 = vmatpush1.bf16.msra.mxu0 0
      %6647 = vmatprep.subr.bf16.mxu0 0
      %6648 = vmatpush1.bf16.msra.mxu0 0
      %6649 = vmatprep.subr.bf16.mxu0 0
      %6650 = vmatpush1.bf16.msra.mxu0 0
      %6651 = vmatprep.subr.bf16.mxu0 0
      %6652 = vmatpush1.bf16.msra.mxu0 0
      %6653 = vmatprep.subr.bf16.mxu0 0
      %6654 = vmatpush1.bf16.msra.mxu0 0
      %6655 = vmatprep.subr.bf16.mxu0 0
      %6656 = vmatpush1.bf16.msra.mxu0 0
      %6657 = vmatprep.subr.bf16.mxu0 0
      %6658 = vmatpush1.bf16.msra.mxu0 0
      %6659 = vmatprep.mubr.bf16.mxu0 0
      %6660 = vmatmul.mubr.bf16.gmra.mrb[0].mxu0 %v6560
      %v6661 = vpop.f32.mrb[0].mxu0
      %v6662 = vadd.f32 0.0, %v6661
      %v6663 = vpop.f32.mrb[0].mxu0
      %v6664 = vadd.f32 0.0, %v6663
      %v6665 = vpop.f32.mrb[0].mxu0
      %v6666 = vpop.f32.mrb[0].mxu0
      %6667 = vdwg.mxu0
      %6668 = vmatprep.subr.bf16.mxu0 %v6578
      %6669 = vmatpush1.bf16.msra.mxu0 %v6575
      %6670 = vmatprep.subr.bf16.mxu0 0
      %6671 = vmatpush1.bf16.msra.mxu0 0
      %6672 = vmatprep.subr.bf16.mxu0 0
      %6673 = vmatpush1.bf16.msra.mxu0 0
      %6674 = vmatprep.subr.bf16.mxu0 0
      %6675 = vmatpush1.bf16.msra.mxu0 0
      %6676 = vmatprep.subr.bf16.mxu0 0
      %6677 = vmatpush1.bf16.msra.mxu0 0
      %6678 = vmatprep.subr.bf16.mxu0 0
      %6679 = vmatpush1.bf16.msra.mxu0 0
      %6680 = vmatprep.subr.bf16.mxu0 0
      %6681 = vmatpush1.bf16.msra.mxu0 0
      %6682 = vmatprep.subr.bf16.mxu0 0
      %6683 = vmatpush1.bf16.msra.mxu0 0
      %6684 = vmatprep.subr.bf16.mxu0 0
      %6685 = vmatpush1.bf16.msra.mxu0 0
      %6686 = vmatprep.subr.bf16.mxu0 0
      %6687 = vmatpush1.bf16.msra.mxu0 0
      %6688 = vmatprep.subr.bf16.mxu0 0
      %6689 = vmatpush1.bf16.msra.mxu0 0
      %6690 = vmatprep.subr.bf16.mxu0 0
      %6691 = vmatpush1.bf16.msra.mxu0 0
      %6692 = vmatprep.subr.bf16.mxu0 0
      %6693 = vmatpush1.bf16.msra.mxu0 0
      %6694 = vmatprep.subr.bf16.mxu0 0
      %6695 = vmatpush1.bf16.msra.mxu0 0
      %6696 = vmatprep.subr.bf16.mxu0 0
      %6697 = vmatpush1.bf16.msra.mxu0 0
      %6698 = vmatprep.subr.bf16.mxu0 0
      %6699 = vmatpush1.bf16.msra.mxu0 0
      %6700 = vmatprep.mubr.bf16.mxu0 0
      %6701 = vmatmul.mubr.bf16.gmra.mrb[0].mxu0 %v6560
      %v6702 = vpop.f32.mrb[0].mxu0
      %v6703 = vadd.f32 0.0, %v6702
      %v6704 = vpop.f32.mrb[0].mxu0
      %v6705 = vadd.f32 0.0, %v6704
      %v6706 = vpop.f32.mrb[0].mxu0
      %v6707 = vpop.f32.mrb[0].mxu0
      %6708 = vdwg.mxu0
      %6709 = vmatprep.subr.bf16.mxu0 %v6584
      %6710 = vmatpush1.bf16.msra.mxu0 %v6581
      %6711 = vmatprep.subr.bf16.mxu0 0
      %6712 = vmatpush1.bf16.msra.mxu0 0
      %6713 = vmatprep.subr.bf16.mxu0 0
      %6714 = vmatpush1.bf16.msra.mxu0 0
      %6715 = vmatprep.subr.bf16.mxu0 0
      %6716 = vmatpush1.bf16.msra.mxu0 0
      %6717 = vmatprep.subr.bf16.mxu0 0
      %6718 = vmatpush1.bf16.msra.mxu0 0
      %6719 = vmatprep.subr.bf16.mxu0 0
      %6720 = vmatpush1.bf16.msra.mxu0 0
      %6721 = vmatprep.subr.bf16.mxu0 0
      %6722 = vmatpush1.bf16.msra.mxu0 0
      %6723 = vmatprep.subr.bf16.mxu0 0
      %6724 = vmatpush1.bf16.msra.mxu0 0
      %6725 = vmatprep.subr.bf16.mxu0 0
      %6726 = vmatpush1.bf16.msra.mxu0 0
      %6727 = vmatprep.subr.bf16.mxu0 0
      %6728 = vmatpush1.bf16.msra.mxu0 0
      %6729 = vmatprep.subr.bf16.mxu0 0
      %6730 = vmatpush1.bf16.msra.mxu0 0
      %6731 = vmatprep.subr.bf16.mxu0 0
      %6732 = vmatpush1.bf16.msra.mxu0 0
      %6733 = vmatprep.subr.bf16.mxu0 0
      %6734 = vmatpush1.bf16.msra.mxu0 0
      %6735 = vmatprep.subr.bf16.mxu0 0
      %6736 = vmatpush1.bf16.msra.mxu0 0
      %6737 = vmatprep.subr.bf16.mxu0 0
      %6738 = vmatpush1.bf16.msra.mxu0 0
      %6739 = vmatprep.subr.bf16.mxu0 0
      %6740 = vmatpush1.bf16.msra.mxu0 0
      %6741 = vmatprep.mubr.bf16.mxu0 0
      %6742 = vmatmul.mubr.bf16.gmra.mrb[0].mxu0 %v6560
      %v6743 = vpop.f32.mrb[0].mxu0
      %v6744 = vadd.f32 0.0, %v6743
      %v6745 = vpop.f32.mrb[0].mxu0
      %v6746 = vadd.f32 0.0, %v6745
      %v6747 = vpop.f32.mrb[0].mxu0
      %v6748 = vpop.f32.mrb[0].mxu0
      %6749 = vdwg.mxu0
      %v6750 = vadd.f32 %v6475, %v6621
      %v6751 = vadd.f32 %v6476, %v6623
      %v6752 = vadd.f32 %v6477, %v6662
      %v6753 = vadd.f32 %v6478, %v6664
      %v6754 = vadd.f32 %v6479, %v6703
      %v6755 = vadd.f32 %v6480, %v6705
      %v6756 = vadd.f32 %v6481, %v6744
      %v6757 = vadd.f32 %v6482, %v6746
      %v6758 = vld [vmem:[%s232 + $0x2] sm:$0xff]
      %v6759 = vld [vmem:[%s232 + $0xa] sm:$0xff]
      %v6760 = vld [vmem:[%s232 + $0x12] sm:$0x3]
      %s6761 = scalar_lea.vmem %s0, 96
      %v6762 = vld [vmem:[%s6761] sm:$0xf]
      %v6766 = vcombine.high %v6758, %v6758
      %v6768 = vunpack.c.l.s4 1983009808
      %v6769 = vunpack.c.0.s8 %v6768
      %v6770 = vlaneseq
      %v6771 = vshrl.u32 %v6770, 7
      %v6772 = vsub.s32 %v6769, %v6771
      %v6773 = vrot.slane %v6758, %v6772
      %v6775 = vunpack.c.l.s4 1983009808
      %v6776 = vunpack.c.0.s8 %v6775
      %v6777 = vlaneseq
      %v6778 = vshrl.u32 %v6777, 7
      %v6779 = vsub.s32 %v6776, %v6778
      %v6780 = vrot.slane %v6766, %v6779
      %v6781 = vcombine.high %v6773, %v6773
      %v6782 = vcombine.high %v6780, %v6780
      %v6783 = vcombine.high %v6759, %v6759
      %v6785 = vunpack.c.l.s4 1983009808
      %v6786 = vunpack.c.0.s8 %v6785
      %v6787 = vlaneseq
      %v6788 = vshrl.u32 %v6787, 7
      %v6789 = vsub.s32 %v6786, %v6788
      %v6790 = vrot.slane %v6759, %v6789
      %v6792 = vunpack.c.l.s4 1983009808
      %v6793 = vunpack.c.0.s8 %v6792
      %v6794 = vlaneseq
      %v6795 = vshrl.u32 %v6794, 7
      %v6796 = vsub.s32 %v6793, %v6795
      %v6797 = vrot.slane %v6783, %v6796
      %v6798 = vcombine.high %v6790, %v6790
      %v6799 = vcombine.high %v6797, %v6797
      %v6801 = vunpack.c.l.s4 1983009808
      %v6802 = vunpack.c.0.s8 %v6801
      %v6803 = vlaneseq
      %v6804 = vshrl.u32 %v6803, 7
      %v6805 = vsub.s32 %v6802, %v6804
      %v6806 = vrot.slane %v6760, %v6805
      %6807 = vrot.lane.b32.xlu0 %v6773, 36
      %v6808 = vpop.permute.xlu0 %6807
      %6809 = vrot.lane.b32.xlu0 %v6781, 36
      %v6810 = vpop.permute.xlu0 %6809
      %6811 = vrot.lane.b32.xlu0 %v6780, 36
      %v6812 = vpop.permute.xlu0 %6811
      %6813 = vrot.lane.b32.xlu0 %v6782, 36
      %v6814 = vpop.permute.xlu0 %6813
      %6815 = vrot.lane.b32.xlu0 %v6790, 36
      %v6816 = vpop.permute.xlu0 %6815
      %6817 = vrot.lane.b32.xlu0 %v6798, 36
      %v6818 = vpop.permute.xlu0 %6817
      %6819 = vrot.lane.b32.xlu0 %v6797, 36
      %v6820 = vpop.permute.xlu0 %6819
      %6821 = vrot.lane.b32.xlu0 %v6799, 36
      %v6822 = vpop.permute.xlu0 %6821
      %6823 = vrot.lane.b32.xlu0 %v6806, 36
      %v6824 = vpop.permute.xlu0 %6823
      %vm6825 = vcmask 293888
      %v6826 = vsel %vm6825, %v6808, %v6810
      %v6827 = vsel %vm6825, %v6810, %v6812
      %v6828 = vsel %vm6825, %v6812, %v6814
      %v6829 = vsel %vm6825, %v6814, %v6816
      %v6830 = vsel %vm6825, %v6816, %v6818
      %v6831 = vsel %vm6825, %v6818, %v6820
      %v6832 = vsel %vm6825, %v6820, %v6822
      %v6833 = vsel %vm6825, %v6822, %v6824
      %v6835 = vsel %vm324, %v6762, 0
      %v6838 = vsel %vm328, %v6826, 0
      %v6841 = vsel %vm328, %v6827, 0
      %v6844 = vsel %vm328, %v6828, 0
      %v6847 = vsel %vm328, %v6829, 0
      %v6850 = vsel %vm328, %v6830, 0
      %v6853 = vsel %vm328, %v6831, 0
      %v6856 = vsel %vm328, %v6832, 0
      %v6859 = vsel %vm328, %v6833, 0
      %6861 = vmatprep.subr.bf16.mxu0 %v6841
      %6862 = vmatpush1.bf16.msra.mxu0 %v6838
      %6863 = vmatprep.subr.bf16.mxu0 0
      %6864 = vmatpush1.bf16.msra.mxu0 0
      %6865 = vmatprep.subr.bf16.mxu0 0
      %6866 = vmatpush1.bf16.msra.mxu0 0
      %6867 = vmatprep.subr.bf16.mxu0 0
      %6868 = vmatpush1.bf16.msra.mxu0 0
      %6869 = vmatprep.subr.bf16.mxu0 0
      %6870 = vmatpush1.bf16.msra.mxu0 0
      %6871 = vmatprep.subr.bf16.mxu0 0
      %6872 = vmatpush1.bf16.msra.mxu0 0
      %6873 = vmatprep.subr.bf16.mxu0 0
      %6874 = vmatpush1.bf16.msra.mxu0 0
      %6875 = vmatprep.subr.bf16.mxu0 0
      %6876 = vmatpush1.bf16.msra.mxu0 0
      %6877 = vmatprep.subr.bf16.mxu0 0
      %6878 = vmatpush1.bf16.msra.mxu0 0
      %6879 = vmatprep.subr.bf16.mxu0 0
      %6880 = vmatpush1.bf16.msra.mxu0 0
      %6881 = vmatprep.subr.bf16.mxu0 0
      %6882 = vmatpush1.bf16.msra.mxu0 0
      %6883 = vmatprep.subr.bf16.mxu0 0
      %6884 = vmatpush1.bf16.msra.mxu0 0
      %6885 = vmatprep.subr.bf16.mxu0 0
      %6886 = vmatpush1.bf16.msra.mxu0 0
      %6887 = vmatprep.subr.bf16.mxu0 0
      %6888 = vmatpush1.bf16.msra.mxu0 0
      %6889 = vmatprep.subr.bf16.mxu0 0
      %6890 = vmatpush1.bf16.msra.mxu0 0
      %6891 = vmatprep.subr.bf16.mxu0 0
      %6892 = vmatpush1.bf16.msra.mxu0 0
      %6893 = vmatprep.mubr.bf16.mxu0 0
      %6894 = vmatmul.mubr.bf16.gmra.mrb[0].mxu0 %v6835
      %v6895 = vpop.f32.mrb[0].mxu0
      %v6896 = vadd.f32 0.0, %v6895
      %v6897 = vpop.f32.mrb[0].mxu0
      %v6898 = vadd.f32 0.0, %v6897
      %v6899 = vpop.f32.mrb[0].mxu0
      %v6900 = vpop.f32.mrb[0].mxu0
      %6901 = vdwg.mxu0
      %6902 = vmatprep.subr.bf16.mxu0 %v6847
      %6903 = vmatpush1.bf16.msra.mxu0 %v6844
      %6904 = vmatprep.subr.bf16.mxu0 0
      %6905 = vmatpush1.bf16.msra.mxu0 0
      %6906 = vmatprep.subr.bf16.mxu0 0
      %6907 = vmatpush1.bf16.msra.mxu0 0
      %6908 = vmatprep.subr.bf16.mxu0 0
      %6909 = vmatpush1.bf16.msra.mxu0 0
      %6910 = vmatprep.subr.bf16.mxu0 0
      %6911 = vmatpush1.bf16.msra.mxu0 0
      %6912 = vmatprep.subr.bf16.mxu0 0
      %6913 = vmatpush1.bf16.msra.mxu0 0
      %6914 = vmatprep.subr.bf16.mxu0 0
      %6915 = vmatpush1.bf16.msra.mxu0 0
      %6916 = vmatprep.subr.bf16.mxu0 0
      %6917 = vmatpush1.bf16.msra.mxu0 0
      %6918 = vmatprep.subr.bf16.mxu0 0
      %6919 = vmatpush1.bf16.msra.mxu0 0
      %6920 = vmatprep.subr.bf16.mxu0 0
      %6921 = vmatpush1.bf16.msra.mxu0 0
      %6922 = vmatprep.subr.bf16.mxu0 0
      %6923 = vmatpush1.bf16.msra.mxu0 0
      %6924 = vmatprep.subr.bf16.mxu0 0
      %6925 = vmatpush1.bf16.msra.mxu0 0
      %6926 = vmatprep.subr.bf16.mxu0 0
      %6927 = vmatpush1.bf16.msra.mxu0 0
      %6928 = vmatprep.subr.bf16.mxu0 0
      %6929 = vmatpush1.bf16.msra.mxu0 0
      %6930 = vmatprep.subr.bf16.mxu0 0
      %6931 = vmatpush1.bf16.msra.mxu0 0
      %6932 = vmatprep.subr.bf16.mxu0 0
      %6933 = vmatpush1.bf16.msra.mxu0 0
      %6934 = vmatprep.mubr.bf16.mxu0 0
      %6935 = vmatmul.mubr.bf16.gmra.mrb[0].mxu0 %v6835
      %v6936 = vpop.f32.mrb[0].mxu0
      %v6937 = vadd.f32 0.0, %v6936
      %v6938 = vpop.f32.mrb[0].mxu0
      %v6939 = vadd.f32 0.0, %v6938
      %v6940 = vpop.f32.mrb[0].mxu0
      %v6941 = vpop.f32.mrb[0].mxu0
      %6942 = vdwg.mxu0
      %6943 = vmatprep.subr.bf16.mxu0 %v6853
      %6944 = vmatpush1.bf16.msra.mxu0 %v6850
      %6945 = vmatprep.subr.bf16.mxu0 0
      %6946 = vmatpush1.bf16.msra.mxu0 0
      %6947 = vmatprep.subr.bf16.mxu0 0
      %6948 = vmatpush1.bf16.msra.mxu0 0
      %6949 = vmatprep.subr.bf16.mxu0 0
      %6950 = vmatpush1.bf16.msra.mxu0 0
      %6951 = vmatprep.subr.bf16.mxu0 0
      %6952 = vmatpush1.bf16.msra.mxu0 0
      %6953 = vmatprep.subr.bf16.mxu0 0
      %6954 = vmatpush1.bf16.msra.mxu0 0
      %6955 = vmatprep.subr.bf16.mxu0 0
      %6956 = vmatpush1.bf16.msra.mxu0 0
      %6957 = vmatprep.subr.bf16.mxu0 0
      %6958 = vmatpush1.bf16.msra.mxu0 0
      %6959 = vmatprep.subr.bf16.mxu0 0
      %6960 = vmatpush1.bf16.msra.mxu0 0
      %6961 = vmatprep.subr.bf16.mxu0 0
      %6962 = vmatpush1.bf16.msra.mxu0 0
      %6963 = vmatprep.subr.bf16.mxu0 0
      %6964 = vmatpush1.bf16.msra.mxu0 0
      %6965 = vmatprep.subr.bf16.mxu0 0
      %6966 = vmatpush1.bf16.msra.mxu0 0
      %6967 = vmatprep.subr.bf16.mxu0 0
      %6968 = vmatpush1.bf16.msra.mxu0 0
      %6969 = vmatprep.subr.bf16.mxu0 0
      %6970 = vmatpush1.bf16.msra.mxu0 0
      %6971 = vmatprep.subr.bf16.mxu0 0
      %6972 = vmatpush1.bf16.msra.mxu0 0
      %6973 = vmatprep.subr.bf16.mxu0 0
      %6974 = vmatpush1.bf16.msra.mxu0 0
      %6975 = vmatprep.mubr.bf16.mxu0 0
      %6976 = vmatmul.mubr.bf16.gmra.mrb[0].mxu0 %v6835
      %v6977 = vpop.f32.mrb[0].mxu0
      %v6978 = vadd.f32 0.0, %v6977
      %v6979 = vpop.f32.mrb[0].mxu0
      %v6980 = vadd.f32 0.0, %v6979
      %v6981 = vpop.f32.mrb[0].mxu0
      %v6982 = vpop.f32.mrb[0].mxu0
      %6983 = vdwg.mxu0
      %6984 = vmatprep.subr.bf16.mxu0 %v6859
      %6985 = vmatpush1.bf16.msra.mxu0 %v6856
      %6986 = vmatprep.subr.bf16.mxu0 0
      %6987 = vmatpush1.bf16.msra.mxu0 0
      %6988 = vmatprep.subr.bf16.mxu0 0
      %6989 = vmatpush1.bf16.msra.mxu0 0
      %6990 = vmatprep.subr.bf16.mxu0 0
      %6991 = vmatpush1.bf16.msra.mxu0 0
      %6992 = vmatprep.subr.bf16.mxu0 0
      %6993 = vmatpush1.bf16.msra.mxu0 0
      %6994 = vmatprep.subr.bf16.mxu0 0
      %6995 = vmatpush1.bf16.msra.mxu0 0
      %6996 = vmatprep.subr.bf16.mxu0 0
      %6997 = vmatpush1.bf16.msra.mxu0 0
      %6998 = vmatprep.subr.bf16.mxu0 0
      %6999 = vmatpush1.bf16.msra.mxu0 0
      %7000 = vmatprep.subr.bf16.mxu0 0
      %7001 = vmatpush1.bf16.msra.mxu0 0
      %7002 = vmatprep.subr.bf16.mxu0 0
      %7003 = vmatpush1.bf16.msra.mxu0 0
      %7004 = vmatprep.subr.bf16.mxu0 0
      %7005 = vmatpush1.bf16.msra.mxu0 0
      %7006 = vmatprep.subr.bf16.mxu0 0
      %7007 = vmatpush1.bf16.msra.mxu0 0
      %7008 = vmatprep.subr.bf16.mxu0 0
      %7009 = vmatpush1.bf16.msra.mxu0 0
      %7010 = vmatprep.subr.bf16.mxu0 0
      %7011 = vmatpush1.bf16.msra.mxu0 0
      %7012 = vmatprep.subr.bf16.mxu0 0
      %7013 = vmatpush1.bf16.msra.mxu0 0
      %7014 = vmatprep.subr.bf16.mxu0 0
      %7015 = vmatpush1.bf16.msra.mxu0 0
      %7016 = vmatprep.mubr.bf16.mxu0 0
      %7017 = vmatmul.mubr.bf16.gmra.mrb[0].mxu0 %v6835
      %v7018 = vpop.f32.mrb[0].mxu0
      %v7019 = vadd.f32 0.0, %v7018
      %v7020 = vpop.f32.mrb[0].mxu0
      %v7021 = vadd.f32 0.0, %v7020
      %v7022 = vpop.f32.mrb[0].mxu0
      %v7023 = vpop.f32.mrb[0].mxu0
      %7024 = vdwg.mxu0
      %v7025 = vadd.f32 %v6750, %v6896
      %v7026 = vadd.f32 %v6751, %v6898
      %v7027 = vadd.f32 %v6752, %v6937
      %v7028 = vadd.f32 %v6753, %v6939
      %v7029 = vadd.f32 %v6754, %v6978
      %v7030 = vadd.f32 %v6755, %v6980
      %v7031 = vadd.f32 %v6756, %v7019
      %v7032 = vadd.f32 %v6757, %v7021
      %v7033 = vld [vmem:[%s232 + $0x2] sm:$0xff]
      %v7034 = vld [vmem:[%s232 + $0xa] sm:$0xff]
      %v7035 = vld [vmem:[%s232 + $0x12] sm:$0x3]
      %s7036 = scalar_lea.vmem %s0, 100
      %v7037 = vld [vmem:[%s7036] sm:$0xf]
      %v7041 = vcombine.high %v7033, %v7033
      %v7043 = vunpack.c.l.s4 1983009808
      %v7044 = vunpack.c.0.s8 %v7043
      %v7045 = vlaneseq
      %v7046 = vshrl.u32 %v7045, 7
      %v7047 = vsub.s32 %v7044, %v7046
      %v7048 = vrot.slane %v7033, %v7047
      %v7050 = vunpack.c.l.s4 1983009808
      %v7051 = vunpack.c.0.s8 %v7050
      %v7052 = vlaneseq
      %v7053 = vshrl.u32 %v7052, 7
      %v7054 = vsub.s32 %v7051, %v7053
      %v7055 = vrot.slane %v7041, %v7054
      %v7056 = vcombine.high %v7048, %v7048
      %v7057 = vcombine.high %v7055, %v7055
      %v7058 = vcombine.high %v7034, %v7034
      %v7060 = vunpack.c.l.s4 1983009808
      %v7061 = vunpack.c.0.s8 %v7060
      %v7062 = vlaneseq
      %v7063 = vshrl.u32 %v7062, 7
      %v7064 = vsub.s32 %v7061, %v7063
      %v7065 = vrot.slane %v7034, %v7064
      %v7067 = vunpack.c.l.s4 1983009808
      %v7068 = vunpack.c.0.s8 %v7067
      %v7069 = vlaneseq
      %v7070 = vshrl.u32 %v7069, 7
      %v7071 = vsub.s32 %v7068, %v7070
      %v7072 = vrot.slane %v7058, %v7071
      %v7073 = vcombine.high %v7065, %v7065
      %v7074 = vcombine.high %v7072, %v7072
      %v7076 = vunpack.c.l.s4 1983009808
      %v7077 = vunpack.c.0.s8 %v7076
      %v7078 = vlaneseq
      %v7079 = vshrl.u32 %v7078, 7
      %v7080 = vsub.s32 %v7077, %v7079
      %v7081 = vrot.slane %v7035, %v7080
      %7082 = vrot.lane.b32.xlu0 %v7048, 35
      %v7083 = vpop.permute.xlu0 %7082
      %7084 = vrot.lane.b32.xlu0 %v7056, 35
      %v7085 = vpop.permute.xlu0 %7084
      %7086 = vrot.lane.b32.xlu0 %v7055, 35
      %v7087 = vpop.permute.xlu0 %7086
      %7088 = vrot.lane.b32.xlu0 %v7057, 35
      %v7089 = vpop.permute.xlu0 %7088
      %7090 = vrot.lane.b32.xlu0 %v7065, 35
      %v7091 = vpop.permute.xlu0 %7090
      %7092 = vrot.lane.b32.xlu0 %v7073, 35
      %v7093 = vpop.permute.xlu0 %7092
      %7094 = vrot.lane.b32.xlu0 %v7072, 35
      %v7095 = vpop.permute.xlu0 %7094
      %7096 = vrot.lane.b32.xlu0 %v7074, 35
      %v7097 = vpop.permute.xlu0 %7096
      %7098 = vrot.lane.b32.xlu0 %v7081, 35
      %v7099 = vpop.permute.xlu0 %7098
      %vm7100 = vcmask 285696
      %v7101 = vsel %vm7100, %v7083, %v7085
      %v7102 = vsel %vm7100, %v7085, %v7087
      %v7103 = vsel %vm7100, %v7087, %v7089
      %v7104 = vsel %vm7100, %v7089, %v7091
      %v7105 = vsel %vm7100, %v7091, %v7093
      %v7106 = vsel %vm7100, %v7093, %v7095
      %v7107 = vsel %vm7100, %v7095, %v7097
      %v7108 = vsel %vm7100, %v7097, %v7099
      %v7110 = vsel %vm324, %v7037, 0
      %v7113 = vsel %vm328, %v7101, 0
      %v7116 = vsel %vm328, %v7102, 0
      %v7119 = vsel %vm328, %v7103, 0
      %v7122 = vsel %vm328, %v7104, 0
      %v7125 = vsel %vm328, %v7105, 0
      %v7128 = vsel %vm328, %v7106, 0
      %v7131 = vsel %vm328, %v7107, 0
      %v7134 = vsel %vm328, %v7108, 0
      %7136 = vmatprep.subr.bf16.mxu0 %v7116
      %7137 = vmatpush1.bf16.msra.mxu0 %v7113
      %7138 = vmatprep.subr.bf16.mxu0 0
      %7139 = vmatpush1.bf16.msra.mxu0 0
      %7140 = vmatprep.subr.bf16.mxu0 0
      %7141 = vmatpush1.bf16.msra.mxu0 0
      %7142 = vmatprep.subr.bf16.mxu0 0
      %7143 = vmatpush1.bf16.msra.mxu0 0
      %7144 = vmatprep.subr.bf16.mxu0 0
      %7145 = vmatpush1.bf16.msra.mxu0 0
      %7146 = vmatprep.subr.bf16.mxu0 0
      %7147 = vmatpush1.bf16.msra.mxu0 0
      %7148 = vmatprep.subr.bf16.mxu0 0
      %7149 = vmatpush1.bf16.msra.mxu0 0
      %7150 = vmatprep.subr.bf16.mxu0 0
      %7151 = vmatpush1.bf16.msra.mxu0 0
      %7152 = vmatprep.subr.bf16.mxu0 0
      %7153 = vmatpush1.bf16.msra.mxu0 0
      %7154 = vmatprep.subr.bf16.mxu0 0
      %7155 = vmatpush1.bf16.msra.mxu0 0
      %7156 = vmatprep.subr.bf16.mxu0 0
      %7157 = vmatpush1.bf16.msra.mxu0 0
      %7158 = vmatprep.subr.bf16.mxu0 0
      %7159 = vmatpush1.bf16.msra.mxu0 0
      %7160 = vmatprep.subr.bf16.mxu0 0
      %7161 = vmatpush1.bf16.msra.mxu0 0
      %7162 = vmatprep.subr.bf16.mxu0 0
      %7163 = vmatpush1.bf16.msra.mxu0 0
      %7164 = vmatprep.subr.bf16.mxu0 0
      %7165 = vmatpush1.bf16.msra.mxu0 0
      %7166 = vmatprep.subr.bf16.mxu0 0
      %7167 = vmatpush1.bf16.msra.mxu0 0
      %7168 = vmatprep.mubr.bf16.mxu0 0
      %7169 = vmatmul.mubr.bf16.gmra.mrb[0].mxu0 %v7110
      %v7170 = vpop.f32.mrb[0].mxu0
      %v7171 = vadd.f32 0.0, %v7170
      %v7172 = vpop.f32.mrb[0].mxu0
      %v7173 = vadd.f32 0.0, %v7172
      %v7174 = vpop.f32.mrb[0].mxu0
      %v7175 = vpop.f32.mrb[0].mxu0
      %7176 = vdwg.mxu0
      %7177 = vmatprep.subr.bf16.mxu0 %v7122
      %7178 = vmatpush1.bf16.msra.mxu0 %v7119
      %7179 = vmatprep.subr.bf16.mxu0 0
      %7180 = vmatpush1.bf16.msra.mxu0 0
      %7181 = vmatprep.subr.bf16.mxu0 0
      %7182 = vmatpush1.bf16.msra.mxu0 0
      %7183 = vmatprep.subr.bf16.mxu0 0
      %7184 = vmatpush1.bf16.msra.mxu0 0
      %7185 = vmatprep.subr.bf16.mxu0 0
      %7186 = vmatpush1.bf16.msra.mxu0 0
      %7187 = vmatprep.subr.bf16.mxu0 0
      %7188 = vmatpush1.bf16.msra.mxu0 0
      %7189 = vmatprep.subr.bf16.mxu0 0
      %7190 = vmatpush1.bf16.msra.mxu0 0
      %7191 = vmatprep.subr.bf16.mxu0 0
      %7192 = vmatpush1.bf16.msra.mxu0 0
      %7193 = vmatprep.subr.bf16.mxu0 0
      %7194 = vmatpush1.bf16.msra.mxu0 0
      %7195 = vmatprep.subr.bf16.mxu0 0
      %7196 = vmatpush1.bf16.msra.mxu0 0
      %7197 = vmatprep.subr.bf16.mxu0 0
      %7198 = vmatpush1.bf16.msra.mxu0 0
      %7199 = vmatprep.subr.bf16.mxu0 0
      %7200 = vmatpush1.bf16.msra.mxu0 0
      %7201 = vmatprep.subr.bf16.mxu0 0
      %7202 = vmatpush1.bf16.msra.mxu0 0
      %7203 = vmatprep.subr.bf16.mxu0 0
      %7204 = vmatpush1.bf16.msra.mxu0 0
      %7205 = vmatprep.subr.bf16.mxu0 0
      %7206 = vmatpush1.bf16.msra.mxu0 0
      %7207 = vmatprep.subr.bf16.mxu0 0
      %7208 = vmatpush1.bf16.msra.mxu0 0
      %7209 = vmatprep.mubr.bf16.mxu0 0
      %7210 = vmatmul.mubr.bf16.gmra.mrb[0].mxu0 %v7110
      %v7211 = vpop.f32.mrb[0].mxu0
      %v7212 = vadd.f32 0.0, %v7211
      %v7213 = vpop.f32.mrb[0].mxu0
      %v7214 = vadd.f32 0.0, %v7213
      %v7215 = vpop.f32.mrb[0].mxu0
      %v7216 = vpop.f32.mrb[0].mxu0
      %7217 = vdwg.mxu0
      %7218 = vmatprep.subr.bf16.mxu0 %v7128
      %7219 = vmatpush1.bf16.msra.mxu0 %v7125
      %7220 = vmatprep.subr.bf16.mxu0 0
      %7221 = vmatpush1.bf16.msra.mxu0 0
      %7222 = vmatprep.subr.bf16.mxu0 0
      %7223 = vmatpush1.bf16.msra.mxu0 0
      %7224 = vmatprep.subr.bf16.mxu0 0
      %7225 = vmatpush1.bf16.msra.mxu0 0
      %7226 = vmatprep.subr.bf16.mxu0 0
      %7227 = vmatpush1.bf16.msra.mxu0 0
      %7228 = vmatprep.subr.bf16.mxu0 0
      %7229 = vmatpush1.bf16.msra.mxu0 0
      %7230 = vmatprep.subr.bf16.mxu0 0
      %7231 = vmatpush1.bf16.msra.mxu0 0
      %7232 = vmatprep.subr.bf16.mxu0 0
      %7233 = vmatpush1.bf16.msra.mxu0 0
      %7234 = vmatprep.subr.bf16.mxu0 0
      %7235 = vmatpush1.bf16.msra.mxu0 0
      %7236 = vmatprep.subr.bf16.mxu0 0
      %7237 = vmatpush1.bf16.msra.mxu0 0
      %7238 = vmatprep.subr.bf16.mxu0 0
      %7239 = vmatpush1.bf16.msra.mxu0 0
      %7240 = vmatprep.subr.bf16.mxu0 0
      %7241 = vmatpush1.bf16.msra.mxu0 0
      %7242 = vmatprep.subr.bf16.mxu0 0
      %7243 = vmatpush1.bf16.msra.mxu0 0
      %7244 = vmatprep.subr.bf16.mxu0 0
      %7245 = vmatpush1.bf16.msra.mxu0 0
      %7246 = vmatprep.subr.bf16.mxu0 0
      %7247 = vmatpush1.bf16.msra.mxu0 0
      %7248 = vmatprep.subr.bf16.mxu0 0
      %7249 = vmatpush1.bf16.msra.mxu0 0
      %7250 = vmatprep.mubr.bf16.mxu0 0
      %7251 = vmatmul.mubr.bf16.gmra.mrb[0].mxu0 %v7110
      %v7252 = vpop.f32.mrb[0].mxu0
      %v7253 = vadd.f32 0.0, %v7252
      %v7254 = vpop.f32.mrb[0].mxu0
      %v7255 = vadd.f32 0.0, %v7254
      %v7256 = vpop.f32.mrb[0].mxu0
      %v7257 = vpop.f32.mrb[0].mxu0
      %7258 = vdwg.mxu0
      %7259 = vmatprep.subr.bf16.mxu0 %v7134
      %7260 = vmatpush1.bf16.msra.mxu0 %v7131
      %7261 = vmatprep.subr.bf16.mxu0 0
      %7262 = vmatpush1.bf16.msra.mxu0 0
      %7263 = vmatprep.subr.bf16.mxu0 0
      %7264 = vmatpush1.bf16.msra.mxu0 0
      %7265 = vmatprep.subr.bf16.mxu0 0
      %7266 = vmatpush1.bf16.msra.mxu0 0
      %7267 = vmatprep.subr.bf16.mxu0 0
      %7268 = vmatpush1.bf16.msra.mxu0 0
      %7269 = vmatprep.subr.bf16.mxu0 0
      %7270 = vmatpush1.bf16.msra.mxu0 0
      %7271 = vmatprep.subr.bf16.mxu0 0
      %7272 = vmatpush1.bf16.msra.mxu0 0
      %7273 = vmatprep.subr.bf16.mxu0 0
      %7274 = vmatpush1.bf16.msra.mxu0 0
      %7275 = vmatprep.subr.bf16.mxu0 0
      %7276 = vmatpush1.bf16.msra.mxu0 0
      %7277 = vmatprep.subr.bf16.mxu0 0
      %7278 = vmatpush1.bf16.msra.mxu0 0
      %7279 = vmatprep.subr.bf16.mxu0 0
      %7280 = vmatpush1.bf16.msra.mxu0 0
      %7281 = vmatprep.subr.bf16.mxu0 0
      %7282 = vmatpush1.bf16.msra.mxu0 0
      %7283 = vmatprep.subr.bf16.mxu0 0
      %7284 = vmatpush1.bf16.msra.mxu0 0
      %7285 = vmatprep.subr.bf16.mxu0 0
      %7286 = vmatpush1.bf16.msra.mxu0 0
      %7287 = vmatprep.subr.bf16.mxu0 0
      %7288 = vmatpush1.bf16.msra.mxu0 0
      %7289 = vmatprep.subr.bf16.mxu0 0
      %7290 = vmatpush1.bf16.msra.mxu0 0
      %7291 = vmatprep.mubr.bf16.mxu0 0
      %7292 = vmatmul.mubr.bf16.gmra.mrb[0].mxu0 %v7110
      %v7293 = vpop.f32.mrb[0].mxu0
      %v7294 = vadd.f32 0.0, %v7293
      %v7295 = vpop.f32.mrb[0].mxu0
      %v7296 = vadd.f32 0.0, %v7295
      %v7297 = vpop.f32.mrb[0].mxu0
      %v7298 = vpop.f32.mrb[0].mxu0
      %7299 = vdwg.mxu0
      %v7300 = vadd.f32 %v7025, %v7171
      %v7301 = vadd.f32 %v7026, %v7173
      %v7302 = vadd.f32 %v7027, %v7212
      %v7303 = vadd.f32 %v7028, %v7214
      %v7304 = vadd.f32 %v7029, %v7253
      %v7305 = vadd.f32 %v7030, %v7255
      %v7306 = vadd.f32 %v7031, %v7294
      %v7307 = vadd.f32 %v7032, %v7296
      %v7308 = vld [vmem:[%s232 + $0x2] sm:$0xff]
      %v7309 = vld [vmem:[%s232 + $0xa] sm:$0xff]
      %v7310 = vld [vmem:[%s232 + $0x12] sm:$0x3]
      %s7311 = scalar_lea.vmem %s0, 104
      %v7312 = vld [vmem:[%s7311] sm:$0xf]
      %v7316 = vcombine.high %v7308, %v7308
      %v7318 = vunpack.c.l.s4 1983009808
      %v7319 = vunpack.c.0.s8 %v7318
      %v7320 = vlaneseq
      %v7321 = vshrl.u32 %v7320, 7
      %v7322 = vsub.s32 %v7319, %v7321
      %v7323 = vrot.slane %v7308, %v7322
      %v7325 = vunpack.c.l.s4 1983009808
      %v7326 = vunpack.c.0.s8 %v7325
      %v7327 = vlaneseq
      %v7328 = vshrl.u32 %v7327, 7
      %v7329 = vsub.s32 %v7326, %v7328
      %v7330 = vrot.slane %v7316, %v7329
      %v7331 = vcombine.high %v7323, %v7323
      %v7332 = vcombine.high %v7330, %v7330
      %v7333 = vcombine.high %v7309, %v7309
      %v7335 = vunpack.c.l.s4 1983009808
      %v7336 = vunpack.c.0.s8 %v7335
      %v7337 = vlaneseq
      %v7338 = vshrl.u32 %v7337, 7
      %v7339 = vsub.s32 %v7336, %v7338
      %v7340 = vrot.slane %v7309, %v7339
      %v7342 = vunpack.c.l.s4 1983009808
      %v7343 = vunpack.c.0.s8 %v7342
      %v7344 = vlaneseq
      %v7345 = vshrl.u32 %v7344, 7
      %v7346 = vsub.s32 %v7343, %v7345
      %v7347 = vrot.slane %v7333, %v7346
      %v7348 = vcombine.high %v7340, %v7340
      %v7349 = vcombine.high %v7347, %v7347
      %v7351 = vunpack.c.l.s4 1983009808
      %v7352 = vunpack.c.0.s8 %v7351
      %v7353 = vlaneseq
      %v7354 = vshrl.u32 %v7353, 7
      %v7355 = vsub.s32 %v7352, %v7354
      %v7356 = vrot.slane %v7310, %v7355
      %7357 = vrot.lane.b32.xlu0 %v7323, 34
      %v7358 = vpop.permute.xlu0 %7357
      %7359 = vrot.lane.b32.xlu0 %v7331, 34
      %v7360 = vpop.permute.xlu0 %7359
      %7361 = vrot.lane.b32.xlu0 %v7330, 34
      %v7362 = vpop.permute.xlu0 %7361
      %7363 = vrot.lane.b32.xlu0 %v7332, 34
      %v7364 = vpop.permute.xlu0 %7363
      %7365 = vrot.lane.b32.xlu0 %v7340, 34
      %v7366 = vpop.permute.xlu0 %7365
      %7367 = vrot.lane.b32.xlu0 %v7348, 34
      %v7368 = vpop.permute.xlu0 %7367
      %7369 = vrot.lane.b32.xlu0 %v7347, 34
      %v7370 = vpop.permute.xlu0 %7369
      %7371 = vrot.lane.b32.xlu0 %v7349, 34
      %v7372 = vpop.permute.xlu0 %7371
      %7373 = vrot.lane.b32.xlu0 %v7356, 34
      %v7374 = vpop.permute.xlu0 %7373
      %vm7375 = vcmask 277504
      %v7376 = vsel %vm7375, %v7358, %v7360
      %v7377 = vsel %vm7375, %v7360, %v7362
      %v7378 = vsel %vm7375, %v7362, %v7364
      %v7379 = vsel %vm7375, %v7364, %v7366
      %v7380 = vsel %vm7375, %v7366, %v7368
      %v7381 = vsel %vm7375, %v7368, %v7370
      %v7382 = vsel %vm7375, %v7370, %v7372
      %v7383 = vsel %vm7375, %v7372, %v7374
      %v7385 = vsel %vm324, %v7312, 0
      %v7388 = vsel %vm328, %v7376, 0
      %v7391 = vsel %vm328, %v7377, 0
      %v7394 = vsel %vm328, %v7378, 0
      %v7397 = vsel %vm328, %v7379, 0
      %v7400 = vsel %vm328, %v7380, 0
      %v7403 = vsel %vm328, %v7381, 0
      %v7406 = vsel %vm328, %v7382, 0
      %v7409 = vsel %vm328, %v7383, 0
      %7411 = vmatprep.subr.bf16.mxu0 %v7391
      %7412 = vmatpush1.bf16.msra.mxu0 %v7388
      %7413 = vmatprep.subr.bf16.mxu0 0
      %7414 = vmatpush1.bf16.msra.mxu0 0
      %7415 = vmatprep.subr.bf16.mxu0 0
      %7416 = vmatpush1.bf16.msra.mxu0 0
      %7417 = vmatprep.subr.bf16.mxu0 0
      %7418 = vmatpush1.bf16.msra.mxu0 0
      %7419 = vmatprep.subr.bf16.mxu0 0
      %7420 = vmatpush1.bf16.msra.mxu0 0
      %7421 = vmatprep.subr.bf16.mxu0 0
      %7422 = vmatpush1.bf16.msra.mxu0 0
      %7423 = vmatprep.subr.bf16.mxu0 0
      %7424 = vmatpush1.bf16.msra.mxu0 0
      %7425 = vmatprep.subr.bf16.mxu0 0
      %7426 = vmatpush1.bf16.msra.mxu0 0
      %7427 = vmatprep.subr.bf16.mxu0 0
      %7428 = vmatpush1.bf16.msra.mxu0 0
      %7429 = vmatprep.subr.bf16.mxu0 0
      %7430 = vmatpush1.bf16.msra.mxu0 0
      %7431 = vmatprep.subr.bf16.mxu0 0
      %7432 = vmatpush1.bf16.msra.mxu0 0
      %7433 = vmatprep.subr.bf16.mxu0 0
      %7434 = vmatpush1.bf16.msra.mxu0 0
      %7435 = vmatprep.subr.bf16.mxu0 0
      %7436 = vmatpush1.bf16.msra.mxu0 0
      %7437 = vmatprep.subr.bf16.mxu0 0
      %7438 = vmatpush1.bf16.msra.mxu0 0
      %7439 = vmatprep.subr.bf16.mxu0 0
      %7440 = vmatpush1.bf16.msra.mxu0 0
      %7441 = vmatprep.subr.bf16.mxu0 0
      %7442 = vmatpush1.bf16.msra.mxu0 0
      %7443 = vmatprep.mubr.bf16.mxu0 0
      %7444 = vmatmul.mubr.bf16.gmra.mrb[0].mxu0 %v7385
      %v7445 = vpop.f32.mrb[0].mxu0
      %v7446 = vadd.f32 0.0, %v7445
      %v7447 = vpop.f32.mrb[0].mxu0
      %v7448 = vadd.f32 0.0, %v7447
      %v7449 = vpop.f32.mrb[0].mxu0
      %v7450 = vpop.f32.mrb[0].mxu0
      %7451 = vdwg.mxu0
      %7452 = vmatprep.subr.bf16.mxu0 %v7397
      %7453 = vmatpush1.bf16.msra.mxu0 %v7394
      %7454 = vmatprep.subr.bf16.mxu0 0
      %7455 = vmatpush1.bf16.msra.mxu0 0
      %7456 = vmatprep.subr.bf16.mxu0 0
      %7457 = vmatpush1.bf16.msra.mxu0 0
      %7458 = vmatprep.subr.bf16.mxu0 0
      %7459 = vmatpush1.bf16.msra.mxu0 0
      %7460 = vmatprep.subr.bf16.mxu0 0
      %7461 = vmatpush1.bf16.msra.mxu0 0
      %7462 = vmatprep.subr.bf16.mxu0 0
      %7463 = vmatpush1.bf16.msra.mxu0 0
      %7464 = vmatprep.subr.bf16.mxu0 0
      %7465 = vmatpush1.bf16.msra.mxu0 0
      %7466 = vmatprep.subr.bf16.mxu0 0
      %7467 = vmatpush1.bf16.msra.mxu0 0
      %7468 = vmatprep.subr.bf16.mxu0 0
      %7469 = vmatpush1.bf16.msra.mxu0 0
      %7470 = vmatprep.subr.bf16.mxu0 0
      %7471 = vmatpush1.bf16.msra.mxu0 0
      %7472 = vmatprep.subr.bf16.mxu0 0
      %7473 = vmatpush1.bf16.msra.mxu0 0
      %7474 = vmatprep.subr.bf16.mxu0 0
      %7475 = vmatpush1.bf16.msra.mxu0 0
      %7476 = vmatprep.subr.bf16.mxu0 0
      %7477 = vmatpush1.bf16.msra.mxu0 0
      %7478 = vmatprep.subr.bf16.mxu0 0
      %7479 = vmatpush1.bf16.msra.mxu0 0
      %7480 = vmatprep.subr.bf16.mxu0 0
      %7481 = vmatpush1.bf16.msra.mxu0 0
      %7482 = vmatprep.subr.bf16.mxu0 0
      %7483 = vmatpush1.bf16.msra.mxu0 0
      %7484 = vmatprep.mubr.bf16.mxu0 0
      %7485 = vmatmul.mubr.bf16.gmra.mrb[0].mxu0 %v7385
      %v7486 = vpop.f32.mrb[0].mxu0
      %v7487 = vadd.f32 0.0, %v7486
      %v7488 = vpop.f32.mrb[0].mxu0
      %v7489 = vadd.f32 0.0, %v7488
      %v7490 = vpop.f32.mrb[0].mxu0
      %v7491 = vpop.f32.mrb[0].mxu0
      %7492 = vdwg.mxu0
      %7493 = vmatprep.subr.bf16.mxu0 %v7403
      %7494 = vmatpush1.bf16.msra.mxu0 %v7400
      %7495 = vmatprep.subr.bf16.mxu0 0
      %7496 = vmatpush1.bf16.msra.mxu0 0
      %7497 = vmatprep.subr.bf16.mxu0 0
      %7498 = vmatpush1.bf16.msra.mxu0 0
      %7499 = vmatprep.subr.bf16.mxu0 0
      %7500 = vmatpush1.bf16.msra.mxu0 0
      %7501 = vmatprep.subr.bf16.mxu0 0
      %7502 = vmatpush1.bf16.msra.mxu0 0
      %7503 = vmatprep.subr.bf16.mxu0 0
      %7504 = vmatpush1.bf16.msra.mxu0 0
      %7505 = vmatprep.subr.bf16.mxu0 0
      %7506 = vmatpush1.bf16.msra.mxu0 0
      %7507 = vmatprep.subr.bf16.mxu0 0
      %7508 = vmatpush1.bf16.msra.mxu0 0
      %7509 = vmatprep.subr.bf16.mxu0 0
      %7510 = vmatpush1.bf16.msra.mxu0 0
      %7511 = vmatprep.subr.bf16.mxu0 0
      %7512 = vmatpush1.bf16.msra.mxu0 0
      %7513 = vmatprep.subr.bf16.mxu0 0
      %7514 = vmatpush1.bf16.msra.mxu0 0
      %7515 = vmatprep.subr.bf16.mxu0 0
      %7516 = vmatpush1.bf16.msra.mxu0 0
      %7517 = vmatprep.subr.bf16.mxu0 0
      %7518 = vmatpush1.bf16.msra.mxu0 0
      %7519 = vmatprep.subr.bf16.mxu0 0
      %7520 = vmatpush1.bf16.msra.mxu0 0
      %7521 = vmatprep.subr.bf16.mxu0 0
      %7522 = vmatpush1.bf16.msra.mxu0 0
      %7523 = vmatprep.subr.bf16.mxu0 0
      %7524 = vmatpush1.bf16.msra.mxu0 0
      %7525 = vmatprep.mubr.bf16.mxu0 0
      %7526 = vmatmul.mubr.bf16.gmra.mrb[0].mxu0 %v7385
      %v7527 = vpop.f32.mrb[0].mxu0
      %v7528 = vadd.f32 0.0, %v7527
      %v7529 = vpop.f32.mrb[0].mxu0
      %v7530 = vadd.f32 0.0, %v7529
      %v7531 = vpop.f32.mrb[0].mxu0
      %v7532 = vpop.f32.mrb[0].mxu0
      %7533 = vdwg.mxu0
      %7534 = vmatprep.subr.bf16.mxu0 %v7409
      %7535 = vmatpush1.bf16.msra.mxu0 %v7406
      %7536 = vmatprep.subr.bf16.mxu0 0
      %7537 = vmatpush1.bf16.msra.mxu0 0
      %7538 = vmatprep.subr.bf16.mxu0 0
      %7539 = vmatpush1.bf16.msra.mxu0 0
      %7540 = vmatprep.subr.bf16.mxu0 0
      %7541 = vmatpush1.bf16.msra.mxu0 0
      %7542 = vmatprep.subr.bf16.mxu0 0
      %7543 = vmatpush1.bf16.msra.mxu0 0
      %7544 = vmatprep.subr.bf16.mxu0 0
      %7545 = vmatpush1.bf16.msra.mxu0 0
      %7546 = vmatprep.subr.bf16.mxu0 0
      %7547 = vmatpush1.bf16.msra.mxu0 0
      %7548 = vmatprep.subr.bf16.mxu0 0
      %7549 = vmatpush1.bf16.msra.mxu0 0
      %7550 = vmatprep.subr.bf16.mxu0 0
      %7551 = vmatpush1.bf16.msra.mxu0 0
      %7552 = vmatprep.subr.bf16.mxu0 0
      %7553 = vmatpush1.bf16.msra.mxu0 0
      %7554 = vmatprep.subr.bf16.mxu0 0
      %7555 = vmatpush1.bf16.msra.mxu0 0
      %7556 = vmatprep.subr.bf16.mxu0 0
      %7557 = vmatpush1.bf16.msra.mxu0 0
      %7558 = vmatprep.subr.bf16.mxu0 0
      %7559 = vmatpush1.bf16.msra.mxu0 0
      %7560 = vmatprep.subr.bf16.mxu0 0
      %7561 = vmatpush1.bf16.msra.mxu0 0
      %7562 = vmatprep.subr.bf16.mxu0 0
      %7563 = vmatpush1.bf16.msra.mxu0 0
      %7564 = vmatprep.subr.bf16.mxu0 0
      %7565 = vmatpush1.bf16.msra.mxu0 0
      %7566 = vmatprep.mubr.bf16.mxu0 0
      %7567 = vmatmul.mubr.bf16.gmra.mrb[0].mxu0 %v7385
      %v7568 = vpop.f32.mrb[0].mxu0
      %v7569 = vadd.f32 0.0, %v7568
      %v7570 = vpop.f32.mrb[0].mxu0
      %v7571 = vadd.f32 0.0, %v7570
      %v7572 = vpop.f32.mrb[0].mxu0
      %v7573 = vpop.f32.mrb[0].mxu0
      %7574 = vdwg.mxu0
      %v7575 = vadd.f32 %v7300, %v7446
      %v7576 = vadd.f32 %v7301, %v7448
      %v7577 = vadd.f32 %v7302, %v7487
      %v7578 = vadd.f32 %v7303, %v7489
      %v7579 = vadd.f32 %v7304, %v7528
      %v7580 = vadd.f32 %v7305, %v7530
      %v7581 = vadd.f32 %v7306, %v7569
      %v7582 = vadd.f32 %v7307, %v7571
      %v7583 = vld [vmem:[%s2] sm:$0xff]
      %v7585 = vlaneseq
      %v7586 = vshrl.u32 %v7585, 7
      %v7587 = vsub.s32 0, %v7586
      %v7588 = vrot.slane %v7583, %v7587
      %v7589 = vlaneseq
      %v7590 = vshrl.u32 %v7589, 7
      %v7591 = vsub.s32 1, %v7590
      %v7592 = vrot.slane %v7583, %v7591
      %v7593 = vlaneseq
      %v7594 = vshrl.u32 %v7593, 7
      %v7595 = vsub.s32 2, %v7594
      %v7596 = vrot.slane %v7583, %v7595
      %v7597 = vlaneseq
      %v7598 = vshrl.u32 %v7597, 7
      %v7599 = vsub.s32 3, %v7598
      %v7600 = vrot.slane %v7583, %v7599
      %v7601 = vlaneseq
      %v7602 = vshrl.u32 %v7601, 7
      %v7603 = vsub.s32 4, %v7602
      %v7604 = vrot.slane %v7583, %v7603
      %v7605 = vlaneseq
      %v7606 = vshrl.u32 %v7605, 7
      %v7607 = vsub.s32 5, %v7606
      %v7608 = vrot.slane %v7583, %v7607
      %v7609 = vlaneseq
      %v7610 = vshrl.u32 %v7609, 7
      %v7611 = vsub.s32 6, %v7610
      %v7612 = vrot.slane %v7583, %v7611
      %v7613 = vlaneseq
      %v7614 = vshrl.u32 %v7613, 7
      %v7615 = vsub.s32 7, %v7614
      %v7616 = vrot.slane %v7583, %v7615
      %v7625 = vmul.f32 %v7575, %v7588
      %v7626 = vmul.f32 %v7576, %v7592
      %v7627 = vmul.f32 %v7577, %v7596
      %v7628 = vmul.f32 %v7578, %v7600
      %v7629 = vmul.f32 %v7579, %v7604
      %v7630 = vmul.f32 %v7580, %v7608
      %v7631 = vmul.f32 %v7581, %v7612
      %v7632 = vmul.f32 %v7582, %v7616
      %v7633 = vpack.c.bf16 %v7625, %v7625
      %v7634 = vpack.c.bf16 %v7626, %v7626
      %v7635 = vpack.c.bf16 %v7627, %v7627
      %v7636 = vpack.c.bf16 %v7628, %v7628
      %v7637 = vpack.c.bf16 %v7629, %v7629
      %v7638 = vpack.c.bf16 %v7630, %v7630
      %v7639 = vpack.c.bf16 %v7631, %v7631
      %v7640 = vpack.c.bf16 %v7632, %v7632
      %v7649 = vunpack.c.l.b16 %v7633
      %v7650 = vunpack.c.l.b16 %v7634
      %v7651 = vunpack.c.l.b16 %v7635
      %v7652 = vunpack.c.l.b16 %v7636
      %v7653 = vunpack.c.l.b16 %v7637
      %v7654 = vunpack.c.l.b16 %v7638
      %v7655 = vunpack.c.l.b16 %v7639
      %v7656 = vunpack.c.l.b16 %v7640
      %v7657 = vpack.c.b16 %v7650, %v7649
      %v7658 = vpack.c.b16 %v7652, %v7651
      %v7659 = vpack.c.b16 %v7654, %v7653
      %v7660 = vpack.c.b16 %v7656, %v7655
      %7665 = vst [vmem:[%s237] sm:$0xff] %v7657
      %7666 = vst [vmem:[%s237 + $0x8] sm:$0xff] %v7658
      %7667 = vst [vmem:[%s237 + $0x10] sm:$0xff] %v7659
      %7668 = vst [vmem:[%s237 + $0x18] sm:$0xff] %v7660
      %v7669 = vadd.f32 %v7625, %v7626
      %v7670 = vadd.f32 %v7669, %v7627
      %v7671 = vadd.f32 %v7670, %v7628
      %v7672 = vadd.f32 %v7671, %v7629
      %v7673 = vadd.f32 %v7672, %v7630
      %v7674 = vadd.f32 %v7673, %v7631
      %v7675 = vadd.f32 %v7674, %v7632
      %7676 = vadd.xlane.f32.xlu0 %v7675
      %v7677 = vpop.xlane.xlu0 %7676
      %v7678 = vmul.f32 %v7625, %v7625
      %v7679 = vmul.f32 %v7626, %v7626
      %v7680 = vmul.f32 %v7627, %v7627
      %v7681 = vmul.f32 %v7628, %v7628
      %v7682 = vmul.f32 %v7629, %v7629
      %v7683 = vmul.f32 %v7630, %v7630
      %v7684 = vmul.f32 %v7631, %v7631
      %v7685 = vmul.f32 %v7632, %v7632
      %v7686 = vadd.f32 %v7678, %v7679
      %v7687 = vadd.f32 %v7686, %v7680
      %v7688 = vadd.f32 %v7687, %v7681
      %v7689 = vadd.f32 %v7688, %v7682
      %v7690 = vadd.f32 %v7689, %v7683
      %v7691 = vadd.f32 %v7690, %v7684
      %v7692 = vadd.f32 %v7691, %v7685
      %7693 = vadd.xlane.f32.xlu0 %v7692
      %v7694 = vpop.xlane.xlu0 %7693
      %7695 = vst [vmem:[%s241] sm:$0xff] %v7677
      %7696 = vst [vmem:[%s245] sm:$0xff] %v7694
      %p7697 = scmp.lt.s32.totalorder %s17, 1
      %s7698 = scalar_select %p7697, %s17, 1
      %s7699 = smul.addr %s7698, 8
      %s7700 = smul.addr %s7699, 4
      %s7701 = scalar_lea.vmem %s3, %s7700
      %p7702 = scmp.lt.s32.totalorder %s17, 1
      %s7703 = scalar_select %p7702, %s17, 1
      %s7704 = smul.addr %s7703, 8
      %s7705 = scalar_lea.vmem %s4, %s7704
      %p7706 = scmp.lt.s32.totalorder %s17, 1
      %s7707 = scalar_select %p7706, %s17, 1
      %s7708 = smul.addr %s7707, 8
      %s7709 = scalar_lea.vmem %s5, %s7708
      // Predicated region
      $region33: #{relation_conv_block.2} parent=31 // pred_check
        %p7710 = pneg %p103
      $region34: #{relation_conv_block.2} parent=31 // pred_check_branch
        %7712 = sbr.rel (%p7710) target = $region36
      $region35: #{relation_conv_block.2} parent=31 // pred_region
        _
      $region36: #{relation_conv_block.2} parent=31 // pred_fallthru
        _
      // Predicated region
      $region37: #{relation_conv_block.2} parent=31 // pred_check
        %p7713 = pneg %p129
      $region38: #{relation_conv_block.2} parent=31 // pred_check_branch
        %7715 = sbr.rel (%p7713) target = $region40
      $region39: #{relation_conv_block.2} parent=31 // pred_region
        _
      $region40: #{relation_conv_block.2} parent=31 // pred_fallthru
        _
      // Predicated region
      $region41: #{relation_conv_block.2} parent=31 // pred_check
        %p7716 = pneg %p155
      $region42: #{relation_conv_block.2} parent=31 // pred_check_branch
        %7718 = sbr.rel (%p7716) target = $region44
      $region43: #{relation_conv_block.2} parent=31 // pred_region
        _
      $region44: #{relation_conv_block.2} parent=31 // pred_fallthru
        _
    $region32: #{relation_conv_block.2} parent=5 // pred_fallthru
      _
    %p7719 = scmp.le.s32.totalorder 2, %s12
    // Predicated region
    $region45: #{relation_conv_block.2} parent=5 // pred_check
      %p7720 = pneg %p7719
    $region46: #{relation_conv_block.2} parent=5 // pred_check_branch
      %7722 = sbr.rel (%p7720) target = $region48
    $region47: #{relation_conv_block.2} parent=5 // pred_region
      %s7723 = ssub.s32 %s12, 2
      // Predicated region
      $region49: #{relation_conv_block.2} parent=47 // pred_check
        %p7724 = pneg %p109
      $region50: #{relation_conv_block.2} parent=47 // pred_check_branch
        %7726 = sbr.rel (%p7724) target = $region52
      $region51: #{relation_conv_block.2} parent=47 // pred_region
        %p7727 = scmp.lt.s32.totalorder %s18, 1
        %s7728 = scalar_select %p7727, %s18, 1
        %s7729 = smul.addr %s7728, 8
        %s7730 = smul.addr %s7729, 4
        %s7731 = scalar_lea.vmem %s3, %s7730
      $region52: #{relation_conv_block.2} parent=47 // pred_fallthru
        _
      // Predicated region
      $region53: #{relation_conv_block.2} parent=47 // pred_check
        %p7732 = pneg %p135
      $region54: #{relation_conv_block.2} parent=47 // pred_check_branch
        %7734 = sbr.rel (%p7732) target = $region56
      $region55: #{relation_conv_block.2} parent=47 // pred_region
        %p7735 = scmp.lt.s32.totalorder %s18, 1
        %s7736 = scalar_select %p7735, %s18, 1
        %s7737 = smul.addr %s7736, 8
        %s7738 = scalar_lea.vmem %s4, %s7737
      $region56: #{relation_conv_block.2} parent=47 // pred_fallthru
        _
      // Predicated region
      $region57: #{relation_conv_block.2} parent=47 // pred_check
        %p7739 = pneg %p161
      $region58: #{relation_conv_block.2} parent=47 // pred_check_branch
        %7741 = sbr.rel (%p7739) target = $region60
      $region59: #{relation_conv_block.2} parent=47 // pred_region
        %p7742 = scmp.lt.s32.totalorder %s18, 1
        %s7743 = scalar_select %p7742, %s18, 1
        %s7744 = smul.addr %s7743, 8
        %s7745 = scalar_lea.vmem %s5, %s7744
      $region60: #{relation_conv_block.2} parent=47 // pred_fallthru
        _
    $region48: #{relation_conv_block.2} parent=5 // pred_fallthru
      _
  $region6: #{relation_conv_block.2} parent=0 // loop_footer
    %s16 = sadd.s32 1, %s12
  $region7: #{relation_conv_block.2} parent=0 // loop_footer_branch
    %11 = sbr.rel target = $region3
  $region8: #{relation_conv_block.2} parent=0 // loop_exit
    _

</llo_original>
